<compile_context>
chip_gen: v7x
topology: tpu7x:2x2x1
jax: 0.10.0
libtpu: 0.0.40
codegen_flags: <defaults>
</compile_context>

<pallas_src>
import functools

import jax
import jax.numpy as jnp
from jax.experimental import pallas as pl
from jax.experimental.pallas import tpu as pltpu

BN_EPS = 1e-5
LANE = 128


def _round_up(n, m):
    return ((n + m - 1) // m) * m


# ---------------------------------------------------------------------------
# Fused forward kernel: enc1 -> enc2 -> heads -> reparam -> dec1 -> dec2 -> dec3
# ---------------------------------------------------------------------------
def _fused_vae_kernel(
    x_ref, u_ref,
    w1_ref, b1_ref, w2_ref, b2_ref, wh_ref, bh_ref,
    wd1_ref, bd1_ref, wd2_ref, bd2_ref, wd3_ref, bd3_ref,
    xhat_ref, mean_ref, logvar_ref,
    *, L, LP,
):
    f32 = jnp.float32
    bf16 = jnp.bfloat16

    # --- encoder -------------------------------------------------------------
    # Linear + BatchNorm(eval; scale pre-folded into w1/b1) + Tanh (+Dropout=id)
    x = x_ref[...].astype(bf16)
    h1 = jnp.tanh(
        jnp.dot(x, w1_ref[...], preferred_element_type=f32) + b1_ref[...]
    )
    # Linear + Sigmoid (+Dropout=id)
    h2 = jax.nn.sigmoid(
        jnp.dot(h1.astype(bf16), w2_ref[...], preferred_element_type=f32) + b2_ref[...]
    )

    # --- merged mean/logvar heads --------------------------------------------
    # mean weights live in columns [0, L); logvar weights in [LP, LP+L)
    heads = jnp.dot(h2.astype(bf16), wh_ref[...], preferred_element_type=f32) + bh_ref[...]
    mean = heads[:, 0:L]
    logvar = heads[:, LP:LP + L]
    mean_ref[...] = mean
    logvar_ref[...] = logvar

    # --- reparameterization (Exponential branch) ------------------------------
    # rate = 1/(mean + 1e-9);  z = -log(u)/rate  ==  -log(u) * (mean + 1e-9)
    z = -jnp.log(u_ref[...]) * (mean + 1e-9)
    z_min = jnp.min(z)
    z_max = jnp.max(z)
    denom = jnp.maximum(z_max - z_min, 1e-12)  # guard the degenerate all-equal case
    z = (z - z_min) / denom

    # --- decoder ---------------------------------------------------------------
    h3 = jax.nn.sigmoid(
        jnp.dot(z.astype(bf16), wd1_ref[...], preferred_element_type=f32) + bd1_ref[...]
    )
    h4 = jax.nn.sigmoid(
        jnp.dot(h3.astype(bf16), wd2_ref[...], preferred_element_type=f32) + bd2_ref[...]
    )
    xhat = jax.nn.sigmoid(
        jnp.dot(h4.astype(bf16), wd3_ref[...], preferred_element_type=f32) + bd3_ref[...]
    )
    xhat_ref[...] = xhat


def variational_example_forward(params, x, u):
    B, D = x.shape
    L = u.shape[1]
    LP = params["LP"]

    inputs = (
        x, u,
        params["w1"], params["b1"], params["w2"], params["b2"],
        params["wh"], params["bh"],
        params["wd1"], params["bd1"], params["wd2"], params["bd2"],
        params["wd3"], params["bd3"],
    )

    def full_spec(a):
        return pl.BlockSpec(a.shape, lambda i: (0,) * a.ndim)

    in_specs = [full_spec(a) for a in inputs]
    out_shape = (
        jax.ShapeDtypeStruct((B, D), jnp.float32),
        jax.ShapeDtypeStruct((B, L), jnp.float32),
        jax.ShapeDtypeStruct((B, L), jnp.float32),
    )
    out_specs = (
        pl.BlockSpec((B, D), lambda i: (0, 0)),
        pl.BlockSpec((B, L), lambda i: (0, 0)),
        pl.BlockSpec((B, L), lambda i: (0, 0)),
    )

    kernel = functools.partial(_fused_vae_kernel, L=L, LP=LP)
    return pl.pallas_call(
        kernel,
        out_shape=out_shape,
        grid=(1,),
        in_specs=in_specs,
        out_specs=out_specs,
        compiler_params=pltpu.CompilerParams(
            dimension_semantics=("arbitrary",),
            vmem_limit_bytes=32 << 20,
        ),
    )(*inputs)


# ---------------------------------------------------------------------------
# Parameter init (PyTorch-Linear-style uniform(-1/sqrt(in), 1/sqrt(in))),
# BN-fold, lane padding, bf16 cast.
# ---------------------------------------------------------------------------
def _torch_linear_init(key, d_in, d_out):
    kw, kb = jax.random.split(key)
    bound = 1.0 / jnp.sqrt(jnp.float32(d_in))
    w = jax.random.uniform(kw, (d_in, d_out), jnp.float32, -bound, bound)
    b = jax.random.uniform(kb, (1, d_out), jnp.float32, -bound, bound)
    return w, b


def _pad2d(a, rows, cols):
    out = jnp.zeros((rows, cols), a.dtype)
    return out.at[: a.shape[0], : a.shape[1]].set(a)


def init_params(key, input_dim, L):
    H1, H2 = 1500, 500
    H1P, H2P = _round_up(H1, LANE), _round_up(H2, LANE)   # 1536, 512
    LP = LANE                                             # per-head padded width

    keys = jax.random.split(key, 7)
    w1, b1 = _torch_linear_init(keys[0], input_dim, H1)
    w2, b2 = _torch_linear_init(keys[1], H1, H2)
    wm, bm = _torch_linear_init(keys[2], H2, L)
    wv, bv = _torch_linear_init(keys[3], H2, L)
    wd1, bd1 = _torch_linear_init(keys[4], L, H2)
    wd2, bd2 = _torch_linear_init(keys[5], H2, H1)
    wd3, bd3 = _torch_linear_init(keys[6], H1, input_dim)

    # Fold BatchNorm1d eval transform (running_mean=0, running_var=1, gamma=1,
    # beta=0): y_bn = y_lin / sqrt(1 + eps) -> scale enc1 weight and bias.
    bn_scale = 1.0 / jnp.sqrt(1.0 + BN_EPS)
    w1 = w1 * bn_scale
    b1 = b1 * bn_scale

    # Merged heads weight: mean in columns [0, L), logvar in [LP, LP+L); zero pad
    # elsewhere so the (padded) 0.5-valued sigmoid columns of h2 contribute 0.
    wh = jnp.zeros((H2P, 2 * LP), jnp.float32)
    wh = wh.at[:H2, :L].set(wm).at[:H2, LP:LP + L].set(wv)
    bh = jnp.zeros((1, 2 * LP), jnp.float32)
    bh = bh.at[:, :L].set(bm).at[:, LP:LP + L].set(bv)

    bf = jnp.bfloat16
    return {
        "LP": LP,
        # bf16 weights (DMA-bound regime), f32 biases (tiny)
        "w1": _pad2d(w1, input_dim, H1P).astype(bf),
        "b1": _pad2d(b1, 1, H1P),
        "w2": _pad2d(w2, H1P, H2P).astype(bf),
        "b2": _pad2d(b2, 1, H2P),
        "wh": wh.astype(bf),
        "bh": bh,
        "wd1": _pad2d(wd1, L, H2P).astype(bf),
        "bd1": _pad2d(bd1, 1, H2P),
        "wd2": _pad2d(wd2, H2P, H1P).astype(bf),
        "bd2": _pad2d(bd2, 1, H1P),
        "wd3": _pad2d(wd3, H1P, input_dim).astype(bf),
        "bd3": _pad2d(bd3, 1, input_dim),
    }


# ---------------------------------------------------------------------------
if __name__ == "__main__":
    B = 8
    INPUT_DIM = 64
    L = 8

    root = jax.random.PRNGKey(0)
    k_params, k_x, k_u = jax.random.split(root, 3)

    params = init_params(k_params, INPUT_DIM, L)
    x = jax.random.uniform(k_x, (B, INPUT_DIM), jnp.float32)
    # uniform samples for the exponential reparameterization (torch.rand_like)
    u = jax.random.uniform(k_u, (B, L), jnp.float32, minval=1e-7, maxval=1.0)

    x_hat, mean, log_var = variational_example_forward(params, x, u)
    jax.block_until_ready((x_hat, mean, log_var))

    assert x_hat.shape == (B, INPUT_DIM)
    assert mean.shape == (B, L) and log_var.shape == (B, L)
    assert bool(jnp.all(jnp.isfinite(x_hat)))
    assert bool(jnp.all(jnp.isfinite(mean))) and bool(jnp.all(jnp.isfinite(log_var)))
    # TODO(synk): training-mode Dropout and BatchNorm1d batch statistics are not
    # reproduced; inference-mode semantics (Dropout=identity, BN running stats
    # folded into enc1) are implemented instead.
    print("KERNEL_OK")
</pallas_src>

<mosaic_0001>
module attributes {stable_mosaic.version = 11 : i64} {
  func.func @_fused_vae_kernel(%arg0: i32, %arg1: memref<8x64xf32, #tpu.memory_space<vmem>>, %arg2: memref<8x8xf32, #tpu.memory_space<vmem>>, %arg3: memref<64x1536xbf16, #tpu.memory_space<vmem>>, %arg4: memref<1x1536xf32, #tpu.memory_space<vmem>>, %arg5: memref<1536x512xbf16, #tpu.memory_space<vmem>>, %arg6: memref<1x512xf32, #tpu.memory_space<vmem>>, %arg7: memref<512x256xbf16, #tpu.memory_space<vmem>>, %arg8: memref<1x256xf32, #tpu.memory_space<vmem>>, %arg9: memref<8x512xbf16, #tpu.memory_space<vmem>>, %arg10: memref<1x512xf32, #tpu.memory_space<vmem>>, %arg11: memref<512x1536xbf16, #tpu.memory_space<vmem>>, %arg12: memref<1x1536xf32, #tpu.memory_space<vmem>>, %arg13: memref<1536x64xbf16, #tpu.memory_space<vmem>>, %arg14: memref<1x64xf32, #tpu.memory_space<vmem>>, %arg15: memref<8x64xf32, #tpu.memory_space<vmem>>, %arg16: memref<8x8xf32, #tpu.memory_space<vmem>>, %arg17: memref<8x8xf32, #tpu.memory_space<vmem>>) attributes {dimension_semantics = [#tpu.dimension_semantics<arbitrary>], iteration_bounds = array<i64: 1>, scalar_prefetch = 0 : i64, scratch_operands = 0 : i64, tpu.core_type = #tpu.core_type<tc>, window_params = [{pipeline_mode = #tpu.pipeline_mode<synchronous>, transform_indices = @transform_0, window_bounds = array<i64: 8, 64>}, {pipeline_mode = #tpu.pipeline_mode<synchronous>, transform_indices = @transform_1, window_bounds = array<i64: 8, 8>}, {pipeline_mode = #tpu.pipeline_mode<synchronous>, transform_indices = @transform_2, window_bounds = array<i64: 64, 1536>}, {pipeline_mode = #tpu.pipeline_mode<synchronous>, transform_indices = @transform_3, window_bounds = array<i64: 1, 1536>}, {pipeline_mode = #tpu.pipeline_mode<synchronous>, transform_indices = @transform_4, window_bounds = array<i64: 1536, 512>}, {pipeline_mode = #tpu.pipeline_mode<synchronous>, transform_indices = @transform_5, window_bounds = array<i64: 1, 512>}, {pipeline_mode = #tpu.pipeline_mode<synchronous>, transform_indices = @transform_6, window_bounds = array<i64: 512, 256>}, {pipeline_mode = #tpu.pipeline_mode<synchronous>, transform_indices = @transform_7, window_bounds = array<i64: 1, 256>}, {pipeline_mode = #tpu.pipeline_mode<synchronous>, transform_indices = @transform_8, window_bounds = array<i64: 8, 512>}, {pipeline_mode = #tpu.pipeline_mode<synchronous>, transform_indices = @transform_9, window_bounds = array<i64: 1, 512>}, {pipeline_mode = #tpu.pipeline_mode<synchronous>, transform_indices = @transform_10, window_bounds = array<i64: 512, 1536>}, {pipeline_mode = #tpu.pipeline_mode<synchronous>, transform_indices = @transform_11, window_bounds = array<i64: 1, 1536>}, {pipeline_mode = #tpu.pipeline_mode<synchronous>, transform_indices = @transform_12, window_bounds = array<i64: 1536, 64>}, {pipeline_mode = #tpu.pipeline_mode<synchronous>, transform_indices = @transform_13, window_bounds = array<i64: 1, 64>}, {pipeline_mode = #tpu.pipeline_mode<synchronous>, transform_indices = @transform_14, window_bounds = array<i64: 8, 64>}, {pipeline_mode = #tpu.pipeline_mode<synchronous>, transform_indices = @transform_15, window_bounds = array<i64: 8, 8>}, {pipeline_mode = #tpu.pipeline_mode<synchronous>, transform_indices = @transform_16, window_bounds = array<i64: 8, 8>}]} {
    %c0 = arith.constant 0 : index
    %c0_0 = arith.constant 0 : index
    %0 = vector.load %arg1[%c0, %c0_0] : memref<8x64xf32, #tpu.memory_space<vmem>>, vector<8x64xf32>
    %1 = arith.truncf %0 : vector<8x64xf32> to vector<8x64xbf16>
    %c0_1 = arith.constant 0 : index
    %c0_2 = arith.constant 0 : index
    %2 = vector.load %arg3[%c0_1, %c0_2] : memref<64x1536xbf16, #tpu.memory_space<vmem>>, vector<64x1536xbf16>
    %cst = arith.constant dense<0.000000e+00> : vector<8x1536xf32>
    %3 = tpu.matmul %1, %2, %cst {dimension_numbers = #tpu.dot_dimension_numbers<[1], [0], [0], [1], [0, 0, 1, 1], [], []>} : vector<8x64xbf16>, vector<64x1536xbf16>, vector<8x1536xf32> -> vector<8x1536xf32>
    %c0_3 = arith.constant 0 : index
    %c0_4 = arith.constant 0 : index
    %4 = vector.load %arg4[%c0_3, %c0_4] : memref<1x1536xf32, #tpu.memory_space<vmem>>, vector<1x1536xf32>
    %5 = vector.broadcast %4 : vector<1x1536xf32> to vector<8x1536xf32>
    %6 = arith.addf %3, %5 : vector<8x1536xf32>
    %7 = math.tanh %6 : vector<8x1536xf32>
    %8 = arith.truncf %7 : vector<8x1536xf32> to vector<8x1536xbf16>
    %c0_5 = arith.constant 0 : index
    %c0_6 = arith.constant 0 : index
    %9 = vector.load %arg5[%c0_5, %c0_6] : memref<1536x512xbf16, #tpu.memory_space<vmem>>, vector<1536x512xbf16>
    %cst_7 = arith.constant dense<0.000000e+00> : vector<8x512xf32>
    %10 = tpu.matmul %8, %9, %cst_7 {dimension_numbers = #tpu.dot_dimension_numbers<[1], [0], [0], [1], [0, 0, 1, 1], [], []>} : vector<8x1536xbf16>, vector<1536x512xbf16>, vector<8x512xf32> -> vector<8x512xf32>
    %c0_8 = arith.constant 0 : index
    %c0_9 = arith.constant 0 : index
    %11 = vector.load %arg6[%c0_8, %c0_9] : memref<1x512xf32, #tpu.memory_space<vmem>>, vector<1x512xf32>
    %12 = vector.broadcast %11 : vector<1x512xf32> to vector<8x512xf32>
    %13 = arith.addf %10, %12 : vector<8x512xf32>
    %14 = arith.negf %13 : vector<8x512xf32>
    %15 = math.exp %14 : vector<8x512xf32>
    %cst_10 = arith.constant 1.000000e+00 : f32
    %16 = vector.broadcast %cst_10 : f32 to vector<8x512xf32>
    %17 = arith.addf %16, %15 : vector<8x512xf32>
    %18 = arith.divf %16, %17 : vector<8x512xf32>
    %19 = arith.truncf %18 : vector<8x512xf32> to vector<8x512xbf16>
    %c0_11 = arith.constant 0 : index
    %c0_12 = arith.constant 0 : index
    %20 = vector.load %arg7[%c0_11, %c0_12] : memref<512x256xbf16, #tpu.memory_space<vmem>>, vector<512x256xbf16>
    %cst_13 = arith.constant dense<0.000000e+00> : vector<8x256xf32>
    %21 = tpu.matmul %19, %20, %cst_13 {dimension_numbers = #tpu.dot_dimension_numbers<[1], [0], [0], [1], [0, 0, 1, 1], [], []>} : vector<8x512xbf16>, vector<512x256xbf16>, vector<8x256xf32> -> vector<8x256xf32>
    %c0_14 = arith.constant 0 : index
    %c0_15 = arith.constant 0 : index
    %22 = vector.load %arg8[%c0_14, %c0_15] : memref<1x256xf32, #tpu.memory_space<vmem>>, vector<1x256xf32>
    %23 = vector.broadcast %22 : vector<1x256xf32> to vector<8x256xf32>
    %24 = arith.addf %21, %23 : vector<8x256xf32>
    %25 = vector.extract_strided_slice %24 {offsets = [0, 0], sizes = [8, 8], strides = [1, 1]} : vector<8x256xf32> to vector<8x8xf32>
    %26 = vector.extract_strided_slice %24 {offsets = [0, 128], sizes = [8, 8], strides = [1, 1]} : vector<8x256xf32> to vector<8x8xf32>
    %c0_16 = arith.constant 0 : index
    %c0_17 = arith.constant 0 : index
    %27 = vector.load %arg16[%c0_16, %c0_17] : memref<8x8xf32, #tpu.memory_space<vmem>>, vector<8x8xf32>
    tpu.vector_store %arg16[%c0_16, %c0_17], %25 {strides = array<i32>} : memref<8x8xf32, #tpu.memory_space<vmem>>, vector<8x8xf32>,
    %c0_18 = arith.constant 0 : index
    %c0_19 = arith.constant 0 : index
    %28 = vector.load %arg17[%c0_18, %c0_19] : memref<8x8xf32, #tpu.memory_space<vmem>>, vector<8x8xf32>
    tpu.vector_store %arg17[%c0_18, %c0_19], %26 {strides = array<i32>} : memref<8x8xf32, #tpu.memory_space<vmem>>, vector<8x8xf32>,
    %c0_20 = arith.constant 0 : index
    %c0_21 = arith.constant 0 : index
    %29 = vector.load %arg2[%c0_20, %c0_21] : memref<8x8xf32, #tpu.memory_space<vmem>>, vector<8x8xf32>
    %30 = math.log %29 : vector<8x8xf32>
    %cst_22 = arith.constant 0.000000e+00 : f32
    %31 = vector.broadcast %cst_22 : f32 to vector<8x8xf32>
    %32 = arith.subf %31, %30 : vector<8x8xf32>
    %cst_23 = arith.constant 9.99999971E-10 : f32
    %33 = vector.broadcast %cst_23 : f32 to vector<8x8xf32>
    %34 = arith.addf %25, %33 : vector<8x8xf32>
    %35 = arith.mulf %32, %34 : vector<8x8xf32>
    %36 = vector.shape_cast %35 : vector<8x8xf32> to vector<1x8x8xf32>
    %cst_24 = arith.constant dense<0x7F800000> : vector<1xf32>
    %37 = vector.multi_reduction <minimumf>, %36, %cst_24 [1, 2] : vector<1x8x8xf32> to vector<1xf32>
    %38 = vector.shape_cast %37 : vector<1xf32> to vector<1x1x1xf32>
    %39 = vector.extract %38[0, 0, 0] : f32 from vector<1x1x1xf32>
    %40 = vector.shape_cast %35 : vector<8x8xf32> to vector<1x8x8xf32>
    %cst_25 = arith.constant dense<0xFF800000> : vector<1xf32>
    %41 = vector.multi_reduction <maximumf>, %40, %cst_25 [1, 2] : vector<1x8x8xf32> to vector<1xf32>
    %42 = vector.shape_cast %41 : vector<1xf32> to vector<1x1x1xf32>
    %43 = vector.extract %42[0, 0, 0] : f32 from vector<1x1x1xf32>
    %44 = arith.subf %43, %39 : f32
    %cst_26 = arith.constant 9.99999996E-13 : f32
    %45 = arith.maximumf %44, %cst_26 : f32
    %46 = vector.broadcast %39 : f32 to vector<8x8xf32>
    %47 = arith.subf %35, %46 : vector<8x8xf32>
    %48 = vector.broadcast %45 : f32 to vector<8x8xf32>
    %49 = arith.divf %47, %48 : vector<8x8xf32>
    %50 = arith.truncf %49 : vector<8x8xf32> to vector<8x8xbf16>
    %c0_27 = arith.constant 0 : index
    %c0_28 = arith.constant 0 : index
    %51 = vector.load %arg9[%c0_27, %c0_28] : memref<8x512xbf16, #tpu.memory_space<vmem>>, vector<8x512xbf16>
    %cst_29 = arith.constant dense<0.000000e+00> : vector<8x512xf32>
    %52 = tpu.matmul %50, %51, %cst_29 {dimension_numbers = #tpu.dot_dimension_numbers<[1], [0], [0], [1], [0, 0, 1, 1], [], []>} : vector<8x8xbf16>, vector<8x512xbf16>, vector<8x512xf32> -> vector<8x512xf32>
    %c0_30 = arith.constant 0 : index
    %c0_31 = arith.constant 0 : index
    %53 = vector.load %arg10[%c0_30, %c0_31] : memref<1x512xf32, #tpu.memory_space<vmem>>, vector<1x512xf32>
    %54 = vector.broadcast %53 : vector<1x512xf32> to vector<8x512xf32>
    %55 = arith.addf %52, %54 : vector<8x512xf32>
    %56 = arith.negf %55 : vector<8x512xf32>
    %57 = math.exp %56 : vector<8x512xf32>
    %cst_32 = arith.constant 1.000000e+00 : f32
    %58 = vector.broadcast %cst_32 : f32 to vector<8x512xf32>
    %59 = arith.addf %58, %57 : vector<8x512xf32>
    %60 = arith.divf %58, %59 : vector<8x512xf32>
    %61 = arith.truncf %60 : vector<8x512xf32> to vector<8x512xbf16>
    %c0_33 = arith.constant 0 : index
    %c0_34 = arith.constant 0 : index
    %62 = vector.load %arg11[%c0_33, %c0_34] : memref<512x1536xbf16, #tpu.memory_space<vmem>>, vector<512x1536xbf16>
    %cst_35 = arith.constant dense<0.000000e+00> : vector<8x1536xf32>
    %63 = tpu.matmul %61, %62, %cst_35 {dimension_numbers = #tpu.dot_dimension_numbers<[1], [0], [0], [1], [0, 0, 1, 1], [], []>} : vector<8x512xbf16>, vector<512x1536xbf16>, vector<8x1536xf32> -> vector<8x1536xf32>
    %c0_36 = arith.constant 0 : index
    %c0_37 = arith.constant 0 : index
    %64 = vector.load %arg12[%c0_36, %c0_37] : memref<1x1536xf32, #tpu.memory_space<vmem>>, vector<1x1536xf32>
    %65 = vector.broadcast %64 : vector<1x1536xf32> to vector<8x1536xf32>
    %66 = arith.addf %63, %65 : vector<8x1536xf32>
    %67 = arith.negf %66 : vector<8x1536xf32>
    %68 = math.exp %67 : vector<8x1536xf32>
    %cst_38 = arith.constant 1.000000e+00 : f32
    %69 = vector.broadcast %cst_38 : f32 to vector<8x1536xf32>
    %70 = arith.addf %69, %68 : vector<8x1536xf32>
    %71 = arith.divf %69, %70 : vector<8x1536xf32>
    %72 = arith.truncf %71 : vector<8x1536xf32> to vector<8x1536xbf16>
    %c0_39 = arith.constant 0 : index
    %c0_40 = arith.constant 0 : index
    %73 = vector.load %arg13[%c0_39, %c0_40] : memref<1536x64xbf16, #tpu.memory_space<vmem>>, vector<1536x64xbf16>
    %cst_41 = arith.constant dense<0.000000e+00> : vector<8x64xf32>
    %74 = tpu.matmul %72, %73, %cst_41 {dimension_numbers = #tpu.dot_dimension_numbers<[1], [0], [0], [1], [0, 0, 1, 1], [], []>} : vector<8x1536xbf16>, vector<1536x64xbf16>, vector<8x64xf32> -> vector<8x64xf32>
    %c0_42 = arith.constant 0 : index
    %c0_43 = arith.constant 0 : index
    %75 = vector.load %arg14[%c0_42, %c0_43] : memref<1x64xf32, #tpu.memory_space<vmem>>, vector<1x64xf32>
    %76 = vector.broadcast %75 : vector<1x64xf32> to vector<8x64xf32>
    %77 = arith.addf %74, %76 : vector<8x64xf32>
    %78 = arith.negf %77 : vector<8x64xf32>
    %79 = math.exp %78 : vector<8x64xf32>
    %cst_44 = arith.constant 1.000000e+00 : f32
    %80 = vector.broadcast %cst_44 : f32 to vector<8x64xf32>
    %81 = arith.addf %80, %79 : vector<8x64xf32>
    %82 = arith.divf %80, %81 : vector<8x64xf32>
    %c0_45 = arith.constant 0 : index
    %c0_46 = arith.constant 0 : index
    %83 = vector.load %arg15[%c0_45, %c0_46] : memref<8x64xf32, #tpu.memory_space<vmem>>, vector<8x64xf32>
    tpu.vector_store %arg15[%c0_45, %c0_46], %82 {strides = array<i32>} : memref<8x64xf32, #tpu.memory_space<vmem>>, vector<8x64xf32>,
    return
  }
  func.func @transform_0(%arg0: i32) -> (i32, i32) {
    %c0_i32 = arith.constant 0 : i32
    %c0_i32_0 = arith.constant 0 : i32
    %c0_i32_1 = arith.constant 0 : i32
    return %c0_i32, %c0_i32_0 : i32, i32
  }
  func.func @transform_1(%arg0: i32) -> (i32, i32) {
    %c0_i32 = arith.constant 0 : i32
    %c0_i32_0 = arith.constant 0 : i32
    %c0_i32_1 = arith.constant 0 : i32
    return %c0_i32, %c0_i32_0 : i32, i32
  }
  func.func @transform_2(%arg0: i32) -> (i32, i32) {
    %c0_i32 = arith.constant 0 : i32
    %c0_i32_0 = arith.constant 0 : i32
    %c0_i32_1 = arith.constant 0 : i32
    return %c0_i32, %c0_i32_0 : i32, i32
  }
  func.func @transform_3(%arg0: i32) -> (i32, i32) {
    %c0_i32 = arith.constant 0 : i32
    %c0_i32_0 = arith.constant 0 : i32
    %c0_i32_1 = arith.constant 0 : i32
    return %c0_i32, %c0_i32_0 : i32, i32
  }
  func.func @transform_4(%arg0: i32) -> (i32, i32) {
    %c0_i32 = arith.constant 0 : i32
    %c0_i32_0 = arith.constant 0 : i32
    %c0_i32_1 = arith.constant 0 : i32
    return %c0_i32, %c0_i32_0 : i32, i32
  }
  func.func @transform_5(%arg0: i32) -> (i32, i32) {
    %c0_i32 = arith.constant 0 : i32
    %c0_i32_0 = arith.constant 0 : i32
    %c0_i32_1 = arith.constant 0 : i32
    return %c0_i32, %c0_i32_0 : i32, i32
  }
  func.func @transform_6(%arg0: i32) -> (i32, i32) {
    %c0_i32 = arith.constant 0 : i32
    %c0_i32_0 = arith.constant 0 : i32
    %c0_i32_1 = arith.constant 0 : i32
    return %c0_i32, %c0_i32_0 : i32, i32
  }
  func.func @transform_7(%arg0: i32) -> (i32, i32) {
    %c0_i32 = arith.constant 0 : i32
    %c0_i32_0 = arith.constant 0 : i32
    %c0_i32_1 = arith.constant 0 : i32
    return %c0_i32, %c0_i32_0 : i32, i32
  }
  func.func @transform_8(%arg0: i32) -> (i32, i32) {
    %c0_i32 = arith.constant 0 : i32
    %c0_i32_0 = arith.constant 0 : i32
    %c0_i32_1 = arith.constant 0 : i32
    return %c0_i32, %c0_i32_0 : i32, i32
  }
  func.func @transform_9(%arg0: i32) -> (i32, i32) {
    %c0_i32 = arith.constant 0 : i32
    %c0_i32_0 = arith.constant 0 : i32
    %c0_i32_1 = arith.constant 0 : i32
    return %c0_i32, %c0_i32_0 : i32, i32
  }
  func.func @transform_10(%arg0: i32) -> (i32, i32) {
    %c0_i32 = arith.constant 0 : i32
    %c0_i32_0 = arith.constant 0 : i32
    %c0_i32_1 = arith.constant 0 : i32
    return %c0_i32, %c0_i32_0 : i32, i32
  }
  func.func @transform_11(%arg0: i32) -> (i32, i32) {
    %c0_i32 = arith.constant 0 : i32
    %c0_i32_0 = arith.constant 0 : i32
    %c0_i32_1 = arith.constant 0 : i32
    return %c0_i32, %c0_i32_0 : i32, i32
  }
  func.func @transform_12(%arg0: i32) -> (i32, i32) {
    %c0_i32 = arith.constant 0 : i32
    %c0_i32_0 = arith.constant 0 : i32
    %c0_i32_1 = arith.constant 0 : i32
    return %c0_i32, %c0_i32_0 : i32, i32
  }
  func.func @transform_13(%arg0: i32) -> (i32, i32) {
    %c0_i32 = arith.constant 0 : i32
    %c0_i32_0 = arith.constant 0 : i32
    %c0_i32_1 = arith.constant 0 : i32
    return %c0_i32, %c0_i32_0 : i32, i32
  }
  func.func @transform_14(%arg0: i32) -> (i32, i32) {
    %c0_i32 = arith.constant 0 : i32
    %c0_i32_0 = arith.constant 0 : i32
    %c0_i32_1 = arith.constant 0 : i32
    return %c0_i32, %c0_i32_0 : i32, i32
  }
  func.func @transform_15(%arg0: i32) -> (i32, i32) {
    %c0_i32 = arith.constant 0 : i32
    %c0_i32_0 = arith.constant 0 : i32
    %c0_i32_1 = arith.constant 0 : i32
    return %c0_i32, %c0_i32_0 : i32, i32
  }
  func.func @transform_16(%arg0: i32) -> (i32, i32) {
    %c0_i32 = arith.constant 0 : i32
    %c0_i32_0 = arith.constant 0 : i32
    %c0_i32_1 = arith.constant 0 : i32
    return %c0_i32, %c0_i32_0 : i32, i32
  }
}

</mosaic_0001>

<llo_original>
// kernel: tpu_custom_call.1
$region0: #{tpu_custom_call.1}
  #allocation0 [shape = 'u32[]', space=smem, size = 0x4, offset = 0x4, fixed_abs, tag = 'smem constant byte address 0x4 - core index']
  #allocation1 [shape = 'u32[144,128]{1,0:T(1,128)}', space=vmem, size = 0x12000, scoped, tag = 'internal scratch']
  %s0 = inlined_call_operand.hbm [shape: f32[8,64], index: 0, kind: input, shape index: {}]
  %s1 = inlined_call_operand.hbm [shape: f32[8,8], index: 1, kind: input, shape index: {}]
  %s2 = inlined_call_operand.hbm [shape: bf16[64,1536], index: 2, kind: input, shape index: {}]
  %s3 = inlined_call_operand.hbm [shape: f32[1,1536], index: 3, kind: input, shape index: {}]
  %s4 = inlined_call_operand.hbm [shape: bf16[1536,512], index: 4, kind: input, shape index: {}]
  %s5 = inlined_call_operand.hbm [shape: f32[1,512], index: 5, kind: input, shape index: {}]
  %s6 = inlined_call_operand.hbm [shape: bf16[512,256], index: 6, kind: input, shape index: {}]
  %s7 = inlined_call_operand.hbm [shape: f32[1,256], index: 7, kind: input, shape index: {}]
  %s8 = inlined_call_operand.hbm [shape: bf16[8,512], index: 8, kind: input, shape index: {}]
  %s9 = inlined_call_operand.hbm [shape: f32[1,512], index: 9, kind: input, shape index: {}]
  %s10 = inlined_call_operand.hbm [shape: bf16[512,1536], index: 10, kind: input, shape index: {}]
  %s11 = inlined_call_operand.hbm [shape: f32[1,1536], index: 11, kind: input, shape index: {}]
  %s12 = inlined_call_operand.vmem [shape: bf16[1536,64], index: 12, kind: input, shape index: {}]
  %s13 = inlined_call_operand.hbm [shape: f32[1,64], index: 13, kind: input, shape index: {}]
  %s14 = inlined_call_operand.hbm [shape: f32[8,64], index: 14, kind: output, shape index: {0}]
  %s15 = inlined_call_operand.hbm [shape: f32[8,8], index: 15, kind: output, shape index: {1}]
  %s16 = inlined_call_operand.hbm [shape: f32[8,8], index: 16, kind: output, shape index: {2}]
  %17 = xla_tuple %s14, %s15, %s16
  %s18 = sld [smem:[#allocation0]]
  $region134: #{tpu_custom_call.1} parent=0
    _
  %s20 = ssub.s32 1, %s18
  %s21 = scalar_select 0, %s20, %s18
  $region1: #{tpu_custom_call.1} parent=0
    #allocation2 [shape = 'u8[4096]{0}', space=vmem, size = 0x1000, scoped, tag = 'input window, operand 0, single buffered']
    #allocation3 [shape = 's32[1]{0}', space=sflag, size = 0x4, scoped, tag = 'scoped memory for tpu_custom_call.1']
    #allocation4 [shape = 's32[1]{0}', space=sflag, size = 0x4, scoped, tag = 'scoped memory for tpu_custom_call.1']
    #allocation5 [shape = 'u8[4096]{0}', space=vmem, size = 0x1000, scoped, tag = 'input window, operand 1, single buffered']
    #allocation6 [shape = 's32[1]{0}', space=sflag, size = 0x4, scoped, tag = 'scoped memory for tpu_custom_call.1']
    #allocation7 [shape = 'u8[196608]{0}', space=vmem, size = 0x30000, scoped, tag = 'input window, operand 2, single buffered']
    #allocation8 [shape = 'u8[6144]{0}', space=vmem, size = 0x1800, scoped, tag = 'input window, operand 3, single buffered']
    #allocation9 [shape = 's32[1]{0}', space=sflag, size = 0x4, scoped, tag = 'scoped memory for tpu_custom_call.1']
    #allocation10 [shape = 'u8[1572864]{0}', space=vmem, size = 0x180000, scoped, tag = 'input window, operand 4, single buffered']
    #allocation11 [shape = 'u8[2048]{0}', space=vmem, size = 0x800, scoped, tag = 'input window, operand 5, single buffered']
    #allocation12 [shape = 's32[1]{0}', space=sflag, size = 0x4, scoped, tag = 'scoped memory for tpu_custom_call.1']
    #allocation13 [shape = 'u8[262144]{0}', space=vmem, size = 0x40000, scoped, tag = 'input window, operand 6, single buffered']
    #allocation14 [shape = 'u8[1024]{0}', space=vmem, size = 0x400, scoped, tag = 'input window, operand 7, single buffered']
    #allocation15 [shape = 's32[1]{0}', space=sflag, size = 0x4, scoped, tag = 'scoped memory for tpu_custom_call.1']
    #allocation16 [shape = 'u8[8192]{0}', space=vmem, size = 0x2000, scoped, tag = 'input window, operand 8, single buffered']
    #allocation17 [shape = 'u8[2048]{0}', space=vmem, size = 0x800, scoped, tag = 'input window, operand 9, single buffered']
    #allocation18 [shape = 's32[1]{0}', space=sflag, size = 0x4, scoped, tag = 'scoped memory for tpu_custom_call.1']
    #allocation19 [shape = 'u8[1572864]{0}', space=vmem, size = 0x180000, scoped, tag = 'input window, operand 10, single buffered']
    #allocation20 [shape = 'u8[6144]{0}', space=vmem, size = 0x1800, scoped, tag = 'input window, operand 11, single buffered']
    #allocation21 [shape = 's32[1]{0}', space=sflag, size = 0x4, scoped, tag = 'scoped memory for tpu_custom_call.1']
    #allocation22 [shape = 'u8[512]{0}', space=vmem, size = 0x400, scoped, tag = 'input window, operand 13, single buffered']
    #allocation23 [shape = 'u8[4096]{0}', space=vmem, size = 0x1000, scoped, tag = 'output window, operand 0, single buffered']
    #allocation24 [shape = 'u8[4096]{0}', space=vmem, size = 0x1000, scoped, tag = 'output window, operand 1, single buffered']
    #allocation25 [shape = 's32[1]{0}', space=sflag, size = 0x4, scoped, tag = 'scoped memory for tpu_custom_call.1']
    #allocation26 [shape = 'u8[4096]{0}', space=vmem, size = 0x1000, scoped, tag = 'output window, operand 2, single buffered']
    %22 = vsyncpa [#allocation3], 0
    %23 = vsyncpa [#allocation6], 0
    %24 = vsyncpa [#allocation9], 0
    %25 = vsyncpa [#allocation12], 0
    %26 = vsyncpa [#allocation15], 0
    %27 = vsyncpa [#allocation18], 0
    %28 = vsyncpa [#allocation21], 0
    %29 = vsyncpa [#allocation4], 0
    %30 = vsyncpa [#allocation25], 0
    // Predicated region
    $region2: #{tpu_custom_call.1} parent=1 // pred_check
      _
    $region3: #{tpu_custom_call.1} parent=1 // pred_check_branch
      %32 = sbr.rel (0) target = $region5
    $region4: #{tpu_custom_call.1} parent=1 // pred_region
      %s34 = ssub.s32 128, 128
      %35 = vsyncadd [#allocation3], %s34
      %s37 = sshll.u32 [#allocation2], 4
      %s38 = int_to_ptr.vmem [resolvable:$true] %s37
      %40 = dma.hbm_to_vmem [thread:$0]  %s0, 128, %s38, [#allocation3]
    $region5: #{tpu_custom_call.1} parent=1 // pred_fallthru
      _
    // Predicated region
    $region6: #{tpu_custom_call.1} parent=1 // pred_check
      _
    $region7: #{tpu_custom_call.1} parent=1 // pred_check_branch
      %42 = sbr.rel (0) target = $region9
    $region8: #{tpu_custom_call.1} parent=1 // pred_region
      %s44 = ssub.s32 128, 128
      %45 = vsyncadd [#allocation6], %s44
      %s47 = sshll.u32 [#allocation5], 4
      %s48 = int_to_ptr.vmem [resolvable:$true] %s47
      %50 = dma.hbm_to_vmem [thread:$0]  %s1, 128, %s48, [#allocation6]
    $region9: #{tpu_custom_call.1} parent=1 // pred_fallthru
      _
    // Predicated region
    $region10: #{tpu_custom_call.1} parent=1 // pred_check
      _
    $region11: #{tpu_custom_call.1} parent=1 // pred_check_branch
      %52 = sbr.rel (0) target = $region13
    $region12: #{tpu_custom_call.1} parent=1 // pred_region
      %s54 = ssub.s32 6144, 6144
      %55 = vsyncadd [#allocation6], %s54
      %s56 = sshll.u32 [#allocation7], 4
      %s57 = int_to_ptr.vmem [resolvable:$true] %s56
      %62 = dma.hbm_to_vmem [thread:$0]  %s2, 6144, %s57, [#allocation6], 768, 768, 48
    $region13: #{tpu_custom_call.1} parent=1 // pred_fallthru
      _
    // Predicated region
    $region14: #{tpu_custom_call.1} parent=1 // pred_check
      _
    $region15: #{tpu_custom_call.1} parent=1 // pred_check_branch
      %64 = sbr.rel (0) target = $region17
    $region16: #{tpu_custom_call.1} parent=1 // pred_region
      %s66 = ssub.s32 192, 192
      %67 = vsyncadd [#allocation9], %s66
      %s69 = sshll.u32 [#allocation8], 4
      %s70 = int_to_ptr.vmem [resolvable:$true] %s69
      %72 = dma.hbm_to_vmem [thread:$0]  %s3, 192, %s70, [#allocation9]
    $region17: #{tpu_custom_call.1} parent=1 // pred_fallthru
      _
    // Predicated region
    $region18: #{tpu_custom_call.1} parent=1 // pred_check
      _
    $region19: #{tpu_custom_call.1} parent=1 // pred_check_branch
      %74 = sbr.rel (0) target = $region21
    $region20: #{tpu_custom_call.1} parent=1 // pred_region
      %s76 = ssub.s32 49152, 49152
      %77 = vsyncadd [#allocation9], %s76
      %s78 = sshll.u32 [#allocation10], 4
      %s79 = int_to_ptr.vmem [resolvable:$true] %s78
      %84 = dma.hbm_to_vmem [thread:$0]  %s4, 49152, %s79, [#allocation9], 256, 256, 16
    $region21: #{tpu_custom_call.1} parent=1 // pred_fallthru
      _
    // Predicated region
    $region22: #{tpu_custom_call.1} parent=1 // pred_check
      _
    $region23: #{tpu_custom_call.1} parent=1 // pred_check_branch
      %86 = sbr.rel (0) target = $region25
    $region24: #{tpu_custom_call.1} parent=1 // pred_region
      %s88 = ssub.s32 64, 64
      %89 = vsyncadd [#allocation12], %s88
      %s91 = sshll.u32 [#allocation11], 4
      %s92 = int_to_ptr.vmem [resolvable:$true] %s91
      %94 = dma.hbm_to_vmem [thread:$0]  %s5, 64, %s92, [#allocation12]
    $region25: #{tpu_custom_call.1} parent=1 // pred_fallthru
      _
    // Predicated region
    $region26: #{tpu_custom_call.1} parent=1 // pred_check
      _
    $region27: #{tpu_custom_call.1} parent=1 // pred_check_branch
      %96 = sbr.rel (0) target = $region29
    $region28: #{tpu_custom_call.1} parent=1 // pred_region
      %s98 = ssub.s32 8192, 8192
      %99 = vsyncadd [#allocation12], %s98
      %s100 = sshll.u32 [#allocation13], 4
      %s101 = int_to_ptr.vmem [resolvable:$true] %s100
      %106 = dma.hbm_to_vmem [thread:$0]  %s6, 8192, %s101, [#allocation12], 128, 128, 8
    $region29: #{tpu_custom_call.1} parent=1 // pred_fallthru
      _
    // Predicated region
    $region30: #{tpu_custom_call.1} parent=1 // pred_check
      _
    $region31: #{tpu_custom_call.1} parent=1 // pred_check_branch
      %108 = sbr.rel (0) target = $region33
    $region32: #{tpu_custom_call.1} parent=1 // pred_region
      %s110 = ssub.s32 32, 32
      %111 = vsyncadd [#allocation15], %s110
      %s113 = sshll.u32 [#allocation14], 4
      %s114 = int_to_ptr.vmem [resolvable:$true] %s113
      %116 = dma.hbm_to_vmem [thread:$0]  %s7, 32, %s114, [#allocation15]
    $region33: #{tpu_custom_call.1} parent=1 // pred_fallthru
      _
    // Predicated region
    $region34: #{tpu_custom_call.1} parent=1 // pred_check
      _
    $region35: #{tpu_custom_call.1} parent=1 // pred_check_branch
      %118 = sbr.rel (0) target = $region37
    $region36: #{tpu_custom_call.1} parent=1 // pred_region
      %s120 = ssub.s32 256, 256
      %121 = vsyncadd [#allocation15], %s120
      %s123 = sshll.u32 [#allocation16], 4
      %s124 = int_to_ptr.vmem [resolvable:$true] %s123
      %126 = dma.hbm_to_vmem [thread:$0]  %s8, 256, %s124, [#allocation15]
    $region37: #{tpu_custom_call.1} parent=1 // pred_fallthru
      _
    // Predicated region
    $region38: #{tpu_custom_call.1} parent=1 // pred_check
      _
    $region39: #{tpu_custom_call.1} parent=1 // pred_check_branch
      %128 = sbr.rel (0) target = $region41
    $region40: #{tpu_custom_call.1} parent=1 // pred_region
      %s130 = ssub.s32 64, 64
      %131 = vsyncadd [#allocation18], %s130
      %s133 = sshll.u32 [#allocation17], 4
      %s134 = int_to_ptr.vmem [resolvable:$true] %s133
      %136 = dma.hbm_to_vmem [thread:$0]  %s9, 64, %s134, [#allocation18]
    $region41: #{tpu_custom_call.1} parent=1 // pred_fallthru
      _
    // Predicated region
    $region42: #{tpu_custom_call.1} parent=1 // pred_check
      _
    $region43: #{tpu_custom_call.1} parent=1 // pred_check_branch
      %138 = sbr.rel (0) target = $region45
    $region44: #{tpu_custom_call.1} parent=1 // pred_region
      %s140 = ssub.s32 49152, 49152
      %141 = vsyncadd [#allocation18], %s140
      %s142 = sshll.u32 [#allocation19], 4
      %s143 = int_to_ptr.vmem [resolvable:$true] %s142
      %148 = dma.hbm_to_vmem [thread:$0]  %s10, 49152, %s143, [#allocation18], 768, 768, 48
    $region45: #{tpu_custom_call.1} parent=1 // pred_fallthru
      _
    // Predicated region
    $region46: #{tpu_custom_call.1} parent=1 // pred_check
      _
    $region47: #{tpu_custom_call.1} parent=1 // pred_check_branch
      %150 = sbr.rel (0) target = $region49
    $region48: #{tpu_custom_call.1} parent=1 // pred_region
      %s152 = ssub.s32 192, 192
      %153 = vsyncadd [#allocation21], %s152
      %s155 = sshll.u32 [#allocation20], 4
      %s156 = int_to_ptr.vmem [resolvable:$true] %s155
      %158 = dma.hbm_to_vmem [thread:$0]  %s11, 192, %s156, [#allocation21]
    $region49: #{tpu_custom_call.1} parent=1 // pred_fallthru
      _
    // Predicated region
    $region50: #{tpu_custom_call.1} parent=1 // pred_check
      _
    $region51: #{tpu_custom_call.1} parent=1 // pred_check_branch
      %160 = sbr.rel (0) target = $region53
    $region52: #{tpu_custom_call.1} parent=1 // pred_region
      _
    $region53: #{tpu_custom_call.1} parent=1 // pred_fallthru
      _
    // Predicated region
    $region54: #{tpu_custom_call.1} parent=1 // pred_check
      _
    $region55: #{tpu_custom_call.1} parent=1 // pred_check_branch
      %162 = sbr.rel (0) target = $region57
    $region56: #{tpu_custom_call.1} parent=1 // pred_region
      %s164 = ssub.s32 16, 16
      %165 = vsyncadd [#allocation21], %s164
      %s167 = sshll.u32 [#allocation22], 4
      %s168 = int_to_ptr.vmem [resolvable:$true] %s167
      %170 = dma.hbm_to_vmem [thread:$0]  %s13, 16, %s168, [#allocation21]
    $region57: #{tpu_custom_call.1} parent=1 // pred_fallthru
      _
    // Predicated region
    $region58: #{tpu_custom_call.1} parent=1 // pred_check
      _
    $region59: #{tpu_custom_call.1} parent=1 // pred_check_branch
      %172 = sbr.rel (0) target = $region61
    $region60: #{tpu_custom_call.1} parent=1 // pred_region
      %173 = dma.done [#allocation3], 128
    $region61: #{tpu_custom_call.1} parent=1 // pred_fallthru
      _
    // Predicated region
    $region62: #{tpu_custom_call.1} parent=1 // pred_check
      _
    $region63: #{tpu_custom_call.1} parent=1 // pred_check_branch
      %175 = sbr.rel (0) target = $region65
    $region64: #{tpu_custom_call.1} parent=1 // pred_region
      %176 = dma.done [#allocation6], 128
    $region65: #{tpu_custom_call.1} parent=1 // pred_fallthru
      _
    // Predicated region
    $region66: #{tpu_custom_call.1} parent=1 // pred_check
      _
    $region67: #{tpu_custom_call.1} parent=1 // pred_check_branch
      %178 = sbr.rel (0) target = $region69
    $region68: #{tpu_custom_call.1} parent=1 // pred_region
      %179 = dma.done [#allocation6], 6144
    $region69: #{tpu_custom_call.1} parent=1 // pred_fallthru
      _
    // Predicated region
    $region70: #{tpu_custom_call.1} parent=1 // pred_check
      _
    $region71: #{tpu_custom_call.1} parent=1 // pred_check_branch
      %181 = sbr.rel (0) target = $region73
    $region72: #{tpu_custom_call.1} parent=1 // pred_region
      %182 = dma.done [#allocation9], 192
    $region73: #{tpu_custom_call.1} parent=1 // pred_fallthru
      _
    // Predicated region
    $region74: #{tpu_custom_call.1} parent=1 // pred_check
      _
    $region75: #{tpu_custom_call.1} parent=1 // pred_check_branch
      %184 = sbr.rel (0) target = $region77
    $region76: #{tpu_custom_call.1} parent=1 // pred_region
      %185 = dma.done [#allocation9], 49152
    $region77: #{tpu_custom_call.1} parent=1 // pred_fallthru
      _
    // Predicated region
    $region78: #{tpu_custom_call.1} parent=1 // pred_check
      _
    $region79: #{tpu_custom_call.1} parent=1 // pred_check_branch
      %187 = sbr.rel (0) target = $region81
    $region80: #{tpu_custom_call.1} parent=1 // pred_region
      %188 = dma.done [#allocation12], 64
    $region81: #{tpu_custom_call.1} parent=1 // pred_fallthru
      _
    // Predicated region
    $region82: #{tpu_custom_call.1} parent=1 // pred_check
      _
    $region83: #{tpu_custom_call.1} parent=1 // pred_check_branch
      %190 = sbr.rel (0) target = $region85
    $region84: #{tpu_custom_call.1} parent=1 // pred_region
      %191 = dma.done [#allocation12], 8192
    $region85: #{tpu_custom_call.1} parent=1 // pred_fallthru
      _
    // Predicated region
    $region86: #{tpu_custom_call.1} parent=1 // pred_check
      _
    $region87: #{tpu_custom_call.1} parent=1 // pred_check_branch
      %193 = sbr.rel (0) target = $region89
    $region88: #{tpu_custom_call.1} parent=1 // pred_region
      %194 = dma.done [#allocation15], 32
    $region89: #{tpu_custom_call.1} parent=1 // pred_fallthru
      _
    // Predicated region
    $region90: #{tpu_custom_call.1} parent=1 // pred_check
      _
    $region91: #{tpu_custom_call.1} parent=1 // pred_check_branch
      %196 = sbr.rel (0) target = $region93
    $region92: #{tpu_custom_call.1} parent=1 // pred_region
      %197 = dma.done [#allocation15], 256
    $region93: #{tpu_custom_call.1} parent=1 // pred_fallthru
      _
    // Predicated region
    $region94: #{tpu_custom_call.1} parent=1 // pred_check
      _
    $region95: #{tpu_custom_call.1} parent=1 // pred_check_branch
      %199 = sbr.rel (0) target = $region97
    $region96: #{tpu_custom_call.1} parent=1 // pred_region
      %200 = dma.done [#allocation18], 64
    $region97: #{tpu_custom_call.1} parent=1 // pred_fallthru
      _
    // Predicated region
    $region98: #{tpu_custom_call.1} parent=1 // pred_check
      _
    $region99: #{tpu_custom_call.1} parent=1 // pred_check_branch
      %202 = sbr.rel (0) target = $region101
    $region100: #{tpu_custom_call.1} parent=1 // pred_region
      %203 = dma.done [#allocation18], 49152
    $region101: #{tpu_custom_call.1} parent=1 // pred_fallthru
      _
    // Predicated region
    $region102: #{tpu_custom_call.1} parent=1 // pred_check
      _
    $region103: #{tpu_custom_call.1} parent=1 // pred_check_branch
      %205 = sbr.rel (0) target = $region105
    $region104: #{tpu_custom_call.1} parent=1 // pred_region
      %206 = dma.done [#allocation21], 192
    $region105: #{tpu_custom_call.1} parent=1 // pred_fallthru
      _
    // Predicated region
    $region106: #{tpu_custom_call.1} parent=1 // pred_check
      _
    $region107: #{tpu_custom_call.1} parent=1 // pred_check_branch
      %208 = sbr.rel (0) target = $region109
    $region108: #{tpu_custom_call.1} parent=1 // pred_region
      %209 = dma.done [#allocation21], 16
    $region109: #{tpu_custom_call.1} parent=1 // pred_fallthru
      _
    %v211 = vld [vmem:[#allocation2] sm:$0xff]
    %v212 = vpack.c.bf16 %v211, %v211
    %v213 = vld [vmem:[#allocation7] sm:$0xff]
    %v214 = vld [vmem:[#allocation7 + $0x8] sm:$0xff]
    %v215 = vld [vmem:[#allocation7 + $0x10] sm:$0xff]
    %v216 = vld [vmem:[#allocation7 + $0x18] sm:$0xff]
    %v217 = vld [vmem:[#allocation7 + $0x20] sm:$0xff]
    %v218 = vld [vmem:[#allocation7 + $0x28] sm:$0xff]
    %v219 = vld [vmem:[#allocation7 + $0x30] sm:$0xff]
    %v220 = vld [vmem:[#allocation7 + $0x38] sm:$0xff]
    %v221 = vld [vmem:[#allocation7 + $0x40] sm:$0xff]
    %v222 = vld [vmem:[#allocation7 + $0x48] sm:$0xff]
    %v223 = vld [vmem:[#allocation7 + $0x50] sm:$0xff]
    %v224 = vld [vmem:[#allocation7 + $0x58] sm:$0xff]
    %v225 = vld [vmem:[#allocation7 + $0x60] sm:$0xff]
    %v226 = vld [vmem:[#allocation7 + $0x68] sm:$0xff]
    %v227 = vld [vmem:[#allocation7 + $0x70] sm:$0xff]
    %v228 = vld [vmem:[#allocation7 + $0x78] sm:$0xff]
    %v229 = vld [vmem:[#allocation7 + $0x80] sm:$0xff]
    %v230 = vld [vmem:[#allocation7 + $0x88] sm:$0xff]
    %v231 = vld [vmem:[#allocation7 + $0x90] sm:$0xff]
    %v232 = vld [vmem:[#allocation7 + $0x98] sm:$0xff]
    %v233 = vld [vmem:[#allocation7 + $0xa0] sm:$0xff]
    %v234 = vld [vmem:[#allocation7 + $0xa8] sm:$0xff]
    %v235 = vld [vmem:[#allocation7 + $0xb0] sm:$0xff]
    %v236 = vld [vmem:[#allocation7 + $0xb8] sm:$0xff]
    %v237 = vld [vmem:[#allocation7 + $0xc0] sm:$0xff]
    %v238 = vld [vmem:[#allocation7 + $0xc8] sm:$0xff]
    %v239 = vld [vmem:[#allocation7 + $0xd0] sm:$0xff]
    %v240 = vld [vmem:[#allocation7 + $0xd8] sm:$0xff]
    %v241 = vld [vmem:[#allocation7 + $0xe0] sm:$0xff]
    %v242 = vld [vmem:[#allocation7 + $0xe8] sm:$0xff]
    %v243 = vld [vmem:[#allocation7 + $0xf0] sm:$0xff]
    %v244 = vld [vmem:[#allocation7 + $0xf8] sm:$0xff]
    %v245 = vld [vmem:[#allocation7 + $0x100] sm:$0xff]
    %v246 = vld [vmem:[#allocation7 + $0x108] sm:$0xff]
    %v247 = vld [vmem:[#allocation7 + $0x110] sm:$0xff]
    %v248 = vld [vmem:[#allocation7 + $0x118] sm:$0xff]
    %v249 = vld [vmem:[#allocation7 + $0x120] sm:$0xff]
    %v250 = vld [vmem:[#allocation7 + $0x128] sm:$0xff]
    %v251 = vld [vmem:[#allocation7 + $0x130] sm:$0xff]
    %v252 = vld [vmem:[#allocation7 + $0x138] sm:$0xff]
    %v253 = vld [vmem:[#allocation7 + $0x140] sm:$0xff]
    %v254 = vld [vmem:[#allocation7 + $0x148] sm:$0xff]
    %v255 = vld [vmem:[#allocation7 + $0x150] sm:$0xff]
    %v256 = vld [vmem:[#allocation7 + $0x158] sm:$0xff]
    %v257 = vld [vmem:[#allocation7 + $0x160] sm:$0xff]
    %v258 = vld [vmem:[#allocation7 + $0x168] sm:$0xff]
    %v259 = vld [vmem:[#allocation7 + $0x170] sm:$0xff]
    %v260 = vld [vmem:[#allocation7 + $0x178] sm:$0xff]
    %v261 = vld [vmem:[#allocation8] sm:$0xff]
    %v262 = vld [vmem:[#allocation8 + $0x8] sm:$0xf]
    %v265 = vlaneseq
    %v266 = vshrl.u32 %v265, 7
    %v267 = vsub.s32 0, %v266
    %v268 = vrot.slane %v261, %v267
    %v269 = vlaneseq
    %v270 = vshrl.u32 %v269, 7
    %v271 = vsub.s32 1, %v270
    %v272 = vrot.slane %v261, %v271
    %v273 = vlaneseq
    %v274 = vshrl.u32 %v273, 7
    %v275 = vsub.s32 2, %v274
    %v276 = vrot.slane %v261, %v275
    %v277 = vlaneseq
    %v278 = vshrl.u32 %v277, 7
    %v279 = vsub.s32 3, %v278
    %v280 = vrot.slane %v261, %v279
    %v281 = vlaneseq
    %v282 = vshrl.u32 %v281, 7
    %v283 = vsub.s32 4, %v282
    %v284 = vrot.slane %v261, %v283
    %v285 = vlaneseq
    %v286 = vshrl.u32 %v285, 7
    %v287 = vsub.s32 5, %v286
    %v288 = vrot.slane %v261, %v287
    %v289 = vlaneseq
    %v290 = vshrl.u32 %v289, 7
    %v291 = vsub.s32 6, %v290
    %v292 = vrot.slane %v261, %v291
    %v293 = vlaneseq
    %v294 = vshrl.u32 %v293, 7
    %v295 = vsub.s32 7, %v294
    %v296 = vrot.slane %v261, %v295
    %v297 = vlaneseq
    %v298 = vshrl.u32 %v297, 7
    %v299 = vsub.s32 0, %v298
    %v300 = vrot.slane %v262, %v299
    %v301 = vlaneseq
    %v302 = vshrl.u32 %v301, 7
    %v303 = vsub.s32 1, %v302
    %v304 = vrot.slane %v262, %v303
    %v305 = vlaneseq
    %v306 = vshrl.u32 %v305, 7
    %v307 = vsub.s32 2, %v306
    %v308 = vrot.slane %v262, %v307
    %v309 = vlaneseq
    %v310 = vshrl.u32 %v309, 7
    %v311 = vsub.s32 3, %v310
    %v312 = vrot.slane %v262, %v311
    %v373 = vunpack.c.l.b16 %v213
    %v374 = vunpack.c.h.b16 %v213
    %v375 = vunpack.c.l.b16 %v214
    %v376 = vunpack.c.h.b16 %v214
    %v377 = vunpack.c.l.b16 %v215
    %v378 = vunpack.c.h.b16 %v215
    %v379 = vunpack.c.l.b16 %v216
    %v380 = vunpack.c.h.b16 %v216
    %v381 = vunpack.c.l.b16 %v217
    %v382 = vunpack.c.h.b16 %v217
    %v383 = vunpack.c.l.b16 %v218
    %v384 = vunpack.c.h.b16 %v218
    %v385 = vunpack.c.l.b16 %v219
    %v386 = vunpack.c.h.b16 %v219
    %v387 = vunpack.c.l.b16 %v220
    %v388 = vunpack.c.h.b16 %v220
    %v389 = vunpack.c.l.b16 %v221
    %v390 = vunpack.c.h.b16 %v221
    %v391 = vunpack.c.l.b16 %v222
    %v392 = vunpack.c.h.b16 %v222
    %v393 = vunpack.c.l.b16 %v223
    %v394 = vunpack.c.h.b16 %v223
    %v395 = vunpack.c.l.b16 %v224
    %v396 = vunpack.c.h.b16 %v224
    %v397 = vunpack.c.l.b16 %v225
    %v398 = vunpack.c.h.b16 %v225
    %v399 = vunpack.c.l.b16 %v226
    %v400 = vunpack.c.h.b16 %v226
    %v401 = vunpack.c.l.b16 %v227
    %v402 = vunpack.c.h.b16 %v227
    %v403 = vunpack.c.l.b16 %v228
    %v404 = vunpack.c.h.b16 %v228
    %v405 = vunpack.c.l.b16 %v229
    %v406 = vunpack.c.h.b16 %v229
    %v407 = vunpack.c.l.b16 %v230
    %v408 = vunpack.c.h.b16 %v230
    %v409 = vunpack.c.l.b16 %v231
    %v410 = vunpack.c.h.b16 %v231
    %v411 = vunpack.c.l.b16 %v232
    %v412 = vunpack.c.h.b16 %v232
    %v413 = vunpack.c.l.b16 %v233
    %v414 = vunpack.c.h.b16 %v233
    %v415 = vunpack.c.l.b16 %v234
    %v416 = vunpack.c.h.b16 %v234
    %v417 = vunpack.c.l.b16 %v235
    %v418 = vunpack.c.h.b16 %v235
    %v419 = vunpack.c.l.b16 %v236
    %v420 = vunpack.c.h.b16 %v236
    %v421 = vunpack.c.l.b16 %v237
    %v422 = vunpack.c.h.b16 %v237
    %v423 = vunpack.c.l.b16 %v238
    %v424 = vunpack.c.h.b16 %v238
    %v425 = vunpack.c.l.b16 %v239
    %v426 = vunpack.c.h.b16 %v239
    %v427 = vunpack.c.l.b16 %v240
    %v428 = vunpack.c.h.b16 %v240
    %v429 = vunpack.c.l.b16 %v241
    %v430 = vunpack.c.h.b16 %v241
    %v431 = vunpack.c.l.b16 %v242
    %v432 = vunpack.c.h.b16 %v242
    %v433 = vunpack.c.l.b16 %v243
    %v434 = vunpack.c.h.b16 %v243
    %v435 = vunpack.c.l.b16 %v244
    %v436 = vunpack.c.h.b16 %v244
    %v437 = vunpack.c.l.b16 %v245
    %v438 = vunpack.c.h.b16 %v245
    %v439 = vunpack.c.l.b16 %v246
    %v440 = vunpack.c.h.b16 %v246
    %v441 = vunpack.c.l.b16 %v247
    %v442 = vunpack.c.h.b16 %v247
    %v443 = vunpack.c.l.b16 %v248
    %v444 = vunpack.c.h.b16 %v248
    %v445 = vunpack.c.l.b16 %v249
    %v446 = vunpack.c.h.b16 %v249
    %v447 = vunpack.c.l.b16 %v250
    %v448 = vunpack.c.h.b16 %v250
    %v449 = vunpack.c.l.b16 %v251
    %v450 = vunpack.c.h.b16 %v251
    %v451 = vunpack.c.l.b16 %v252
    %v452 = vunpack.c.h.b16 %v252
    %v453 = vunpack.c.l.b16 %v253
    %v454 = vunpack.c.h.b16 %v253
    %v455 = vunpack.c.l.b16 %v254
    %v456 = vunpack.c.h.b16 %v254
    %v457 = vunpack.c.l.b16 %v255
    %v458 = vunpack.c.h.b16 %v255
    %v459 = vunpack.c.l.b16 %v256
    %v460 = vunpack.c.h.b16 %v256
    %v461 = vunpack.c.l.b16 %v257
    %v462 = vunpack.c.h.b16 %v257
    %v463 = vunpack.c.l.b16 %v258
    %v464 = vunpack.c.h.b16 %v258
    %v465 = vunpack.c.l.b16 %v259
    %v466 = vunpack.c.h.b16 %v259
    %v467 = vunpack.c.l.b16 %v260
    %v468 = vunpack.c.h.b16 %v260
    %v469 = vpack.c.b16 %v385, %v373
    %v470 = vpack.c.b16 %v386, %v374
    %v471 = vpack.c.b16 %v387, %v375
    %v472 = vpack.c.b16 %v388, %v376
    %v473 = vpack.c.b16 %v389, %v377
    %v474 = vpack.c.b16 %v390, %v378
    %v475 = vpack.c.b16 %v391, %v379
    %v476 = vpack.c.b16 %v392, %v380
    %v477 = vpack.c.b16 %v393, %v381
    %v478 = vpack.c.b16 %v394, %v382
    %v479 = vpack.c.b16 %v395, %v383
    %v480 = vpack.c.b16 %v396, %v384
    %v481 = vpack.c.b16 %v409, %v397
    %v482 = vpack.c.b16 %v410, %v398
    %v483 = vpack.c.b16 %v411, %v399
    %v484 = vpack.c.b16 %v412, %v400
    %v485 = vpack.c.b16 %v413, %v401
    %v486 = vpack.c.b16 %v414, %v402
    %v487 = vpack.c.b16 %v415, %v403
    %v488 = vpack.c.b16 %v416, %v404
    %v489 = vpack.c.b16 %v417, %v405
    %v490 = vpack.c.b16 %v418, %v406
    %v491 = vpack.c.b16 %v419, %v407
    %v492 = vpack.c.b16 %v420, %v408
    %v493 = vpack.c.b16 %v433, %v421
    %v494 = vpack.c.b16 %v434, %v422
    %v495 = vpack.c.b16 %v435, %v423
    %v496 = vpack.c.b16 %v436, %v424
    %v497 = vpack.c.b16 %v437, %v425
    %v498 = vpack.c.b16 %v438, %v426
    %v499 = vpack.c.b16 %v439, %v427
    %v500 = vpack.c.b16 %v440, %v428
    %v501 = vpack.c.b16 %v441, %v429
    %v502 = vpack.c.b16 %v442, %v430
    %v503 = vpack.c.b16 %v443, %v431
    %v504 = vpack.c.b16 %v444, %v432
    %v505 = vpack.c.b16 %v457, %v445
    %v506 = vpack.c.b16 %v458, %v446
    %v507 = vpack.c.b16 %v459, %v447
    %v508 = vpack.c.b16 %v460, %v448
    %v509 = vpack.c.b16 %v461, %v449
    %v510 = vpack.c.b16 %v462, %v450
    %v511 = vpack.c.b16 %v463, %v451
    %v512 = vpack.c.b16 %v464, %v452
    %v513 = vpack.c.b16 %v465, %v453
    %v514 = vpack.c.b16 %v466, %v454
    %v515 = vpack.c.b16 %v467, %v455
    %v516 = vpack.c.b16 %v468, %v456
    %vm565 = vcmask 523264
    %v567 = vsel %vm565, %v212, 0
    %569 = vmatprep.subr.bf16.mxu0 %v470
    %570 = vmatpush1.bf16.msra.mxu0 %v469
    %571 = vmatprep.subr.bf16.mxu0 %v482
    %572 = vmatpush1.bf16.msra.mxu0 %v481
    %573 = vmatprep.subr.bf16.mxu0 %v494
    %574 = vmatpush1.bf16.msra.mxu0 %v493
    %575 = vmatprep.subr.bf16.mxu0 %v506
    %576 = vmatpush1.bf16.msra.mxu0 %v505
    %577 = vmatprep.subr.bf16.mxu0 0
    %578 = vmatpush1.bf16.msra.mxu0 0
    %579 = vmatprep.subr.bf16.mxu0 0
    %580 = vmatpush1.bf16.msra.mxu0 0
    %581 = vmatprep.subr.bf16.mxu0 0
    %582 = vmatpush1.bf16.msra.mxu0 0
    %583 = vmatprep.subr.bf16.mxu0 0
    %584 = vmatpush1.bf16.msra.mxu0 0
    %585 = vmatprep.subr.bf16.mxu0 0
    %586 = vmatpush1.bf16.msra.mxu0 0
    %587 = vmatprep.subr.bf16.mxu0 0
    %588 = vmatpush1.bf16.msra.mxu0 0
    %589 = vmatprep.subr.bf16.mxu0 0
    %590 = vmatpush1.bf16.msra.mxu0 0
    %591 = vmatprep.subr.bf16.mxu0 0
    %592 = vmatpush1.bf16.msra.mxu0 0
    %593 = vmatprep.subr.bf16.mxu0 0
    %594 = vmatpush1.bf16.msra.mxu0 0
    %595 = vmatprep.subr.bf16.mxu0 0
    %596 = vmatpush1.bf16.msra.mxu0 0
    %597 = vmatprep.subr.bf16.mxu0 0
    %598 = vmatpush1.bf16.msra.mxu0 0
    %599 = vmatprep.subr.bf16.mxu0 0
    %600 = vmatpush1.bf16.msra.mxu0 0
    %601 = vmatprep.mubr.bf16.mxu0 0
    %602 = vmatmul.mubr.bf16.gmra.mrb[0].mxu0 %v567
    %v603 = vpop.f32.mrb[0].mxu0
    %v604 = vadd.f32 %v268, %v603
    %v605 = vpop.f32.mrb[0].mxu0
    %v606 = vadd.f32 %v272, %v605
    %v607 = vpop.f32.mrb[0].mxu0
    %v608 = vpop.f32.mrb[0].mxu0
    %609 = vdwg.mxu0
    %610 = vmatprep.subr.bf16.mxu0 %v472
    %611 = vmatpush1.bf16.msra.mxu0 %v471
    %612 = vmatprep.subr.bf16.mxu0 %v484
    %613 = vmatpush1.bf16.msra.mxu0 %v483
    %614 = vmatprep.subr.bf16.mxu0 %v496
    %615 = vmatpush1.bf16.msra.mxu0 %v495
    %616 = vmatprep.subr.bf16.mxu0 %v508
    %617 = vmatpush1.bf16.msra.mxu0 %v507
    %618 = vmatprep.subr.bf16.mxu0 0
    %619 = vmatpush1.bf16.msra.mxu0 0
    %620 = vmatprep.subr.bf16.mxu0 0
    %621 = vmatpush1.bf16.msra.mxu0 0
    %622 = vmatprep.subr.bf16.mxu0 0
    %623 = vmatpush1.bf16.msra.mxu0 0
    %624 = vmatprep.subr.bf16.mxu0 0
    %625 = vmatpush1.bf16.msra.mxu0 0
    %626 = vmatprep.subr.bf16.mxu0 0
    %627 = vmatpush1.bf16.msra.mxu0 0
    %628 = vmatprep.subr.bf16.mxu0 0
    %629 = vmatpush1.bf16.msra.mxu0 0
    %630 = vmatprep.subr.bf16.mxu0 0
    %631 = vmatpush1.bf16.msra.mxu0 0
    %632 = vmatprep.subr.bf16.mxu0 0
    %633 = vmatpush1.bf16.msra.mxu0 0
    %634 = vmatprep.subr.bf16.mxu0 0
    %635 = vmatpush1.bf16.msra.mxu0 0
    %636 = vmatprep.subr.bf16.mxu0 0
    %637 = vmatpush1.bf16.msra.mxu0 0
    %638 = vmatprep.subr.bf16.mxu0 0
    %639 = vmatpush1.bf16.msra.mxu0 0
    %640 = vmatprep.subr.bf16.mxu0 0
    %641 = vmatpush1.bf16.msra.mxu0 0
    %642 = vmatprep.mubr.bf16.mxu0 0
    %643 = vmatmul.mubr.bf16.gmra.mrb[0].mxu0 %v567
    %v644 = vpop.f32.mrb[0].mxu0
    %v645 = vadd.f32 %v276, %v644
    %v646 = vpop.f32.mrb[0].mxu0
    %v647 = vadd.f32 %v280, %v646
    %v648 = vpop.f32.mrb[0].mxu0
    %v649 = vpop.f32.mrb[0].mxu0
    %650 = vdwg.mxu0
    %651 = vmatprep.subr.bf16.mxu0 %v474
    %652 = vmatpush1.bf16.msra.mxu0 %v473
    %653 = vmatprep.subr.bf16.mxu0 %v486
    %654 = vmatpush1.bf16.msra.mxu0 %v485
    %655 = vmatprep.subr.bf16.mxu0 %v498
    %656 = vmatpush1.bf16.msra.mxu0 %v497
    %657 = vmatprep.subr.bf16.mxu0 %v510
    %658 = vmatpush1.bf16.msra.mxu0 %v509
    %659 = vmatprep.subr.bf16.mxu0 0
    %660 = vmatpush1.bf16.msra.mxu0 0
    %661 = vmatprep.subr.bf16.mxu0 0
    %662 = vmatpush1.bf16.msra.mxu0 0
    %663 = vmatprep.subr.bf16.mxu0 0
    %664 = vmatpush1.bf16.msra.mxu0 0
    %665 = vmatprep.subr.bf16.mxu0 0
    %666 = vmatpush1.bf16.msra.mxu0 0
    %667 = vmatprep.subr.bf16.mxu0 0
    %668 = vmatpush1.bf16.msra.mxu0 0
    %669 = vmatprep.subr.bf16.mxu0 0
    %670 = vmatpush1.bf16.msra.mxu0 0
    %671 = vmatprep.subr.bf16.mxu0 0
    %672 = vmatpush1.bf16.msra.mxu0 0
    %673 = vmatprep.subr.bf16.mxu0 0
    %674 = vmatpush1.bf16.msra.mxu0 0
    %675 = vmatprep.subr.bf16.mxu0 0
    %676 = vmatpush1.bf16.msra.mxu0 0
    %677 = vmatprep.subr.bf16.mxu0 0
    %678 = vmatpush1.bf16.msra.mxu0 0
    %679 = vmatprep.subr.bf16.mxu0 0
    %680 = vmatpush1.bf16.msra.mxu0 0
    %681 = vmatprep.subr.bf16.mxu0 0
    %682 = vmatpush1.bf16.msra.mxu0 0
    %683 = vmatprep.mubr.bf16.mxu0 0
    %684 = vmatmul.mubr.bf16.gmra.mrb[0].mxu0 %v567
    %v685 = vpop.f32.mrb[0].mxu0
    %v686 = vadd.f32 %v284, %v685
    %v687 = vpop.f32.mrb[0].mxu0
    %v688 = vadd.f32 %v288, %v687
    %v689 = vpop.f32.mrb[0].mxu0
    %v690 = vpop.f32.mrb[0].mxu0
    %691 = vdwg.mxu0
    %692 = vmatprep.subr.bf16.mxu0 %v476
    %693 = vmatpush1.bf16.msra.mxu0 %v475
    %694 = vmatprep.subr.bf16.mxu0 %v488
    %695 = vmatpush1.bf16.msra.mxu0 %v487
    %696 = vmatprep.subr.bf16.mxu0 %v500
    %697 = vmatpush1.bf16.msra.mxu0 %v499
    %698 = vmatprep.subr.bf16.mxu0 %v512
    %699 = vmatpush1.bf16.msra.mxu0 %v511
    %700 = vmatprep.subr.bf16.mxu0 0
    %701 = vmatpush1.bf16.msra.mxu0 0
    %702 = vmatprep.subr.bf16.mxu0 0
    %703 = vmatpush1.bf16.msra.mxu0 0
    %704 = vmatprep.subr.bf16.mxu0 0
    %705 = vmatpush1.bf16.msra.mxu0 0
    %706 = vmatprep.subr.bf16.mxu0 0
    %707 = vmatpush1.bf16.msra.mxu0 0
    %708 = vmatprep.subr.bf16.mxu0 0
    %709 = vmatpush1.bf16.msra.mxu0 0
    %710 = vmatprep.subr.bf16.mxu0 0
    %711 = vmatpush1.bf16.msra.mxu0 0
    %712 = vmatprep.subr.bf16.mxu0 0
    %713 = vmatpush1.bf16.msra.mxu0 0
    %714 = vmatprep.subr.bf16.mxu0 0
    %715 = vmatpush1.bf16.msra.mxu0 0
    %716 = vmatprep.subr.bf16.mxu0 0
    %717 = vmatpush1.bf16.msra.mxu0 0
    %718 = vmatprep.subr.bf16.mxu0 0
    %719 = vmatpush1.bf16.msra.mxu0 0
    %720 = vmatprep.subr.bf16.mxu0 0
    %721 = vmatpush1.bf16.msra.mxu0 0
    %722 = vmatprep.subr.bf16.mxu0 0
    %723 = vmatpush1.bf16.msra.mxu0 0
    %724 = vmatprep.mubr.bf16.mxu0 0
    %725 = vmatmul.mubr.bf16.gmra.mrb[0].mxu0 %v567
    %v726 = vpop.f32.mrb[0].mxu0
    %v727 = vadd.f32 %v292, %v726
    %v728 = vpop.f32.mrb[0].mxu0
    %v729 = vadd.f32 %v296, %v728
    %v730 = vpop.f32.mrb[0].mxu0
    %v731 = vpop.f32.mrb[0].mxu0
    %732 = vdwg.mxu0
    %733 = vmatprep.subr.bf16.mxu0 %v478
    %734 = vmatpush1.bf16.msra.mxu0 %v477
    %735 = vmatprep.subr.bf16.mxu0 %v490
    %736 = vmatpush1.bf16.msra.mxu0 %v489
    %737 = vmatprep.subr.bf16.mxu0 %v502
    %738 = vmatpush1.bf16.msra.mxu0 %v501
    %739 = vmatprep.subr.bf16.mxu0 %v514
    %740 = vmatpush1.bf16.msra.mxu0 %v513
    %741 = vmatprep.subr.bf16.mxu0 0
    %742 = vmatpush1.bf16.msra.mxu0 0
    %743 = vmatprep.subr.bf16.mxu0 0
    %744 = vmatpush1.bf16.msra.mxu0 0
    %745 = vmatprep.subr.bf16.mxu0 0
    %746 = vmatpush1.bf16.msra.mxu0 0
    %747 = vmatprep.subr.bf16.mxu0 0
    %748 = vmatpush1.bf16.msra.mxu0 0
    %749 = vmatprep.subr.bf16.mxu0 0
    %750 = vmatpush1.bf16.msra.mxu0 0
    %751 = vmatprep.subr.bf16.mxu0 0
    %752 = vmatpush1.bf16.msra.mxu0 0
    %753 = vmatprep.subr.bf16.mxu0 0
    %754 = vmatpush1.bf16.msra.mxu0 0
    %755 = vmatprep.subr.bf16.mxu0 0
    %756 = vmatpush1.bf16.msra.mxu0 0
    %757 = vmatprep.subr.bf16.mxu0 0
    %758 = vmatpush1.bf16.msra.mxu0 0
    %759 = vmatprep.subr.bf16.mxu0 0
    %760 = vmatpush1.bf16.msra.mxu0 0
    %761 = vmatprep.subr.bf16.mxu0 0
    %762 = vmatpush1.bf16.msra.mxu0 0
    %763 = vmatprep.subr.bf16.mxu0 0
    %764 = vmatpush1.bf16.msra.mxu0 0
    %765 = vmatprep.mubr.bf16.mxu0 0
    %766 = vmatmul.mubr.bf16.gmra.mrb[0].mxu0 %v567
    %v767 = vpop.f32.mrb[0].mxu0
    %v768 = vadd.f32 %v300, %v767
    %v769 = vpop.f32.mrb[0].mxu0
    %v770 = vadd.f32 %v304, %v769
    %v771 = vpop.f32.mrb[0].mxu0
    %v772 = vpop.f32.mrb[0].mxu0
    %773 = vdwg.mxu0
    %774 = vmatprep.subr.bf16.mxu0 %v480
    %775 = vmatpush1.bf16.msra.mxu0 %v479
    %776 = vmatprep.subr.bf16.mxu0 %v492
    %777 = vmatpush1.bf16.msra.mxu0 %v491
    %778 = vmatprep.subr.bf16.mxu0 %v504
    %779 = vmatpush1.bf16.msra.mxu0 %v503
    %780 = vmatprep.subr.bf16.mxu0 %v516
    %781 = vmatpush1.bf16.msra.mxu0 %v515
    %782 = vmatprep.subr.bf16.mxu0 0
    %783 = vmatpush1.bf16.msra.mxu0 0
    %784 = vmatprep.subr.bf16.mxu0 0
    %785 = vmatpush1.bf16.msra.mxu0 0
    %786 = vmatprep.subr.bf16.mxu0 0
    %787 = vmatpush1.bf16.msra.mxu0 0
    %788 = vmatprep.subr.bf16.mxu0 0
    %789 = vmatpush1.bf16.msra.mxu0 0
    %790 = vmatprep.subr.bf16.mxu0 0
    %791 = vmatpush1.bf16.msra.mxu0 0
    %792 = vmatprep.subr.bf16.mxu0 0
    %793 = vmatpush1.bf16.msra.mxu0 0
    %794 = vmatprep.subr.bf16.mxu0 0
    %795 = vmatpush1.bf16.msra.mxu0 0
    %796 = vmatprep.subr.bf16.mxu0 0
    %797 = vmatpush1.bf16.msra.mxu0 0
    %798 = vmatprep.subr.bf16.mxu0 0
    %799 = vmatpush1.bf16.msra.mxu0 0
    %800 = vmatprep.subr.bf16.mxu0 0
    %801 = vmatpush1.bf16.msra.mxu0 0
    %802 = vmatprep.subr.bf16.mxu0 0
    %803 = vmatpush1.bf16.msra.mxu0 0
    %804 = vmatprep.subr.bf16.mxu0 0
    %805 = vmatpush1.bf16.msra.mxu0 0
    %806 = vmatprep.mubr.bf16.mxu0 0
    %807 = vmatmul.mubr.bf16.gmra.mrb[0].mxu0 %v567
    %v808 = vpop.f32.mrb[0].mxu0
    %v809 = vadd.f32 %v308, %v808
    %v810 = vpop.f32.mrb[0].mxu0
    %v811 = vadd.f32 %v312, %v810
    %v812 = vpop.f32.mrb[0].mxu0
    %v813 = vpop.f32.mrb[0].mxu0
    %814 = vdwg.mxu0
    %v815 = vtanh.pop %v604
    %v816 = vtanh.pop %v606
    %v817 = vtanh.pop %v645
    %v818 = vtanh.pop %v647
    %v819 = vtanh.pop %v686
    %v820 = vtanh.pop %v688
    %v821 = vtanh.pop %v727
    %v822 = vtanh.pop %v729
    %v823 = vtanh.pop %v768
    %v824 = vtanh.pop %v770
    %v825 = vtanh.pop %v809
    %v826 = vtanh.pop %v811
    %v827 = vpack.c.bf16 %v815, %v815
    %v828 = vpack.c.bf16 %v816, %v816
    %v829 = vpack.c.bf16 %v817, %v817
    %v830 = vpack.c.bf16 %v818, %v818
    %v831 = vpack.c.bf16 %v819, %v819
    %v832 = vpack.c.bf16 %v820, %v820
    %v833 = vpack.c.bf16 %v821, %v821
    %v834 = vpack.c.bf16 %v822, %v822
    %v835 = vpack.c.bf16 %v823, %v823
    %v836 = vpack.c.bf16 %v824, %v824
    %v837 = vpack.c.bf16 %v825, %v825
    %v838 = vpack.c.bf16 %v826, %v826
    %v839 = vld [vmem:[#allocation10] sm:$0xff]
    %v840 = vld [vmem:[#allocation10 + $0x8] sm:$0xff]
    %v841 = vld [vmem:[#allocation10 + $0x10] sm:$0xff]
    %v842 = vld [vmem:[#allocation10 + $0x18] sm:$0xff]
    %v843 = vld [vmem:[#allocation10 + $0x20] sm:$0xff]
    %v844 = vld [vmem:[#allocation10 + $0x28] sm:$0xff]
    %v845 = vld [vmem:[#allocation10 + $0x30] sm:$0xff]
    %v846 = vld [vmem:[#allocation10 + $0x38] sm:$0xff]
    %v847 = vld [vmem:[#allocation10 + $0x40] sm:$0xff]
    %v848 = vld [vmem:[#allocation10 + $0x48] sm:$0xff]
    %v849 = vld [vmem:[#allocation10 + $0x50] sm:$0xff]
    %v850 = vld [vmem:[#allocation10 + $0x58] sm:$0xff]
    %v851 = vld [vmem:[#allocation10 + $0x60] sm:$0xff]
    %v852 = vld [vmem:[#allocation10 + $0x68] sm:$0xff]
    %v853 = vld [vmem:[#allocation10 + $0x70] sm:$0xff]
    %v854 = vld [vmem:[#allocation10 + $0x78] sm:$0xff]
    %v855 = vld [vmem:[#allocation10 + $0x80] sm:$0xff]
    %v856 = vld [vmem:[#allocation10 + $0x88] sm:$0xff]
    %v857 = vld [vmem:[#allocation10 + $0x90] sm:$0xff]
    %v858 = vld [vmem:[#allocation10 + $0x98] sm:$0xff]
    %v859 = vld [vmem:[#allocation10 + $0xa0] sm:$0xff]
    %v860 = vld [vmem:[#allocation10 + $0xa8] sm:$0xff]
    %v861 = vld [vmem:[#allocation10 + $0xb0] sm:$0xff]
    %v862 = vld [vmem:[#allocation10 + $0xb8] sm:$0xff]
    %v863 = vld [vmem:[#allocation10 + $0xc0] sm:$0xff]
    %v864 = vld [vmem:[#allocation10 + $0xc8] sm:$0xff]
    %v865 = vld [vmem:[#allocation10 + $0xd0] sm:$0xff]
    %v866 = vld [vmem:[#allocation10 + $0xd8] sm:$0xff]
    %v867 = vld [vmem:[#allocation10 + $0xe0] sm:$0xff]
    %v868 = vld [vmem:[#allocation10 + $0xe8] sm:$0xff]
    %v869 = vld [vmem:[#allocation10 + $0xf0] sm:$0xff]
    %v870 = vld [vmem:[#allocation10 + $0xf8] sm:$0xff]
    %v871 = vld [vmem:[#allocation10 + $0x100] sm:$0xff]
    %v872 = vld [vmem:[#allocation10 + $0x108] sm:$0xff]
    %v873 = vld [vmem:[#allocation10 + $0x110] sm:$0xff]
    %v874 = vld [vmem:[#allocation10 + $0x118] sm:$0xff]
    %v875 = vld [vmem:[#allocation10 + $0x120] sm:$0xff]
    %v876 = vld [vmem:[#allocation10 + $0x128] sm:$0xff]
    %v877 = vld [vmem:[#allocation10 + $0x130] sm:$0xff]
    %v878 = vld [vmem:[#allocation10 + $0x138] sm:$0xff]
    %v879 = vld [vmem:[#allocation10 + $0x140] sm:$0xff]
    %v880 = vld [vmem:[#allocation10 + $0x148] sm:$0xff]
    %v881 = vld [vmem:[#allocation10 + $0x150] sm:$0xff]
    %v882 = vld [vmem:[#allocation10 + $0x158] sm:$0xff]
    %v883 = vld [vmem:[#allocation10 + $0x160] sm:$0xff]
    %v884 = vld [vmem:[#allocation10 + $0x168] sm:$0xff]
    %v885 = vld [vmem:[#allocation10 + $0x170] sm:$0xff]
    %v886 = vld [vmem:[#allocation10 + $0x178] sm:$0xff]
    %v887 = vld [vmem:[#allocation10 + $0x180] sm:$0xff]
    %v888 = vld [vmem:[#allocation10 + $0x188] sm:$0xff]
    %v889 = vld [vmem:[#allocation10 + $0x190] sm:$0xff]
    %v890 = vld [vmem:[#allocation10 + $0x198] sm:$0xff]
    %v891 = vld [vmem:[#allocation10 + $0x1a0] sm:$0xff]
    %v892 = vld [vmem:[#allocation10 + $0x1a8] sm:$0xff]
    %v893 = vld [vmem:[#allocation10 + $0x1b0] sm:$0xff]
    %v894 = vld [vmem:[#allocation10 + $0x1b8] sm:$0xff]
    %v895 = vld [vmem:[#allocation10 + $0x1c0] sm:$0xff]
    %v896 = vld [vmem:[#allocation10 + $0x1c8] sm:$0xff]
    %v897 = vld [vmem:[#allocation10 + $0x1d0] sm:$0xff]
    %v898 = vld [vmem:[#allocation10 + $0x1d8] sm:$0xff]
    %v899 = vld [vmem:[#allocation10 + $0x1e0] sm:$0xff]
    %v900 = vld [vmem:[#allocation10 + $0x1e8] sm:$0xff]
    %v901 = vld [vmem:[#allocation10 + $0x1f0] sm:$0xff]
    %v902 = vld [vmem:[#allocation10 + $0x1f8] sm:$0xff]
    %v903 = vld [vmem:[#allocation10 + $0x200] sm:$0xff]
    %v904 = vld [vmem:[#allocation10 + $0x208] sm:$0xff]
    %v905 = vld [vmem:[#allocation10 + $0x210] sm:$0xff]
    %v906 = vld [vmem:[#allocation10 + $0x218] sm:$0xff]
    %v907 = vld [vmem:[#allocation10 + $0x220] sm:$0xff]
    %v908 = vld [vmem:[#allocation10 + $0x228] sm:$0xff]
    %v909 = vld [vmem:[#allocation10 + $0x230] sm:$0xff]
    %v910 = vld [vmem:[#allocation10 + $0x238] sm:$0xff]
    %v911 = vld [vmem:[#allocation10 + $0x240] sm:$0xff]
    %v912 = vld [vmem:[#allocation10 + $0x248] sm:$0xff]
    %v913 = vld [vmem:[#allocation10 + $0x250] sm:$0xff]
    %v914 = vld [vmem:[#allocation10 + $0x258] sm:$0xff]
    %v915 = vld [vmem:[#allocation10 + $0x260] sm:$0xff]
    %v916 = vld [vmem:[#allocation10 + $0x268] sm:$0xff]
    %v917 = vld [vmem:[#allocation10 + $0x270] sm:$0xff]
    %v918 = vld [vmem:[#allocation10 + $0x278] sm:$0xff]
    %v919 = vld [vmem:[#allocation10 + $0x280] sm:$0xff]
    %v920 = vld [vmem:[#allocation10 + $0x288] sm:$0xff]
    %v921 = vld [vmem:[#allocation10 + $0x290] sm:$0xff]
    %v922 = vld [vmem:[#allocation10 + $0x298] sm:$0xff]
    %v923 = vld [vmem:[#allocation10 + $0x2a0] sm:$0xff]
    %v924 = vld [vmem:[#allocation10 + $0x2a8] sm:$0xff]
    %v925 = vld [vmem:[#allocation10 + $0x2b0] sm:$0xff]
    %v926 = vld [vmem:[#allocation10 + $0x2b8] sm:$0xff]
    %v927 = vld [vmem:[#allocation10 + $0x2c0] sm:$0xff]
    %v928 = vld [vmem:[#allocation10 + $0x2c8] sm:$0xff]
    %v929 = vld [vmem:[#allocation10 + $0x2d0] sm:$0xff]
    %v930 = vld [vmem:[#allocation10 + $0x2d8] sm:$0xff]
    %v931 = vld [vmem:[#allocation10 + $0x2e0] sm:$0xff]
    %v932 = vld [vmem:[#allocation10 + $0x2e8] sm:$0xff]
    %v933 = vld [vmem:[#allocation10 + $0x2f0] sm:$0xff]
    %v934 = vld [vmem:[#allocation10 + $0x2f8] sm:$0xff]
    %v935 = vld [vmem:[#allocation10 + $0x300] sm:$0xff]
    %v936 = vld [vmem:[#allocation10 + $0x308] sm:$0xff]
    %v937 = vld [vmem:[#allocation10 + $0x310] sm:$0xff]
    %v938 = vld [vmem:[#allocation10 + $0x318] sm:$0xff]
    %v939 = vld [vmem:[#allocation10 + $0x320] sm:$0xff]
    %v940 = vld [vmem:[#allocation10 + $0x328] sm:$0xff]
    %v941 = vld [vmem:[#allocation10 + $0x330] sm:$0xff]
    %v942 = vld [vmem:[#allocation10 + $0x338] sm:$0xff]
    %v943 = vld [vmem:[#allocation10 + $0x340] sm:$0xff]
    %v944 = vld [vmem:[#allocation10 + $0x348] sm:$0xff]
    %v945 = vld [vmem:[#allocation10 + $0x350] sm:$0xff]
    %v946 = vld [vmem:[#allocation10 + $0x358] sm:$0xff]
    %v947 = vld [vmem:[#allocation10 + $0x360] sm:$0xff]
    %v948 = vld [vmem:[#allocation10 + $0x368] sm:$0xff]
    %v949 = vld [vmem:[#allocation10 + $0x370] sm:$0xff]
    %v950 = vld [vmem:[#allocation10 + $0x378] sm:$0xff]
    %v951 = vld [vmem:[#allocation10 + $0x380] sm:$0xff]
    %v952 = vld [vmem:[#allocation10 + $0x388] sm:$0xff]
    %v953 = vld [vmem:[#allocation10 + $0x390] sm:$0xff]
    %v954 = vld [vmem:[#allocation10 + $0x398] sm:$0xff]
    %v955 = vld [vmem:[#allocation10 + $0x3a0] sm:$0xff]
    %v956 = vld [vmem:[#allocation10 + $0x3a8] sm:$0xff]
    %v957 = vld [vmem:[#allocation10 + $0x3b0] sm:$0xff]
    %v958 = vld [vmem:[#allocation10 + $0x3b8] sm:$0xff]
    %v959 = vld [vmem:[#allocation10 + $0x3c0] sm:$0xff]
    %v960 = vld [vmem:[#allocation10 + $0x3c8] sm:$0xff]
    %v961 = vld [vmem:[#allocation10 + $0x3d0] sm:$0xff]
    %v962 = vld [vmem:[#allocation10 + $0x3d8] sm:$0xff]
    %v963 = vld [vmem:[#allocation10 + $0x3e0] sm:$0xff]
    %v964 = vld [vmem:[#allocation10 + $0x3e8] sm:$0xff]
    %v965 = vld [vmem:[#allocation10 + $0x3f0] sm:$0xff]
    %v966 = vld [vmem:[#allocation10 + $0x3f8] sm:$0xff]
    %v967 = vld [vmem:[#allocation10 + $0x400] sm:$0xff]
    %v968 = vld [vmem:[#allocation10 + $0x408] sm:$0xff]
    %v969 = vld [vmem:[#allocation10 + $0x410] sm:$0xff]
    %v970 = vld [vmem:[#allocation10 + $0x418] sm:$0xff]
    %v971 = vld [vmem:[#allocation10 + $0x420] sm:$0xff]
    %v972 = vld [vmem:[#allocation10 + $0x428] sm:$0xff]
    %v973 = vld [vmem:[#allocation10 + $0x430] sm:$0xff]
    %v974 = vld [vmem:[#allocation10 + $0x438] sm:$0xff]
    %v975 = vld [vmem:[#allocation10 + $0x440] sm:$0xff]
    %v976 = vld [vmem:[#allocation10 + $0x448] sm:$0xff]
    %v977 = vld [vmem:[#allocation10 + $0x450] sm:$0xff]
    %v978 = vld [vmem:[#allocation10 + $0x458] sm:$0xff]
    %v979 = vld [vmem:[#allocation10 + $0x460] sm:$0xff]
    %v980 = vld [vmem:[#allocation10 + $0x468] sm:$0xff]
    %v981 = vld [vmem:[#allocation10 + $0x470] sm:$0xff]
    %v982 = vld [vmem:[#allocation10 + $0x478] sm:$0xff]
    %v983 = vld [vmem:[#allocation10 + $0x480] sm:$0xff]
    %v984 = vld [vmem:[#allocation10 + $0x488] sm:$0xff]
    %v985 = vld [vmem:[#allocation10 + $0x490] sm:$0xff]
    %v986 = vld [vmem:[#allocation10 + $0x498] sm:$0xff]
    %v987 = vld [vmem:[#allocation10 + $0x4a0] sm:$0xff]
    %v988 = vld [vmem:[#allocation10 + $0x4a8] sm:$0xff]
    %v989 = vld [vmem:[#allocation10 + $0x4b0] sm:$0xff]
    %v990 = vld [vmem:[#allocation10 + $0x4b8] sm:$0xff]
    %v991 = vld [vmem:[#allocation10 + $0x4c0] sm:$0xff]
    %v992 = vld [vmem:[#allocation10 + $0x4c8] sm:$0xff]
    %v993 = vld [vmem:[#allocation10 + $0x4d0] sm:$0xff]
    %v994 = vld [vmem:[#allocation10 + $0x4d8] sm:$0xff]
    %v995 = vld [vmem:[#allocation10 + $0x4e0] sm:$0xff]
    %v996 = vld [vmem:[#allocation10 + $0x4e8] sm:$0xff]
    %v997 = vld [vmem:[#allocation10 + $0x4f0] sm:$0xff]
    %v998 = vld [vmem:[#allocation10 + $0x4f8] sm:$0xff]
    %v999 = vld [vmem:[#allocation10 + $0x500] sm:$0xff]
    %v1000 = vld [vmem:[#allocation10 + $0x508] sm:$0xff]
    %v1001 = vld [vmem:[#allocation10 + $0x510] sm:$0xff]
    %v1002 = vld [vmem:[#allocation10 + $0x518] sm:$0xff]
    %v1003 = vld [vmem:[#allocation10 + $0x520] sm:$0xff]
    %v1004 = vld [vmem:[#allocation10 + $0x528] sm:$0xff]
    %v1005 = vld [vmem:[#allocation10 + $0x530] sm:$0xff]
    %v1006 = vld [vmem:[#allocation10 + $0x538] sm:$0xff]
    %v1007 = vld [vmem:[#allocation10 + $0x540] sm:$0xff]
    %v1008 = vld [vmem:[#allocation10 + $0x548] sm:$0xff]
    %v1009 = vld [vmem:[#allocation10 + $0x550] sm:$0xff]
    %v1010 = vld [vmem:[#allocation10 + $0x558] sm:$0xff]
    %v1011 = vld [vmem:[#allocation10 + $0x560] sm:$0xff]
    %v1012 = vld [vmem:[#allocation10 + $0x568] sm:$0xff]
    %v1013 = vld [vmem:[#allocation10 + $0x570] sm:$0xff]
    %v1014 = vld [vmem:[#allocation10 + $0x578] sm:$0xff]
    %v1015 = vld [vmem:[#allocation10 + $0x580] sm:$0xff]
    %v1016 = vld [vmem:[#allocation10 + $0x588] sm:$0xff]
    %v1017 = vld [vmem:[#allocation10 + $0x590] sm:$0xff]
    %v1018 = vld [vmem:[#allocation10 + $0x598] sm:$0xff]
    %v1019 = vld [vmem:[#allocation10 + $0x5a0] sm:$0xff]
    %v1020 = vld [vmem:[#allocation10 + $0x5a8] sm:$0xff]
    %v1021 = vld [vmem:[#allocation10 + $0x5b0] sm:$0xff]
    %v1022 = vld [vmem:[#allocation10 + $0x5b8] sm:$0xff]
    %v1023 = vld [vmem:[#allocation10 + $0x5c0] sm:$0xff]
    %v1024 = vld [vmem:[#allocation10 + $0x5c8] sm:$0xff]
    %v1025 = vld [vmem:[#allocation10 + $0x5d0] sm:$0xff]
    %v1026 = vld [vmem:[#allocation10 + $0x5d8] sm:$0xff]
    %v1027 = vld [vmem:[#allocation10 + $0x5e0] sm:$0xff]
    %v1028 = vld [vmem:[#allocation10 + $0x5e8] sm:$0xff]
    %v1029 = vld [vmem:[#allocation10 + $0x5f0] sm:$0xff]
    %v1030 = vld [vmem:[#allocation10 + $0x5f8] sm:$0xff]
    %v1031 = vld [vmem:[#allocation10 + $0x600] sm:$0xff]
    %v1032 = vld [vmem:[#allocation10 + $0x608] sm:$0xff]
    %v1033 = vld [vmem:[#allocation10 + $0x610] sm:$0xff]
    %v1034 = vld [vmem:[#allocation10 + $0x618] sm:$0xff]
    %v1035 = vld [vmem:[#allocation10 + $0x620] sm:$0xff]
    %v1036 = vld [vmem:[#allocation10 + $0x628] sm:$0xff]
    %v1037 = vld [vmem:[#allocation10 + $0x630] sm:$0xff]
    %v1038 = vld [vmem:[#allocation10 + $0x638] sm:$0xff]
    %v1039 = vld [vmem:[#allocation10 + $0x640] sm:$0xff]
    %v1040 = vld [vmem:[#allocation10 + $0x648] sm:$0xff]
    %v1041 = vld [vmem:[#allocation10 + $0x650] sm:$0xff]
    %v1042 = vld [vmem:[#allocation10 + $0x658] sm:$0xff]
    %v1043 = vld [vmem:[#allocation10 + $0x660] sm:$0xff]
    %v1044 = vld [vmem:[#allocation10 + $0x668] sm:$0xff]
    %v1045 = vld [vmem:[#allocation10 + $0x670] sm:$0xff]
    %v1046 = vld [vmem:[#allocation10 + $0x678] sm:$0xff]
    %v1047 = vld [vmem:[#allocation10 + $0x680] sm:$0xff]
    %v1048 = vld [vmem:[#allocation10 + $0x688] sm:$0xff]
    %v1049 = vld [vmem:[#allocation10 + $0x690] sm:$0xff]
    %v1050 = vld [vmem:[#allocation10 + $0x698] sm:$0xff]
    %v1051 = vld [vmem:[#allocation10 + $0x6a0] sm:$0xff]
    %v1052 = vld [vmem:[#allocation10 + $0x6a8] sm:$0xff]
    %v1053 = vld [vmem:[#allocation10 + $0x6b0] sm:$0xff]
    %v1054 = vld [vmem:[#allocation10 + $0x6b8] sm:$0xff]
    %v1055 = vld [vmem:[#allocation10 + $0x6c0] sm:$0xff]
    %v1056 = vld [vmem:[#allocation10 + $0x6c8] sm:$0xff]
    %v1057 = vld [vmem:[#allocation10 + $0x6d0] sm:$0xff]
    %v1058 = vld [vmem:[#allocation10 + $0x6d8] sm:$0xff]
    %v1059 = vld [vmem:[#allocation10 + $0x6e0] sm:$0xff]
    %v1060 = vld [vmem:[#allocation10 + $0x6e8] sm:$0xff]
    %v1061 = vld [vmem:[#allocation10 + $0x6f0] sm:$0xff]
    %v1062 = vld [vmem:[#allocation10 + $0x6f8] sm:$0xff]
    %v1063 = vld [vmem:[#allocation10 + $0x700] sm:$0xff]
    %v1064 = vld [vmem:[#allocation10 + $0x708] sm:$0xff]
    %v1065 = vld [vmem:[#allocation10 + $0x710] sm:$0xff]
    %v1066 = vld [vmem:[#allocation10 + $0x718] sm:$0xff]
    %v1067 = vld [vmem:[#allocation10 + $0x720] sm:$0xff]
    %v1068 = vld [vmem:[#allocation10 + $0x728] sm:$0xff]
    %v1069 = vld [vmem:[#allocation10 + $0x730] sm:$0xff]
    %v1070 = vld [vmem:[#allocation10 + $0x738] sm:$0xff]
    %v1071 = vld [vmem:[#allocation10 + $0x740] sm:$0xff]
    %v1072 = vld [vmem:[#allocation10 + $0x748] sm:$0xff]
    %v1073 = vld [vmem:[#allocation10 + $0x750] sm:$0xff]
    %v1074 = vld [vmem:[#allocation10 + $0x758] sm:$0xff]
    %v1075 = vld [vmem:[#allocation10 + $0x760] sm:$0xff]
    %v1076 = vld [vmem:[#allocation10 + $0x768] sm:$0xff]
    %v1077 = vld [vmem:[#allocation10 + $0x770] sm:$0xff]
    %v1078 = vld [vmem:[#allocation10 + $0x778] sm:$0xff]
    %v1079 = vld [vmem:[#allocation10 + $0x780] sm:$0xff]
    %v1080 = vld [vmem:[#allocation10 + $0x788] sm:$0xff]
    %v1081 = vld [vmem:[#allocation10 + $0x790] sm:$0xff]
    %v1082 = vld [vmem:[#allocation10 + $0x798] sm:$0xff]
    %v1083 = vld [vmem:[#allocation10 + $0x7a0] sm:$0xff]
    %v1084 = vld [vmem:[#allocation10 + $0x7a8] sm:$0xff]
    %v1085 = vld [vmem:[#allocation10 + $0x7b0] sm:$0xff]
    %v1086 = vld [vmem:[#allocation10 + $0x7b8] sm:$0xff]
    %v1087 = vld [vmem:[#allocation10 + $0x7c0] sm:$0xff]
    %v1088 = vld [vmem:[#allocation10 + $0x7c8] sm:$0xff]
    %v1089 = vld [vmem:[#allocation10 + $0x7d0] sm:$0xff]
    %v1090 = vld [vmem:[#allocation10 + $0x7d8] sm:$0xff]
    %v1091 = vld [vmem:[#allocation10 + $0x7e0] sm:$0xff]
    %v1092 = vld [vmem:[#allocation10 + $0x7e8] sm:$0xff]
    %v1093 = vld [vmem:[#allocation10 + $0x7f0] sm:$0xff]
    %v1094 = vld [vmem:[#allocation10 + $0x7f8] sm:$0xff]
    %v1095 = vld [vmem:[#allocation10 + $0x800] sm:$0xff]
    %v1096 = vld [vmem:[#allocation10 + $0x808] sm:$0xff]
    %v1097 = vld [vmem:[#allocation10 + $0x810] sm:$0xff]
    %v1098 = vld [vmem:[#allocation10 + $0x818] sm:$0xff]
    %v1099 = vld [vmem:[#allocation10 + $0x820] sm:$0xff]
    %v1100 = vld [vmem:[#allocation10 + $0x828] sm:$0xff]
    %v1101 = vld [vmem:[#allocation10 + $0x830] sm:$0xff]
    %v1102 = vld [vmem:[#allocation10 + $0x838] sm:$0xff]
    %v1103 = vld [vmem:[#allocation10 + $0x840] sm:$0xff]
    %v1104 = vld [vmem:[#allocation10 + $0x848] sm:$0xff]
    %v1105 = vld [vmem:[#allocation10 + $0x850] sm:$0xff]
    %v1106 = vld [vmem:[#allocation10 + $0x858] sm:$0xff]
    %v1107 = vld [vmem:[#allocation10 + $0x860] sm:$0xff]
    %v1108 = vld [vmem:[#allocation10 + $0x868] sm:$0xff]
    %v1109 = vld [vmem:[#allocation10 + $0x870] sm:$0xff]
    %v1110 = vld [vmem:[#allocation10 + $0x878] sm:$0xff]
    %v1111 = vld [vmem:[#allocation10 + $0x880] sm:$0xff]
    %v1112 = vld [vmem:[#allocation10 + $0x888] sm:$0xff]
    %v1113 = vld [vmem:[#allocation10 + $0x890] sm:$0xff]
    %v1114 = vld [vmem:[#allocation10 + $0x898] sm:$0xff]
    %v1115 = vld [vmem:[#allocation10 + $0x8a0] sm:$0xff]
    %v1116 = vld [vmem:[#allocation10 + $0x8a8] sm:$0xff]
    %v1117 = vld [vmem:[#allocation10 + $0x8b0] sm:$0xff]
    %v1118 = vld [vmem:[#allocation10 + $0x8b8] sm:$0xff]
    %v1119 = vld [vmem:[#allocation10 + $0x8c0] sm:$0xff]
    %v1120 = vld [vmem:[#allocation10 + $0x8c8] sm:$0xff]
    %v1121 = vld [vmem:[#allocation10 + $0x8d0] sm:$0xff]
    %v1122 = vld [vmem:[#allocation10 + $0x8d8] sm:$0xff]
    %v1123 = vld [vmem:[#allocation10 + $0x8e0] sm:$0xff]
    %v1124 = vld [vmem:[#allocation10 + $0x8e8] sm:$0xff]
    %v1125 = vld [vmem:[#allocation10 + $0x8f0] sm:$0xff]
    %v1126 = vld [vmem:[#allocation10 + $0x8f8] sm:$0xff]
    %v1127 = vld [vmem:[#allocation10 + $0x900] sm:$0xff]
    %v1128 = vld [vmem:[#allocation10 + $0x908] sm:$0xff]
    %v1129 = vld [vmem:[#allocation10 + $0x910] sm:$0xff]
    %v1130 = vld [vmem:[#allocation10 + $0x918] sm:$0xff]
    %v1131 = vld [vmem:[#allocation10 + $0x920] sm:$0xff]
    %v1132 = vld [vmem:[#allocation10 + $0x928] sm:$0xff]
    %v1133 = vld [vmem:[#allocation10 + $0x930] sm:$0xff]
    %v1134 = vld [vmem:[#allocation10 + $0x938] sm:$0xff]
    %v1135 = vld [vmem:[#allocation10 + $0x940] sm:$0xff]
    %v1136 = vld [vmem:[#allocation10 + $0x948] sm:$0xff]
    %v1137 = vld [vmem:[#allocation10 + $0x950] sm:$0xff]
    %v1138 = vld [vmem:[#allocation10 + $0x958] sm:$0xff]
    %v1139 = vld [vmem:[#allocation10 + $0x960] sm:$0xff]
    %v1140 = vld [vmem:[#allocation10 + $0x968] sm:$0xff]
    %v1141 = vld [vmem:[#allocation10 + $0x970] sm:$0xff]
    %v1142 = vld [vmem:[#allocation10 + $0x978] sm:$0xff]
    %v1143 = vld [vmem:[#allocation10 + $0x980] sm:$0xff]
    %v1144 = vld [vmem:[#allocation10 + $0x988] sm:$0xff]
    %v1145 = vld [vmem:[#allocation10 + $0x990] sm:$0xff]
    %v1146 = vld [vmem:[#allocation10 + $0x998] sm:$0xff]
    %v1147 = vld [vmem:[#allocation10 + $0x9a0] sm:$0xff]
    %v1148 = vld [vmem:[#allocation10 + $0x9a8] sm:$0xff]
    %v1149 = vld [vmem:[#allocation10 + $0x9b0] sm:$0xff]
    %v1150 = vld [vmem:[#allocation10 + $0x9b8] sm:$0xff]
    %v1151 = vld [vmem:[#allocation10 + $0x9c0] sm:$0xff]
    %v1152 = vld [vmem:[#allocation10 + $0x9c8] sm:$0xff]
    %v1153 = vld [vmem:[#allocation10 + $0x9d0] sm:$0xff]
    %v1154 = vld [vmem:[#allocation10 + $0x9d8] sm:$0xff]
    %v1155 = vld [vmem:[#allocation10 + $0x9e0] sm:$0xff]
    %v1156 = vld [vmem:[#allocation10 + $0x9e8] sm:$0xff]
    %v1157 = vld [vmem:[#allocation10 + $0x9f0] sm:$0xff]
    %v1158 = vld [vmem:[#allocation10 + $0x9f8] sm:$0xff]
    %v1159 = vld [vmem:[#allocation10 + $0xa00] sm:$0xff]
    %v1160 = vld [vmem:[#allocation10 + $0xa08] sm:$0xff]
    %v1161 = vld [vmem:[#allocation10 + $0xa10] sm:$0xff]
    %v1162 = vld [vmem:[#allocation10 + $0xa18] sm:$0xff]
    %v1163 = vld [vmem:[#allocation10 + $0xa20] sm:$0xff]
    %v1164 = vld [vmem:[#allocation10 + $0xa28] sm:$0xff]
    %v1165 = vld [vmem:[#allocation10 + $0xa30] sm:$0xff]
    %v1166 = vld [vmem:[#allocation10 + $0xa38] sm:$0xff]
    %v1167 = vld [vmem:[#allocation10 + $0xa40] sm:$0xff]
    %v1168 = vld [vmem:[#allocation10 + $0xa48] sm:$0xff]
    %v1169 = vld [vmem:[#allocation10 + $0xa50] sm:$0xff]
    %v1170 = vld [vmem:[#allocation10 + $0xa58] sm:$0xff]
    %v1171 = vld [vmem:[#allocation10 + $0xa60] sm:$0xff]
    %v1172 = vld [vmem:[#allocation10 + $0xa68] sm:$0xff]
    %v1173 = vld [vmem:[#allocation10 + $0xa70] sm:$0xff]
    %v1174 = vld [vmem:[#allocation10 + $0xa78] sm:$0xff]
    %v1175 = vld [vmem:[#allocation10 + $0xa80] sm:$0xff]
    %v1176 = vld [vmem:[#allocation10 + $0xa88] sm:$0xff]
    %v1177 = vld [vmem:[#allocation10 + $0xa90] sm:$0xff]
    %v1178 = vld [vmem:[#allocation10 + $0xa98] sm:$0xff]
    %v1179 = vld [vmem:[#allocation10 + $0xaa0] sm:$0xff]
    %v1180 = vld [vmem:[#allocation10 + $0xaa8] sm:$0xff]
    %v1181 = vld [vmem:[#allocation10 + $0xab0] sm:$0xff]
    %v1182 = vld [vmem:[#allocation10 + $0xab8] sm:$0xff]
    %v1183 = vld [vmem:[#allocation10 + $0xac0] sm:$0xff]
    %v1184 = vld [vmem:[#allocation10 + $0xac8] sm:$0xff]
    %v1185 = vld [vmem:[#allocation10 + $0xad0] sm:$0xff]
    %v1186 = vld [vmem:[#allocation10 + $0xad8] sm:$0xff]
    %v1187 = vld [vmem:[#allocation10 + $0xae0] sm:$0xff]
    %v1188 = vld [vmem:[#allocation10 + $0xae8] sm:$0xff]
    %v1189 = vld [vmem:[#allocation10 + $0xaf0] sm:$0xff]
    %v1190 = vld [vmem:[#allocation10 + $0xaf8] sm:$0xff]
    %v1191 = vld [vmem:[#allocation10 + $0xb00] sm:$0xff]
    %v1192 = vld [vmem:[#allocation10 + $0xb08] sm:$0xff]
    %v1193 = vld [vmem:[#allocation10 + $0xb10] sm:$0xff]
    %v1194 = vld [vmem:[#allocation10 + $0xb18] sm:$0xff]
    %v1195 = vld [vmem:[#allocation10 + $0xb20] sm:$0xff]
    %v1196 = vld [vmem:[#allocation10 + $0xb28] sm:$0xff]
    %v1197 = vld [vmem:[#allocation10 + $0xb30] sm:$0xff]
    %v1198 = vld [vmem:[#allocation10 + $0xb38] sm:$0xff]
    %v1199 = vld [vmem:[#allocation10 + $0xb40] sm:$0xff]
    %v1200 = vld [vmem:[#allocation10 + $0xb48] sm:$0xff]
    %v1201 = vld [vmem:[#allocation10 + $0xb50] sm:$0xff]
    %v1202 = vld [vmem:[#allocation10 + $0xb58] sm:$0xff]
    %v1203 = vld [vmem:[#allocation10 + $0xb60] sm:$0xff]
    %v1204 = vld [vmem:[#allocation10 + $0xb68] sm:$0xff]
    %v1205 = vld [vmem:[#allocation10 + $0xb70] sm:$0xff]
    %v1206 = vld [vmem:[#allocation10 + $0xb78] sm:$0xff]
    %v1207 = vld [vmem:[#allocation10 + $0xb80] sm:$0xff]
    %v1208 = vld [vmem:[#allocation10 + $0xb88] sm:$0xff]
    %v1209 = vld [vmem:[#allocation10 + $0xb90] sm:$0xff]
    %v1210 = vld [vmem:[#allocation10 + $0xb98] sm:$0xff]
    %v1211 = vld [vmem:[#allocation10 + $0xba0] sm:$0xff]
    %v1212 = vld [vmem:[#allocation10 + $0xba8] sm:$0xff]
    %v1213 = vld [vmem:[#allocation10 + $0xbb0] sm:$0xff]
    %v1214 = vld [vmem:[#allocation10 + $0xbb8] sm:$0xff]
    %v1215 = vld [vmem:[#allocation10 + $0xbc0] sm:$0xff]
    %v1216 = vld [vmem:[#allocation10 + $0xbc8] sm:$0xff]
    %v1217 = vld [vmem:[#allocation10 + $0xbd0] sm:$0xff]
    %v1218 = vld [vmem:[#allocation10 + $0xbd8] sm:$0xff]
    %v1219 = vld [vmem:[#allocation10 + $0xbe0] sm:$0xff]
    %v1220 = vld [vmem:[#allocation10 + $0xbe8] sm:$0xff]
    %v1221 = vld [vmem:[#allocation10 + $0xbf0] sm:$0xff]
    %v1222 = vld [vmem:[#allocation10 + $0xbf8] sm:$0xff]
    %v1223 = vld [vmem:[#allocation11] sm:$0xf]
    %v1225 = vlaneseq
    %v1226 = vshrl.u32 %v1225, 7
    %v1227 = vsub.s32 0, %v1226
    %v1228 = vrot.slane %v1223, %v1227
    %v1229 = vlaneseq
    %v1230 = vshrl.u32 %v1229, 7
    %v1231 = vsub.s32 1, %v1230
    %v1232 = vrot.slane %v1223, %v1231
    %v1233 = vlaneseq
    %v1234 = vshrl.u32 %v1233, 7
    %v1235 = vsub.s32 2, %v1234
    %v1236 = vrot.slane %v1223, %v1235
    %v1237 = vlaneseq
    %v1238 = vshrl.u32 %v1237, 7
    %v1239 = vsub.s32 3, %v1238
    %v1240 = vrot.slane %v1223, %v1239
    %v1629 = vunpack.c.l.b16 %v839
    %v1630 = vunpack.c.h.b16 %v839
    %v1631 = vunpack.c.l.b16 %v840
    %v1632 = vunpack.c.h.b16 %v840
    %v1633 = vunpack.c.l.b16 %v841
    %v1634 = vunpack.c.h.b16 %v841
    %v1635 = vunpack.c.l.b16 %v842
    %v1636 = vunpack.c.h.b16 %v842
    %v1637 = vunpack.c.l.b16 %v843
    %v1638 = vunpack.c.h.b16 %v843
    %v1639 = vunpack.c.l.b16 %v844
    %v1640 = vunpack.c.h.b16 %v844
    %v1641 = vunpack.c.l.b16 %v845
    %v1642 = vunpack.c.h.b16 %v845
    %v1643 = vunpack.c.l.b16 %v846
    %v1644 = vunpack.c.h.b16 %v846
    %v1645 = vunpack.c.l.b16 %v847
    %v1646 = vunpack.c.h.b16 %v847
    %v1647 = vunpack.c.l.b16 %v848
    %v1648 = vunpack.c.h.b16 %v848
    %v1649 = vunpack.c.l.b16 %v849
    %v1650 = vunpack.c.h.b16 %v849
    %v1651 = vunpack.c.l.b16 %v850
    %v1652 = vunpack.c.h.b16 %v850
    %v1653 = vunpack.c.l.b16 %v851
    %v1654 = vunpack.c.h.b16 %v851
    %v1655 = vunpack.c.l.b16 %v852
    %v1656 = vunpack.c.h.b16 %v852
    %v1657 = vunpack.c.l.b16 %v853
    %v1658 = vunpack.c.h.b16 %v853
    %v1659 = vunpack.c.l.b16 %v854
    %v1660 = vunpack.c.h.b16 %v854
    %v1661 = vunpack.c.l.b16 %v855
    %v1662 = vunpack.c.h.b16 %v855
    %v1663 = vunpack.c.l.b16 %v856
    %v1664 = vunpack.c.h.b16 %v856
    %v1665 = vunpack.c.l.b16 %v857
    %v1666 = vunpack.c.h.b16 %v857
    %v1667 = vunpack.c.l.b16 %v858
    %v1668 = vunpack.c.h.b16 %v858
    %v1669 = vunpack.c.l.b16 %v859
    %v1670 = vunpack.c.h.b16 %v859
    %v1671 = vunpack.c.l.b16 %v860
    %v1672 = vunpack.c.h.b16 %v860
    %v1673 = vunpack.c.l.b16 %v861
    %v1674 = vunpack.c.h.b16 %v861
    %v1675 = vunpack.c.l.b16 %v862
    %v1676 = vunpack.c.h.b16 %v862
    %v1677 = vunpack.c.l.b16 %v863
    %v1678 = vunpack.c.h.b16 %v863
    %v1679 = vunpack.c.l.b16 %v864
    %v1680 = vunpack.c.h.b16 %v864
    %v1681 = vunpack.c.l.b16 %v865
    %v1682 = vunpack.c.h.b16 %v865
    %v1683 = vunpack.c.l.b16 %v866
    %v1684 = vunpack.c.h.b16 %v866
    %v1685 = vunpack.c.l.b16 %v867
    %v1686 = vunpack.c.h.b16 %v867
    %v1687 = vunpack.c.l.b16 %v868
    %v1688 = vunpack.c.h.b16 %v868
    %v1689 = vunpack.c.l.b16 %v869
    %v1690 = vunpack.c.h.b16 %v869
    %v1691 = vunpack.c.l.b16 %v870
    %v1692 = vunpack.c.h.b16 %v870
    %v1693 = vunpack.c.l.b16 %v871
    %v1694 = vunpack.c.h.b16 %v871
    %v1695 = vunpack.c.l.b16 %v872
    %v1696 = vunpack.c.h.b16 %v872
    %v1697 = vunpack.c.l.b16 %v873
    %v1698 = vunpack.c.h.b16 %v873
    %v1699 = vunpack.c.l.b16 %v874
    %v1700 = vunpack.c.h.b16 %v874
    %v1701 = vunpack.c.l.b16 %v875
    %v1702 = vunpack.c.h.b16 %v875
    %v1703 = vunpack.c.l.b16 %v876
    %v1704 = vunpack.c.h.b16 %v876
    %v1705 = vunpack.c.l.b16 %v877
    %v1706 = vunpack.c.h.b16 %v877
    %v1707 = vunpack.c.l.b16 %v878
    %v1708 = vunpack.c.h.b16 %v878
    %v1709 = vunpack.c.l.b16 %v879
    %v1710 = vunpack.c.h.b16 %v879
    %v1711 = vunpack.c.l.b16 %v880
    %v1712 = vunpack.c.h.b16 %v880
    %v1713 = vunpack.c.l.b16 %v881
    %v1714 = vunpack.c.h.b16 %v881
    %v1715 = vunpack.c.l.b16 %v882
    %v1716 = vunpack.c.h.b16 %v882
    %v1717 = vunpack.c.l.b16 %v883
    %v1718 = vunpack.c.h.b16 %v883
    %v1719 = vunpack.c.l.b16 %v884
    %v1720 = vunpack.c.h.b16 %v884
    %v1721 = vunpack.c.l.b16 %v885
    %v1722 = vunpack.c.h.b16 %v885
    %v1723 = vunpack.c.l.b16 %v886
    %v1724 = vunpack.c.h.b16 %v886
    %v1725 = vunpack.c.l.b16 %v887
    %v1726 = vunpack.c.h.b16 %v887
    %v1727 = vunpack.c.l.b16 %v888
    %v1728 = vunpack.c.h.b16 %v888
    %v1729 = vunpack.c.l.b16 %v889
    %v1730 = vunpack.c.h.b16 %v889
    %v1731 = vunpack.c.l.b16 %v890
    %v1732 = vunpack.c.h.b16 %v890
    %v1733 = vunpack.c.l.b16 %v891
    %v1734 = vunpack.c.h.b16 %v891
    %v1735 = vunpack.c.l.b16 %v892
    %v1736 = vunpack.c.h.b16 %v892
    %v1737 = vunpack.c.l.b16 %v893
    %v1738 = vunpack.c.h.b16 %v893
    %v1739 = vunpack.c.l.b16 %v894
    %v1740 = vunpack.c.h.b16 %v894
    %v1741 = vunpack.c.l.b16 %v895
    %v1742 = vunpack.c.h.b16 %v895
    %v1743 = vunpack.c.l.b16 %v896
    %v1744 = vunpack.c.h.b16 %v896
    %v1745 = vunpack.c.l.b16 %v897
    %v1746 = vunpack.c.h.b16 %v897
    %v1747 = vunpack.c.l.b16 %v898
    %v1748 = vunpack.c.h.b16 %v898
    %v1749 = vunpack.c.l.b16 %v899
    %v1750 = vunpack.c.h.b16 %v899
    %v1751 = vunpack.c.l.b16 %v900
    %v1752 = vunpack.c.h.b16 %v900
    %v1753 = vunpack.c.l.b16 %v901
    %v1754 = vunpack.c.h.b16 %v901
    %v1755 = vunpack.c.l.b16 %v902
    %v1756 = vunpack.c.h.b16 %v902
    %v1757 = vunpack.c.l.b16 %v903
    %v1758 = vunpack.c.h.b16 %v903
    %v1759 = vunpack.c.l.b16 %v904
    %v1760 = vunpack.c.h.b16 %v904
    %v1761 = vunpack.c.l.b16 %v905
    %v1762 = vunpack.c.h.b16 %v905
    %v1763 = vunpack.c.l.b16 %v906
    %v1764 = vunpack.c.h.b16 %v906
    %v1765 = vunpack.c.l.b16 %v907
    %v1766 = vunpack.c.h.b16 %v907
    %v1767 = vunpack.c.l.b16 %v908
    %v1768 = vunpack.c.h.b16 %v908
    %v1769 = vunpack.c.l.b16 %v909
    %v1770 = vunpack.c.h.b16 %v909
    %v1771 = vunpack.c.l.b16 %v910
    %v1772 = vunpack.c.h.b16 %v910
    %v1773 = vunpack.c.l.b16 %v911
    %v1774 = vunpack.c.h.b16 %v911
    %v1775 = vunpack.c.l.b16 %v912
    %v1776 = vunpack.c.h.b16 %v912
    %v1777 = vunpack.c.l.b16 %v913
    %v1778 = vunpack.c.h.b16 %v913
    %v1779 = vunpack.c.l.b16 %v914
    %v1780 = vunpack.c.h.b16 %v914
    %v1781 = vunpack.c.l.b16 %v915
    %v1782 = vunpack.c.h.b16 %v915
    %v1783 = vunpack.c.l.b16 %v916
    %v1784 = vunpack.c.h.b16 %v916
    %v1785 = vunpack.c.l.b16 %v917
    %v1786 = vunpack.c.h.b16 %v917
    %v1787 = vunpack.c.l.b16 %v918
    %v1788 = vunpack.c.h.b16 %v918
    %v1789 = vunpack.c.l.b16 %v919
    %v1790 = vunpack.c.h.b16 %v919
    %v1791 = vunpack.c.l.b16 %v920
    %v1792 = vunpack.c.h.b16 %v920
    %v1793 = vunpack.c.l.b16 %v921
    %v1794 = vunpack.c.h.b16 %v921
    %v1795 = vunpack.c.l.b16 %v922
    %v1796 = vunpack.c.h.b16 %v922
    %v1797 = vunpack.c.l.b16 %v923
    %v1798 = vunpack.c.h.b16 %v923
    %v1799 = vunpack.c.l.b16 %v924
    %v1800 = vunpack.c.h.b16 %v924
    %v1801 = vunpack.c.l.b16 %v925
    %v1802 = vunpack.c.h.b16 %v925
    %v1803 = vunpack.c.l.b16 %v926
    %v1804 = vunpack.c.h.b16 %v926
    %v1805 = vunpack.c.l.b16 %v927
    %v1806 = vunpack.c.h.b16 %v927
    %v1807 = vunpack.c.l.b16 %v928
    %v1808 = vunpack.c.h.b16 %v928
    %v1809 = vunpack.c.l.b16 %v929
    %v1810 = vunpack.c.h.b16 %v929
    %v1811 = vunpack.c.l.b16 %v930
    %v1812 = vunpack.c.h.b16 %v930
    %v1813 = vunpack.c.l.b16 %v931
    %v1814 = vunpack.c.h.b16 %v931
    %v1815 = vunpack.c.l.b16 %v932
    %v1816 = vunpack.c.h.b16 %v932
    %v1817 = vunpack.c.l.b16 %v933
    %v1818 = vunpack.c.h.b16 %v933
    %v1819 = vunpack.c.l.b16 %v934
    %v1820 = vunpack.c.h.b16 %v934
    %v1821 = vunpack.c.l.b16 %v935
    %v1822 = vunpack.c.h.b16 %v935
    %v1823 = vunpack.c.l.b16 %v936
    %v1824 = vunpack.c.h.b16 %v936
    %v1825 = vunpack.c.l.b16 %v937
    %v1826 = vunpack.c.h.b16 %v937
    %v1827 = vunpack.c.l.b16 %v938
    %v1828 = vunpack.c.h.b16 %v938
    %v1829 = vunpack.c.l.b16 %v939
    %v1830 = vunpack.c.h.b16 %v939
    %v1831 = vunpack.c.l.b16 %v940
    %v1832 = vunpack.c.h.b16 %v940
    %v1833 = vunpack.c.l.b16 %v941
    %v1834 = vunpack.c.h.b16 %v941
    %v1835 = vunpack.c.l.b16 %v942
    %v1836 = vunpack.c.h.b16 %v942
    %v1837 = vunpack.c.l.b16 %v943
    %v1838 = vunpack.c.h.b16 %v943
    %v1839 = vunpack.c.l.b16 %v944
    %v1840 = vunpack.c.h.b16 %v944
    %v1841 = vunpack.c.l.b16 %v945
    %v1842 = vunpack.c.h.b16 %v945
    %v1843 = vunpack.c.l.b16 %v946
    %v1844 = vunpack.c.h.b16 %v946
    %v1845 = vunpack.c.l.b16 %v947
    %v1846 = vunpack.c.h.b16 %v947
    %v1847 = vunpack.c.l.b16 %v948
    %v1848 = vunpack.c.h.b16 %v948
    %v1849 = vunpack.c.l.b16 %v949
    %v1850 = vunpack.c.h.b16 %v949
    %v1851 = vunpack.c.l.b16 %v950
    %v1852 = vunpack.c.h.b16 %v950
    %v1853 = vunpack.c.l.b16 %v951
    %v1854 = vunpack.c.h.b16 %v951
    %v1855 = vunpack.c.l.b16 %v952
    %v1856 = vunpack.c.h.b16 %v952
    %v1857 = vunpack.c.l.b16 %v953
    %v1858 = vunpack.c.h.b16 %v953
    %v1859 = vunpack.c.l.b16 %v954
    %v1860 = vunpack.c.h.b16 %v954
    %v1861 = vunpack.c.l.b16 %v955
    %v1862 = vunpack.c.h.b16 %v955
    %v1863 = vunpack.c.l.b16 %v956
    %v1864 = vunpack.c.h.b16 %v956
    %v1865 = vunpack.c.l.b16 %v957
    %v1866 = vunpack.c.h.b16 %v957
    %v1867 = vunpack.c.l.b16 %v958
    %v1868 = vunpack.c.h.b16 %v958
    %v1869 = vunpack.c.l.b16 %v959
    %v1870 = vunpack.c.h.b16 %v959
    %v1871 = vunpack.c.l.b16 %v960
    %v1872 = vunpack.c.h.b16 %v960
    %v1873 = vunpack.c.l.b16 %v961
    %v1874 = vunpack.c.h.b16 %v961
    %v1875 = vunpack.c.l.b16 %v962
    %v1876 = vunpack.c.h.b16 %v962
    %v1877 = vunpack.c.l.b16 %v963
    %v1878 = vunpack.c.h.b16 %v963
    %v1879 = vunpack.c.l.b16 %v964
    %v1880 = vunpack.c.h.b16 %v964
    %v1881 = vunpack.c.l.b16 %v965
    %v1882 = vunpack.c.h.b16 %v965
    %v1883 = vunpack.c.l.b16 %v966
    %v1884 = vunpack.c.h.b16 %v966
    %v1885 = vunpack.c.l.b16 %v967
    %v1886 = vunpack.c.h.b16 %v967
    %v1887 = vunpack.c.l.b16 %v968
    %v1888 = vunpack.c.h.b16 %v968
    %v1889 = vunpack.c.l.b16 %v969
    %v1890 = vunpack.c.h.b16 %v969
    %v1891 = vunpack.c.l.b16 %v970
    %v1892 = vunpack.c.h.b16 %v970
    %v1893 = vunpack.c.l.b16 %v971
    %v1894 = vunpack.c.h.b16 %v971
    %v1895 = vunpack.c.l.b16 %v972
    %v1896 = vunpack.c.h.b16 %v972
    %v1897 = vunpack.c.l.b16 %v973
    %v1898 = vunpack.c.h.b16 %v973
    %v1899 = vunpack.c.l.b16 %v974
    %v1900 = vunpack.c.h.b16 %v974
    %v1901 = vunpack.c.l.b16 %v975
    %v1902 = vunpack.c.h.b16 %v975
    %v1903 = vunpack.c.l.b16 %v976
    %v1904 = vunpack.c.h.b16 %v976
    %v1905 = vunpack.c.l.b16 %v977
    %v1906 = vunpack.c.h.b16 %v977
    %v1907 = vunpack.c.l.b16 %v978
    %v1908 = vunpack.c.h.b16 %v978
    %v1909 = vunpack.c.l.b16 %v979
    %v1910 = vunpack.c.h.b16 %v979
    %v1911 = vunpack.c.l.b16 %v980
    %v1912 = vunpack.c.h.b16 %v980
    %v1913 = vunpack.c.l.b16 %v981
    %v1914 = vunpack.c.h.b16 %v981
    %v1915 = vunpack.c.l.b16 %v982
    %v1916 = vunpack.c.h.b16 %v982
    %v1917 = vunpack.c.l.b16 %v983
    %v1918 = vunpack.c.h.b16 %v983
    %v1919 = vunpack.c.l.b16 %v984
    %v1920 = vunpack.c.h.b16 %v984
    %v1921 = vunpack.c.l.b16 %v985
    %v1922 = vunpack.c.h.b16 %v985
    %v1923 = vunpack.c.l.b16 %v986
    %v1924 = vunpack.c.h.b16 %v986
    %v1925 = vunpack.c.l.b16 %v987
    %v1926 = vunpack.c.h.b16 %v987
    %v1927 = vunpack.c.l.b16 %v988
    %v1928 = vunpack.c.h.b16 %v988
    %v1929 = vunpack.c.l.b16 %v989
    %v1930 = vunpack.c.h.b16 %v989
    %v1931 = vunpack.c.l.b16 %v990
    %v1932 = vunpack.c.h.b16 %v990
    %v1933 = vunpack.c.l.b16 %v991
    %v1934 = vunpack.c.h.b16 %v991
    %v1935 = vunpack.c.l.b16 %v992
    %v1936 = vunpack.c.h.b16 %v992
    %v1937 = vunpack.c.l.b16 %v993
    %v1938 = vunpack.c.h.b16 %v993
    %v1939 = vunpack.c.l.b16 %v994
    %v1940 = vunpack.c.h.b16 %v994
    %v1941 = vunpack.c.l.b16 %v995
    %v1942 = vunpack.c.h.b16 %v995
    %v1943 = vunpack.c.l.b16 %v996
    %v1944 = vunpack.c.h.b16 %v996
    %v1945 = vunpack.c.l.b16 %v997
    %v1946 = vunpack.c.h.b16 %v997
    %v1947 = vunpack.c.l.b16 %v998
    %v1948 = vunpack.c.h.b16 %v998
    %v1949 = vunpack.c.l.b16 %v999
    %v1950 = vunpack.c.h.b16 %v999
    %v1951 = vunpack.c.l.b16 %v1000
    %v1952 = vunpack.c.h.b16 %v1000
    %v1953 = vunpack.c.l.b16 %v1001
    %v1954 = vunpack.c.h.b16 %v1001
    %v1955 = vunpack.c.l.b16 %v1002
    %v1956 = vunpack.c.h.b16 %v1002
    %v1957 = vunpack.c.l.b16 %v1003
    %v1958 = vunpack.c.h.b16 %v1003
    %v1959 = vunpack.c.l.b16 %v1004
    %v1960 = vunpack.c.h.b16 %v1004
    %v1961 = vunpack.c.l.b16 %v1005
    %v1962 = vunpack.c.h.b16 %v1005
    %v1963 = vunpack.c.l.b16 %v1006
    %v1964 = vunpack.c.h.b16 %v1006
    %v1965 = vunpack.c.l.b16 %v1007
    %v1966 = vunpack.c.h.b16 %v1007
    %v1967 = vunpack.c.l.b16 %v1008
    %v1968 = vunpack.c.h.b16 %v1008
    %v1969 = vunpack.c.l.b16 %v1009
    %v1970 = vunpack.c.h.b16 %v1009
    %v1971 = vunpack.c.l.b16 %v1010
    %v1972 = vunpack.c.h.b16 %v1010
    %v1973 = vunpack.c.l.b16 %v1011
    %v1974 = vunpack.c.h.b16 %v1011
    %v1975 = vunpack.c.l.b16 %v1012
    %v1976 = vunpack.c.h.b16 %v1012
    %v1977 = vunpack.c.l.b16 %v1013
    %v1978 = vunpack.c.h.b16 %v1013
    %v1979 = vunpack.c.l.b16 %v1014
    %v1980 = vunpack.c.h.b16 %v1014
    %v1981 = vunpack.c.l.b16 %v1015
    %v1982 = vunpack.c.h.b16 %v1015
    %v1983 = vunpack.c.l.b16 %v1016
    %v1984 = vunpack.c.h.b16 %v1016
    %v1985 = vunpack.c.l.b16 %v1017
    %v1986 = vunpack.c.h.b16 %v1017
    %v1987 = vunpack.c.l.b16 %v1018
    %v1988 = vunpack.c.h.b16 %v1018
    %v1989 = vunpack.c.l.b16 %v1019
    %v1990 = vunpack.c.h.b16 %v1019
    %v1991 = vunpack.c.l.b16 %v1020
    %v1992 = vunpack.c.h.b16 %v1020
    %v1993 = vunpack.c.l.b16 %v1021
    %v1994 = vunpack.c.h.b16 %v1021
    %v1995 = vunpack.c.l.b16 %v1022
    %v1996 = vunpack.c.h.b16 %v1022
    %v1997 = vunpack.c.l.b16 %v1023
    %v1998 = vunpack.c.h.b16 %v1023
    %v1999 = vunpack.c.l.b16 %v1024
    %v2000 = vunpack.c.h.b16 %v1024
    %v2001 = vunpack.c.l.b16 %v1025
    %v2002 = vunpack.c.h.b16 %v1025
    %v2003 = vunpack.c.l.b16 %v1026
    %v2004 = vunpack.c.h.b16 %v1026
    %v2005 = vunpack.c.l.b16 %v1027
    %v2006 = vunpack.c.h.b16 %v1027
    %v2007 = vunpack.c.l.b16 %v1028
    %v2008 = vunpack.c.h.b16 %v1028
    %v2009 = vunpack.c.l.b16 %v1029
    %v2010 = vunpack.c.h.b16 %v1029
    %v2011 = vunpack.c.l.b16 %v1030
    %v2012 = vunpack.c.h.b16 %v1030
    %v2013 = vunpack.c.l.b16 %v1031
    %v2014 = vunpack.c.h.b16 %v1031
    %v2015 = vunpack.c.l.b16 %v1032
    %v2016 = vunpack.c.h.b16 %v1032
    %v2017 = vunpack.c.l.b16 %v1033
    %v2018 = vunpack.c.h.b16 %v1033
    %v2019 = vunpack.c.l.b16 %v1034
    %v2020 = vunpack.c.h.b16 %v1034
    %v2021 = vunpack.c.l.b16 %v1035
    %v2022 = vunpack.c.h.b16 %v1035
    %v2023 = vunpack.c.l.b16 %v1036
    %v2024 = vunpack.c.h.b16 %v1036
    %v2025 = vunpack.c.l.b16 %v1037
    %v2026 = vunpack.c.h.b16 %v1037
    %v2027 = vunpack.c.l.b16 %v1038
    %v2028 = vunpack.c.h.b16 %v1038
    %v2029 = vunpack.c.l.b16 %v1039
    %v2030 = vunpack.c.h.b16 %v1039
    %v2031 = vunpack.c.l.b16 %v1040
    %v2032 = vunpack.c.h.b16 %v1040
    %v2033 = vunpack.c.l.b16 %v1041
    %v2034 = vunpack.c.h.b16 %v1041
    %v2035 = vunpack.c.l.b16 %v1042
    %v2036 = vunpack.c.h.b16 %v1042
    %v2037 = vunpack.c.l.b16 %v1043
    %v2038 = vunpack.c.h.b16 %v1043
    %v2039 = vunpack.c.l.b16 %v1044
    %v2040 = vunpack.c.h.b16 %v1044
    %v2041 = vunpack.c.l.b16 %v1045
    %v2042 = vunpack.c.h.b16 %v1045
    %v2043 = vunpack.c.l.b16 %v1046
    %v2044 = vunpack.c.h.b16 %v1046
    %v2045 = vunpack.c.l.b16 %v1047
    %v2046 = vunpack.c.h.b16 %v1047
    %v2047 = vunpack.c.l.b16 %v1048
    %v2048 = vunpack.c.h.b16 %v1048
    %v2049 = vunpack.c.l.b16 %v1049
    %v2050 = vunpack.c.h.b16 %v1049
    %v2051 = vunpack.c.l.b16 %v1050
    %v2052 = vunpack.c.h.b16 %v1050
    %v2053 = vunpack.c.l.b16 %v1051
    %v2054 = vunpack.c.h.b16 %v1051
    %v2055 = vunpack.c.l.b16 %v1052
    %v2056 = vunpack.c.h.b16 %v1052
    %v2057 = vunpack.c.l.b16 %v1053
    %v2058 = vunpack.c.h.b16 %v1053
    %v2059 = vunpack.c.l.b16 %v1054
    %v2060 = vunpack.c.h.b16 %v1054
    %v2061 = vunpack.c.l.b16 %v1055
    %v2062 = vunpack.c.h.b16 %v1055
    %v2063 = vunpack.c.l.b16 %v1056
    %v2064 = vunpack.c.h.b16 %v1056
    %v2065 = vunpack.c.l.b16 %v1057
    %v2066 = vunpack.c.h.b16 %v1057
    %v2067 = vunpack.c.l.b16 %v1058
    %v2068 = vunpack.c.h.b16 %v1058
    %v2069 = vunpack.c.l.b16 %v1059
    %v2070 = vunpack.c.h.b16 %v1059
    %v2071 = vunpack.c.l.b16 %v1060
    %v2072 = vunpack.c.h.b16 %v1060
    %v2073 = vunpack.c.l.b16 %v1061
    %v2074 = vunpack.c.h.b16 %v1061
    %v2075 = vunpack.c.l.b16 %v1062
    %v2076 = vunpack.c.h.b16 %v1062
    %v2077 = vunpack.c.l.b16 %v1063
    %v2078 = vunpack.c.h.b16 %v1063
    %v2079 = vunpack.c.l.b16 %v1064
    %v2080 = vunpack.c.h.b16 %v1064
    %v2081 = vunpack.c.l.b16 %v1065
    %v2082 = vunpack.c.h.b16 %v1065
    %v2083 = vunpack.c.l.b16 %v1066
    %v2084 = vunpack.c.h.b16 %v1066
    %v2085 = vunpack.c.l.b16 %v1067
    %v2086 = vunpack.c.h.b16 %v1067
    %v2087 = vunpack.c.l.b16 %v1068
    %v2088 = vunpack.c.h.b16 %v1068
    %v2089 = vunpack.c.l.b16 %v1069
    %v2090 = vunpack.c.h.b16 %v1069
    %v2091 = vunpack.c.l.b16 %v1070
    %v2092 = vunpack.c.h.b16 %v1070
    %v2093 = vunpack.c.l.b16 %v1071
    %v2094 = vunpack.c.h.b16 %v1071
    %v2095 = vunpack.c.l.b16 %v1072
    %v2096 = vunpack.c.h.b16 %v1072
    %v2097 = vunpack.c.l.b16 %v1073
    %v2098 = vunpack.c.h.b16 %v1073
    %v2099 = vunpack.c.l.b16 %v1074
    %v2100 = vunpack.c.h.b16 %v1074
    %v2101 = vunpack.c.l.b16 %v1075
    %v2102 = vunpack.c.h.b16 %v1075
    %v2103 = vunpack.c.l.b16 %v1076
    %v2104 = vunpack.c.h.b16 %v1076
    %v2105 = vunpack.c.l.b16 %v1077
    %v2106 = vunpack.c.h.b16 %v1077
    %v2107 = vunpack.c.l.b16 %v1078
    %v2108 = vunpack.c.h.b16 %v1078
    %v2109 = vunpack.c.l.b16 %v1079
    %v2110 = vunpack.c.h.b16 %v1079
    %v2111 = vunpack.c.l.b16 %v1080
    %v2112 = vunpack.c.h.b16 %v1080
    %v2113 = vunpack.c.l.b16 %v1081
    %v2114 = vunpack.c.h.b16 %v1081
    %v2115 = vunpack.c.l.b16 %v1082
    %v2116 = vunpack.c.h.b16 %v1082
    %v2117 = vunpack.c.l.b16 %v1083
    %v2118 = vunpack.c.h.b16 %v1083
    %v2119 = vunpack.c.l.b16 %v1084
    %v2120 = vunpack.c.h.b16 %v1084
    %v2121 = vunpack.c.l.b16 %v1085
    %v2122 = vunpack.c.h.b16 %v1085
    %v2123 = vunpack.c.l.b16 %v1086
    %v2124 = vunpack.c.h.b16 %v1086
    %v2125 = vunpack.c.l.b16 %v1087
    %v2126 = vunpack.c.h.b16 %v1087
    %v2127 = vunpack.c.l.b16 %v1088
    %v2128 = vunpack.c.h.b16 %v1088
    %v2129 = vunpack.c.l.b16 %v1089
    %v2130 = vunpack.c.h.b16 %v1089
    %v2131 = vunpack.c.l.b16 %v1090
    %v2132 = vunpack.c.h.b16 %v1090
    %v2133 = vunpack.c.l.b16 %v1091
    %v2134 = vunpack.c.h.b16 %v1091
    %v2135 = vunpack.c.l.b16 %v1092
    %v2136 = vunpack.c.h.b16 %v1092
    %v2137 = vunpack.c.l.b16 %v1093
    %v2138 = vunpack.c.h.b16 %v1093
    %v2139 = vunpack.c.l.b16 %v1094
    %v2140 = vunpack.c.h.b16 %v1094
    %v2141 = vunpack.c.l.b16 %v1095
    %v2142 = vunpack.c.h.b16 %v1095
    %v2143 = vunpack.c.l.b16 %v1096
    %v2144 = vunpack.c.h.b16 %v1096
    %v2145 = vunpack.c.l.b16 %v1097
    %v2146 = vunpack.c.h.b16 %v1097
    %v2147 = vunpack.c.l.b16 %v1098
    %v2148 = vunpack.c.h.b16 %v1098
    %v2149 = vunpack.c.l.b16 %v1099
    %v2150 = vunpack.c.h.b16 %v1099
    %v2151 = vunpack.c.l.b16 %v1100
    %v2152 = vunpack.c.h.b16 %v1100
    %v2153 = vunpack.c.l.b16 %v1101
    %v2154 = vunpack.c.h.b16 %v1101
    %v2155 = vunpack.c.l.b16 %v1102
    %v2156 = vunpack.c.h.b16 %v1102
    %v2157 = vunpack.c.l.b16 %v1103
    %v2158 = vunpack.c.h.b16 %v1103
    %v2159 = vunpack.c.l.b16 %v1104
    %v2160 = vunpack.c.h.b16 %v1104
    %v2161 = vunpack.c.l.b16 %v1105
    %v2162 = vunpack.c.h.b16 %v1105
    %v2163 = vunpack.c.l.b16 %v1106
    %v2164 = vunpack.c.h.b16 %v1106
    %v2165 = vunpack.c.l.b16 %v1107
    %v2166 = vunpack.c.h.b16 %v1107
    %v2167 = vunpack.c.l.b16 %v1108
    %v2168 = vunpack.c.h.b16 %v1108
    %v2169 = vunpack.c.l.b16 %v1109
    %v2170 = vunpack.c.h.b16 %v1109
    %v2171 = vunpack.c.l.b16 %v1110
    %v2172 = vunpack.c.h.b16 %v1110
    %v2173 = vunpack.c.l.b16 %v1111
    %v2174 = vunpack.c.h.b16 %v1111
    %v2175 = vunpack.c.l.b16 %v1112
    %v2176 = vunpack.c.h.b16 %v1112
    %v2177 = vunpack.c.l.b16 %v1113
    %v2178 = vunpack.c.h.b16 %v1113
    %v2179 = vunpack.c.l.b16 %v1114
    %v2180 = vunpack.c.h.b16 %v1114
    %v2181 = vunpack.c.l.b16 %v1115
    %v2182 = vunpack.c.h.b16 %v1115
    %v2183 = vunpack.c.l.b16 %v1116
    %v2184 = vunpack.c.h.b16 %v1116
    %v2185 = vunpack.c.l.b16 %v1117
    %v2186 = vunpack.c.h.b16 %v1117
    %v2187 = vunpack.c.l.b16 %v1118
    %v2188 = vunpack.c.h.b16 %v1118
    %v2189 = vunpack.c.l.b16 %v1119
    %v2190 = vunpack.c.h.b16 %v1119
    %v2191 = vunpack.c.l.b16 %v1120
    %v2192 = vunpack.c.h.b16 %v1120
    %v2193 = vunpack.c.l.b16 %v1121
    %v2194 = vunpack.c.h.b16 %v1121
    %v2195 = vunpack.c.l.b16 %v1122
    %v2196 = vunpack.c.h.b16 %v1122
    %v2197 = vunpack.c.l.b16 %v1123
    %v2198 = vunpack.c.h.b16 %v1123
    %v2199 = vunpack.c.l.b16 %v1124
    %v2200 = vunpack.c.h.b16 %v1124
    %v2201 = vunpack.c.l.b16 %v1125
    %v2202 = vunpack.c.h.b16 %v1125
    %v2203 = vunpack.c.l.b16 %v1126
    %v2204 = vunpack.c.h.b16 %v1126
    %v2205 = vunpack.c.l.b16 %v1127
    %v2206 = vunpack.c.h.b16 %v1127
    %v2207 = vunpack.c.l.b16 %v1128
    %v2208 = vunpack.c.h.b16 %v1128
    %v2209 = vunpack.c.l.b16 %v1129
    %v2210 = vunpack.c.h.b16 %v1129
    %v2211 = vunpack.c.l.b16 %v1130
    %v2212 = vunpack.c.h.b16 %v1130
    %v2213 = vunpack.c.l.b16 %v1131
    %v2214 = vunpack.c.h.b16 %v1131
    %v2215 = vunpack.c.l.b16 %v1132
    %v2216 = vunpack.c.h.b16 %v1132
    %v2217 = vunpack.c.l.b16 %v1133
    %v2218 = vunpack.c.h.b16 %v1133
    %v2219 = vunpack.c.l.b16 %v1134
    %v2220 = vunpack.c.h.b16 %v1134
    %v2221 = vunpack.c.l.b16 %v1135
    %v2222 = vunpack.c.h.b16 %v1135
    %v2223 = vunpack.c.l.b16 %v1136
    %v2224 = vunpack.c.h.b16 %v1136
    %v2225 = vunpack.c.l.b16 %v1137
    %v2226 = vunpack.c.h.b16 %v1137
    %v2227 = vunpack.c.l.b16 %v1138
    %v2228 = vunpack.c.h.b16 %v1138
    %v2229 = vunpack.c.l.b16 %v1139
    %v2230 = vunpack.c.h.b16 %v1139
    %v2231 = vunpack.c.l.b16 %v1140
    %v2232 = vunpack.c.h.b16 %v1140
    %v2233 = vunpack.c.l.b16 %v1141
    %v2234 = vunpack.c.h.b16 %v1141
    %v2235 = vunpack.c.l.b16 %v1142
    %v2236 = vunpack.c.h.b16 %v1142
    %v2237 = vunpack.c.l.b16 %v1143
    %v2238 = vunpack.c.h.b16 %v1143
    %v2239 = vunpack.c.l.b16 %v1144
    %v2240 = vunpack.c.h.b16 %v1144
    %v2241 = vunpack.c.l.b16 %v1145
    %v2242 = vunpack.c.h.b16 %v1145
    %v2243 = vunpack.c.l.b16 %v1146
    %v2244 = vunpack.c.h.b16 %v1146
    %v2245 = vunpack.c.l.b16 %v1147
    %v2246 = vunpack.c.h.b16 %v1147
    %v2247 = vunpack.c.l.b16 %v1148
    %v2248 = vunpack.c.h.b16 %v1148
    %v2249 = vunpack.c.l.b16 %v1149
    %v2250 = vunpack.c.h.b16 %v1149
    %v2251 = vunpack.c.l.b16 %v1150
    %v2252 = vunpack.c.h.b16 %v1150
    %v2253 = vunpack.c.l.b16 %v1151
    %v2254 = vunpack.c.h.b16 %v1151
    %v2255 = vunpack.c.l.b16 %v1152
    %v2256 = vunpack.c.h.b16 %v1152
    %v2257 = vunpack.c.l.b16 %v1153
    %v2258 = vunpack.c.h.b16 %v1153
    %v2259 = vunpack.c.l.b16 %v1154
    %v2260 = vunpack.c.h.b16 %v1154
    %v2261 = vunpack.c.l.b16 %v1155
    %v2262 = vunpack.c.h.b16 %v1155
    %v2263 = vunpack.c.l.b16 %v1156
    %v2264 = vunpack.c.h.b16 %v1156
    %v2265 = vunpack.c.l.b16 %v1157
    %v2266 = vunpack.c.h.b16 %v1157
    %v2267 = vunpack.c.l.b16 %v1158
    %v2268 = vunpack.c.h.b16 %v1158
    %v2269 = vunpack.c.l.b16 %v1159
    %v2270 = vunpack.c.h.b16 %v1159
    %v2271 = vunpack.c.l.b16 %v1160
    %v2272 = vunpack.c.h.b16 %v1160
    %v2273 = vunpack.c.l.b16 %v1161
    %v2274 = vunpack.c.h.b16 %v1161
    %v2275 = vunpack.c.l.b16 %v1162
    %v2276 = vunpack.c.h.b16 %v1162
    %v2277 = vunpack.c.l.b16 %v1163
    %v2278 = vunpack.c.h.b16 %v1163
    %v2279 = vunpack.c.l.b16 %v1164
    %v2280 = vunpack.c.h.b16 %v1164
    %v2281 = vunpack.c.l.b16 %v1165
    %v2282 = vunpack.c.h.b16 %v1165
    %v2283 = vunpack.c.l.b16 %v1166
    %v2284 = vunpack.c.h.b16 %v1166
    %v2285 = vunpack.c.l.b16 %v1167
    %v2286 = vunpack.c.h.b16 %v1167
    %v2287 = vunpack.c.l.b16 %v1168
    %v2288 = vunpack.c.h.b16 %v1168
    %v2289 = vunpack.c.l.b16 %v1169
    %v2290 = vunpack.c.h.b16 %v1169
    %v2291 = vunpack.c.l.b16 %v1170
    %v2292 = vunpack.c.h.b16 %v1170
    %v2293 = vunpack.c.l.b16 %v1171
    %v2294 = vunpack.c.h.b16 %v1171
    %v2295 = vunpack.c.l.b16 %v1172
    %v2296 = vunpack.c.h.b16 %v1172
    %v2297 = vunpack.c.l.b16 %v1173
    %v2298 = vunpack.c.h.b16 %v1173
    %v2299 = vunpack.c.l.b16 %v1174
    %v2300 = vunpack.c.h.b16 %v1174
    %v2301 = vunpack.c.l.b16 %v1175
    %v2302 = vunpack.c.h.b16 %v1175
    %v2303 = vunpack.c.l.b16 %v1176
    %v2304 = vunpack.c.h.b16 %v1176
    %v2305 = vunpack.c.l.b16 %v1177
    %v2306 = vunpack.c.h.b16 %v1177
    %v2307 = vunpack.c.l.b16 %v1178
    %v2308 = vunpack.c.h.b16 %v1178
    %v2309 = vunpack.c.l.b16 %v1179
    %v2310 = vunpack.c.h.b16 %v1179
    %v2311 = vunpack.c.l.b16 %v1180
    %v2312 = vunpack.c.h.b16 %v1180
    %v2313 = vunpack.c.l.b16 %v1181
    %v2314 = vunpack.c.h.b16 %v1181
    %v2315 = vunpack.c.l.b16 %v1182
    %v2316 = vunpack.c.h.b16 %v1182
    %v2317 = vunpack.c.l.b16 %v1183
    %v2318 = vunpack.c.h.b16 %v1183
    %v2319 = vunpack.c.l.b16 %v1184
    %v2320 = vunpack.c.h.b16 %v1184
    %v2321 = vunpack.c.l.b16 %v1185
    %v2322 = vunpack.c.h.b16 %v1185
    %v2323 = vunpack.c.l.b16 %v1186
    %v2324 = vunpack.c.h.b16 %v1186
    %v2325 = vunpack.c.l.b16 %v1187
    %v2326 = vunpack.c.h.b16 %v1187
    %v2327 = vunpack.c.l.b16 %v1188
    %v2328 = vunpack.c.h.b16 %v1188
    %v2329 = vunpack.c.l.b16 %v1189
    %v2330 = vunpack.c.h.b16 %v1189
    %v2331 = vunpack.c.l.b16 %v1190
    %v2332 = vunpack.c.h.b16 %v1190
    %v2333 = vunpack.c.l.b16 %v1191
    %v2334 = vunpack.c.h.b16 %v1191
    %v2335 = vunpack.c.l.b16 %v1192
    %v2336 = vunpack.c.h.b16 %v1192
    %v2337 = vunpack.c.l.b16 %v1193
    %v2338 = vunpack.c.h.b16 %v1193
    %v2339 = vunpack.c.l.b16 %v1194
    %v2340 = vunpack.c.h.b16 %v1194
    %v2341 = vunpack.c.l.b16 %v1195
    %v2342 = vunpack.c.h.b16 %v1195
    %v2343 = vunpack.c.l.b16 %v1196
    %v2344 = vunpack.c.h.b16 %v1196
    %v2345 = vunpack.c.l.b16 %v1197
    %v2346 = vunpack.c.h.b16 %v1197
    %v2347 = vunpack.c.l.b16 %v1198
    %v2348 = vunpack.c.h.b16 %v1198
    %v2349 = vunpack.c.l.b16 %v1199
    %v2350 = vunpack.c.h.b16 %v1199
    %v2351 = vunpack.c.l.b16 %v1200
    %v2352 = vunpack.c.h.b16 %v1200
    %v2353 = vunpack.c.l.b16 %v1201
    %v2354 = vunpack.c.h.b16 %v1201
    %v2355 = vunpack.c.l.b16 %v1202
    %v2356 = vunpack.c.h.b16 %v1202
    %v2357 = vunpack.c.l.b16 %v1203
    %v2358 = vunpack.c.h.b16 %v1203
    %v2359 = vunpack.c.l.b16 %v1204
    %v2360 = vunpack.c.h.b16 %v1204
    %v2361 = vunpack.c.l.b16 %v1205
    %v2362 = vunpack.c.h.b16 %v1205
    %v2363 = vunpack.c.l.b16 %v1206
    %v2364 = vunpack.c.h.b16 %v1206
    %v2365 = vunpack.c.l.b16 %v1207
    %v2366 = vunpack.c.h.b16 %v1207
    %v2367 = vunpack.c.l.b16 %v1208
    %v2368 = vunpack.c.h.b16 %v1208
    %v2369 = vunpack.c.l.b16 %v1209
    %v2370 = vunpack.c.h.b16 %v1209
    %v2371 = vunpack.c.l.b16 %v1210
    %v2372 = vunpack.c.h.b16 %v1210
    %v2373 = vunpack.c.l.b16 %v1211
    %v2374 = vunpack.c.h.b16 %v1211
    %v2375 = vunpack.c.l.b16 %v1212
    %v2376 = vunpack.c.h.b16 %v1212
    %v2377 = vunpack.c.l.b16 %v1213
    %v2378 = vunpack.c.h.b16 %v1213
    %v2379 = vunpack.c.l.b16 %v1214
    %v2380 = vunpack.c.h.b16 %v1214
    %v2381 = vunpack.c.l.b16 %v1215
    %v2382 = vunpack.c.h.b16 %v1215
    %v2383 = vunpack.c.l.b16 %v1216
    %v2384 = vunpack.c.h.b16 %v1216
    %v2385 = vunpack.c.l.b16 %v1217
    %v2386 = vunpack.c.h.b16 %v1217
    %v2387 = vunpack.c.l.b16 %v1218
    %v2388 = vunpack.c.h.b16 %v1218
    %v2389 = vunpack.c.l.b16 %v1219
    %v2390 = vunpack.c.h.b16 %v1219
    %v2391 = vunpack.c.l.b16 %v1220
    %v2392 = vunpack.c.h.b16 %v1220
    %v2393 = vunpack.c.l.b16 %v1221
    %v2394 = vunpack.c.h.b16 %v1221
    %v2395 = vunpack.c.l.b16 %v1222
    %v2396 = vunpack.c.h.b16 %v1222
    %v2397 = vpack.c.b16 %v1633, %v1629
    %v2398 = vpack.c.b16 %v1634, %v1630
    %v2399 = vpack.c.b16 %v1635, %v1631
    %v2400 = vpack.c.b16 %v1636, %v1632
    %v2401 = vpack.c.b16 %v1641, %v1637
    %v2402 = vpack.c.b16 %v1642, %v1638
    %v2403 = vpack.c.b16 %v1643, %v1639
    %v2404 = vpack.c.b16 %v1644, %v1640
    %v2405 = vpack.c.b16 %v1649, %v1645
    %v2406 = vpack.c.b16 %v1650, %v1646
    %v2407 = vpack.c.b16 %v1651, %v1647
    %v2408 = vpack.c.b16 %v1652, %v1648
    %v2409 = vpack.c.b16 %v1657, %v1653
    %v2410 = vpack.c.b16 %v1658, %v1654
    %v2411 = vpack.c.b16 %v1659, %v1655
    %v2412 = vpack.c.b16 %v1660, %v1656
    %v2413 = vpack.c.b16 %v1665, %v1661
    %v2414 = vpack.c.b16 %v1666, %v1662
    %v2415 = vpack.c.b16 %v1667, %v1663
    %v2416 = vpack.c.b16 %v1668, %v1664
    %v2417 = vpack.c.b16 %v1673, %v1669
    %v2418 = vpack.c.b16 %v1674, %v1670
    %v2419 = vpack.c.b16 %v1675, %v1671
    %v2420 = vpack.c.b16 %v1676, %v1672
    %v2421 = vpack.c.b16 %v1681, %v1677
    %v2422 = vpack.c.b16 %v1682, %v1678
    %v2423 = vpack.c.b16 %v1683, %v1679
    %v2424 = vpack.c.b16 %v1684, %v1680
    %v2425 = vpack.c.b16 %v1689, %v1685
    %v2426 = vpack.c.b16 %v1690, %v1686
    %v2427 = vpack.c.b16 %v1691, %v1687
    %v2428 = vpack.c.b16 %v1692, %v1688
    %v2429 = vpack.c.b16 %v1697, %v1693
    %v2430 = vpack.c.b16 %v1698, %v1694
    %v2431 = vpack.c.b16 %v1699, %v1695
    %v2432 = vpack.c.b16 %v1700, %v1696
    %v2433 = vpack.c.b16 %v1705, %v1701
    %v2434 = vpack.c.b16 %v1706, %v1702
    %v2435 = vpack.c.b16 %v1707, %v1703
    %v2436 = vpack.c.b16 %v1708, %v1704
    %v2437 = vpack.c.b16 %v1713, %v1709
    %v2438 = vpack.c.b16 %v1714, %v1710
    %v2439 = vpack.c.b16 %v1715, %v1711
    %v2440 = vpack.c.b16 %v1716, %v1712
    %v2441 = vpack.c.b16 %v1721, %v1717
    %v2442 = vpack.c.b16 %v1722, %v1718
    %v2443 = vpack.c.b16 %v1723, %v1719
    %v2444 = vpack.c.b16 %v1724, %v1720
    %v2445 = vpack.c.b16 %v1729, %v1725
    %v2446 = vpack.c.b16 %v1730, %v1726
    %v2447 = vpack.c.b16 %v1731, %v1727
    %v2448 = vpack.c.b16 %v1732, %v1728
    %v2449 = vpack.c.b16 %v1737, %v1733
    %v2450 = vpack.c.b16 %v1738, %v1734
    %v2451 = vpack.c.b16 %v1739, %v1735
    %v2452 = vpack.c.b16 %v1740, %v1736
    %v2453 = vpack.c.b16 %v1745, %v1741
    %v2454 = vpack.c.b16 %v1746, %v1742
    %v2455 = vpack.c.b16 %v1747, %v1743
    %v2456 = vpack.c.b16 %v1748, %v1744
    %v2457 = vpack.c.b16 %v1753, %v1749
    %v2458 = vpack.c.b16 %v1754, %v1750
    %v2459 = vpack.c.b16 %v1755, %v1751
    %v2460 = vpack.c.b16 %v1756, %v1752
    %v2461 = vpack.c.b16 %v1761, %v1757
    %v2462 = vpack.c.b16 %v1762, %v1758
    %v2463 = vpack.c.b16 %v1763, %v1759
    %v2464 = vpack.c.b16 %v1764, %v1760
    %v2465 = vpack.c.b16 %v1769, %v1765
    %v2466 = vpack.c.b16 %v1770, %v1766
    %v2467 = vpack.c.b16 %v1771, %v1767
    %v2468 = vpack.c.b16 %v1772, %v1768
    %v2469 = vpack.c.b16 %v1777, %v1773
    %v2470 = vpack.c.b16 %v1778, %v1774
    %v2471 = vpack.c.b16 %v1779, %v1775
    %v2472 = vpack.c.b16 %v1780, %v1776
    %v2473 = vpack.c.b16 %v1785, %v1781
    %v2474 = vpack.c.b16 %v1786, %v1782
    %v2475 = vpack.c.b16 %v1787, %v1783
    %v2476 = vpack.c.b16 %v1788, %v1784
    %v2477 = vpack.c.b16 %v1793, %v1789
    %v2478 = vpack.c.b16 %v1794, %v1790
    %v2479 = vpack.c.b16 %v1795, %v1791
    %v2480 = vpack.c.b16 %v1796, %v1792
    %v2481 = vpack.c.b16 %v1801, %v1797
    %v2482 = vpack.c.b16 %v1802, %v1798
    %v2483 = vpack.c.b16 %v1803, %v1799
    %v2484 = vpack.c.b16 %v1804, %v1800
    %v2485 = vpack.c.b16 %v1809, %v1805
    %v2486 = vpack.c.b16 %v1810, %v1806
    %v2487 = vpack.c.b16 %v1811, %v1807
    %v2488 = vpack.c.b16 %v1812, %v1808
    %v2489 = vpack.c.b16 %v1817, %v1813
    %v2490 = vpack.c.b16 %v1818, %v1814
    %v2491 = vpack.c.b16 %v1819, %v1815
    %v2492 = vpack.c.b16 %v1820, %v1816
    %v2493 = vpack.c.b16 %v1825, %v1821
    %v2494 = vpack.c.b16 %v1826, %v1822
    %v2495 = vpack.c.b16 %v1827, %v1823
    %v2496 = vpack.c.b16 %v1828, %v1824
    %v2497 = vpack.c.b16 %v1833, %v1829
    %v2498 = vpack.c.b16 %v1834, %v1830
    %v2499 = vpack.c.b16 %v1835, %v1831
    %v2500 = vpack.c.b16 %v1836, %v1832
    %v2501 = vpack.c.b16 %v1841, %v1837
    %v2502 = vpack.c.b16 %v1842, %v1838
    %v2503 = vpack.c.b16 %v1843, %v1839
    %v2504 = vpack.c.b16 %v1844, %v1840
    %v2505 = vpack.c.b16 %v1849, %v1845
    %v2506 = vpack.c.b16 %v1850, %v1846
    %v2507 = vpack.c.b16 %v1851, %v1847
    %v2508 = vpack.c.b16 %v1852, %v1848
    %v2509 = vpack.c.b16 %v1857, %v1853
    %v2510 = vpack.c.b16 %v1858, %v1854
    %v2511 = vpack.c.b16 %v1859, %v1855
    %v2512 = vpack.c.b16 %v1860, %v1856
    %v2513 = vpack.c.b16 %v1865, %v1861
    %v2514 = vpack.c.b16 %v1866, %v1862
    %v2515 = vpack.c.b16 %v1867, %v1863
    %v2516 = vpack.c.b16 %v1868, %v1864
    %v2517 = vpack.c.b16 %v1873, %v1869
    %v2518 = vpack.c.b16 %v1874, %v1870
    %v2519 = vpack.c.b16 %v1875, %v1871
    %v2520 = vpack.c.b16 %v1876, %v1872
    %v2521 = vpack.c.b16 %v1881, %v1877
    %v2522 = vpack.c.b16 %v1882, %v1878
    %v2523 = vpack.c.b16 %v1883, %v1879
    %v2524 = vpack.c.b16 %v1884, %v1880
    %v2525 = vpack.c.b16 %v1889, %v1885
    %v2526 = vpack.c.b16 %v1890, %v1886
    %v2527 = vpack.c.b16 %v1891, %v1887
    %v2528 = vpack.c.b16 %v1892, %v1888
    %v2529 = vpack.c.b16 %v1897, %v1893
    %v2530 = vpack.c.b16 %v1898, %v1894
    %v2531 = vpack.c.b16 %v1899, %v1895
    %v2532 = vpack.c.b16 %v1900, %v1896
    %v2533 = vpack.c.b16 %v1905, %v1901
    %v2534 = vpack.c.b16 %v1906, %v1902
    %v2535 = vpack.c.b16 %v1907, %v1903
    %v2536 = vpack.c.b16 %v1908, %v1904
    %v2537 = vpack.c.b16 %v1913, %v1909
    %v2538 = vpack.c.b16 %v1914, %v1910
    %v2539 = vpack.c.b16 %v1915, %v1911
    %v2540 = vpack.c.b16 %v1916, %v1912
    %v2541 = vpack.c.b16 %v1921, %v1917
    %v2542 = vpack.c.b16 %v1922, %v1918
    %v2543 = vpack.c.b16 %v1923, %v1919
    %v2544 = vpack.c.b16 %v1924, %v1920
    %v2545 = vpack.c.b16 %v1929, %v1925
    %v2546 = vpack.c.b16 %v1930, %v1926
    %v2547 = vpack.c.b16 %v1931, %v1927
    %v2548 = vpack.c.b16 %v1932, %v1928
    %v2549 = vpack.c.b16 %v1937, %v1933
    %v2550 = vpack.c.b16 %v1938, %v1934
    %v2551 = vpack.c.b16 %v1939, %v1935
    %v2552 = vpack.c.b16 %v1940, %v1936
    %v2553 = vpack.c.b16 %v1945, %v1941
    %v2554 = vpack.c.b16 %v1946, %v1942
    %v2555 = vpack.c.b16 %v1947, %v1943
    %v2556 = vpack.c.b16 %v1948, %v1944
    %v2557 = vpack.c.b16 %v1953, %v1949
    %v2558 = vpack.c.b16 %v1954, %v1950
    %v2559 = vpack.c.b16 %v1955, %v1951
    %v2560 = vpack.c.b16 %v1956, %v1952
    %v2561 = vpack.c.b16 %v1961, %v1957
    %v2562 = vpack.c.b16 %v1962, %v1958
    %v2563 = vpack.c.b16 %v1963, %v1959
    %v2564 = vpack.c.b16 %v1964, %v1960
    %v2565 = vpack.c.b16 %v1969, %v1965
    %v2566 = vpack.c.b16 %v1970, %v1966
    %v2567 = vpack.c.b16 %v1971, %v1967
    %v2568 = vpack.c.b16 %v1972, %v1968
    %v2569 = vpack.c.b16 %v1977, %v1973
    %v2570 = vpack.c.b16 %v1978, %v1974
    %v2571 = vpack.c.b16 %v1979, %v1975
    %v2572 = vpack.c.b16 %v1980, %v1976
    %v2573 = vpack.c.b16 %v1985, %v1981
    %v2574 = vpack.c.b16 %v1986, %v1982
    %v2575 = vpack.c.b16 %v1987, %v1983
    %v2576 = vpack.c.b16 %v1988, %v1984
    %v2577 = vpack.c.b16 %v1993, %v1989
    %v2578 = vpack.c.b16 %v1994, %v1990
    %v2579 = vpack.c.b16 %v1995, %v1991
    %v2580 = vpack.c.b16 %v1996, %v1992
    %v2581 = vpack.c.b16 %v2001, %v1997
    %v2582 = vpack.c.b16 %v2002, %v1998
    %v2583 = vpack.c.b16 %v2003, %v1999
    %v2584 = vpack.c.b16 %v2004, %v2000
    %v2585 = vpack.c.b16 %v2009, %v2005
    %v2586 = vpack.c.b16 %v2010, %v2006
    %v2587 = vpack.c.b16 %v2011, %v2007
    %v2588 = vpack.c.b16 %v2012, %v2008
    %v2589 = vpack.c.b16 %v2017, %v2013
    %v2590 = vpack.c.b16 %v2018, %v2014
    %v2591 = vpack.c.b16 %v2019, %v2015
    %v2592 = vpack.c.b16 %v2020, %v2016
    %v2593 = vpack.c.b16 %v2025, %v2021
    %v2594 = vpack.c.b16 %v2026, %v2022
    %v2595 = vpack.c.b16 %v2027, %v2023
    %v2596 = vpack.c.b16 %v2028, %v2024
    %v2597 = vpack.c.b16 %v2033, %v2029
    %v2598 = vpack.c.b16 %v2034, %v2030
    %v2599 = vpack.c.b16 %v2035, %v2031
    %v2600 = vpack.c.b16 %v2036, %v2032
    %v2601 = vpack.c.b16 %v2041, %v2037
    %v2602 = vpack.c.b16 %v2042, %v2038
    %v2603 = vpack.c.b16 %v2043, %v2039
    %v2604 = vpack.c.b16 %v2044, %v2040
    %v2605 = vpack.c.b16 %v2049, %v2045
    %v2606 = vpack.c.b16 %v2050, %v2046
    %v2607 = vpack.c.b16 %v2051, %v2047
    %v2608 = vpack.c.b16 %v2052, %v2048
    %v2609 = vpack.c.b16 %v2057, %v2053
    %v2610 = vpack.c.b16 %v2058, %v2054
    %v2611 = vpack.c.b16 %v2059, %v2055
    %v2612 = vpack.c.b16 %v2060, %v2056
    %v2613 = vpack.c.b16 %v2065, %v2061
    %v2614 = vpack.c.b16 %v2066, %v2062
    %v2615 = vpack.c.b16 %v2067, %v2063
    %v2616 = vpack.c.b16 %v2068, %v2064
    %v2617 = vpack.c.b16 %v2073, %v2069
    %v2618 = vpack.c.b16 %v2074, %v2070
    %v2619 = vpack.c.b16 %v2075, %v2071
    %v2620 = vpack.c.b16 %v2076, %v2072
    %v2621 = vpack.c.b16 %v2081, %v2077
    %v2622 = vpack.c.b16 %v2082, %v2078
    %v2623 = vpack.c.b16 %v2083, %v2079
    %v2624 = vpack.c.b16 %v2084, %v2080
    %v2625 = vpack.c.b16 %v2089, %v2085
    %v2626 = vpack.c.b16 %v2090, %v2086
    %v2627 = vpack.c.b16 %v2091, %v2087
    %v2628 = vpack.c.b16 %v2092, %v2088
    %v2629 = vpack.c.b16 %v2097, %v2093
    %v2630 = vpack.c.b16 %v2098, %v2094
    %v2631 = vpack.c.b16 %v2099, %v2095
    %v2632 = vpack.c.b16 %v2100, %v2096
    %v2633 = vpack.c.b16 %v2105, %v2101
    %v2634 = vpack.c.b16 %v2106, %v2102
    %v2635 = vpack.c.b16 %v2107, %v2103
    %v2636 = vpack.c.b16 %v2108, %v2104
    %v2637 = vpack.c.b16 %v2113, %v2109
    %v2638 = vpack.c.b16 %v2114, %v2110
    %v2639 = vpack.c.b16 %v2115, %v2111
    %v2640 = vpack.c.b16 %v2116, %v2112
    %v2641 = vpack.c.b16 %v2121, %v2117
    %v2642 = vpack.c.b16 %v2122, %v2118
    %v2643 = vpack.c.b16 %v2123, %v2119
    %v2644 = vpack.c.b16 %v2124, %v2120
    %v2645 = vpack.c.b16 %v2129, %v2125
    %v2646 = vpack.c.b16 %v2130, %v2126
    %v2647 = vpack.c.b16 %v2131, %v2127
    %v2648 = vpack.c.b16 %v2132, %v2128
    %v2649 = vpack.c.b16 %v2137, %v2133
    %v2650 = vpack.c.b16 %v2138, %v2134
    %v2651 = vpack.c.b16 %v2139, %v2135
    %v2652 = vpack.c.b16 %v2140, %v2136
    %v2653 = vpack.c.b16 %v2145, %v2141
    %v2654 = vpack.c.b16 %v2146, %v2142
    %v2655 = vpack.c.b16 %v2147, %v2143
    %v2656 = vpack.c.b16 %v2148, %v2144
    %v2657 = vpack.c.b16 %v2153, %v2149
    %v2658 = vpack.c.b16 %v2154, %v2150
    %v2659 = vpack.c.b16 %v2155, %v2151
    %v2660 = vpack.c.b16 %v2156, %v2152
    %v2661 = vpack.c.b16 %v2161, %v2157
    %v2662 = vpack.c.b16 %v2162, %v2158
    %v2663 = vpack.c.b16 %v2163, %v2159
    %v2664 = vpack.c.b16 %v2164, %v2160
    %v2665 = vpack.c.b16 %v2169, %v2165
    %v2666 = vpack.c.b16 %v2170, %v2166
    %v2667 = vpack.c.b16 %v2171, %v2167
    %v2668 = vpack.c.b16 %v2172, %v2168
    %v2669 = vpack.c.b16 %v2177, %v2173
    %v2670 = vpack.c.b16 %v2178, %v2174
    %v2671 = vpack.c.b16 %v2179, %v2175
    %v2672 = vpack.c.b16 %v2180, %v2176
    %v2673 = vpack.c.b16 %v2185, %v2181
    %v2674 = vpack.c.b16 %v2186, %v2182
    %v2675 = vpack.c.b16 %v2187, %v2183
    %v2676 = vpack.c.b16 %v2188, %v2184
    %v2677 = vpack.c.b16 %v2193, %v2189
    %v2678 = vpack.c.b16 %v2194, %v2190
    %v2679 = vpack.c.b16 %v2195, %v2191
    %v2680 = vpack.c.b16 %v2196, %v2192
    %v2681 = vpack.c.b16 %v2201, %v2197
    %v2682 = vpack.c.b16 %v2202, %v2198
    %v2683 = vpack.c.b16 %v2203, %v2199
    %v2684 = vpack.c.b16 %v2204, %v2200
    %v2685 = vpack.c.b16 %v2209, %v2205
    %v2686 = vpack.c.b16 %v2210, %v2206
    %v2687 = vpack.c.b16 %v2211, %v2207
    %v2688 = vpack.c.b16 %v2212, %v2208
    %v2689 = vpack.c.b16 %v2217, %v2213
    %v2690 = vpack.c.b16 %v2218, %v2214
    %v2691 = vpack.c.b16 %v2219, %v2215
    %v2692 = vpack.c.b16 %v2220, %v2216
    %v2693 = vpack.c.b16 %v2225, %v2221
    %v2694 = vpack.c.b16 %v2226, %v2222
    %v2695 = vpack.c.b16 %v2227, %v2223
    %v2696 = vpack.c.b16 %v2228, %v2224
    %v2697 = vpack.c.b16 %v2233, %v2229
    %v2698 = vpack.c.b16 %v2234, %v2230
    %v2699 = vpack.c.b16 %v2235, %v2231
    %v2700 = vpack.c.b16 %v2236, %v2232
    %v2701 = vpack.c.b16 %v2241, %v2237
    %v2702 = vpack.c.b16 %v2242, %v2238
    %v2703 = vpack.c.b16 %v2243, %v2239
    %v2704 = vpack.c.b16 %v2244, %v2240
    %v2705 = vpack.c.b16 %v2249, %v2245
    %v2706 = vpack.c.b16 %v2250, %v2246
    %v2707 = vpack.c.b16 %v2251, %v2247
    %v2708 = vpack.c.b16 %v2252, %v2248
    %v2709 = vpack.c.b16 %v2257, %v2253
    %v2710 = vpack.c.b16 %v2258, %v2254
    %v2711 = vpack.c.b16 %v2259, %v2255
    %v2712 = vpack.c.b16 %v2260, %v2256
    %v2713 = vpack.c.b16 %v2265, %v2261
    %v2714 = vpack.c.b16 %v2266, %v2262
    %v2715 = vpack.c.b16 %v2267, %v2263
    %v2716 = vpack.c.b16 %v2268, %v2264
    %v2717 = vpack.c.b16 %v2273, %v2269
    %v2718 = vpack.c.b16 %v2274, %v2270
    %v2719 = vpack.c.b16 %v2275, %v2271
    %v2720 = vpack.c.b16 %v2276, %v2272
    %v2721 = vpack.c.b16 %v2281, %v2277
    %v2722 = vpack.c.b16 %v2282, %v2278
    %v2723 = vpack.c.b16 %v2283, %v2279
    %v2724 = vpack.c.b16 %v2284, %v2280
    %v2725 = vpack.c.b16 %v2289, %v2285
    %v2726 = vpack.c.b16 %v2290, %v2286
    %v2727 = vpack.c.b16 %v2291, %v2287
    %v2728 = vpack.c.b16 %v2292, %v2288
    %v2729 = vpack.c.b16 %v2297, %v2293
    %v2730 = vpack.c.b16 %v2298, %v2294
    %v2731 = vpack.c.b16 %v2299, %v2295
    %v2732 = vpack.c.b16 %v2300, %v2296
    %v2733 = vpack.c.b16 %v2305, %v2301
    %v2734 = vpack.c.b16 %v2306, %v2302
    %v2735 = vpack.c.b16 %v2307, %v2303
    %v2736 = vpack.c.b16 %v2308, %v2304
    %v2737 = vpack.c.b16 %v2313, %v2309
    %v2738 = vpack.c.b16 %v2314, %v2310
    %v2739 = vpack.c.b16 %v2315, %v2311
    %v2740 = vpack.c.b16 %v2316, %v2312
    %v2741 = vpack.c.b16 %v2321, %v2317
    %v2742 = vpack.c.b16 %v2322, %v2318
    %v2743 = vpack.c.b16 %v2323, %v2319
    %v2744 = vpack.c.b16 %v2324, %v2320
    %v2745 = vpack.c.b16 %v2329, %v2325
    %v2746 = vpack.c.b16 %v2330, %v2326
    %v2747 = vpack.c.b16 %v2331, %v2327
    %v2748 = vpack.c.b16 %v2332, %v2328
    %v2749 = vpack.c.b16 %v2337, %v2333
    %v2750 = vpack.c.b16 %v2338, %v2334
    %v2751 = vpack.c.b16 %v2339, %v2335
    %v2752 = vpack.c.b16 %v2340, %v2336
    %v2753 = vpack.c.b16 %v2345, %v2341
    %v2754 = vpack.c.b16 %v2346, %v2342
    %v2755 = vpack.c.b16 %v2347, %v2343
    %v2756 = vpack.c.b16 %v2348, %v2344
    %v2757 = vpack.c.b16 %v2353, %v2349
    %v2758 = vpack.c.b16 %v2354, %v2350
    %v2759 = vpack.c.b16 %v2355, %v2351
    %v2760 = vpack.c.b16 %v2356, %v2352
    %v2761 = vpack.c.b16 %v2361, %v2357
    %v2762 = vpack.c.b16 %v2362, %v2358
    %v2763 = vpack.c.b16 %v2363, %v2359
    %v2764 = vpack.c.b16 %v2364, %v2360
    %v2765 = vpack.c.b16 %v2369, %v2365
    %v2766 = vpack.c.b16 %v2370, %v2366
    %v2767 = vpack.c.b16 %v2371, %v2367
    %v2768 = vpack.c.b16 %v2372, %v2368
    %v2769 = vpack.c.b16 %v2377, %v2373
    %v2770 = vpack.c.b16 %v2378, %v2374
    %v2771 = vpack.c.b16 %v2379, %v2375
    %v2772 = vpack.c.b16 %v2380, %v2376
    %v2773 = vpack.c.b16 %v2385, %v2381
    %v2774 = vpack.c.b16 %v2386, %v2382
    %v2775 = vpack.c.b16 %v2387, %v2383
    %v2776 = vpack.c.b16 %v2388, %v2384
    %v2777 = vpack.c.b16 %v2393, %v2389
    %v2778 = vpack.c.b16 %v2394, %v2390
    %v2779 = vpack.c.b16 %v2395, %v2391
    %v2780 = vpack.c.b16 %v2396, %v2392
    %3165 = vmatprep.subr.bf16.mxu0 %v2398
    %3166 = vmatpush1.bf16.msra.mxu0 %v2397
    %3167 = vmatprep.subr.bf16.mxu0 %v2402
    %3168 = vmatpush1.bf16.msra.mxu0 %v2401
    %3169 = vmatprep.subr.bf16.mxu0 %v2406
    %3170 = vmatpush1.bf16.msra.mxu0 %v2405
    %3171 = vmatprep.subr.bf16.mxu0 %v2410
    %3172 = vmatpush1.bf16.msra.mxu0 %v2409
    %3173 = vmatprep.subr.bf16.mxu0 %v2414
    %3174 = vmatpush1.bf16.msra.mxu0 %v2413
    %3175 = vmatprep.subr.bf16.mxu0 %v2418
    %3176 = vmatpush1.bf16.msra.mxu0 %v2417
    %3177 = vmatprep.subr.bf16.mxu0 %v2422
    %3178 = vmatpush1.bf16.msra.mxu0 %v2421
    %3179 = vmatprep.subr.bf16.mxu0 %v2426
    %3180 = vmatpush1.bf16.msra.mxu0 %v2425
    %3181 = vmatprep.subr.bf16.mxu0 %v2430
    %3182 = vmatpush1.bf16.msra.mxu0 %v2429
    %3183 = vmatprep.subr.bf16.mxu0 %v2434
    %3184 = vmatpush1.bf16.msra.mxu0 %v2433
    %3185 = vmatprep.subr.bf16.mxu0 %v2438
    %3186 = vmatpush1.bf16.msra.mxu0 %v2437
    %3187 = vmatprep.subr.bf16.mxu0 %v2442
    %3188 = vmatpush1.bf16.msra.mxu0 %v2441
    %3189 = vmatprep.subr.bf16.mxu0 %v2446
    %3190 = vmatpush1.bf16.msra.mxu0 %v2445
    %3191 = vmatprep.subr.bf16.mxu0 %v2450
    %3192 = vmatpush1.bf16.msra.mxu0 %v2449
    %3193 = vmatprep.subr.bf16.mxu0 %v2454
    %3194 = vmatpush1.bf16.msra.mxu0 %v2453
    %3195 = vmatprep.subr.bf16.mxu0 %v2458
    %3196 = vmatpush1.bf16.msra.mxu0 %v2457
    %3197 = vmatprep.mubr.bf16.mxu0 %v828
    %3198 = vmatmul.mubr.bf16.gmra.mrb[0].mxu0 %v827
    %v3199 = vpop.f32.mrb[0].mxu0
    %v3200 = vadd.f32 %v1228, %v3199
    %v3201 = vpop.f32.mrb[0].mxu0
    %v3202 = vadd.f32 %v1232, %v3201
    %v3203 = vpop.f32.mrb[0].mxu0
    %v3204 = vpop.f32.mrb[0].mxu0
    %3205 = vdwg.mxu0
    %3206 = vmatprep.subr.bf16.mxu0 %v2462
    %3207 = vmatpush1.bf16.msra.mxu0 %v2461
    %3208 = vmatprep.subr.bf16.mxu0 %v2466
    %3209 = vmatpush1.bf16.msra.mxu0 %v2465
    %3210 = vmatprep.subr.bf16.mxu0 %v2470
    %3211 = vmatpush1.bf16.msra.mxu0 %v2469
    %3212 = vmatprep.subr.bf16.mxu0 %v2474
    %3213 = vmatpush1.bf16.msra.mxu0 %v2473
    %3214 = vmatprep.subr.bf16.mxu0 %v2478
    %3215 = vmatpush1.bf16.msra.mxu0 %v2477
    %3216 = vmatprep.subr.bf16.mxu0 %v2482
    %3217 = vmatpush1.bf16.msra.mxu0 %v2481
    %3218 = vmatprep.subr.bf16.mxu0 %v2486
    %3219 = vmatpush1.bf16.msra.mxu0 %v2485
    %3220 = vmatprep.subr.bf16.mxu0 %v2490
    %3221 = vmatpush1.bf16.msra.mxu0 %v2489
    %3222 = vmatprep.subr.bf16.mxu0 %v2494
    %3223 = vmatpush1.bf16.msra.mxu0 %v2493
    %3224 = vmatprep.subr.bf16.mxu0 %v2498
    %3225 = vmatpush1.bf16.msra.mxu0 %v2497
    %3226 = vmatprep.subr.bf16.mxu0 %v2502
    %3227 = vmatpush1.bf16.msra.mxu0 %v2501
    %3228 = vmatprep.subr.bf16.mxu0 %v2506
    %3229 = vmatpush1.bf16.msra.mxu0 %v2505
    %3230 = vmatprep.subr.bf16.mxu0 %v2510
    %3231 = vmatpush1.bf16.msra.mxu0 %v2509
    %3232 = vmatprep.subr.bf16.mxu0 %v2514
    %3233 = vmatpush1.bf16.msra.mxu0 %v2513
    %3234 = vmatprep.subr.bf16.mxu0 %v2518
    %3235 = vmatpush1.bf16.msra.mxu0 %v2517
    %3236 = vmatprep.subr.bf16.mxu0 %v2522
    %3237 = vmatpush1.bf16.msra.mxu0 %v2521
    %3238 = vmatprep.mubr.bf16.mxu0 %v830
    %3239 = vmatmul.mubr.bf16.gmra.mrb[0].mxu0 %v829
    %v3240 = vpop.f32.mrb[0].mxu0
    %v3241 = vadd.f32 %v3200, %v3240
    %v3242 = vpop.f32.mrb[0].mxu0
    %v3243 = vadd.f32 %v3202, %v3242
    %v3244 = vpop.f32.mrb[0].mxu0
    %v3245 = vpop.f32.mrb[0].mxu0
    %3246 = vdwg.mxu0
    %3247 = vmatprep.subr.bf16.mxu0 %v2526
    %3248 = vmatpush1.bf16.msra.mxu0 %v2525
    %3249 = vmatprep.subr.bf16.mxu0 %v2530
    %3250 = vmatpush1.bf16.msra.mxu0 %v2529
    %3251 = vmatprep.subr.bf16.mxu0 %v2534
    %3252 = vmatpush1.bf16.msra.mxu0 %v2533
    %3253 = vmatprep.subr.bf16.mxu0 %v2538
    %3254 = vmatpush1.bf16.msra.mxu0 %v2537
    %3255 = vmatprep.subr.bf16.mxu0 %v2542
    %3256 = vmatpush1.bf16.msra.mxu0 %v2541
    %3257 = vmatprep.subr.bf16.mxu0 %v2546
    %3258 = vmatpush1.bf16.msra.mxu0 %v2545
    %3259 = vmatprep.subr.bf16.mxu0 %v2550
    %3260 = vmatpush1.bf16.msra.mxu0 %v2549
    %3261 = vmatprep.subr.bf16.mxu0 %v2554
    %3262 = vmatpush1.bf16.msra.mxu0 %v2553
    %3263 = vmatprep.subr.bf16.mxu0 %v2558
    %3264 = vmatpush1.bf16.msra.mxu0 %v2557
    %3265 = vmatprep.subr.bf16.mxu0 %v2562
    %3266 = vmatpush1.bf16.msra.mxu0 %v2561
    %3267 = vmatprep.subr.bf16.mxu0 %v2566
    %3268 = vmatpush1.bf16.msra.mxu0 %v2565
    %3269 = vmatprep.subr.bf16.mxu0 %v2570
    %3270 = vmatpush1.bf16.msra.mxu0 %v2569
    %3271 = vmatprep.subr.bf16.mxu0 %v2574
    %3272 = vmatpush1.bf16.msra.mxu0 %v2573
    %3273 = vmatprep.subr.bf16.mxu0 %v2578
    %3274 = vmatpush1.bf16.msra.mxu0 %v2577
    %3275 = vmatprep.subr.bf16.mxu0 %v2582
    %3276 = vmatpush1.bf16.msra.mxu0 %v2581
    %3277 = vmatprep.subr.bf16.mxu0 %v2586
    %3278 = vmatpush1.bf16.msra.mxu0 %v2585
    %3279 = vmatprep.mubr.bf16.mxu0 %v832
    %3280 = vmatmul.mubr.bf16.gmra.mrb[0].mxu0 %v831
    %v3281 = vpop.f32.mrb[0].mxu0
    %v3282 = vadd.f32 %v3241, %v3281
    %v3283 = vpop.f32.mrb[0].mxu0
    %v3284 = vadd.f32 %v3243, %v3283
    %v3285 = vpop.f32.mrb[0].mxu0
    %v3286 = vpop.f32.mrb[0].mxu0
    %3287 = vdwg.mxu0
    %3288 = vmatprep.subr.bf16.mxu0 %v2590
    %3289 = vmatpush1.bf16.msra.mxu0 %v2589
    %3290 = vmatprep.subr.bf16.mxu0 %v2594
    %3291 = vmatpush1.bf16.msra.mxu0 %v2593
    %3292 = vmatprep.subr.bf16.mxu0 %v2598
    %3293 = vmatpush1.bf16.msra.mxu0 %v2597
    %3294 = vmatprep.subr.bf16.mxu0 %v2602
    %3295 = vmatpush1.bf16.msra.mxu0 %v2601
    %3296 = vmatprep.subr.bf16.mxu0 %v2606
    %3297 = vmatpush1.bf16.msra.mxu0 %v2605
    %3298 = vmatprep.subr.bf16.mxu0 %v2610
    %3299 = vmatpush1.bf16.msra.mxu0 %v2609
    %3300 = vmatprep.subr.bf16.mxu0 %v2614
    %3301 = vmatpush1.bf16.msra.mxu0 %v2613
    %3302 = vmatprep.subr.bf16.mxu0 %v2618
    %3303 = vmatpush1.bf16.msra.mxu0 %v2617
    %3304 = vmatprep.subr.bf16.mxu0 %v2622
    %3305 = vmatpush1.bf16.msra.mxu0 %v2621
    %3306 = vmatprep.subr.bf16.mxu0 %v2626
    %3307 = vmatpush1.bf16.msra.mxu0 %v2625
    %3308 = vmatprep.subr.bf16.mxu0 %v2630
    %3309 = vmatpush1.bf16.msra.mxu0 %v2629
    %3310 = vmatprep.subr.bf16.mxu0 %v2634
    %3311 = vmatpush1.bf16.msra.mxu0 %v2633
    %3312 = vmatprep.subr.bf16.mxu0 %v2638
    %3313 = vmatpush1.bf16.msra.mxu0 %v2637
    %3314 = vmatprep.subr.bf16.mxu0 %v2642
    %3315 = vmatpush1.bf16.msra.mxu0 %v2641
    %3316 = vmatprep.subr.bf16.mxu0 %v2646
    %3317 = vmatpush1.bf16.msra.mxu0 %v2645
    %3318 = vmatprep.subr.bf16.mxu0 %v2650
    %3319 = vmatpush1.bf16.msra.mxu0 %v2649
    %3320 = vmatprep.mubr.bf16.mxu0 %v834
    %3321 = vmatmul.mubr.bf16.gmra.mrb[0].mxu0 %v833
    %v3322 = vpop.f32.mrb[0].mxu0
    %v3323 = vadd.f32 %v3282, %v3322
    %v3324 = vpop.f32.mrb[0].mxu0
    %v3325 = vadd.f32 %v3284, %v3324
    %v3326 = vpop.f32.mrb[0].mxu0
    %v3327 = vpop.f32.mrb[0].mxu0
    %3328 = vdwg.mxu0
    %3329 = vmatprep.subr.bf16.mxu0 %v2654
    %3330 = vmatpush1.bf16.msra.mxu0 %v2653
    %3331 = vmatprep.subr.bf16.mxu0 %v2658
    %3332 = vmatpush1.bf16.msra.mxu0 %v2657
    %3333 = vmatprep.subr.bf16.mxu0 %v2662
    %3334 = vmatpush1.bf16.msra.mxu0 %v2661
    %3335 = vmatprep.subr.bf16.mxu0 %v2666
    %3336 = vmatpush1.bf16.msra.mxu0 %v2665
    %3337 = vmatprep.subr.bf16.mxu0 %v2670
    %3338 = vmatpush1.bf16.msra.mxu0 %v2669
    %3339 = vmatprep.subr.bf16.mxu0 %v2674
    %3340 = vmatpush1.bf16.msra.mxu0 %v2673
    %3341 = vmatprep.subr.bf16.mxu0 %v2678
    %3342 = vmatpush1.bf16.msra.mxu0 %v2677
    %3343 = vmatprep.subr.bf16.mxu0 %v2682
    %3344 = vmatpush1.bf16.msra.mxu0 %v2681
    %3345 = vmatprep.subr.bf16.mxu0 %v2686
    %3346 = vmatpush1.bf16.msra.mxu0 %v2685
    %3347 = vmatprep.subr.bf16.mxu0 %v2690
    %3348 = vmatpush1.bf16.msra.mxu0 %v2689
    %3349 = vmatprep.subr.bf16.mxu0 %v2694
    %3350 = vmatpush1.bf16.msra.mxu0 %v2693
    %3351 = vmatprep.subr.bf16.mxu0 %v2698
    %3352 = vmatpush1.bf16.msra.mxu0 %v2697
    %3353 = vmatprep.subr.bf16.mxu0 %v2702
    %3354 = vmatpush1.bf16.msra.mxu0 %v2701
    %3355 = vmatprep.subr.bf16.mxu0 %v2706
    %3356 = vmatpush1.bf16.msra.mxu0 %v2705
    %3357 = vmatprep.subr.bf16.mxu0 %v2710
    %3358 = vmatpush1.bf16.msra.mxu0 %v2709
    %3359 = vmatprep.subr.bf16.mxu0 %v2714
    %3360 = vmatpush1.bf16.msra.mxu0 %v2713
    %3361 = vmatprep.mubr.bf16.mxu0 %v836
    %3362 = vmatmul.mubr.bf16.gmra.mrb[0].mxu0 %v835
    %v3363 = vpop.f32.mrb[0].mxu0
    %v3364 = vadd.f32 %v3323, %v3363
    %v3365 = vpop.f32.mrb[0].mxu0
    %v3366 = vadd.f32 %v3325, %v3365
    %v3367 = vpop.f32.mrb[0].mxu0
    %v3368 = vpop.f32.mrb[0].mxu0
    %3369 = vdwg.mxu0
    %3370 = vmatprep.subr.bf16.mxu0 %v2718
    %3371 = vmatpush1.bf16.msra.mxu0 %v2717
    %3372 = vmatprep.subr.bf16.mxu0 %v2722
    %3373 = vmatpush1.bf16.msra.mxu0 %v2721
    %3374 = vmatprep.subr.bf16.mxu0 %v2726
    %3375 = vmatpush1.bf16.msra.mxu0 %v2725
    %3376 = vmatprep.subr.bf16.mxu0 %v2730
    %3377 = vmatpush1.bf16.msra.mxu0 %v2729
    %3378 = vmatprep.subr.bf16.mxu0 %v2734
    %3379 = vmatpush1.bf16.msra.mxu0 %v2733
    %3380 = vmatprep.subr.bf16.mxu0 %v2738
    %3381 = vmatpush1.bf16.msra.mxu0 %v2737
    %3382 = vmatprep.subr.bf16.mxu0 %v2742
    %3383 = vmatpush1.bf16.msra.mxu0 %v2741
    %3384 = vmatprep.subr.bf16.mxu0 %v2746
    %3385 = vmatpush1.bf16.msra.mxu0 %v2745
    %3386 = vmatprep.subr.bf16.mxu0 %v2750
    %3387 = vmatpush1.bf16.msra.mxu0 %v2749
    %3388 = vmatprep.subr.bf16.mxu0 %v2754
    %3389 = vmatpush1.bf16.msra.mxu0 %v2753
    %3390 = vmatprep.subr.bf16.mxu0 %v2758
    %3391 = vmatpush1.bf16.msra.mxu0 %v2757
    %3392 = vmatprep.subr.bf16.mxu0 %v2762
    %3393 = vmatpush1.bf16.msra.mxu0 %v2761
    %3394 = vmatprep.subr.bf16.mxu0 %v2766
    %3395 = vmatpush1.bf16.msra.mxu0 %v2765
    %3396 = vmatprep.subr.bf16.mxu0 %v2770
    %3397 = vmatpush1.bf16.msra.mxu0 %v2769
    %3398 = vmatprep.subr.bf16.mxu0 %v2774
    %3399 = vmatpush1.bf16.msra.mxu0 %v2773
    %3400 = vmatprep.subr.bf16.mxu0 %v2778
    %3401 = vmatpush1.bf16.msra.mxu0 %v2777
    %3402 = vmatprep.mubr.bf16.mxu0 %v838
    %3403 = vmatmul.mubr.bf16.gmra.mrb[0].mxu0 %v837
    %v3404 = vpop.f32.mrb[0].mxu0
    %v3405 = vadd.f32 %v3364, %v3404
    %v3406 = vpop.f32.mrb[0].mxu0
    %v3407 = vadd.f32 %v3366, %v3406
    %v3408 = vpop.f32.mrb[0].mxu0
    %v3409 = vpop.f32.mrb[0].mxu0
    %3410 = vdwg.mxu0
    %3411 = vmatprep.subr.bf16.mxu0 %v2400
    %3412 = vmatpush1.bf16.msra.mxu0 %v2399
    %3413 = vmatprep.subr.bf16.mxu0 %v2404
    %3414 = vmatpush1.bf16.msra.mxu0 %v2403
    %3415 = vmatprep.subr.bf16.mxu0 %v2408
    %3416 = vmatpush1.bf16.msra.mxu0 %v2407
    %3417 = vmatprep.subr.bf16.mxu0 %v2412
    %3418 = vmatpush1.bf16.msra.mxu0 %v2411
    %3419 = vmatprep.subr.bf16.mxu0 %v2416
    %3420 = vmatpush1.bf16.msra.mxu0 %v2415
    %3421 = vmatprep.subr.bf16.mxu0 %v2420
    %3422 = vmatpush1.bf16.msra.mxu0 %v2419
    %3423 = vmatprep.subr.bf16.mxu0 %v2424
    %3424 = vmatpush1.bf16.msra.mxu0 %v2423
    %3425 = vmatprep.subr.bf16.mxu0 %v2428
    %3426 = vmatpush1.bf16.msra.mxu0 %v2427
    %3427 = vmatprep.subr.bf16.mxu0 %v2432
    %3428 = vmatpush1.bf16.msra.mxu0 %v2431
    %3429 = vmatprep.subr.bf16.mxu0 %v2436
    %3430 = vmatpush1.bf16.msra.mxu0 %v2435
    %3431 = vmatprep.subr.bf16.mxu0 %v2440
    %3432 = vmatpush1.bf16.msra.mxu0 %v2439
    %3433 = vmatprep.subr.bf16.mxu0 %v2444
    %3434 = vmatpush1.bf16.msra.mxu0 %v2443
    %3435 = vmatprep.subr.bf16.mxu0 %v2448
    %3436 = vmatpush1.bf16.msra.mxu0 %v2447
    %3437 = vmatprep.subr.bf16.mxu0 %v2452
    %3438 = vmatpush1.bf16.msra.mxu0 %v2451
    %3439 = vmatprep.subr.bf16.mxu0 %v2456
    %3440 = vmatpush1.bf16.msra.mxu0 %v2455
    %3441 = vmatprep.subr.bf16.mxu0 %v2460
    %3442 = vmatpush1.bf16.msra.mxu0 %v2459
    %3443 = vmatprep.mubr.bf16.mxu0 %v828
    %3444 = vmatmul.mubr.bf16.gmra.mrb[0].mxu0 %v827
    %v3445 = vpop.f32.mrb[0].mxu0
    %v3446 = vadd.f32 %v1236, %v3445
    %v3447 = vpop.f32.mrb[0].mxu0
    %v3448 = vadd.f32 %v1240, %v3447
    %v3449 = vpop.f32.mrb[0].mxu0
    %v3450 = vpop.f32.mrb[0].mxu0
    %3451 = vdwg.mxu0
    %3452 = vmatprep.subr.bf16.mxu0 %v2464
    %3453 = vmatpush1.bf16.msra.mxu0 %v2463
    %3454 = vmatprep.subr.bf16.mxu0 %v2468
    %3455 = vmatpush1.bf16.msra.mxu0 %v2467
    %3456 = vmatprep.subr.bf16.mxu0 %v2472
    %3457 = vmatpush1.bf16.msra.mxu0 %v2471
    %3458 = vmatprep.subr.bf16.mxu0 %v2476
    %3459 = vmatpush1.bf16.msra.mxu0 %v2475
    %3460 = vmatprep.subr.bf16.mxu0 %v2480
    %3461 = vmatpush1.bf16.msra.mxu0 %v2479
    %3462 = vmatprep.subr.bf16.mxu0 %v2484
    %3463 = vmatpush1.bf16.msra.mxu0 %v2483
    %3464 = vmatprep.subr.bf16.mxu0 %v2488
    %3465 = vmatpush1.bf16.msra.mxu0 %v2487
    %3466 = vmatprep.subr.bf16.mxu0 %v2492
    %3467 = vmatpush1.bf16.msra.mxu0 %v2491
    %3468 = vmatprep.subr.bf16.mxu0 %v2496
    %3469 = vmatpush1.bf16.msra.mxu0 %v2495
    %3470 = vmatprep.subr.bf16.mxu0 %v2500
    %3471 = vmatpush1.bf16.msra.mxu0 %v2499
    %3472 = vmatprep.subr.bf16.mxu0 %v2504
    %3473 = vmatpush1.bf16.msra.mxu0 %v2503
    %3474 = vmatprep.subr.bf16.mxu0 %v2508
    %3475 = vmatpush1.bf16.msra.mxu0 %v2507
    %3476 = vmatprep.subr.bf16.mxu0 %v2512
    %3477 = vmatpush1.bf16.msra.mxu0 %v2511
    %3478 = vmatprep.subr.bf16.mxu0 %v2516
    %3479 = vmatpush1.bf16.msra.mxu0 %v2515
    %3480 = vmatprep.subr.bf16.mxu0 %v2520
    %3481 = vmatpush1.bf16.msra.mxu0 %v2519
    %3482 = vmatprep.subr.bf16.mxu0 %v2524
    %3483 = vmatpush1.bf16.msra.mxu0 %v2523
    %3484 = vmatprep.mubr.bf16.mxu0 %v830
    %3485 = vmatmul.mubr.bf16.gmra.mrb[0].mxu0 %v829
    %v3486 = vpop.f32.mrb[0].mxu0
    %v3487 = vadd.f32 %v3446, %v3486
    %v3488 = vpop.f32.mrb[0].mxu0
    %v3489 = vadd.f32 %v3448, %v3488
    %v3490 = vpop.f32.mrb[0].mxu0
    %v3491 = vpop.f32.mrb[0].mxu0
    %3492 = vdwg.mxu0
    %3493 = vmatprep.subr.bf16.mxu0 %v2528
    %3494 = vmatpush1.bf16.msra.mxu0 %v2527
    %3495 = vmatprep.subr.bf16.mxu0 %v2532
    %3496 = vmatpush1.bf16.msra.mxu0 %v2531
    %3497 = vmatprep.subr.bf16.mxu0 %v2536
    %3498 = vmatpush1.bf16.msra.mxu0 %v2535
    %3499 = vmatprep.subr.bf16.mxu0 %v2540
    %3500 = vmatpush1.bf16.msra.mxu0 %v2539
    %3501 = vmatprep.subr.bf16.mxu0 %v2544
    %3502 = vmatpush1.bf16.msra.mxu0 %v2543
    %3503 = vmatprep.subr.bf16.mxu0 %v2548
    %3504 = vmatpush1.bf16.msra.mxu0 %v2547
    %3505 = vmatprep.subr.bf16.mxu0 %v2552
    %3506 = vmatpush1.bf16.msra.mxu0 %v2551
    %3507 = vmatprep.subr.bf16.mxu0 %v2556
    %3508 = vmatpush1.bf16.msra.mxu0 %v2555
    %3509 = vmatprep.subr.bf16.mxu0 %v2560
    %3510 = vmatpush1.bf16.msra.mxu0 %v2559
    %3511 = vmatprep.subr.bf16.mxu0 %v2564
    %3512 = vmatpush1.bf16.msra.mxu0 %v2563
    %3513 = vmatprep.subr.bf16.mxu0 %v2568
    %3514 = vmatpush1.bf16.msra.mxu0 %v2567
    %3515 = vmatprep.subr.bf16.mxu0 %v2572
    %3516 = vmatpush1.bf16.msra.mxu0 %v2571
    %3517 = vmatprep.subr.bf16.mxu0 %v2576
    %3518 = vmatpush1.bf16.msra.mxu0 %v2575
    %3519 = vmatprep.subr.bf16.mxu0 %v2580
    %3520 = vmatpush1.bf16.msra.mxu0 %v2579
    %3521 = vmatprep.subr.bf16.mxu0 %v2584
    %3522 = vmatpush1.bf16.msra.mxu0 %v2583
    %3523 = vmatprep.subr.bf16.mxu0 %v2588
    %3524 = vmatpush1.bf16.msra.mxu0 %v2587
    %3525 = vmatprep.mubr.bf16.mxu0 %v832
    %3526 = vmatmul.mubr.bf16.gmra.mrb[0].mxu0 %v831
    %v3527 = vpop.f32.mrb[0].mxu0
    %v3528 = vadd.f32 %v3487, %v3527
    %v3529 = vpop.f32.mrb[0].mxu0
    %v3530 = vadd.f32 %v3489, %v3529
    %v3531 = vpop.f32.mrb[0].mxu0
    %v3532 = vpop.f32.mrb[0].mxu0
    %3533 = vdwg.mxu0
    %3534 = vmatprep.subr.bf16.mxu0 %v2592
    %3535 = vmatpush1.bf16.msra.mxu0 %v2591
    %3536 = vmatprep.subr.bf16.mxu0 %v2596
    %3537 = vmatpush1.bf16.msra.mxu0 %v2595
    %3538 = vmatprep.subr.bf16.mxu0 %v2600
    %3539 = vmatpush1.bf16.msra.mxu0 %v2599
    %3540 = vmatprep.subr.bf16.mxu0 %v2604
    %3541 = vmatpush1.bf16.msra.mxu0 %v2603
    %3542 = vmatprep.subr.bf16.mxu0 %v2608
    %3543 = vmatpush1.bf16.msra.mxu0 %v2607
    %3544 = vmatprep.subr.bf16.mxu0 %v2612
    %3545 = vmatpush1.bf16.msra.mxu0 %v2611
    %3546 = vmatprep.subr.bf16.mxu0 %v2616
    %3547 = vmatpush1.bf16.msra.mxu0 %v2615
    %3548 = vmatprep.subr.bf16.mxu0 %v2620
    %3549 = vmatpush1.bf16.msra.mxu0 %v2619
    %3550 = vmatprep.subr.bf16.mxu0 %v2624
    %3551 = vmatpush1.bf16.msra.mxu0 %v2623
    %3552 = vmatprep.subr.bf16.mxu0 %v2628
    %3553 = vmatpush1.bf16.msra.mxu0 %v2627
    %3554 = vmatprep.subr.bf16.mxu0 %v2632
    %3555 = vmatpush1.bf16.msra.mxu0 %v2631
    %3556 = vmatprep.subr.bf16.mxu0 %v2636
    %3557 = vmatpush1.bf16.msra.mxu0 %v2635
    %3558 = vmatprep.subr.bf16.mxu0 %v2640
    %3559 = vmatpush1.bf16.msra.mxu0 %v2639
    %3560 = vmatprep.subr.bf16.mxu0 %v2644
    %3561 = vmatpush1.bf16.msra.mxu0 %v2643
    %3562 = vmatprep.subr.bf16.mxu0 %v2648
    %3563 = vmatpush1.bf16.msra.mxu0 %v2647
    %3564 = vmatprep.subr.bf16.mxu0 %v2652
    %3565 = vmatpush1.bf16.msra.mxu0 %v2651
    %3566 = vmatprep.mubr.bf16.mxu0 %v834
    %3567 = vmatmul.mubr.bf16.gmra.mrb[0].mxu0 %v833
    %v3568 = vpop.f32.mrb[0].mxu0
    %v3569 = vadd.f32 %v3528, %v3568
    %v3570 = vpop.f32.mrb[0].mxu0
    %v3571 = vadd.f32 %v3530, %v3570
    %v3572 = vpop.f32.mrb[0].mxu0
    %v3573 = vpop.f32.mrb[0].mxu0
    %3574 = vdwg.mxu0
    %3575 = vmatprep.subr.bf16.mxu0 %v2656
    %3576 = vmatpush1.bf16.msra.mxu0 %v2655
    %3577 = vmatprep.subr.bf16.mxu0 %v2660
    %3578 = vmatpush1.bf16.msra.mxu0 %v2659
    %3579 = vmatprep.subr.bf16.mxu0 %v2664
    %3580 = vmatpush1.bf16.msra.mxu0 %v2663
    %3581 = vmatprep.subr.bf16.mxu0 %v2668
    %3582 = vmatpush1.bf16.msra.mxu0 %v2667
    %3583 = vmatprep.subr.bf16.mxu0 %v2672
    %3584 = vmatpush1.bf16.msra.mxu0 %v2671
    %3585 = vmatprep.subr.bf16.mxu0 %v2676
    %3586 = vmatpush1.bf16.msra.mxu0 %v2675
    %3587 = vmatprep.subr.bf16.mxu0 %v2680
    %3588 = vmatpush1.bf16.msra.mxu0 %v2679
    %3589 = vmatprep.subr.bf16.mxu0 %v2684
    %3590 = vmatpush1.bf16.msra.mxu0 %v2683
    %3591 = vmatprep.subr.bf16.mxu0 %v2688
    %3592 = vmatpush1.bf16.msra.mxu0 %v2687
    %3593 = vmatprep.subr.bf16.mxu0 %v2692
    %3594 = vmatpush1.bf16.msra.mxu0 %v2691
    %3595 = vmatprep.subr.bf16.mxu0 %v2696
    %3596 = vmatpush1.bf16.msra.mxu0 %v2695
    %3597 = vmatprep.subr.bf16.mxu0 %v2700
    %3598 = vmatpush1.bf16.msra.mxu0 %v2699
    %3599 = vmatprep.subr.bf16.mxu0 %v2704
    %3600 = vmatpush1.bf16.msra.mxu0 %v2703
    %3601 = vmatprep.subr.bf16.mxu0 %v2708
    %3602 = vmatpush1.bf16.msra.mxu0 %v2707
    %3603 = vmatprep.subr.bf16.mxu0 %v2712
    %3604 = vmatpush1.bf16.msra.mxu0 %v2711
    %3605 = vmatprep.subr.bf16.mxu0 %v2716
    %3606 = vmatpush1.bf16.msra.mxu0 %v2715
    %3607 = vmatprep.mubr.bf16.mxu0 %v836
    %3608 = vmatmul.mubr.bf16.gmra.mrb[0].mxu0 %v835
    %v3609 = vpop.f32.mrb[0].mxu0
    %v3610 = vadd.f32 %v3569, %v3609
    %v3611 = vpop.f32.mrb[0].mxu0
    %v3612 = vadd.f32 %v3571, %v3611
    %v3613 = vpop.f32.mrb[0].mxu0
    %v3614 = vpop.f32.mrb[0].mxu0
    %3615 = vdwg.mxu0
    %3616 = vmatprep.subr.bf16.mxu0 %v2720
    %3617 = vmatpush1.bf16.msra.mxu0 %v2719
    %3618 = vmatprep.subr.bf16.mxu0 %v2724
    %3619 = vmatpush1.bf16.msra.mxu0 %v2723
    %3620 = vmatprep.subr.bf16.mxu0 %v2728
    %3621 = vmatpush1.bf16.msra.mxu0 %v2727
    %3622 = vmatprep.subr.bf16.mxu0 %v2732
    %3623 = vmatpush1.bf16.msra.mxu0 %v2731
    %3624 = vmatprep.subr.bf16.mxu0 %v2736
    %3625 = vmatpush1.bf16.msra.mxu0 %v2735
    %3626 = vmatprep.subr.bf16.mxu0 %v2740
    %3627 = vmatpush1.bf16.msra.mxu0 %v2739
    %3628 = vmatprep.subr.bf16.mxu0 %v2744
    %3629 = vmatpush1.bf16.msra.mxu0 %v2743
    %3630 = vmatprep.subr.bf16.mxu0 %v2748
    %3631 = vmatpush1.bf16.msra.mxu0 %v2747
    %3632 = vmatprep.subr.bf16.mxu0 %v2752
    %3633 = vmatpush1.bf16.msra.mxu0 %v2751
    %3634 = vmatprep.subr.bf16.mxu0 %v2756
    %3635 = vmatpush1.bf16.msra.mxu0 %v2755
    %3636 = vmatprep.subr.bf16.mxu0 %v2760
    %3637 = vmatpush1.bf16.msra.mxu0 %v2759
    %3638 = vmatprep.subr.bf16.mxu0 %v2764
    %3639 = vmatpush1.bf16.msra.mxu0 %v2763
    %3640 = vmatprep.subr.bf16.mxu0 %v2768
    %3641 = vmatpush1.bf16.msra.mxu0 %v2767
    %3642 = vmatprep.subr.bf16.mxu0 %v2772
    %3643 = vmatpush1.bf16.msra.mxu0 %v2771
    %3644 = vmatprep.subr.bf16.mxu0 %v2776
    %3645 = vmatpush1.bf16.msra.mxu0 %v2775
    %3646 = vmatprep.subr.bf16.mxu0 %v2780
    %3647 = vmatpush1.bf16.msra.mxu0 %v2779
    %3648 = vmatprep.mubr.bf16.mxu0 %v838
    %3649 = vmatmul.mubr.bf16.gmra.mrb[0].mxu0 %v837
    %v3650 = vpop.f32.mrb[0].mxu0
    %v3651 = vadd.f32 %v3610, %v3650
    %v3652 = vpop.f32.mrb[0].mxu0
    %v3653 = vadd.f32 %v3612, %v3652
    %v3654 = vpop.f32.mrb[0].mxu0
    %v3655 = vpop.f32.mrb[0].mxu0
    %3656 = vdwg.mxu0
    %v3657 = vxor.u32 %v3405, 2147483648
    %v3658 = vxor.u32 %v3407, 2147483648
    %v3659 = vxor.u32 %v3651, 2147483648
    %v3660 = vxor.u32 %v3653, 2147483648
    %v3661 = vmul.f32 %v3657, 1.442695
    %v3662 = vpow.pop %v3661
    %v3663 = vmul.f32 %v3658, 1.442695
    %v3664 = vpow.pop %v3663
    %v3665 = vmul.f32 %v3659, 1.442695
    %v3666 = vpow.pop %v3665
    %v3667 = vmul.f32 %v3660, 1.442695
    %v3668 = vpow.pop %v3667
    %v3669 = vadd.f32 %v3662, 1.0
    %v3670 = vadd.f32 %v3664, 1.0
    %v3671 = vadd.f32 %v3666, 1.0
    %v3672 = vadd.f32 %v3668, 1.0
    %v3673 = vrcp.pop %v3669
    %v3674 = vmul.f32 1.0, %v3673
    %v3675 = vrcp.pop %v3670
    %v3676 = vmul.f32 1.0, %v3675
    %v3677 = vrcp.pop %v3671
    %v3678 = vmul.f32 1.0, %v3677
    %v3679 = vrcp.pop %v3672
    %v3680 = vmul.f32 1.0, %v3679
    %v3681 = vpack.c.bf16 %v3674, %v3674
    %v3682 = vpack.c.bf16 %v3676, %v3676
    %v3683 = vpack.c.bf16 %v3678, %v3678
    %v3684 = vpack.c.bf16 %v3680, %v3680
    %v3685 = vld [vmem:[#allocation13] sm:$0xff]
    %v3686 = vld [vmem:[#allocation13 + $0x8] sm:$0xff]
    %v3687 = vld [vmem:[#allocation13 + $0x10] sm:$0xff]
    %v3688 = vld [vmem:[#allocation13 + $0x18] sm:$0xff]
    %v3689 = vld [vmem:[#allocation13 + $0x20] sm:$0xff]
    %v3690 = vld [vmem:[#allocation13 + $0x28] sm:$0xff]
    %v3691 = vld [vmem:[#allocation13 + $0x30] sm:$0xff]
    %v3692 = vld [vmem:[#allocation13 + $0x38] sm:$0xff]
    %v3693 = vld [vmem:[#allocation13 + $0x40] sm:$0xff]
    %v3694 = vld [vmem:[#allocation13 + $0x48] sm:$0xff]
    %v3695 = vld [vmem:[#allocation13 + $0x50] sm:$0xff]
    %v3696 = vld [vmem:[#allocation13 + $0x58] sm:$0xff]
    %v3697 = vld [vmem:[#allocation13 + $0x60] sm:$0xff]
    %v3698 = vld [vmem:[#allocation13 + $0x68] sm:$0xff]
    %v3699 = vld [vmem:[#allocation13 + $0x70] sm:$0xff]
    %v3700 = vld [vmem:[#allocation13 + $0x78] sm:$0xff]
    %v3701 = vld [vmem:[#allocation13 + $0x80] sm:$0xff]
    %v3702 = vld [vmem:[#allocation13 + $0x88] sm:$0xff]
    %v3703 = vld [vmem:[#allocation13 + $0x90] sm:$0xff]
    %v3704 = vld [vmem:[#allocation13 + $0x98] sm:$0xff]
    %v3705 = vld [vmem:[#allocation13 + $0xa0] sm:$0xff]
    %v3706 = vld [vmem:[#allocation13 + $0xa8] sm:$0xff]
    %v3707 = vld [vmem:[#allocation13 + $0xb0] sm:$0xff]
    %v3708 = vld [vmem:[#allocation13 + $0xb8] sm:$0xff]
    %v3709 = vld [vmem:[#allocation13 + $0xc0] sm:$0xff]
    %v3710 = vld [vmem:[#allocation13 + $0xc8] sm:$0xff]
    %v3711 = vld [vmem:[#allocation13 + $0xd0] sm:$0xff]
    %v3712 = vld [vmem:[#allocation13 + $0xd8] sm:$0xff]
    %v3713 = vld [vmem:[#allocation13 + $0xe0] sm:$0xff]
    %v3714 = vld [vmem:[#allocation13 + $0xe8] sm:$0xff]
    %v3715 = vld [vmem:[#allocation13 + $0xf0] sm:$0xff]
    %v3716 = vld [vmem:[#allocation13 + $0xf8] sm:$0xff]
    %v3717 = vld [vmem:[#allocation13 + $0x100] sm:$0xff]
    %v3718 = vld [vmem:[#allocation13 + $0x108] sm:$0xff]
    %v3719 = vld [vmem:[#allocation13 + $0x110] sm:$0xff]
    %v3720 = vld [vmem:[#allocation13 + $0x118] sm:$0xff]
    %v3721 = vld [vmem:[#allocation13 + $0x120] sm:$0xff]
    %v3722 = vld [vmem:[#allocation13 + $0x128] sm:$0xff]
    %v3723 = vld [vmem:[#allocation13 + $0x130] sm:$0xff]
    %v3724 = vld [vmem:[#allocation13 + $0x138] sm:$0xff]
    %v3725 = vld [vmem:[#allocation13 + $0x140] sm:$0xff]
    %v3726 = vld [vmem:[#allocation13 + $0x148] sm:$0xff]
    %v3727 = vld [vmem:[#allocation13 + $0x150] sm:$0xff]
    %v3728 = vld [vmem:[#allocation13 + $0x158] sm:$0xff]
    %v3729 = vld [vmem:[#allocation13 + $0x160] sm:$0xff]
    %v3730 = vld [vmem:[#allocation13 + $0x168] sm:$0xff]
    %v3731 = vld [vmem:[#allocation13 + $0x170] sm:$0xff]
    %v3732 = vld [vmem:[#allocation13 + $0x178] sm:$0xff]
    %v3733 = vld [vmem:[#allocation13 + $0x180] sm:$0xff]
    %v3734 = vld [vmem:[#allocation13 + $0x188] sm:$0xff]
    %v3735 = vld [vmem:[#allocation13 + $0x190] sm:$0xff]
    %v3736 = vld [vmem:[#allocation13 + $0x198] sm:$0xff]
    %v3737 = vld [vmem:[#allocation13 + $0x1a0] sm:$0xff]
    %v3738 = vld [vmem:[#allocation13 + $0x1a8] sm:$0xff]
    %v3739 = vld [vmem:[#allocation13 + $0x1b0] sm:$0xff]
    %v3740 = vld [vmem:[#allocation13 + $0x1b8] sm:$0xff]
    %v3741 = vld [vmem:[#allocation13 + $0x1c0] sm:$0xff]
    %v3742 = vld [vmem:[#allocation13 + $0x1c8] sm:$0xff]
    %v3743 = vld [vmem:[#allocation13 + $0x1d0] sm:$0xff]
    %v3744 = vld [vmem:[#allocation13 + $0x1d8] sm:$0xff]
    %v3745 = vld [vmem:[#allocation13 + $0x1e0] sm:$0xff]
    %v3746 = vld [vmem:[#allocation13 + $0x1e8] sm:$0xff]
    %v3747 = vld [vmem:[#allocation13 + $0x1f0] sm:$0xff]
    %v3748 = vld [vmem:[#allocation13 + $0x1f8] sm:$0xff]
    %v3749 = vld [vmem:[#allocation14] sm:$0x3]
    %v3751 = vlaneseq
    %v3752 = vshrl.u32 %v3751, 7
    %v3753 = vsub.s32 0, %v3752
    %v3754 = vrot.slane %v3749, %v3753
    %v3755 = vlaneseq
    %v3756 = vshrl.u32 %v3755, 7
    %v3757 = vsub.s32 1, %v3756
    %v3758 = vrot.slane %v3749, %v3757
    %v3825 = vunpack.c.l.b16 %v3685
    %v3826 = vunpack.c.h.b16 %v3685
    %v3827 = vunpack.c.l.b16 %v3686
    %v3828 = vunpack.c.h.b16 %v3686
    %v3829 = vunpack.c.l.b16 %v3687
    %v3830 = vunpack.c.h.b16 %v3687
    %v3831 = vunpack.c.l.b16 %v3688
    %v3832 = vunpack.c.h.b16 %v3688
    %v3833 = vunpack.c.l.b16 %v3689
    %v3834 = vunpack.c.h.b16 %v3689
    %v3835 = vunpack.c.l.b16 %v3690
    %v3836 = vunpack.c.h.b16 %v3690
    %v3837 = vunpack.c.l.b16 %v3691
    %v3838 = vunpack.c.h.b16 %v3691
    %v3839 = vunpack.c.l.b16 %v3692
    %v3840 = vunpack.c.h.b16 %v3692
    %v3841 = vunpack.c.l.b16 %v3693
    %v3842 = vunpack.c.h.b16 %v3693
    %v3843 = vunpack.c.l.b16 %v3694
    %v3844 = vunpack.c.h.b16 %v3694
    %v3845 = vunpack.c.l.b16 %v3695
    %v3846 = vunpack.c.h.b16 %v3695
    %v3847 = vunpack.c.l.b16 %v3696
    %v3848 = vunpack.c.h.b16 %v3696
    %v3849 = vunpack.c.l.b16 %v3697
    %v3850 = vunpack.c.h.b16 %v3697
    %v3851 = vunpack.c.l.b16 %v3698
    %v3852 = vunpack.c.h.b16 %v3698
    %v3853 = vunpack.c.l.b16 %v3699
    %v3854 = vunpack.c.h.b16 %v3699
    %v3855 = vunpack.c.l.b16 %v3700
    %v3856 = vunpack.c.h.b16 %v3700
    %v3857 = vunpack.c.l.b16 %v3701
    %v3858 = vunpack.c.h.b16 %v3701
    %v3859 = vunpack.c.l.b16 %v3702
    %v3860 = vunpack.c.h.b16 %v3702
    %v3861 = vunpack.c.l.b16 %v3703
    %v3862 = vunpack.c.h.b16 %v3703
    %v3863 = vunpack.c.l.b16 %v3704
    %v3864 = vunpack.c.h.b16 %v3704
    %v3865 = vunpack.c.l.b16 %v3705
    %v3866 = vunpack.c.h.b16 %v3705
    %v3867 = vunpack.c.l.b16 %v3706
    %v3868 = vunpack.c.h.b16 %v3706
    %v3869 = vunpack.c.l.b16 %v3707
    %v3870 = vunpack.c.h.b16 %v3707
    %v3871 = vunpack.c.l.b16 %v3708
    %v3872 = vunpack.c.h.b16 %v3708
    %v3873 = vunpack.c.l.b16 %v3709
    %v3874 = vunpack.c.h.b16 %v3709
    %v3875 = vunpack.c.l.b16 %v3710
    %v3876 = vunpack.c.h.b16 %v3710
    %v3877 = vunpack.c.l.b16 %v3711
    %v3878 = vunpack.c.h.b16 %v3711
    %v3879 = vunpack.c.l.b16 %v3712
    %v3880 = vunpack.c.h.b16 %v3712
    %v3881 = vunpack.c.l.b16 %v3713
    %v3882 = vunpack.c.h.b16 %v3713
    %v3883 = vunpack.c.l.b16 %v3714
    %v3884 = vunpack.c.h.b16 %v3714
    %v3885 = vunpack.c.l.b16 %v3715
    %v3886 = vunpack.c.h.b16 %v3715
    %v3887 = vunpack.c.l.b16 %v3716
    %v3888 = vunpack.c.h.b16 %v3716
    %v3889 = vunpack.c.l.b16 %v3717
    %v3890 = vunpack.c.h.b16 %v3717
    %v3891 = vunpack.c.l.b16 %v3718
    %v3892 = vunpack.c.h.b16 %v3718
    %v3893 = vunpack.c.l.b16 %v3719
    %v3894 = vunpack.c.h.b16 %v3719
    %v3895 = vunpack.c.l.b16 %v3720
    %v3896 = vunpack.c.h.b16 %v3720
    %v3897 = vunpack.c.l.b16 %v3721
    %v3898 = vunpack.c.h.b16 %v3721
    %v3899 = vunpack.c.l.b16 %v3722
    %v3900 = vunpack.c.h.b16 %v3722
    %v3901 = vunpack.c.l.b16 %v3723
    %v3902 = vunpack.c.h.b16 %v3723
    %v3903 = vunpack.c.l.b16 %v3724
    %v3904 = vunpack.c.h.b16 %v3724
    %v3905 = vunpack.c.l.b16 %v3725
    %v3906 = vunpack.c.h.b16 %v3725
    %v3907 = vunpack.c.l.b16 %v3726
    %v3908 = vunpack.c.h.b16 %v3726
    %v3909 = vunpack.c.l.b16 %v3727
    %v3910 = vunpack.c.h.b16 %v3727
    %v3911 = vunpack.c.l.b16 %v3728
    %v3912 = vunpack.c.h.b16 %v3728
    %v3913 = vunpack.c.l.b16 %v3729
    %v3914 = vunpack.c.h.b16 %v3729
    %v3915 = vunpack.c.l.b16 %v3730
    %v3916 = vunpack.c.h.b16 %v3730
    %v3917 = vunpack.c.l.b16 %v3731
    %v3918 = vunpack.c.h.b16 %v3731
    %v3919 = vunpack.c.l.b16 %v3732
    %v3920 = vunpack.c.h.b16 %v3732
    %v3921 = vunpack.c.l.b16 %v3733
    %v3922 = vunpack.c.h.b16 %v3733
    %v3923 = vunpack.c.l.b16 %v3734
    %v3924 = vunpack.c.h.b16 %v3734
    %v3925 = vunpack.c.l.b16 %v3735
    %v3926 = vunpack.c.h.b16 %v3735
    %v3927 = vunpack.c.l.b16 %v3736
    %v3928 = vunpack.c.h.b16 %v3736
    %v3929 = vunpack.c.l.b16 %v3737
    %v3930 = vunpack.c.h.b16 %v3737
    %v3931 = vunpack.c.l.b16 %v3738
    %v3932 = vunpack.c.h.b16 %v3738
    %v3933 = vunpack.c.l.b16 %v3739
    %v3934 = vunpack.c.h.b16 %v3739
    %v3935 = vunpack.c.l.b16 %v3740
    %v3936 = vunpack.c.h.b16 %v3740
    %v3937 = vunpack.c.l.b16 %v3741
    %v3938 = vunpack.c.h.b16 %v3741
    %v3939 = vunpack.c.l.b16 %v3742
    %v3940 = vunpack.c.h.b16 %v3742
    %v3941 = vunpack.c.l.b16 %v3743
    %v3942 = vunpack.c.h.b16 %v3743
    %v3943 = vunpack.c.l.b16 %v3744
    %v3944 = vunpack.c.h.b16 %v3744
    %v3945 = vunpack.c.l.b16 %v3745
    %v3946 = vunpack.c.h.b16 %v3745
    %v3947 = vunpack.c.l.b16 %v3746
    %v3948 = vunpack.c.h.b16 %v3746
    %v3949 = vunpack.c.l.b16 %v3747
    %v3950 = vunpack.c.h.b16 %v3747
    %v3951 = vunpack.c.l.b16 %v3748
    %v3952 = vunpack.c.h.b16 %v3748
    %v3953 = vpack.c.b16 %v3827, %v3825
    %v3954 = vpack.c.b16 %v3828, %v3826
    %v3955 = vpack.c.b16 %v3831, %v3829
    %v3956 = vpack.c.b16 %v3832, %v3830
    %v3957 = vpack.c.b16 %v3835, %v3833
    %v3958 = vpack.c.b16 %v3836, %v3834
    %v3959 = vpack.c.b16 %v3839, %v3837
    %v3960 = vpack.c.b16 %v3840, %v3838
    %v3961 = vpack.c.b16 %v3843, %v3841
    %v3962 = vpack.c.b16 %v3844, %v3842
    %v3963 = vpack.c.b16 %v3847, %v3845
    %v3964 = vpack.c.b16 %v3848, %v3846
    %v3965 = vpack.c.b16 %v3851, %v3849
    %v3966 = vpack.c.b16 %v3852, %v3850
    %v3967 = vpack.c.b16 %v3855, %v3853
    %v3968 = vpack.c.b16 %v3856, %v3854
    %v3969 = vpack.c.b16 %v3859, %v3857
    %v3970 = vpack.c.b16 %v3860, %v3858
    %v3971 = vpack.c.b16 %v3863, %v3861
    %v3972 = vpack.c.b16 %v3864, %v3862
    %v3973 = vpack.c.b16 %v3867, %v3865
    %v3974 = vpack.c.b16 %v3868, %v3866
    %v3975 = vpack.c.b16 %v3871, %v3869
    %v3976 = vpack.c.b16 %v3872, %v3870
    %v3977 = vpack.c.b16 %v3875, %v3873
    %v3978 = vpack.c.b16 %v3876, %v3874
    %v3979 = vpack.c.b16 %v3879, %v3877
    %v3980 = vpack.c.b16 %v3880, %v3878
    %v3981 = vpack.c.b16 %v3883, %v3881
    %v3982 = vpack.c.b16 %v3884, %v3882
    %v3983 = vpack.c.b16 %v3887, %v3885
    %v3984 = vpack.c.b16 %v3888, %v3886
    %v3985 = vpack.c.b16 %v3891, %v3889
    %v3986 = vpack.c.b16 %v3892, %v3890
    %v3987 = vpack.c.b16 %v3895, %v3893
    %v3988 = vpack.c.b16 %v3896, %v3894
    %v3989 = vpack.c.b16 %v3899, %v3897
    %v3990 = vpack.c.b16 %v3900, %v3898
    %v3991 = vpack.c.b16 %v3903, %v3901
    %v3992 = vpack.c.b16 %v3904, %v3902
    %v3993 = vpack.c.b16 %v3907, %v3905
    %v3994 = vpack.c.b16 %v3908, %v3906
    %v3995 = vpack.c.b16 %v3911, %v3909
    %v3996 = vpack.c.b16 %v3912, %v3910
    %v3997 = vpack.c.b16 %v3915, %v3913
    %v3998 = vpack.c.b16 %v3916, %v3914
    %v3999 = vpack.c.b16 %v3919, %v3917
    %v4000 = vpack.c.b16 %v3920, %v3918
    %v4001 = vpack.c.b16 %v3923, %v3921
    %v4002 = vpack.c.b16 %v3924, %v3922
    %v4003 = vpack.c.b16 %v3927, %v3925
    %v4004 = vpack.c.b16 %v3928, %v3926
    %v4005 = vpack.c.b16 %v3931, %v3929
    %v4006 = vpack.c.b16 %v3932, %v3930
    %v4007 = vpack.c.b16 %v3935, %v3933
    %v4008 = vpack.c.b16 %v3936, %v3934
    %v4009 = vpack.c.b16 %v3939, %v3937
    %v4010 = vpack.c.b16 %v3940, %v3938
    %v4011 = vpack.c.b16 %v3943, %v3941
    %v4012 = vpack.c.b16 %v3944, %v3942
    %v4013 = vpack.c.b16 %v3947, %v3945
    %v4014 = vpack.c.b16 %v3948, %v3946
    %v4015 = vpack.c.b16 %v3951, %v3949
    %v4016 = vpack.c.b16 %v3952, %v3950
    %4081 = vmatprep.subr.bf16.mxu0 %v3954
    %4082 = vmatpush1.bf16.msra.mxu0 %v3953
    %4083 = vmatprep.subr.bf16.mxu0 %v3956
    %4084 = vmatpush1.bf16.msra.mxu0 %v3955
    %4085 = vmatprep.subr.bf16.mxu0 %v3958
    %4086 = vmatpush1.bf16.msra.mxu0 %v3957
    %4087 = vmatprep.subr.bf16.mxu0 %v3960
    %4088 = vmatpush1.bf16.msra.mxu0 %v3959
    %4089 = vmatprep.subr.bf16.mxu0 %v3962
    %4090 = vmatpush1.bf16.msra.mxu0 %v3961
    %4091 = vmatprep.subr.bf16.mxu0 %v3964
    %4092 = vmatpush1.bf16.msra.mxu0 %v3963
    %4093 = vmatprep.subr.bf16.mxu0 %v3966
    %4094 = vmatpush1.bf16.msra.mxu0 %v3965
    %4095 = vmatprep.subr.bf16.mxu0 %v3968
    %4096 = vmatpush1.bf16.msra.mxu0 %v3967
    %4097 = vmatprep.subr.bf16.mxu0 %v3970
    %4098 = vmatpush1.bf16.msra.mxu0 %v3969
    %4099 = vmatprep.subr.bf16.mxu0 %v3972
    %4100 = vmatpush1.bf16.msra.mxu0 %v3971
    %4101 = vmatprep.subr.bf16.mxu0 %v3974
    %4102 = vmatpush1.bf16.msra.mxu0 %v3973
    %4103 = vmatprep.subr.bf16.mxu0 %v3976
    %4104 = vmatpush1.bf16.msra.mxu0 %v3975
    %4105 = vmatprep.subr.bf16.mxu0 %v3978
    %4106 = vmatpush1.bf16.msra.mxu0 %v3977
    %4107 = vmatprep.subr.bf16.mxu0 %v3980
    %4108 = vmatpush1.bf16.msra.mxu0 %v3979
    %4109 = vmatprep.subr.bf16.mxu0 %v3982
    %4110 = vmatpush1.bf16.msra.mxu0 %v3981
    %4111 = vmatprep.subr.bf16.mxu0 %v3984
    %4112 = vmatpush1.bf16.msra.mxu0 %v3983
    %4113 = vmatprep.mubr.bf16.mxu0 %v3682
    %4114 = vmatmul.mubr.bf16.gmra.mrb[0].mxu0 %v3681
    %v4115 = vpop.f32.mrb[0].mxu0
    %v4116 = vadd.f32 %v3754, %v4115
    %v4117 = vpop.f32.mrb[0].mxu0
    %v4118 = vadd.f32 %v3758, %v4117
    %v4119 = vpop.f32.mrb[0].mxu0
    %v4120 = vpop.f32.mrb[0].mxu0
    %4121 = vdwg.mxu0
    %4122 = vmatprep.subr.bf16.mxu0 %v3986
    %4123 = vmatpush1.bf16.msra.mxu0 %v3985
    %4124 = vmatprep.subr.bf16.mxu0 %v3988
    %4125 = vmatpush1.bf16.msra.mxu0 %v3987
    %4126 = vmatprep.subr.bf16.mxu0 %v3990
    %4127 = vmatpush1.bf16.msra.mxu0 %v3989
    %4128 = vmatprep.subr.bf16.mxu0 %v3992
    %4129 = vmatpush1.bf16.msra.mxu0 %v3991
    %4130 = vmatprep.subr.bf16.mxu0 %v3994
    %4131 = vmatpush1.bf16.msra.mxu0 %v3993
    %4132 = vmatprep.subr.bf16.mxu0 %v3996
    %4133 = vmatpush1.bf16.msra.mxu0 %v3995
    %4134 = vmatprep.subr.bf16.mxu0 %v3998
    %4135 = vmatpush1.bf16.msra.mxu0 %v3997
    %4136 = vmatprep.subr.bf16.mxu0 %v4000
    %4137 = vmatpush1.bf16.msra.mxu0 %v3999
    %4138 = vmatprep.subr.bf16.mxu0 %v4002
    %4139 = vmatpush1.bf16.msra.mxu0 %v4001
    %4140 = vmatprep.subr.bf16.mxu0 %v4004
    %4141 = vmatpush1.bf16.msra.mxu0 %v4003
    %4142 = vmatprep.subr.bf16.mxu0 %v4006
    %4143 = vmatpush1.bf16.msra.mxu0 %v4005
    %4144 = vmatprep.subr.bf16.mxu0 %v4008
    %4145 = vmatpush1.bf16.msra.mxu0 %v4007
    %4146 = vmatprep.subr.bf16.mxu0 %v4010
    %4147 = vmatpush1.bf16.msra.mxu0 %v4009
    %4148 = vmatprep.subr.bf16.mxu0 %v4012
    %4149 = vmatpush1.bf16.msra.mxu0 %v4011
    %4150 = vmatprep.subr.bf16.mxu0 %v4014
    %4151 = vmatpush1.bf16.msra.mxu0 %v4013
    %4152 = vmatprep.subr.bf16.mxu0 %v4016
    %4153 = vmatpush1.bf16.msra.mxu0 %v4015
    %4154 = vmatprep.mubr.bf16.mxu0 %v3684
    %4155 = vmatmul.mubr.bf16.gmra.mrb[0].mxu0 %v3683
    %v4156 = vpop.f32.mrb[0].mxu0
    %v4157 = vadd.f32 %v4116, %v4156
    %v4158 = vpop.f32.mrb[0].mxu0
    %v4159 = vadd.f32 %v4118, %v4158
    %v4160 = vpop.f32.mrb[0].mxu0
    %v4161 = vpop.f32.mrb[0].mxu0
    %4162 = vdwg.mxu0
    %vm4163 = vcmask 64512
    %4164 = vst.msk [vmem:[#allocation24] sm:$0xff] %vm4163, %v4157
    %4165 = vst.msk [vmem:[#allocation26] sm:$0xff] %vm4163, %v4159
    %v4166 = vld [vmem:[#allocation5] sm:$0xff]
    %v4167 = vlog2.pop %v4166
    %v4168 = vmul.f32 %v4167, 0.6931472
    %v4169 = vsub.f32 0.0, %v4168
    %v4170 = vadd.f32 %v4157, 1e-09
    %v4171 = vmul.f32 %v4169, %v4170
    %v4172 = vsel %vm4163, %v4171, inf
    %4173 = vmin.xlane.f32.xlu0 %v4172
    %v4174 = vpop.xlane.xlu0 %4173
    %v4175 = vrot.slane %v4174, 4
    %v4176 = vmin.f32 %v4174, %v4175
    %v4177 = vrot.slane %v4176, 2
    %v4178 = vmin.f32 %v4176, %v4177
    %v4179 = vrot.slane %v4178, 1
    %v4180 = vmin.f32 %v4178, %v4179
    %s4181 = vtos %v4180
    %v4182 = vsel %vm4163, %v4171, -inf
    %4183 = vmax.xlane.f32.xlu0 %v4182
    %v4184 = vpop.xlane.xlu0 %4183
    %v4185 = vrot.slane %v4184, 4
    %v4186 = vmax.f32 %v4184, %v4185
    %v4187 = vrot.slane %v4186, 2
    %v4188 = vmax.f32 %v4186, %v4187
    %v4189 = vrot.slane %v4188, 1
    %v4190 = vmax.f32 %v4188, %v4189
    %s4191 = vtos %v4190
    %s4192 = ssub.f32 %s4191, %s4181
    %s4193 = smax.f32 %s4192, 1e-12
    %v4194 = vstv %s4181
    %v4195 = vsub.f32 %v4171, %v4194
    %v4196 = vstv %s4193
    %v4197 = vrcp.pop %v4196
    %v4198 = vmul.f32 %v4195, %v4197
    %v4199 = vpack.c.bf16 %v4198, %v4198
    %v4200 = vld [vmem:[#allocation16] sm:$0xff]
    %v4201 = vld [vmem:[#allocation16 + $0x8] sm:$0xff]
    %v4202 = vld [vmem:[#allocation17] sm:$0xf]
    %v4204 = vlaneseq
    %v4205 = vshrl.u32 %v4204, 7
    %v4206 = vsub.s32 0, %v4205
    %v4207 = vrot.slane %v4202, %v4206
    %v4208 = vlaneseq
    %v4209 = vshrl.u32 %v4208, 7
    %v4210 = vsub.s32 1, %v4209
    %v4211 = vrot.slane %v4202, %v4210
    %v4212 = vlaneseq
    %v4213 = vshrl.u32 %v4212, 7
    %v4214 = vsub.s32 2, %v4213
    %v4215 = vrot.slane %v4202, %v4214
    %v4216 = vlaneseq
    %v4217 = vshrl.u32 %v4216, 7
    %v4218 = vsub.s32 3, %v4217
    %v4219 = vrot.slane %v4202, %v4218
    %v4226 = vunpack.c.l.b16 %v4200
    %v4227 = vunpack.c.h.b16 %v4200
    %v4228 = vunpack.c.l.b16 %v4201
    %v4229 = vunpack.c.h.b16 %v4201
    %v4230 = vpack.c.b16 %v4226, %v4226
    %v4231 = vpack.c.b16 %v4227, %v4227
    %v4232 = vpack.c.b16 %v4228, %v4228
    %v4233 = vpack.c.b16 %v4229, %v4229
    %v4235 = vsel %vm4163, %v4199, 0
    %vm4237 = vcmask 1043456
    %v4239 = vsel %vm4237, %v4230, 0
    %v4242 = vsel %vm4237, %v4231, 0
    %v4245 = vsel %vm4237, %v4232, 0
    %v4248 = vsel %vm4237, %v4233, 0
    %4250 = vmatprep.subr.bf16.mxu0 %v4242
    %4251 = vmatpush1.bf16.msra.mxu0 %v4239
    %4252 = vmatprep.subr.bf16.mxu0 0
    %4253 = vmatpush1.bf16.msra.mxu0 0
    %4254 = vmatprep.subr.bf16.mxu0 0
    %4255 = vmatpush1.bf16.msra.mxu0 0
    %4256 = vmatprep.subr.bf16.mxu0 0
    %4257 = vmatpush1.bf16.msra.mxu0 0
    %4258 = vmatprep.subr.bf16.mxu0 0
    %4259 = vmatpush1.bf16.msra.mxu0 0
    %4260 = vmatprep.subr.bf16.mxu0 0
    %4261 = vmatpush1.bf16.msra.mxu0 0
    %4262 = vmatprep.subr.bf16.mxu0 0
    %4263 = vmatpush1.bf16.msra.mxu0 0
    %4264 = vmatprep.subr.bf16.mxu0 0
    %4265 = vmatpush1.bf16.msra.mxu0 0
    %4266 = vmatprep.subr.bf16.mxu0 0
    %4267 = vmatpush1.bf16.msra.mxu0 0
    %4268 = vmatprep.subr.bf16.mxu0 0
    %4269 = vmatpush1.bf16.msra.mxu0 0
    %4270 = vmatprep.subr.bf16.mxu0 0
    %4271 = vmatpush1.bf16.msra.mxu0 0
    %4272 = vmatprep.subr.bf16.mxu0 0
    %4273 = vmatpush1.bf16.msra.mxu0 0
    %4274 = vmatprep.subr.bf16.mxu0 0
    %4275 = vmatpush1.bf16.msra.mxu0 0
    %4276 = vmatprep.subr.bf16.mxu0 0
    %4277 = vmatpush1.bf16.msra.mxu0 0
    %4278 = vmatprep.subr.bf16.mxu0 0
    %4279 = vmatpush1.bf16.msra.mxu0 0
    %4280 = vmatprep.subr.bf16.mxu0 0
    %4281 = vmatpush1.bf16.msra.mxu0 0
    %4282 = vmatprep.mubr.bf16.mxu0 0
    %4283 = vmatmul.mubr.bf16.gmra.mrb[0].mxu0 %v4235
    %v4284 = vpop.f32.mrb[0].mxu0
    %v4285 = vadd.f32 %v4207, %v4284
    %v4286 = vpop.f32.mrb[0].mxu0
    %v4287 = vadd.f32 %v4211, %v4286
    %v4288 = vpop.f32.mrb[0].mxu0
    %v4289 = vpop.f32.mrb[0].mxu0
    %4290 = vdwg.mxu0
    %4291 = vmatprep.subr.bf16.mxu0 %v4248
    %4292 = vmatpush1.bf16.msra.mxu0 %v4245
    %4293 = vmatprep.subr.bf16.mxu0 0
    %4294 = vmatpush1.bf16.msra.mxu0 0
    %4295 = vmatprep.subr.bf16.mxu0 0
    %4296 = vmatpush1.bf16.msra.mxu0 0
    %4297 = vmatprep.subr.bf16.mxu0 0
    %4298 = vmatpush1.bf16.msra.mxu0 0
    %4299 = vmatprep.subr.bf16.mxu0 0
    %4300 = vmatpush1.bf16.msra.mxu0 0
    %4301 = vmatprep.subr.bf16.mxu0 0
    %4302 = vmatpush1.bf16.msra.mxu0 0
    %4303 = vmatprep.subr.bf16.mxu0 0
    %4304 = vmatpush1.bf16.msra.mxu0 0
    %4305 = vmatprep.subr.bf16.mxu0 0
    %4306 = vmatpush1.bf16.msra.mxu0 0
    %4307 = vmatprep.subr.bf16.mxu0 0
    %4308 = vmatpush1.bf16.msra.mxu0 0
    %4309 = vmatprep.subr.bf16.mxu0 0
    %4310 = vmatpush1.bf16.msra.mxu0 0
    %4311 = vmatprep.subr.bf16.mxu0 0
    %4312 = vmatpush1.bf16.msra.mxu0 0
    %4313 = vmatprep.subr.bf16.mxu0 0
    %4314 = vmatpush1.bf16.msra.mxu0 0
    %4315 = vmatprep.subr.bf16.mxu0 0
    %4316 = vmatpush1.bf16.msra.mxu0 0
    %4317 = vmatprep.subr.bf16.mxu0 0
    %4318 = vmatpush1.bf16.msra.mxu0 0
    %4319 = vmatprep.subr.bf16.mxu0 0
    %4320 = vmatpush1.bf16.msra.mxu0 0
    %4321 = vmatprep.subr.bf16.mxu0 0
    %4322 = vmatpush1.bf16.msra.mxu0 0
    %4323 = vmatprep.mubr.bf16.mxu0 0
    %4324 = vmatmul.mubr.bf16.gmra.mrb[0].mxu0 %v4235
    %v4325 = vpop.f32.mrb[0].mxu0
    %v4326 = vadd.f32 %v4215, %v4325
    %v4327 = vpop.f32.mrb[0].mxu0
    %v4328 = vadd.f32 %v4219, %v4327
    %v4329 = vpop.f32.mrb[0].mxu0
    %v4330 = vpop.f32.mrb[0].mxu0
    %4331 = vdwg.mxu0
    %v4332 = vxor.u32 %v4285, 2147483648
    %v4333 = vxor.u32 %v4287, 2147483648
    %v4334 = vxor.u32 %v4326, 2147483648
    %v4335 = vxor.u32 %v4328, 2147483648
    %v4336 = vmul.f32 %v4332, 1.442695
    %v4337 = vpow.pop %v4336
    %v4338 = vmul.f32 %v4333, 1.442695
    %v4339 = vpow.pop %v4338
    %v4340 = vmul.f32 %v4334, 1.442695
    %v4341 = vpow.pop %v4340
    %v4342 = vmul.f32 %v4335, 1.442695
    %v4343 = vpow.pop %v4342
    %v4344 = vadd.f32 %v4337, 1.0
    %v4345 = vadd.f32 %v4339, 1.0
    %v4346 = vadd.f32 %v4341, 1.0
    %v4347 = vadd.f32 %v4343, 1.0
    %v4348 = vrcp.pop %v4344
    %v4349 = vmul.f32 1.0, %v4348
    %v4350 = vrcp.pop %v4345
    %v4351 = vmul.f32 1.0, %v4350
    %v4352 = vrcp.pop %v4346
    %v4353 = vmul.f32 1.0, %v4352
    %v4354 = vrcp.pop %v4347
    %v4355 = vmul.f32 1.0, %v4354
    %v4356 = vpack.c.bf16 %v4349, %v4349
    %v4357 = vpack.c.bf16 %v4351, %v4351
    %v4358 = vpack.c.bf16 %v4353, %v4353
    %v4359 = vpack.c.bf16 %v4355, %v4355
    %v4360 = vld [vmem:[#allocation19] sm:$0xff]
    %v4361 = vld [vmem:[#allocation19 + $0x8] sm:$0xff]
    %v4362 = vld [vmem:[#allocation19 + $0x10] sm:$0xff]
    %v4363 = vld [vmem:[#allocation19 + $0x18] sm:$0xff]
    %v4364 = vld [vmem:[#allocation19 + $0x20] sm:$0xff]
    %v4365 = vld [vmem:[#allocation19 + $0x28] sm:$0xff]
    %v4366 = vld [vmem:[#allocation19 + $0x30] sm:$0xff]
    %v4367 = vld [vmem:[#allocation19 + $0x38] sm:$0xff]
    %v4368 = vld [vmem:[#allocation19 + $0x40] sm:$0xff]
    %v4369 = vld [vmem:[#allocation19 + $0x48] sm:$0xff]
    %v4370 = vld [vmem:[#allocation19 + $0x50] sm:$0xff]
    %v4371 = vld [vmem:[#allocation19 + $0x58] sm:$0xff]
    %v4372 = vld [vmem:[#allocation19 + $0x60] sm:$0xff]
    %v4373 = vld [vmem:[#allocation19 + $0x68] sm:$0xff]
    %v4374 = vld [vmem:[#allocation19 + $0x70] sm:$0xff]
    %v4375 = vld [vmem:[#allocation19 + $0x78] sm:$0xff]
    %v4376 = vld [vmem:[#allocation19 + $0x80] sm:$0xff]
    %v4377 = vld [vmem:[#allocation19 + $0x88] sm:$0xff]
    %v4378 = vld [vmem:[#allocation19 + $0x90] sm:$0xff]
    %v4379 = vld [vmem:[#allocation19 + $0x98] sm:$0xff]
    %v4380 = vld [vmem:[#allocation19 + $0xa0] sm:$0xff]
    %v4381 = vld [vmem:[#allocation19 + $0xa8] sm:$0xff]
    %v4382 = vld [vmem:[#allocation19 + $0xb0] sm:$0xff]
    %v4383 = vld [vmem:[#allocation19 + $0xb8] sm:$0xff]
    %v4384 = vld [vmem:[#allocation19 + $0xc0] sm:$0xff]
    %v4385 = vld [vmem:[#allocation19 + $0xc8] sm:$0xff]
    %v4386 = vld [vmem:[#allocation19 + $0xd0] sm:$0xff]
    %v4387 = vld [vmem:[#allocation19 + $0xd8] sm:$0xff]
    %v4388 = vld [vmem:[#allocation19 + $0xe0] sm:$0xff]
    %v4389 = vld [vmem:[#allocation19 + $0xe8] sm:$0xff]
    %v4390 = vld [vmem:[#allocation19 + $0xf0] sm:$0xff]
    %v4391 = vld [vmem:[#allocation19 + $0xf8] sm:$0xff]
    %v4392 = vld [vmem:[#allocation19 + $0x100] sm:$0xff]
    %v4393 = vld [vmem:[#allocation19 + $0x108] sm:$0xff]
    %v4394 = vld [vmem:[#allocation19 + $0x110] sm:$0xff]
    %v4395 = vld [vmem:[#allocation19 + $0x118] sm:$0xff]
    %v4396 = vld [vmem:[#allocation19 + $0x120] sm:$0xff]
    %v4397 = vld [vmem:[#allocation19 + $0x128] sm:$0xff]
    %v4398 = vld [vmem:[#allocation19 + $0x130] sm:$0xff]
    %v4399 = vld [vmem:[#allocation19 + $0x138] sm:$0xff]
    %v4400 = vld [vmem:[#allocation19 + $0x140] sm:$0xff]
    %v4401 = vld [vmem:[#allocation19 + $0x148] sm:$0xff]
    %v4402 = vld [vmem:[#allocation19 + $0x150] sm:$0xff]
    %v4403 = vld [vmem:[#allocation19 + $0x158] sm:$0xff]
    %v4404 = vld [vmem:[#allocation19 + $0x160] sm:$0xff]
    %v4405 = vld [vmem:[#allocation19 + $0x168] sm:$0xff]
    %v4406 = vld [vmem:[#allocation19 + $0x170] sm:$0xff]
    %v4407 = vld [vmem:[#allocation19 + $0x178] sm:$0xff]
    %v4408 = vld [vmem:[#allocation19 + $0x180] sm:$0xff]
    %v4409 = vld [vmem:[#allocation19 + $0x188] sm:$0xff]
    %v4410 = vld [vmem:[#allocation19 + $0x190] sm:$0xff]
    %v4411 = vld [vmem:[#allocation19 + $0x198] sm:$0xff]
    %v4412 = vld [vmem:[#allocation19 + $0x1a0] sm:$0xff]
    %v4413 = vld [vmem:[#allocation19 + $0x1a8] sm:$0xff]
    %v4414 = vld [vmem:[#allocation19 + $0x1b0] sm:$0xff]
    %v4415 = vld [vmem:[#allocation19 + $0x1b8] sm:$0xff]
    %v4416 = vld [vmem:[#allocation19 + $0x1c0] sm:$0xff]
    %v4417 = vld [vmem:[#allocation19 + $0x1c8] sm:$0xff]
    %v4418 = vld [vmem:[#allocation19 + $0x1d0] sm:$0xff]
    %v4419 = vld [vmem:[#allocation19 + $0x1d8] sm:$0xff]
    %v4420 = vld [vmem:[#allocation19 + $0x1e0] sm:$0xff]
    %v4421 = vld [vmem:[#allocation19 + $0x1e8] sm:$0xff]
    %v4422 = vld [vmem:[#allocation19 + $0x1f0] sm:$0xff]
    %v4423 = vld [vmem:[#allocation19 + $0x1f8] sm:$0xff]
    %v4424 = vld [vmem:[#allocation19 + $0x200] sm:$0xff]
    %v4425 = vld [vmem:[#allocation19 + $0x208] sm:$0xff]
    %v4426 = vld [vmem:[#allocation19 + $0x210] sm:$0xff]
    %v4427 = vld [vmem:[#allocation19 + $0x218] sm:$0xff]
    %v4428 = vld [vmem:[#allocation19 + $0x220] sm:$0xff]
    %v4429 = vld [vmem:[#allocation19 + $0x228] sm:$0xff]
    %v4430 = vld [vmem:[#allocation19 + $0x230] sm:$0xff]
    %v4431 = vld [vmem:[#allocation19 + $0x238] sm:$0xff]
    %v4432 = vld [vmem:[#allocation19 + $0x240] sm:$0xff]
    %v4433 = vld [vmem:[#allocation19 + $0x248] sm:$0xff]
    %v4434 = vld [vmem:[#allocation19 + $0x250] sm:$0xff]
    %v4435 = vld [vmem:[#allocation19 + $0x258] sm:$0xff]
    %v4436 = vld [vmem:[#allocation19 + $0x260] sm:$0xff]
    %v4437 = vld [vmem:[#allocation19 + $0x268] sm:$0xff]
    %v4438 = vld [vmem:[#allocation19 + $0x270] sm:$0xff]
    %v4439 = vld [vmem:[#allocation19 + $0x278] sm:$0xff]
    %v4440 = vld [vmem:[#allocation19 + $0x280] sm:$0xff]
    %v4441 = vld [vmem:[#allocation19 + $0x288] sm:$0xff]
    %v4442 = vld [vmem:[#allocation19 + $0x290] sm:$0xff]
    %v4443 = vld [vmem:[#allocation19 + $0x298] sm:$0xff]
    %v4444 = vld [vmem:[#allocation19 + $0x2a0] sm:$0xff]
    %v4445 = vld [vmem:[#allocation19 + $0x2a8] sm:$0xff]
    %v4446 = vld [vmem:[#allocation19 + $0x2b0] sm:$0xff]
    %v4447 = vld [vmem:[#allocation19 + $0x2b8] sm:$0xff]
    %v4448 = vld [vmem:[#allocation19 + $0x2c0] sm:$0xff]
    %v4449 = vld [vmem:[#allocation19 + $0x2c8] sm:$0xff]
    %v4450 = vld [vmem:[#allocation19 + $0x2d0] sm:$0xff]
    %v4451 = vld [vmem:[#allocation19 + $0x2d8] sm:$0xff]
    %v4452 = vld [vmem:[#allocation19 + $0x2e0] sm:$0xff]
    %v4453 = vld [vmem:[#allocation19 + $0x2e8] sm:$0xff]
    %v4454 = vld [vmem:[#allocation19 + $0x2f0] sm:$0xff]
    %v4455 = vld [vmem:[#allocation19 + $0x2f8] sm:$0xff]
    %v4456 = vld [vmem:[#allocation19 + $0x300] sm:$0xff]
    %v4457 = vld [vmem:[#allocation19 + $0x308] sm:$0xff]
    %v4458 = vld [vmem:[#allocation19 + $0x310] sm:$0xff]
    %v4459 = vld [vmem:[#allocation19 + $0x318] sm:$0xff]
    %v4460 = vld [vmem:[#allocation19 + $0x320] sm:$0xff]
    %v4461 = vld [vmem:[#allocation19 + $0x328] sm:$0xff]
    %v4462 = vld [vmem:[#allocation19 + $0x330] sm:$0xff]
    %v4463 = vld [vmem:[#allocation19 + $0x338] sm:$0xff]
    %v4464 = vld [vmem:[#allocation19 + $0x340] sm:$0xff]
    %v4465 = vld [vmem:[#allocation19 + $0x348] sm:$0xff]
    %v4466 = vld [vmem:[#allocation19 + $0x350] sm:$0xff]
    %v4467 = vld [vmem:[#allocation19 + $0x358] sm:$0xff]
    %v4468 = vld [vmem:[#allocation19 + $0x360] sm:$0xff]
    %v4469 = vld [vmem:[#allocation19 + $0x368] sm:$0xff]
    %v4470 = vld [vmem:[#allocation19 + $0x370] sm:$0xff]
    %v4471 = vld [vmem:[#allocation19 + $0x378] sm:$0xff]
    %v4472 = vld [vmem:[#allocation19 + $0x380] sm:$0xff]
    %v4473 = vld [vmem:[#allocation19 + $0x388] sm:$0xff]
    %v4474 = vld [vmem:[#allocation19 + $0x390] sm:$0xff]
    %v4475 = vld [vmem:[#allocation19 + $0x398] sm:$0xff]
    %v4476 = vld [vmem:[#allocation19 + $0x3a0] sm:$0xff]
    %v4477 = vld [vmem:[#allocation19 + $0x3a8] sm:$0xff]
    %v4478 = vld [vmem:[#allocation19 + $0x3b0] sm:$0xff]
    %v4479 = vld [vmem:[#allocation19 + $0x3b8] sm:$0xff]
    %v4480 = vld [vmem:[#allocation19 + $0x3c0] sm:$0xff]
    %v4481 = vld [vmem:[#allocation19 + $0x3c8] sm:$0xff]
    %v4482 = vld [vmem:[#allocation19 + $0x3d0] sm:$0xff]
    %v4483 = vld [vmem:[#allocation19 + $0x3d8] sm:$0xff]
    %v4484 = vld [vmem:[#allocation19 + $0x3e0] sm:$0xff]
    %v4485 = vld [vmem:[#allocation19 + $0x3e8] sm:$0xff]
    %v4486 = vld [vmem:[#allocation19 + $0x3f0] sm:$0xff]
    %v4487 = vld [vmem:[#allocation19 + $0x3f8] sm:$0xff]
    %v4488 = vld [vmem:[#allocation19 + $0x400] sm:$0xff]
    %v4489 = vld [vmem:[#allocation19 + $0x408] sm:$0xff]
    %v4490 = vld [vmem:[#allocation19 + $0x410] sm:$0xff]
    %v4491 = vld [vmem:[#allocation19 + $0x418] sm:$0xff]
    %v4492 = vld [vmem:[#allocation19 + $0x420] sm:$0xff]
    %v4493 = vld [vmem:[#allocation19 + $0x428] sm:$0xff]
    %v4494 = vld [vmem:[#allocation19 + $0x430] sm:$0xff]
    %v4495 = vld [vmem:[#allocation19 + $0x438] sm:$0xff]
    %v4496 = vld [vmem:[#allocation19 + $0x440] sm:$0xff]
    %v4497 = vld [vmem:[#allocation19 + $0x448] sm:$0xff]
    %v4498 = vld [vmem:[#allocation19 + $0x450] sm:$0xff]
    %v4499 = vld [vmem:[#allocation19 + $0x458] sm:$0xff]
    %v4500 = vld [vmem:[#allocation19 + $0x460] sm:$0xff]
    %v4501 = vld [vmem:[#allocation19 + $0x468] sm:$0xff]
    %v4502 = vld [vmem:[#allocation19 + $0x470] sm:$0xff]
    %v4503 = vld [vmem:[#allocation19 + $0x478] sm:$0xff]
    %v4504 = vld [vmem:[#allocation19 + $0x480] sm:$0xff]
    %v4505 = vld [vmem:[#allocation19 + $0x488] sm:$0xff]
    %v4506 = vld [vmem:[#allocation19 + $0x490] sm:$0xff]
    %v4507 = vld [vmem:[#allocation19 + $0x498] sm:$0xff]
    %v4508 = vld [vmem:[#allocation19 + $0x4a0] sm:$0xff]
    %v4509 = vld [vmem:[#allocation19 + $0x4a8] sm:$0xff]
    %v4510 = vld [vmem:[#allocation19 + $0x4b0] sm:$0xff]
    %v4511 = vld [vmem:[#allocation19 + $0x4b8] sm:$0xff]
    %v4512 = vld [vmem:[#allocation19 + $0x4c0] sm:$0xff]
    %v4513 = vld [vmem:[#allocation19 + $0x4c8] sm:$0xff]
    %v4514 = vld [vmem:[#allocation19 + $0x4d0] sm:$0xff]
    %v4515 = vld [vmem:[#allocation19 + $0x4d8] sm:$0xff]
    %v4516 = vld [vmem:[#allocation19 + $0x4e0] sm:$0xff]
    %v4517 = vld [vmem:[#allocation19 + $0x4e8] sm:$0xff]
    %v4518 = vld [vmem:[#allocation19 + $0x4f0] sm:$0xff]
    %v4519 = vld [vmem:[#allocation19 + $0x4f8] sm:$0xff]
    %v4520 = vld [vmem:[#allocation19 + $0x500] sm:$0xff]
    %v4521 = vld [vmem:[#allocation19 + $0x508] sm:$0xff]
    %v4522 = vld [vmem:[#allocation19 + $0x510] sm:$0xff]
    %v4523 = vld [vmem:[#allocation19 + $0x518] sm:$0xff]
    %v4524 = vld [vmem:[#allocation19 + $0x520] sm:$0xff]
    %v4525 = vld [vmem:[#allocation19 + $0x528] sm:$0xff]
    %v4526 = vld [vmem:[#allocation19 + $0x530] sm:$0xff]
    %v4527 = vld [vmem:[#allocation19 + $0x538] sm:$0xff]
    %v4528 = vld [vmem:[#allocation19 + $0x540] sm:$0xff]
    %v4529 = vld [vmem:[#allocation19 + $0x548] sm:$0xff]
    %v4530 = vld [vmem:[#allocation19 + $0x550] sm:$0xff]
    %v4531 = vld [vmem:[#allocation19 + $0x558] sm:$0xff]
    %v4532 = vld [vmem:[#allocation19 + $0x560] sm:$0xff]
    %v4533 = vld [vmem:[#allocation19 + $0x568] sm:$0xff]
    %v4534 = vld [vmem:[#allocation19 + $0x570] sm:$0xff]
    %v4535 = vld [vmem:[#allocation19 + $0x578] sm:$0xff]
    %v4536 = vld [vmem:[#allocation19 + $0x580] sm:$0xff]
    %v4537 = vld [vmem:[#allocation19 + $0x588] sm:$0xff]
    %v4538 = vld [vmem:[#allocation19 + $0x590] sm:$0xff]
    %v4539 = vld [vmem:[#allocation19 + $0x598] sm:$0xff]
    %v4540 = vld [vmem:[#allocation19 + $0x5a0] sm:$0xff]
    %v4541 = vld [vmem:[#allocation19 + $0x5a8] sm:$0xff]
    %v4542 = vld [vmem:[#allocation19 + $0x5b0] sm:$0xff]
    %v4543 = vld [vmem:[#allocation19 + $0x5b8] sm:$0xff]
    %v4544 = vld [vmem:[#allocation19 + $0x5c0] sm:$0xff]
    %v4545 = vld [vmem:[#allocation19 + $0x5c8] sm:$0xff]
    %v4546 = vld [vmem:[#allocation19 + $0x5d0] sm:$0xff]
    %v4547 = vld [vmem:[#allocation19 + $0x5d8] sm:$0xff]
    %v4548 = vld [vmem:[#allocation19 + $0x5e0] sm:$0xff]
    %v4549 = vld [vmem:[#allocation19 + $0x5e8] sm:$0xff]
    %v4550 = vld [vmem:[#allocation19 + $0x5f0] sm:$0xff]
    %v4551 = vld [vmem:[#allocation19 + $0x5f8] sm:$0xff]
    %v4552 = vld [vmem:[#allocation19 + $0x600] sm:$0xff]
    %v4553 = vld [vmem:[#allocation19 + $0x608] sm:$0xff]
    %v4554 = vld [vmem:[#allocation19 + $0x610] sm:$0xff]
    %v4555 = vld [vmem:[#allocation19 + $0x618] sm:$0xff]
    %v4556 = vld [vmem:[#allocation19 + $0x620] sm:$0xff]
    %v4557 = vld [vmem:[#allocation19 + $0x628] sm:$0xff]
    %v4558 = vld [vmem:[#allocation19 + $0x630] sm:$0xff]
    %v4559 = vld [vmem:[#allocation19 + $0x638] sm:$0xff]
    %v4560 = vld [vmem:[#allocation19 + $0x640] sm:$0xff]
    %v4561 = vld [vmem:[#allocation19 + $0x648] sm:$0xff]
    %v4562 = vld [vmem:[#allocation19 + $0x650] sm:$0xff]
    %v4563 = vld [vmem:[#allocation19 + $0x658] sm:$0xff]
    %v4564 = vld [vmem:[#allocation19 + $0x660] sm:$0xff]
    %v4565 = vld [vmem:[#allocation19 + $0x668] sm:$0xff]
    %v4566 = vld [vmem:[#allocation19 + $0x670] sm:$0xff]
    %v4567 = vld [vmem:[#allocation19 + $0x678] sm:$0xff]
    %v4568 = vld [vmem:[#allocation19 + $0x680] sm:$0xff]
    %v4569 = vld [vmem:[#allocation19 + $0x688] sm:$0xff]
    %v4570 = vld [vmem:[#allocation19 + $0x690] sm:$0xff]
    %v4571 = vld [vmem:[#allocation19 + $0x698] sm:$0xff]
    %v4572 = vld [vmem:[#allocation19 + $0x6a0] sm:$0xff]
    %v4573 = vld [vmem:[#allocation19 + $0x6a8] sm:$0xff]
    %v4574 = vld [vmem:[#allocation19 + $0x6b0] sm:$0xff]
    %v4575 = vld [vmem:[#allocation19 + $0x6b8] sm:$0xff]
    %v4576 = vld [vmem:[#allocation19 + $0x6c0] sm:$0xff]
    %v4577 = vld [vmem:[#allocation19 + $0x6c8] sm:$0xff]
    %v4578 = vld [vmem:[#allocation19 + $0x6d0] sm:$0xff]
    %v4579 = vld [vmem:[#allocation19 + $0x6d8] sm:$0xff]
    %v4580 = vld [vmem:[#allocation19 + $0x6e0] sm:$0xff]
    %v4581 = vld [vmem:[#allocation19 + $0x6e8] sm:$0xff]
    %v4582 = vld [vmem:[#allocation19 + $0x6f0] sm:$0xff]
    %v4583 = vld [vmem:[#allocation19 + $0x6f8] sm:$0xff]
    %v4584 = vld [vmem:[#allocation19 + $0x700] sm:$0xff]
    %v4585 = vld [vmem:[#allocation19 + $0x708] sm:$0xff]
    %v4586 = vld [vmem:[#allocation19 + $0x710] sm:$0xff]
    %v4587 = vld [vmem:[#allocation19 + $0x718] sm:$0xff]
    %v4588 = vld [vmem:[#allocation19 + $0x720] sm:$0xff]
    %v4589 = vld [vmem:[#allocation19 + $0x728] sm:$0xff]
    %v4590 = vld [vmem:[#allocation19 + $0x730] sm:$0xff]
    %v4591 = vld [vmem:[#allocation19 + $0x738] sm:$0xff]
    %v4592 = vld [vmem:[#allocation19 + $0x740] sm:$0xff]
    %v4593 = vld [vmem:[#allocation19 + $0x748] sm:$0xff]
    %v4594 = vld [vmem:[#allocation19 + $0x750] sm:$0xff]
    %v4595 = vld [vmem:[#allocation19 + $0x758] sm:$0xff]
    %v4596 = vld [vmem:[#allocation19 + $0x760] sm:$0xff]
    %v4597 = vld [vmem:[#allocation19 + $0x768] sm:$0xff]
    %v4598 = vld [vmem:[#allocation19 + $0x770] sm:$0xff]
    %v4599 = vld [vmem:[#allocation19 + $0x778] sm:$0xff]
    %v4600 = vld [vmem:[#allocation19 + $0x780] sm:$0xff]
    %v4601 = vld [vmem:[#allocation19 + $0x788] sm:$0xff]
    %v4602 = vld [vmem:[#allocation19 + $0x790] sm:$0xff]
    %v4603 = vld [vmem:[#allocation19 + $0x798] sm:$0xff]
    %v4604 = vld [vmem:[#allocation19 + $0x7a0] sm:$0xff]
    %v4605 = vld [vmem:[#allocation19 + $0x7a8] sm:$0xff]
    %v4606 = vld [vmem:[#allocation19 + $0x7b0] sm:$0xff]
    %v4607 = vld [vmem:[#allocation19 + $0x7b8] sm:$0xff]
    %v4608 = vld [vmem:[#allocation19 + $0x7c0] sm:$0xff]
    %v4609 = vld [vmem:[#allocation19 + $0x7c8] sm:$0xff]
    %v4610 = vld [vmem:[#allocation19 + $0x7d0] sm:$0xff]
    %v4611 = vld [vmem:[#allocation19 + $0x7d8] sm:$0xff]
    %v4612 = vld [vmem:[#allocation19 + $0x7e0] sm:$0xff]
    %v4613 = vld [vmem:[#allocation19 + $0x7e8] sm:$0xff]
    %v4614 = vld [vmem:[#allocation19 + $0x7f0] sm:$0xff]
    %v4615 = vld [vmem:[#allocation19 + $0x7f8] sm:$0xff]
    %v4616 = vld [vmem:[#allocation19 + $0x800] sm:$0xff]
    %v4617 = vld [vmem:[#allocation19 + $0x808] sm:$0xff]
    %v4618 = vld [vmem:[#allocation19 + $0x810] sm:$0xff]
    %v4619 = vld [vmem:[#allocation19 + $0x818] sm:$0xff]
    %v4620 = vld [vmem:[#allocation19 + $0x820] sm:$0xff]
    %v4621 = vld [vmem:[#allocation19 + $0x828] sm:$0xff]
    %v4622 = vld [vmem:[#allocation19 + $0x830] sm:$0xff]
    %v4623 = vld [vmem:[#allocation19 + $0x838] sm:$0xff]
    %v4624 = vld [vmem:[#allocation19 + $0x840] sm:$0xff]
    %v4625 = vld [vmem:[#allocation19 + $0x848] sm:$0xff]
    %v4626 = vld [vmem:[#allocation19 + $0x850] sm:$0xff]
    %v4627 = vld [vmem:[#allocation19 + $0x858] sm:$0xff]
    %v4628 = vld [vmem:[#allocation19 + $0x860] sm:$0xff]
    %v4629 = vld [vmem:[#allocation19 + $0x868] sm:$0xff]
    %v4630 = vld [vmem:[#allocation19 + $0x870] sm:$0xff]
    %v4631 = vld [vmem:[#allocation19 + $0x878] sm:$0xff]
    %v4632 = vld [vmem:[#allocation19 + $0x880] sm:$0xff]
    %v4633 = vld [vmem:[#allocation19 + $0x888] sm:$0xff]
    %v4634 = vld [vmem:[#allocation19 + $0x890] sm:$0xff]
    %v4635 = vld [vmem:[#allocation19 + $0x898] sm:$0xff]
    %v4636 = vld [vmem:[#allocation19 + $0x8a0] sm:$0xff]
    %v4637 = vld [vmem:[#allocation19 + $0x8a8] sm:$0xff]
    %v4638 = vld [vmem:[#allocation19 + $0x8b0] sm:$0xff]
    %v4639 = vld [vmem:[#allocation19 + $0x8b8] sm:$0xff]
    %v4640 = vld [vmem:[#allocation19 + $0x8c0] sm:$0xff]
    %v4641 = vld [vmem:[#allocation19 + $0x8c8] sm:$0xff]
    %v4642 = vld [vmem:[#allocation19 + $0x8d0] sm:$0xff]
    %v4643 = vld [vmem:[#allocation19 + $0x8d8] sm:$0xff]
    %v4644 = vld [vmem:[#allocation19 + $0x8e0] sm:$0xff]
    %v4645 = vld [vmem:[#allocation19 + $0x8e8] sm:$0xff]
    %v4646 = vld [vmem:[#allocation19 + $0x8f0] sm:$0xff]
    %v4647 = vld [vmem:[#allocation19 + $0x8f8] sm:$0xff]
    %v4648 = vld [vmem:[#allocation19 + $0x900] sm:$0xff]
    %v4649 = vld [vmem:[#allocation19 + $0x908] sm:$0xff]
    %v4650 = vld [vmem:[#allocation19 + $0x910] sm:$0xff]
    %v4651 = vld [vmem:[#allocation19 + $0x918] sm:$0xff]
    %v4652 = vld [vmem:[#allocation19 + $0x920] sm:$0xff]
    %v4653 = vld [vmem:[#allocation19 + $0x928] sm:$0xff]
    %v4654 = vld [vmem:[#allocation19 + $0x930] sm:$0xff]
    %v4655 = vld [vmem:[#allocation19 + $0x938] sm:$0xff]
    %v4656 = vld [vmem:[#allocation19 + $0x940] sm:$0xff]
    %v4657 = vld [vmem:[#allocation19 + $0x948] sm:$0xff]
    %v4658 = vld [vmem:[#allocation19 + $0x950] sm:$0xff]
    %v4659 = vld [vmem:[#allocation19 + $0x958] sm:$0xff]
    %v4660 = vld [vmem:[#allocation19 + $0x960] sm:$0xff]
    %v4661 = vld [vmem:[#allocation19 + $0x968] sm:$0xff]
    %v4662 = vld [vmem:[#allocation19 + $0x970] sm:$0xff]
    %v4663 = vld [vmem:[#allocation19 + $0x978] sm:$0xff]
    %v4664 = vld [vmem:[#allocation19 + $0x980] sm:$0xff]
    %v4665 = vld [vmem:[#allocation19 + $0x988] sm:$0xff]
    %v4666 = vld [vmem:[#allocation19 + $0x990] sm:$0xff]
    %v4667 = vld [vmem:[#allocation19 + $0x998] sm:$0xff]
    %v4668 = vld [vmem:[#allocation19 + $0x9a0] sm:$0xff]
    %v4669 = vld [vmem:[#allocation19 + $0x9a8] sm:$0xff]
    %v4670 = vld [vmem:[#allocation19 + $0x9b0] sm:$0xff]
    %v4671 = vld [vmem:[#allocation19 + $0x9b8] sm:$0xff]
    %v4672 = vld [vmem:[#allocation19 + $0x9c0] sm:$0xff]
    %v4673 = vld [vmem:[#allocation19 + $0x9c8] sm:$0xff]
    %v4674 = vld [vmem:[#allocation19 + $0x9d0] sm:$0xff]
    %v4675 = vld [vmem:[#allocation19 + $0x9d8] sm:$0xff]
    %v4676 = vld [vmem:[#allocation19 + $0x9e0] sm:$0xff]
    %v4677 = vld [vmem:[#allocation19 + $0x9e8] sm:$0xff]
    %v4678 = vld [vmem:[#allocation19 + $0x9f0] sm:$0xff]
    %v4679 = vld [vmem:[#allocation19 + $0x9f8] sm:$0xff]
    %v4680 = vld [vmem:[#allocation19 + $0xa00] sm:$0xff]
    %v4681 = vld [vmem:[#allocation19 + $0xa08] sm:$0xff]
    %v4682 = vld [vmem:[#allocation19 + $0xa10] sm:$0xff]
    %v4683 = vld [vmem:[#allocation19 + $0xa18] sm:$0xff]
    %v4684 = vld [vmem:[#allocation19 + $0xa20] sm:$0xff]
    %v4685 = vld [vmem:[#allocation19 + $0xa28] sm:$0xff]
    %v4686 = vld [vmem:[#allocation19 + $0xa30] sm:$0xff]
    %v4687 = vld [vmem:[#allocation19 + $0xa38] sm:$0xff]
    %v4688 = vld [vmem:[#allocation19 + $0xa40] sm:$0xff]
    %v4689 = vld [vmem:[#allocation19 + $0xa48] sm:$0xff]
    %v4690 = vld [vmem:[#allocation19 + $0xa50] sm:$0xff]
    %v4691 = vld [vmem:[#allocation19 + $0xa58] sm:$0xff]
    %v4692 = vld [vmem:[#allocation19 + $0xa60] sm:$0xff]
    %v4693 = vld [vmem:[#allocation19 + $0xa68] sm:$0xff]
    %v4694 = vld [vmem:[#allocation19 + $0xa70] sm:$0xff]
    %v4695 = vld [vmem:[#allocation19 + $0xa78] sm:$0xff]
    %v4696 = vld [vmem:[#allocation19 + $0xa80] sm:$0xff]
    %v4697 = vld [vmem:[#allocation19 + $0xa88] sm:$0xff]
    %v4698 = vld [vmem:[#allocation19 + $0xa90] sm:$0xff]
    %v4699 = vld [vmem:[#allocation19 + $0xa98] sm:$0xff]
    %v4700 = vld [vmem:[#allocation19 + $0xaa0] sm:$0xff]
    %v4701 = vld [vmem:[#allocation19 + $0xaa8] sm:$0xff]
    %v4702 = vld [vmem:[#allocation19 + $0xab0] sm:$0xff]
    %v4703 = vld [vmem:[#allocation19 + $0xab8] sm:$0xff]
    %v4704 = vld [vmem:[#allocation19 + $0xac0] sm:$0xff]
    %v4705 = vld [vmem:[#allocation19 + $0xac8] sm:$0xff]
    %v4706 = vld [vmem:[#allocation19 + $0xad0] sm:$0xff]
    %v4707 = vld [vmem:[#allocation19 + $0xad8] sm:$0xff]
    %v4708 = vld [vmem:[#allocation19 + $0xae0] sm:$0xff]
    %v4709 = vld [vmem:[#allocation19 + $0xae8] sm:$0xff]
    %v4710 = vld [vmem:[#allocation19 + $0xaf0] sm:$0xff]
    %v4711 = vld [vmem:[#allocation19 + $0xaf8] sm:$0xff]
    %v4712 = vld [vmem:[#allocation19 + $0xb00] sm:$0xff]
    %v4713 = vld [vmem:[#allocation19 + $0xb08] sm:$0xff]
    %v4714 = vld [vmem:[#allocation19 + $0xb10] sm:$0xff]
    %v4715 = vld [vmem:[#allocation19 + $0xb18] sm:$0xff]
    %v4716 = vld [vmem:[#allocation19 + $0xb20] sm:$0xff]
    %v4717 = vld [vmem:[#allocation19 + $0xb28] sm:$0xff]
    %v4718 = vld [vmem:[#allocation19 + $0xb30] sm:$0xff]
    %v4719 = vld [vmem:[#allocation19 + $0xb38] sm:$0xff]
    %v4720 = vld [vmem:[#allocation19 + $0xb40] sm:$0xff]
    %v4721 = vld [vmem:[#allocation19 + $0xb48] sm:$0xff]
    %v4722 = vld [vmem:[#allocation19 + $0xb50] sm:$0xff]
    %v4723 = vld [vmem:[#allocation19 + $0xb58] sm:$0xff]
    %v4724 = vld [vmem:[#allocation19 + $0xb60] sm:$0xff]
    %v4725 = vld [vmem:[#allocation19 + $0xb68] sm:$0xff]
    %v4726 = vld [vmem:[#allocation19 + $0xb70] sm:$0xff]
    %v4727 = vld [vmem:[#allocation19 + $0xb78] sm:$0xff]
    %v4728 = vld [vmem:[#allocation19 + $0xb80] sm:$0xff]
    %v4729 = vld [vmem:[#allocation19 + $0xb88] sm:$0xff]
    %v4730 = vld [vmem:[#allocation19 + $0xb90] sm:$0xff]
    %v4731 = vld [vmem:[#allocation19 + $0xb98] sm:$0xff]
    %v4732 = vld [vmem:[#allocation19 + $0xba0] sm:$0xff]
    %v4733 = vld [vmem:[#allocation19 + $0xba8] sm:$0xff]
    %v4734 = vld [vmem:[#allocation19 + $0xbb0] sm:$0xff]
    %v4735 = vld [vmem:[#allocation19 + $0xbb8] sm:$0xff]
    %v4736 = vld [vmem:[#allocation19 + $0xbc0] sm:$0xff]
    %v4737 = vld [vmem:[#allocation19 + $0xbc8] sm:$0xff]
    %v4738 = vld [vmem:[#allocation19 + $0xbd0] sm:$0xff]
    %v4739 = vld [vmem:[#allocation19 + $0xbd8] sm:$0xff]
    %v4740 = vld [vmem:[#allocation19 + $0xbe0] sm:$0xff]
    %v4741 = vld [vmem:[#allocation19 + $0xbe8] sm:$0xff]
    %v4742 = vld [vmem:[#allocation19 + $0xbf0] sm:$0xff]
    %v4743 = vld [vmem:[#allocation19 + $0xbf8] sm:$0xff]
    %v4744 = vld [vmem:[#allocation20] sm:$0xff]
    %v4745 = vld [vmem:[#allocation20 + $0x8] sm:$0xf]
    %v4748 = vlaneseq
    %v4749 = vshrl.u32 %v4748, 7
    %v4750 = vsub.s32 0, %v4749
    %v4751 = vrot.slane %v4744, %v4750
    %v4752 = vlaneseq
    %v4753 = vshrl.u32 %v4752, 7
    %v4754 = vsub.s32 1, %v4753
    %v4755 = vrot.slane %v4744, %v4754
    %v4756 = vlaneseq
    %v4757 = vshrl.u32 %v4756, 7
    %v4758 = vsub.s32 2, %v4757
    %v4759 = vrot.slane %v4744, %v4758
    %v4760 = vlaneseq
    %v4761 = vshrl.u32 %v4760, 7
    %v4762 = vsub.s32 3, %v4761
    %v4763 = vrot.slane %v4744, %v4762
    %v4764 = vlaneseq
    %v4765 = vshrl.u32 %v4764, 7
    %v4766 = vsub.s32 4, %v4765
    %v4767 = vrot.slane %v4744, %v4766
    %v4768 = vlaneseq
    %v4769 = vshrl.u32 %v4768, 7
    %v4770 = vsub.s32 5, %v4769
    %v4771 = vrot.slane %v4744, %v4770
    %v4772 = vlaneseq
    %v4773 = vshrl.u32 %v4772, 7
    %v4774 = vsub.s32 6, %v4773
    %v4775 = vrot.slane %v4744, %v4774
    %v4776 = vlaneseq
    %v4777 = vshrl.u32 %v4776, 7
    %v4778 = vsub.s32 7, %v4777
    %v4779 = vrot.slane %v4744, %v4778
    %v4780 = vlaneseq
    %v4781 = vshrl.u32 %v4780, 7
    %v4782 = vsub.s32 0, %v4781
    %v4783 = vrot.slane %v4745, %v4782
    %v4784 = vlaneseq
    %v4785 = vshrl.u32 %v4784, 7
    %v4786 = vsub.s32 1, %v4785
    %v4787 = vrot.slane %v4745, %v4786
    %v4788 = vlaneseq
    %v4789 = vshrl.u32 %v4788, 7
    %v4790 = vsub.s32 2, %v4789
    %v4791 = vrot.slane %v4745, %v4790
    %v4792 = vlaneseq
    %v4793 = vshrl.u32 %v4792, 7
    %v4794 = vsub.s32 3, %v4793
    %v4795 = vrot.slane %v4745, %v4794
    %v5192 = vunpack.c.l.b16 %v4360
    %v5193 = vunpack.c.h.b16 %v4360
    %v5194 = vunpack.c.l.b16 %v4361
    %v5195 = vunpack.c.h.b16 %v4361
    %v5196 = vunpack.c.l.b16 %v4362
    %v5197 = vunpack.c.h.b16 %v4362
    %v5198 = vunpack.c.l.b16 %v4363
    %v5199 = vunpack.c.h.b16 %v4363
    %v5200 = vunpack.c.l.b16 %v4364
    %v5201 = vunpack.c.h.b16 %v4364
    %v5202 = vunpack.c.l.b16 %v4365
    %v5203 = vunpack.c.h.b16 %v4365
    %v5204 = vunpack.c.l.b16 %v4366
    %v5205 = vunpack.c.h.b16 %v4366
    %v5206 = vunpack.c.l.b16 %v4367
    %v5207 = vunpack.c.h.b16 %v4367
    %v5208 = vunpack.c.l.b16 %v4368
    %v5209 = vunpack.c.h.b16 %v4368
    %v5210 = vunpack.c.l.b16 %v4369
    %v5211 = vunpack.c.h.b16 %v4369
    %v5212 = vunpack.c.l.b16 %v4370
    %v5213 = vunpack.c.h.b16 %v4370
    %v5214 = vunpack.c.l.b16 %v4371
    %v5215 = vunpack.c.h.b16 %v4371
    %v5216 = vunpack.c.l.b16 %v4372
    %v5217 = vunpack.c.h.b16 %v4372
    %v5218 = vunpack.c.l.b16 %v4373
    %v5219 = vunpack.c.h.b16 %v4373
    %v5220 = vunpack.c.l.b16 %v4374
    %v5221 = vunpack.c.h.b16 %v4374
    %v5222 = vunpack.c.l.b16 %v4375
    %v5223 = vunpack.c.h.b16 %v4375
    %v5224 = vunpack.c.l.b16 %v4376
    %v5225 = vunpack.c.h.b16 %v4376
    %v5226 = vunpack.c.l.b16 %v4377
    %v5227 = vunpack.c.h.b16 %v4377
    %v5228 = vunpack.c.l.b16 %v4378
    %v5229 = vunpack.c.h.b16 %v4378
    %v5230 = vunpack.c.l.b16 %v4379
    %v5231 = vunpack.c.h.b16 %v4379
    %v5232 = vunpack.c.l.b16 %v4380
    %v5233 = vunpack.c.h.b16 %v4380
    %v5234 = vunpack.c.l.b16 %v4381
    %v5235 = vunpack.c.h.b16 %v4381
    %v5236 = vunpack.c.l.b16 %v4382
    %v5237 = vunpack.c.h.b16 %v4382
    %v5238 = vunpack.c.l.b16 %v4383
    %v5239 = vunpack.c.h.b16 %v4383
    %v5240 = vunpack.c.l.b16 %v4384
    %v5241 = vunpack.c.h.b16 %v4384
    %v5242 = vunpack.c.l.b16 %v4385
    %v5243 = vunpack.c.h.b16 %v4385
    %v5244 = vunpack.c.l.b16 %v4386
    %v5245 = vunpack.c.h.b16 %v4386
    %v5246 = vunpack.c.l.b16 %v4387
    %v5247 = vunpack.c.h.b16 %v4387
    %v5248 = vunpack.c.l.b16 %v4388
    %v5249 = vunpack.c.h.b16 %v4388
    %v5250 = vunpack.c.l.b16 %v4389
    %v5251 = vunpack.c.h.b16 %v4389
    %v5252 = vunpack.c.l.b16 %v4390
    %v5253 = vunpack.c.h.b16 %v4390
    %v5254 = vunpack.c.l.b16 %v4391
    %v5255 = vunpack.c.h.b16 %v4391
    %v5256 = vunpack.c.l.b16 %v4392
    %v5257 = vunpack.c.h.b16 %v4392
    %v5258 = vunpack.c.l.b16 %v4393
    %v5259 = vunpack.c.h.b16 %v4393
    %v5260 = vunpack.c.l.b16 %v4394
    %v5261 = vunpack.c.h.b16 %v4394
    %v5262 = vunpack.c.l.b16 %v4395
    %v5263 = vunpack.c.h.b16 %v4395
    %v5264 = vunpack.c.l.b16 %v4396
    %v5265 = vunpack.c.h.b16 %v4396
    %v5266 = vunpack.c.l.b16 %v4397
    %v5267 = vunpack.c.h.b16 %v4397
    %v5268 = vunpack.c.l.b16 %v4398
    %v5269 = vunpack.c.h.b16 %v4398
    %v5270 = vunpack.c.l.b16 %v4399
    %v5271 = vunpack.c.h.b16 %v4399
    %v5272 = vunpack.c.l.b16 %v4400
    %v5273 = vunpack.c.h.b16 %v4400
    %v5274 = vunpack.c.l.b16 %v4401
    %v5275 = vunpack.c.h.b16 %v4401
    %v5276 = vunpack.c.l.b16 %v4402
    %v5277 = vunpack.c.h.b16 %v4402
    %v5278 = vunpack.c.l.b16 %v4403
    %v5279 = vunpack.c.h.b16 %v4403
    %v5280 = vunpack.c.l.b16 %v4404
    %v5281 = vunpack.c.h.b16 %v4404
    %v5282 = vunpack.c.l.b16 %v4405
    %v5283 = vunpack.c.h.b16 %v4405
    %v5284 = vunpack.c.l.b16 %v4406
    %v5285 = vunpack.c.h.b16 %v4406
    %v5286 = vunpack.c.l.b16 %v4407
    %v5287 = vunpack.c.h.b16 %v4407
    %v5288 = vunpack.c.l.b16 %v4408
    %v5289 = vunpack.c.h.b16 %v4408
    %v5290 = vunpack.c.l.b16 %v4409
    %v5291 = vunpack.c.h.b16 %v4409
    %v5292 = vunpack.c.l.b16 %v4410
    %v5293 = vunpack.c.h.b16 %v4410
    %v5294 = vunpack.c.l.b16 %v4411
    %v5295 = vunpack.c.h.b16 %v4411
    %v5296 = vunpack.c.l.b16 %v4412
    %v5297 = vunpack.c.h.b16 %v4412
    %v5298 = vunpack.c.l.b16 %v4413
    %v5299 = vunpack.c.h.b16 %v4413
    %v5300 = vunpack.c.l.b16 %v4414
    %v5301 = vunpack.c.h.b16 %v4414
    %v5302 = vunpack.c.l.b16 %v4415
    %v5303 = vunpack.c.h.b16 %v4415
    %v5304 = vunpack.c.l.b16 %v4416
    %v5305 = vunpack.c.h.b16 %v4416
    %v5306 = vunpack.c.l.b16 %v4417
    %v5307 = vunpack.c.h.b16 %v4417
    %v5308 = vunpack.c.l.b16 %v4418
    %v5309 = vunpack.c.h.b16 %v4418
    %v5310 = vunpack.c.l.b16 %v4419
    %v5311 = vunpack.c.h.b16 %v4419
    %v5312 = vunpack.c.l.b16 %v4420
    %v5313 = vunpack.c.h.b16 %v4420
    %v5314 = vunpack.c.l.b16 %v4421
    %v5315 = vunpack.c.h.b16 %v4421
    %v5316 = vunpack.c.l.b16 %v4422
    %v5317 = vunpack.c.h.b16 %v4422
    %v5318 = vunpack.c.l.b16 %v4423
    %v5319 = vunpack.c.h.b16 %v4423
    %v5320 = vunpack.c.l.b16 %v4424
    %v5321 = vunpack.c.h.b16 %v4424
    %v5322 = vunpack.c.l.b16 %v4425
    %v5323 = vunpack.c.h.b16 %v4425
    %v5324 = vunpack.c.l.b16 %v4426
    %v5325 = vunpack.c.h.b16 %v4426
    %v5326 = vunpack.c.l.b16 %v4427
    %v5327 = vunpack.c.h.b16 %v4427
    %v5328 = vunpack.c.l.b16 %v4428
    %v5329 = vunpack.c.h.b16 %v4428
    %v5330 = vunpack.c.l.b16 %v4429
    %v5331 = vunpack.c.h.b16 %v4429
    %v5332 = vunpack.c.l.b16 %v4430
    %v5333 = vunpack.c.h.b16 %v4430
    %v5334 = vunpack.c.l.b16 %v4431
    %v5335 = vunpack.c.h.b16 %v4431
    %v5336 = vunpack.c.l.b16 %v4432
    %v5337 = vunpack.c.h.b16 %v4432
    %v5338 = vunpack.c.l.b16 %v4433
    %v5339 = vunpack.c.h.b16 %v4433
    %v5340 = vunpack.c.l.b16 %v4434
    %v5341 = vunpack.c.h.b16 %v4434
    %v5342 = vunpack.c.l.b16 %v4435
    %v5343 = vunpack.c.h.b16 %v4435
    %v5344 = vunpack.c.l.b16 %v4436
    %v5345 = vunpack.c.h.b16 %v4436
    %v5346 = vunpack.c.l.b16 %v4437
    %v5347 = vunpack.c.h.b16 %v4437
    %v5348 = vunpack.c.l.b16 %v4438
    %v5349 = vunpack.c.h.b16 %v4438
    %v5350 = vunpack.c.l.b16 %v4439
    %v5351 = vunpack.c.h.b16 %v4439
    %v5352 = vunpack.c.l.b16 %v4440
    %v5353 = vunpack.c.h.b16 %v4440
    %v5354 = vunpack.c.l.b16 %v4441
    %v5355 = vunpack.c.h.b16 %v4441
    %v5356 = vunpack.c.l.b16 %v4442
    %v5357 = vunpack.c.h.b16 %v4442
    %v5358 = vunpack.c.l.b16 %v4443
    %v5359 = vunpack.c.h.b16 %v4443
    %v5360 = vunpack.c.l.b16 %v4444
    %v5361 = vunpack.c.h.b16 %v4444
    %v5362 = vunpack.c.l.b16 %v4445
    %v5363 = vunpack.c.h.b16 %v4445
    %v5364 = vunpack.c.l.b16 %v4446
    %v5365 = vunpack.c.h.b16 %v4446
    %v5366 = vunpack.c.l.b16 %v4447
    %v5367 = vunpack.c.h.b16 %v4447
    %v5368 = vunpack.c.l.b16 %v4448
    %v5369 = vunpack.c.h.b16 %v4448
    %v5370 = vunpack.c.l.b16 %v4449
    %v5371 = vunpack.c.h.b16 %v4449
    %v5372 = vunpack.c.l.b16 %v4450
    %v5373 = vunpack.c.h.b16 %v4450
    %v5374 = vunpack.c.l.b16 %v4451
    %v5375 = vunpack.c.h.b16 %v4451
    %v5376 = vunpack.c.l.b16 %v4452
    %v5377 = vunpack.c.h.b16 %v4452
    %v5378 = vunpack.c.l.b16 %v4453
    %v5379 = vunpack.c.h.b16 %v4453
    %v5380 = vunpack.c.l.b16 %v4454
    %v5381 = vunpack.c.h.b16 %v4454
    %v5382 = vunpack.c.l.b16 %v4455
    %v5383 = vunpack.c.h.b16 %v4455
    %v5384 = vunpack.c.l.b16 %v4456
    %v5385 = vunpack.c.h.b16 %v4456
    %v5386 = vunpack.c.l.b16 %v4457
    %v5387 = vunpack.c.h.b16 %v4457
    %v5388 = vunpack.c.l.b16 %v4458
    %v5389 = vunpack.c.h.b16 %v4458
    %v5390 = vunpack.c.l.b16 %v4459
    %v5391 = vunpack.c.h.b16 %v4459
    %v5392 = vunpack.c.l.b16 %v4460
    %v5393 = vunpack.c.h.b16 %v4460
    %v5394 = vunpack.c.l.b16 %v4461
    %v5395 = vunpack.c.h.b16 %v4461
    %v5396 = vunpack.c.l.b16 %v4462
    %v5397 = vunpack.c.h.b16 %v4462
    %v5398 = vunpack.c.l.b16 %v4463
    %v5399 = vunpack.c.h.b16 %v4463
    %v5400 = vunpack.c.l.b16 %v4464
    %v5401 = vunpack.c.h.b16 %v4464
    %v5402 = vunpack.c.l.b16 %v4465
    %v5403 = vunpack.c.h.b16 %v4465
    %v5404 = vunpack.c.l.b16 %v4466
    %v5405 = vunpack.c.h.b16 %v4466
    %v5406 = vunpack.c.l.b16 %v4467
    %v5407 = vunpack.c.h.b16 %v4467
    %v5408 = vunpack.c.l.b16 %v4468
    %v5409 = vunpack.c.h.b16 %v4468
    %v5410 = vunpack.c.l.b16 %v4469
    %v5411 = vunpack.c.h.b16 %v4469
    %v5412 = vunpack.c.l.b16 %v4470
    %v5413 = vunpack.c.h.b16 %v4470
    %v5414 = vunpack.c.l.b16 %v4471
    %v5415 = vunpack.c.h.b16 %v4471
    %v5416 = vunpack.c.l.b16 %v4472
    %v5417 = vunpack.c.h.b16 %v4472
    %v5418 = vunpack.c.l.b16 %v4473
    %v5419 = vunpack.c.h.b16 %v4473
    %v5420 = vunpack.c.l.b16 %v4474
    %v5421 = vunpack.c.h.b16 %v4474
    %v5422 = vunpack.c.l.b16 %v4475
    %v5423 = vunpack.c.h.b16 %v4475
    %v5424 = vunpack.c.l.b16 %v4476
    %v5425 = vunpack.c.h.b16 %v4476
    %v5426 = vunpack.c.l.b16 %v4477
    %v5427 = vunpack.c.h.b16 %v4477
    %v5428 = vunpack.c.l.b16 %v4478
    %v5429 = vunpack.c.h.b16 %v4478
    %v5430 = vunpack.c.l.b16 %v4479
    %v5431 = vunpack.c.h.b16 %v4479
    %v5432 = vunpack.c.l.b16 %v4480
    %v5433 = vunpack.c.h.b16 %v4480
    %v5434 = vunpack.c.l.b16 %v4481
    %v5435 = vunpack.c.h.b16 %v4481
    %v5436 = vunpack.c.l.b16 %v4482
    %v5437 = vunpack.c.h.b16 %v4482
    %v5438 = vunpack.c.l.b16 %v4483
    %v5439 = vunpack.c.h.b16 %v4483
    %v5440 = vunpack.c.l.b16 %v4484
    %v5441 = vunpack.c.h.b16 %v4484
    %v5442 = vunpack.c.l.b16 %v4485
    %v5443 = vunpack.c.h.b16 %v4485
    %v5444 = vunpack.c.l.b16 %v4486
    %v5445 = vunpack.c.h.b16 %v4486
    %v5446 = vunpack.c.l.b16 %v4487
    %v5447 = vunpack.c.h.b16 %v4487
    %v5448 = vunpack.c.l.b16 %v4488
    %v5449 = vunpack.c.h.b16 %v4488
    %v5450 = vunpack.c.l.b16 %v4489
    %v5451 = vunpack.c.h.b16 %v4489
    %v5452 = vunpack.c.l.b16 %v4490
    %v5453 = vunpack.c.h.b16 %v4490
    %v5454 = vunpack.c.l.b16 %v4491
    %v5455 = vunpack.c.h.b16 %v4491
    %v5456 = vunpack.c.l.b16 %v4492
    %v5457 = vunpack.c.h.b16 %v4492
    %v5458 = vunpack.c.l.b16 %v4493
    %v5459 = vunpack.c.h.b16 %v4493
    %v5460 = vunpack.c.l.b16 %v4494
    %v5461 = vunpack.c.h.b16 %v4494
    %v5462 = vunpack.c.l.b16 %v4495
    %v5463 = vunpack.c.h.b16 %v4495
    %v5464 = vunpack.c.l.b16 %v4496
    %v5465 = vunpack.c.h.b16 %v4496
    %v5466 = vunpack.c.l.b16 %v4497
    %v5467 = vunpack.c.h.b16 %v4497
    %v5468 = vunpack.c.l.b16 %v4498
    %v5469 = vunpack.c.h.b16 %v4498
    %v5470 = vunpack.c.l.b16 %v4499
    %v5471 = vunpack.c.h.b16 %v4499
    %v5472 = vunpack.c.l.b16 %v4500
    %v5473 = vunpack.c.h.b16 %v4500
    %v5474 = vunpack.c.l.b16 %v4501
    %v5475 = vunpack.c.h.b16 %v4501
    %v5476 = vunpack.c.l.b16 %v4502
    %v5477 = vunpack.c.h.b16 %v4502
    %v5478 = vunpack.c.l.b16 %v4503
    %v5479 = vunpack.c.h.b16 %v4503
    %v5480 = vunpack.c.l.b16 %v4504
    %v5481 = vunpack.c.h.b16 %v4504
    %v5482 = vunpack.c.l.b16 %v4505
    %v5483 = vunpack.c.h.b16 %v4505
    %v5484 = vunpack.c.l.b16 %v4506
    %v5485 = vunpack.c.h.b16 %v4506
    %v5486 = vunpack.c.l.b16 %v4507
    %v5487 = vunpack.c.h.b16 %v4507
    %v5488 = vunpack.c.l.b16 %v4508
    %v5489 = vunpack.c.h.b16 %v4508
    %v5490 = vunpack.c.l.b16 %v4509
    %v5491 = vunpack.c.h.b16 %v4509
    %v5492 = vunpack.c.l.b16 %v4510
    %v5493 = vunpack.c.h.b16 %v4510
    %v5494 = vunpack.c.l.b16 %v4511
    %v5495 = vunpack.c.h.b16 %v4511
    %v5496 = vunpack.c.l.b16 %v4512
    %v5497 = vunpack.c.h.b16 %v4512
    %v5498 = vunpack.c.l.b16 %v4513
    %v5499 = vunpack.c.h.b16 %v4513
    %v5500 = vunpack.c.l.b16 %v4514
    %v5501 = vunpack.c.h.b16 %v4514
    %v5502 = vunpack.c.l.b16 %v4515
    %v5503 = vunpack.c.h.b16 %v4515
    %v5504 = vunpack.c.l.b16 %v4516
    %v5505 = vunpack.c.h.b16 %v4516
    %v5506 = vunpack.c.l.b16 %v4517
    %v5507 = vunpack.c.h.b16 %v4517
    %v5508 = vunpack.c.l.b16 %v4518
    %v5509 = vunpack.c.h.b16 %v4518
    %v5510 = vunpack.c.l.b16 %v4519
    %v5511 = vunpack.c.h.b16 %v4519
    %v5512 = vunpack.c.l.b16 %v4520
    %v5513 = vunpack.c.h.b16 %v4520
    %v5514 = vunpack.c.l.b16 %v4521
    %v5515 = vunpack.c.h.b16 %v4521
    %v5516 = vunpack.c.l.b16 %v4522
    %v5517 = vunpack.c.h.b16 %v4522
    %v5518 = vunpack.c.l.b16 %v4523
    %v5519 = vunpack.c.h.b16 %v4523
    %v5520 = vunpack.c.l.b16 %v4524
    %v5521 = vunpack.c.h.b16 %v4524
    %v5522 = vunpack.c.l.b16 %v4525
    %v5523 = vunpack.c.h.b16 %v4525
    %v5524 = vunpack.c.l.b16 %v4526
    %v5525 = vunpack.c.h.b16 %v4526
    %v5526 = vunpack.c.l.b16 %v4527
    %v5527 = vunpack.c.h.b16 %v4527
    %v5528 = vunpack.c.l.b16 %v4528
    %v5529 = vunpack.c.h.b16 %v4528
    %v5530 = vunpack.c.l.b16 %v4529
    %v5531 = vunpack.c.h.b16 %v4529
    %v5532 = vunpack.c.l.b16 %v4530
    %v5533 = vunpack.c.h.b16 %v4530
    %v5534 = vunpack.c.l.b16 %v4531
    %v5535 = vunpack.c.h.b16 %v4531
    %v5536 = vunpack.c.l.b16 %v4532
    %v5537 = vunpack.c.h.b16 %v4532
    %v5538 = vunpack.c.l.b16 %v4533
    %v5539 = vunpack.c.h.b16 %v4533
    %v5540 = vunpack.c.l.b16 %v4534
    %v5541 = vunpack.c.h.b16 %v4534
    %v5542 = vunpack.c.l.b16 %v4535
    %v5543 = vunpack.c.h.b16 %v4535
    %v5544 = vunpack.c.l.b16 %v4536
    %v5545 = vunpack.c.h.b16 %v4536
    %v5546 = vunpack.c.l.b16 %v4537
    %v5547 = vunpack.c.h.b16 %v4537
    %v5548 = vunpack.c.l.b16 %v4538
    %v5549 = vunpack.c.h.b16 %v4538
    %v5550 = vunpack.c.l.b16 %v4539
    %v5551 = vunpack.c.h.b16 %v4539
    %v5552 = vunpack.c.l.b16 %v4540
    %v5553 = vunpack.c.h.b16 %v4540
    %v5554 = vunpack.c.l.b16 %v4541
    %v5555 = vunpack.c.h.b16 %v4541
    %v5556 = vunpack.c.l.b16 %v4542
    %v5557 = vunpack.c.h.b16 %v4542
    %v5558 = vunpack.c.l.b16 %v4543
    %v5559 = vunpack.c.h.b16 %v4543
    %v5560 = vunpack.c.l.b16 %v4544
    %v5561 = vunpack.c.h.b16 %v4544
    %v5562 = vunpack.c.l.b16 %v4545
    %v5563 = vunpack.c.h.b16 %v4545
    %v5564 = vunpack.c.l.b16 %v4546
    %v5565 = vunpack.c.h.b16 %v4546
    %v5566 = vunpack.c.l.b16 %v4547
    %v5567 = vunpack.c.h.b16 %v4547
    %v5568 = vunpack.c.l.b16 %v4548
    %v5569 = vunpack.c.h.b16 %v4548
    %v5570 = vunpack.c.l.b16 %v4549
    %v5571 = vunpack.c.h.b16 %v4549
    %v5572 = vunpack.c.l.b16 %v4550
    %v5573 = vunpack.c.h.b16 %v4550
    %v5574 = vunpack.c.l.b16 %v4551
    %v5575 = vunpack.c.h.b16 %v4551
    %v5576 = vunpack.c.l.b16 %v4552
    %v5577 = vunpack.c.h.b16 %v4552
    %v5578 = vunpack.c.l.b16 %v4553
    %v5579 = vunpack.c.h.b16 %v4553
    %v5580 = vunpack.c.l.b16 %v4554
    %v5581 = vunpack.c.h.b16 %v4554
    %v5582 = vunpack.c.l.b16 %v4555
    %v5583 = vunpack.c.h.b16 %v4555
    %v5584 = vunpack.c.l.b16 %v4556
    %v5585 = vunpack.c.h.b16 %v4556
    %v5586 = vunpack.c.l.b16 %v4557
    %v5587 = vunpack.c.h.b16 %v4557
    %v5588 = vunpack.c.l.b16 %v4558
    %v5589 = vunpack.c.h.b16 %v4558
    %v5590 = vunpack.c.l.b16 %v4559
    %v5591 = vunpack.c.h.b16 %v4559
    %v5592 = vunpack.c.l.b16 %v4560
    %v5593 = vunpack.c.h.b16 %v4560
    %v5594 = vunpack.c.l.b16 %v4561
    %v5595 = vunpack.c.h.b16 %v4561
    %v5596 = vunpack.c.l.b16 %v4562
    %v5597 = vunpack.c.h.b16 %v4562
    %v5598 = vunpack.c.l.b16 %v4563
    %v5599 = vunpack.c.h.b16 %v4563
    %v5600 = vunpack.c.l.b16 %v4564
    %v5601 = vunpack.c.h.b16 %v4564
    %v5602 = vunpack.c.l.b16 %v4565
    %v5603 = vunpack.c.h.b16 %v4565
    %v5604 = vunpack.c.l.b16 %v4566
    %v5605 = vunpack.c.h.b16 %v4566
    %v5606 = vunpack.c.l.b16 %v4567
    %v5607 = vunpack.c.h.b16 %v4567
    %v5608 = vunpack.c.l.b16 %v4568
    %v5609 = vunpack.c.h.b16 %v4568
    %v5610 = vunpack.c.l.b16 %v4569
    %v5611 = vunpack.c.h.b16 %v4569
    %v5612 = vunpack.c.l.b16 %v4570
    %v5613 = vunpack.c.h.b16 %v4570
    %v5614 = vunpack.c.l.b16 %v4571
    %v5615 = vunpack.c.h.b16 %v4571
    %v5616 = vunpack.c.l.b16 %v4572
    %v5617 = vunpack.c.h.b16 %v4572
    %v5618 = vunpack.c.l.b16 %v4573
    %v5619 = vunpack.c.h.b16 %v4573
    %v5620 = vunpack.c.l.b16 %v4574
    %v5621 = vunpack.c.h.b16 %v4574
    %v5622 = vunpack.c.l.b16 %v4575
    %v5623 = vunpack.c.h.b16 %v4575
    %v5624 = vunpack.c.l.b16 %v4576
    %v5625 = vunpack.c.h.b16 %v4576
    %v5626 = vunpack.c.l.b16 %v4577
    %v5627 = vunpack.c.h.b16 %v4577
    %v5628 = vunpack.c.l.b16 %v4578
    %v5629 = vunpack.c.h.b16 %v4578
    %v5630 = vunpack.c.l.b16 %v4579
    %v5631 = vunpack.c.h.b16 %v4579
    %v5632 = vunpack.c.l.b16 %v4580
    %v5633 = vunpack.c.h.b16 %v4580
    %v5634 = vunpack.c.l.b16 %v4581
    %v5635 = vunpack.c.h.b16 %v4581
    %v5636 = vunpack.c.l.b16 %v4582
    %v5637 = vunpack.c.h.b16 %v4582
    %v5638 = vunpack.c.l.b16 %v4583
    %v5639 = vunpack.c.h.b16 %v4583
    %v5640 = vunpack.c.l.b16 %v4584
    %v5641 = vunpack.c.h.b16 %v4584
    %v5642 = vunpack.c.l.b16 %v4585
    %v5643 = vunpack.c.h.b16 %v4585
    %v5644 = vunpack.c.l.b16 %v4586
    %v5645 = vunpack.c.h.b16 %v4586
    %v5646 = vunpack.c.l.b16 %v4587
    %v5647 = vunpack.c.h.b16 %v4587
    %v5648 = vunpack.c.l.b16 %v4588
    %v5649 = vunpack.c.h.b16 %v4588
    %v5650 = vunpack.c.l.b16 %v4589
    %v5651 = vunpack.c.h.b16 %v4589
    %v5652 = vunpack.c.l.b16 %v4590
    %v5653 = vunpack.c.h.b16 %v4590
    %v5654 = vunpack.c.l.b16 %v4591
    %v5655 = vunpack.c.h.b16 %v4591
    %v5656 = vunpack.c.l.b16 %v4592
    %v5657 = vunpack.c.h.b16 %v4592
    %v5658 = vunpack.c.l.b16 %v4593
    %v5659 = vunpack.c.h.b16 %v4593
    %v5660 = vunpack.c.l.b16 %v4594
    %v5661 = vunpack.c.h.b16 %v4594
    %v5662 = vunpack.c.l.b16 %v4595
    %v5663 = vunpack.c.h.b16 %v4595
    %v5664 = vunpack.c.l.b16 %v4596
    %v5665 = vunpack.c.h.b16 %v4596
    %v5666 = vunpack.c.l.b16 %v4597
    %v5667 = vunpack.c.h.b16 %v4597
    %v5668 = vunpack.c.l.b16 %v4598
    %v5669 = vunpack.c.h.b16 %v4598
    %v5670 = vunpack.c.l.b16 %v4599
    %v5671 = vunpack.c.h.b16 %v4599
    %v5672 = vunpack.c.l.b16 %v4600
    %v5673 = vunpack.c.h.b16 %v4600
    %v5674 = vunpack.c.l.b16 %v4601
    %v5675 = vunpack.c.h.b16 %v4601
    %v5676 = vunpack.c.l.b16 %v4602
    %v5677 = vunpack.c.h.b16 %v4602
    %v5678 = vunpack.c.l.b16 %v4603
    %v5679 = vunpack.c.h.b16 %v4603
    %v5680 = vunpack.c.l.b16 %v4604
    %v5681 = vunpack.c.h.b16 %v4604
    %v5682 = vunpack.c.l.b16 %v4605
    %v5683 = vunpack.c.h.b16 %v4605
    %v5684 = vunpack.c.l.b16 %v4606
    %v5685 = vunpack.c.h.b16 %v4606
    %v5686 = vunpack.c.l.b16 %v4607
    %v5687 = vunpack.c.h.b16 %v4607
    %v5688 = vunpack.c.l.b16 %v4608
    %v5689 = vunpack.c.h.b16 %v4608
    %v5690 = vunpack.c.l.b16 %v4609
    %v5691 = vunpack.c.h.b16 %v4609
    %v5692 = vunpack.c.l.b16 %v4610
    %v5693 = vunpack.c.h.b16 %v4610
    %v5694 = vunpack.c.l.b16 %v4611
    %v5695 = vunpack.c.h.b16 %v4611
    %v5696 = vunpack.c.l.b16 %v4612
    %v5697 = vunpack.c.h.b16 %v4612
    %v5698 = vunpack.c.l.b16 %v4613
    %v5699 = vunpack.c.h.b16 %v4613
    %v5700 = vunpack.c.l.b16 %v4614
    %v5701 = vunpack.c.h.b16 %v4614
    %v5702 = vunpack.c.l.b16 %v4615
    %v5703 = vunpack.c.h.b16 %v4615
    %v5704 = vunpack.c.l.b16 %v4616
    %v5705 = vunpack.c.h.b16 %v4616
    %v5706 = vunpack.c.l.b16 %v4617
    %v5707 = vunpack.c.h.b16 %v4617
    %v5708 = vunpack.c.l.b16 %v4618
    %v5709 = vunpack.c.h.b16 %v4618
    %v5710 = vunpack.c.l.b16 %v4619
    %v5711 = vunpack.c.h.b16 %v4619
    %v5712 = vunpack.c.l.b16 %v4620
    %v5713 = vunpack.c.h.b16 %v4620
    %v5714 = vunpack.c.l.b16 %v4621
    %v5715 = vunpack.c.h.b16 %v4621
    %v5716 = vunpack.c.l.b16 %v4622
    %v5717 = vunpack.c.h.b16 %v4622
    %v5718 = vunpack.c.l.b16 %v4623
    %v5719 = vunpack.c.h.b16 %v4623
    %v5720 = vunpack.c.l.b16 %v4624
    %v5721 = vunpack.c.h.b16 %v4624
    %v5722 = vunpack.c.l.b16 %v4625
    %v5723 = vunpack.c.h.b16 %v4625
    %v5724 = vunpack.c.l.b16 %v4626
    %v5725 = vunpack.c.h.b16 %v4626
    %v5726 = vunpack.c.l.b16 %v4627
    %v5727 = vunpack.c.h.b16 %v4627
    %v5728 = vunpack.c.l.b16 %v4628
    %v5729 = vunpack.c.h.b16 %v4628
    %v5730 = vunpack.c.l.b16 %v4629
    %v5731 = vunpack.c.h.b16 %v4629
    %v5732 = vunpack.c.l.b16 %v4630
    %v5733 = vunpack.c.h.b16 %v4630
    %v5734 = vunpack.c.l.b16 %v4631
    %v5735 = vunpack.c.h.b16 %v4631
    %v5736 = vunpack.c.l.b16 %v4632
    %v5737 = vunpack.c.h.b16 %v4632
    %v5738 = vunpack.c.l.b16 %v4633
    %v5739 = vunpack.c.h.b16 %v4633
    %v5740 = vunpack.c.l.b16 %v4634
    %v5741 = vunpack.c.h.b16 %v4634
    %v5742 = vunpack.c.l.b16 %v4635
    %v5743 = vunpack.c.h.b16 %v4635
    %v5744 = vunpack.c.l.b16 %v4636
    %v5745 = vunpack.c.h.b16 %v4636
    %v5746 = vunpack.c.l.b16 %v4637
    %v5747 = vunpack.c.h.b16 %v4637
    %v5748 = vunpack.c.l.b16 %v4638
    %v5749 = vunpack.c.h.b16 %v4638
    %v5750 = vunpack.c.l.b16 %v4639
    %v5751 = vunpack.c.h.b16 %v4639
    %v5752 = vunpack.c.l.b16 %v4640
    %v5753 = vunpack.c.h.b16 %v4640
    %v5754 = vunpack.c.l.b16 %v4641
    %v5755 = vunpack.c.h.b16 %v4641
    %v5756 = vunpack.c.l.b16 %v4642
    %v5757 = vunpack.c.h.b16 %v4642
    %v5758 = vunpack.c.l.b16 %v4643
    %v5759 = vunpack.c.h.b16 %v4643
    %v5760 = vunpack.c.l.b16 %v4644
    %v5761 = vunpack.c.h.b16 %v4644
    %v5762 = vunpack.c.l.b16 %v4645
    %v5763 = vunpack.c.h.b16 %v4645
    %v5764 = vunpack.c.l.b16 %v4646
    %v5765 = vunpack.c.h.b16 %v4646
    %v5766 = vunpack.c.l.b16 %v4647
    %v5767 = vunpack.c.h.b16 %v4647
    %v5768 = vunpack.c.l.b16 %v4648
    %v5769 = vunpack.c.h.b16 %v4648
    %v5770 = vunpack.c.l.b16 %v4649
    %v5771 = vunpack.c.h.b16 %v4649
    %v5772 = vunpack.c.l.b16 %v4650
    %v5773 = vunpack.c.h.b16 %v4650
    %v5774 = vunpack.c.l.b16 %v4651
    %v5775 = vunpack.c.h.b16 %v4651
    %v5776 = vunpack.c.l.b16 %v4652
    %v5777 = vunpack.c.h.b16 %v4652
    %v5778 = vunpack.c.l.b16 %v4653
    %v5779 = vunpack.c.h.b16 %v4653
    %v5780 = vunpack.c.l.b16 %v4654
    %v5781 = vunpack.c.h.b16 %v4654
    %v5782 = vunpack.c.l.b16 %v4655
    %v5783 = vunpack.c.h.b16 %v4655
    %v5784 = vunpack.c.l.b16 %v4656
    %v5785 = vunpack.c.h.b16 %v4656
    %v5786 = vunpack.c.l.b16 %v4657
    %v5787 = vunpack.c.h.b16 %v4657
    %v5788 = vunpack.c.l.b16 %v4658
    %v5789 = vunpack.c.h.b16 %v4658
    %v5790 = vunpack.c.l.b16 %v4659
    %v5791 = vunpack.c.h.b16 %v4659
    %v5792 = vunpack.c.l.b16 %v4660
    %v5793 = vunpack.c.h.b16 %v4660
    %v5794 = vunpack.c.l.b16 %v4661
    %v5795 = vunpack.c.h.b16 %v4661
    %v5796 = vunpack.c.l.b16 %v4662
    %v5797 = vunpack.c.h.b16 %v4662
    %v5798 = vunpack.c.l.b16 %v4663
    %v5799 = vunpack.c.h.b16 %v4663
    %v5800 = vunpack.c.l.b16 %v4664
    %v5801 = vunpack.c.h.b16 %v4664
    %v5802 = vunpack.c.l.b16 %v4665
    %v5803 = vunpack.c.h.b16 %v4665
    %v5804 = vunpack.c.l.b16 %v4666
    %v5805 = vunpack.c.h.b16 %v4666
    %v5806 = vunpack.c.l.b16 %v4667
    %v5807 = vunpack.c.h.b16 %v4667
    %v5808 = vunpack.c.l.b16 %v4668
    %v5809 = vunpack.c.h.b16 %v4668
    %v5810 = vunpack.c.l.b16 %v4669
    %v5811 = vunpack.c.h.b16 %v4669
    %v5812 = vunpack.c.l.b16 %v4670
    %v5813 = vunpack.c.h.b16 %v4670
    %v5814 = vunpack.c.l.b16 %v4671
    %v5815 = vunpack.c.h.b16 %v4671
    %v5816 = vunpack.c.l.b16 %v4672
    %v5817 = vunpack.c.h.b16 %v4672
    %v5818 = vunpack.c.l.b16 %v4673
    %v5819 = vunpack.c.h.b16 %v4673
    %v5820 = vunpack.c.l.b16 %v4674
    %v5821 = vunpack.c.h.b16 %v4674
    %v5822 = vunpack.c.l.b16 %v4675
    %v5823 = vunpack.c.h.b16 %v4675
    %v5824 = vunpack.c.l.b16 %v4676
    %v5825 = vunpack.c.h.b16 %v4676
    %v5826 = vunpack.c.l.b16 %v4677
    %v5827 = vunpack.c.h.b16 %v4677
    %v5828 = vunpack.c.l.b16 %v4678
    %v5829 = vunpack.c.h.b16 %v4678
    %v5830 = vunpack.c.l.b16 %v4679
    %v5831 = vunpack.c.h.b16 %v4679
    %v5832 = vunpack.c.l.b16 %v4680
    %v5833 = vunpack.c.h.b16 %v4680
    %v5834 = vunpack.c.l.b16 %v4681
    %v5835 = vunpack.c.h.b16 %v4681
    %v5836 = vunpack.c.l.b16 %v4682
    %v5837 = vunpack.c.h.b16 %v4682
    %v5838 = vunpack.c.l.b16 %v4683
    %v5839 = vunpack.c.h.b16 %v4683
    %v5840 = vunpack.c.l.b16 %v4684
    %v5841 = vunpack.c.h.b16 %v4684
    %v5842 = vunpack.c.l.b16 %v4685
    %v5843 = vunpack.c.h.b16 %v4685
    %v5844 = vunpack.c.l.b16 %v4686
    %v5845 = vunpack.c.h.b16 %v4686
    %v5846 = vunpack.c.l.b16 %v4687
    %v5847 = vunpack.c.h.b16 %v4687
    %v5848 = vunpack.c.l.b16 %v4688
    %v5849 = vunpack.c.h.b16 %v4688
    %v5850 = vunpack.c.l.b16 %v4689
    %v5851 = vunpack.c.h.b16 %v4689
    %v5852 = vunpack.c.l.b16 %v4690
    %v5853 = vunpack.c.h.b16 %v4690
    %v5854 = vunpack.c.l.b16 %v4691
    %v5855 = vunpack.c.h.b16 %v4691
    %v5856 = vunpack.c.l.b16 %v4692
    %v5857 = vunpack.c.h.b16 %v4692
    %v5858 = vunpack.c.l.b16 %v4693
    %v5859 = vunpack.c.h.b16 %v4693
    %v5860 = vunpack.c.l.b16 %v4694
    %v5861 = vunpack.c.h.b16 %v4694
    %v5862 = vunpack.c.l.b16 %v4695
    %v5863 = vunpack.c.h.b16 %v4695
    %v5864 = vunpack.c.l.b16 %v4696
    %v5865 = vunpack.c.h.b16 %v4696
    %v5866 = vunpack.c.l.b16 %v4697
    %v5867 = vunpack.c.h.b16 %v4697
    %v5868 = vunpack.c.l.b16 %v4698
    %v5869 = vunpack.c.h.b16 %v4698
    %v5870 = vunpack.c.l.b16 %v4699
    %v5871 = vunpack.c.h.b16 %v4699
    %v5872 = vunpack.c.l.b16 %v4700
    %v5873 = vunpack.c.h.b16 %v4700
    %v5874 = vunpack.c.l.b16 %v4701
    %v5875 = vunpack.c.h.b16 %v4701
    %v5876 = vunpack.c.l.b16 %v4702
    %v5877 = vunpack.c.h.b16 %v4702
    %v5878 = vunpack.c.l.b16 %v4703
    %v5879 = vunpack.c.h.b16 %v4703
    %v5880 = vunpack.c.l.b16 %v4704
    %v5881 = vunpack.c.h.b16 %v4704
    %v5882 = vunpack.c.l.b16 %v4705
    %v5883 = vunpack.c.h.b16 %v4705
    %v5884 = vunpack.c.l.b16 %v4706
    %v5885 = vunpack.c.h.b16 %v4706
    %v5886 = vunpack.c.l.b16 %v4707
    %v5887 = vunpack.c.h.b16 %v4707
    %v5888 = vunpack.c.l.b16 %v4708
    %v5889 = vunpack.c.h.b16 %v4708
    %v5890 = vunpack.c.l.b16 %v4709
    %v5891 = vunpack.c.h.b16 %v4709
    %v5892 = vunpack.c.l.b16 %v4710
    %v5893 = vunpack.c.h.b16 %v4710
    %v5894 = vunpack.c.l.b16 %v4711
    %v5895 = vunpack.c.h.b16 %v4711
    %v5896 = vunpack.c.l.b16 %v4712
    %v5897 = vunpack.c.h.b16 %v4712
    %v5898 = vunpack.c.l.b16 %v4713
    %v5899 = vunpack.c.h.b16 %v4713
    %v5900 = vunpack.c.l.b16 %v4714
    %v5901 = vunpack.c.h.b16 %v4714
    %v5902 = vunpack.c.l.b16 %v4715
    %v5903 = vunpack.c.h.b16 %v4715
    %v5904 = vunpack.c.l.b16 %v4716
    %v5905 = vunpack.c.h.b16 %v4716
    %v5906 = vunpack.c.l.b16 %v4717
    %v5907 = vunpack.c.h.b16 %v4717
    %v5908 = vunpack.c.l.b16 %v4718
    %v5909 = vunpack.c.h.b16 %v4718
    %v5910 = vunpack.c.l.b16 %v4719
    %v5911 = vunpack.c.h.b16 %v4719
    %v5912 = vunpack.c.l.b16 %v4720
    %v5913 = vunpack.c.h.b16 %v4720
    %v5914 = vunpack.c.l.b16 %v4721
    %v5915 = vunpack.c.h.b16 %v4721
    %v5916 = vunpack.c.l.b16 %v4722
    %v5917 = vunpack.c.h.b16 %v4722
    %v5918 = vunpack.c.l.b16 %v4723
    %v5919 = vunpack.c.h.b16 %v4723
    %v5920 = vunpack.c.l.b16 %v4724
    %v5921 = vunpack.c.h.b16 %v4724
    %v5922 = vunpack.c.l.b16 %v4725
    %v5923 = vunpack.c.h.b16 %v4725
    %v5924 = vunpack.c.l.b16 %v4726
    %v5925 = vunpack.c.h.b16 %v4726
    %v5926 = vunpack.c.l.b16 %v4727
    %v5927 = vunpack.c.h.b16 %v4727
    %v5928 = vunpack.c.l.b16 %v4728
    %v5929 = vunpack.c.h.b16 %v4728
    %v5930 = vunpack.c.l.b16 %v4729
    %v5931 = vunpack.c.h.b16 %v4729
    %v5932 = vunpack.c.l.b16 %v4730
    %v5933 = vunpack.c.h.b16 %v4730
    %v5934 = vunpack.c.l.b16 %v4731
    %v5935 = vunpack.c.h.b16 %v4731
    %v5936 = vunpack.c.l.b16 %v4732
    %v5937 = vunpack.c.h.b16 %v4732
    %v5938 = vunpack.c.l.b16 %v4733
    %v5939 = vunpack.c.h.b16 %v4733
    %v5940 = vunpack.c.l.b16 %v4734
    %v5941 = vunpack.c.h.b16 %v4734
    %v5942 = vunpack.c.l.b16 %v4735
    %v5943 = vunpack.c.h.b16 %v4735
    %v5944 = vunpack.c.l.b16 %v4736
    %v5945 = vunpack.c.h.b16 %v4736
    %v5946 = vunpack.c.l.b16 %v4737
    %v5947 = vunpack.c.h.b16 %v4737
    %v5948 = vunpack.c.l.b16 %v4738
    %v5949 = vunpack.c.h.b16 %v4738
    %v5950 = vunpack.c.l.b16 %v4739
    %v5951 = vunpack.c.h.b16 %v4739
    %v5952 = vunpack.c.l.b16 %v4740
    %v5953 = vunpack.c.h.b16 %v4740
    %v5954 = vunpack.c.l.b16 %v4741
    %v5955 = vunpack.c.h.b16 %v4741
    %v5956 = vunpack.c.l.b16 %v4742
    %v5957 = vunpack.c.h.b16 %v4742
    %v5958 = vunpack.c.l.b16 %v4743
    %v5959 = vunpack.c.h.b16 %v4743
    %v5960 = vpack.c.b16 %v5204, %v5192
    %v5961 = vpack.c.b16 %v5205, %v5193
    %v5962 = vpack.c.b16 %v5206, %v5194
    %v5963 = vpack.c.b16 %v5207, %v5195
    %v5964 = vpack.c.b16 %v5208, %v5196
    %v5965 = vpack.c.b16 %v5209, %v5197
    %v5966 = vpack.c.b16 %v5210, %v5198
    %v5967 = vpack.c.b16 %v5211, %v5199
    %v5968 = vpack.c.b16 %v5212, %v5200
    %v5969 = vpack.c.b16 %v5213, %v5201
    %v5970 = vpack.c.b16 %v5214, %v5202
    %v5971 = vpack.c.b16 %v5215, %v5203
    %v5972 = vpack.c.b16 %v5228, %v5216
    %v5973 = vpack.c.b16 %v5229, %v5217
    %v5974 = vpack.c.b16 %v5230, %v5218
    %v5975 = vpack.c.b16 %v5231, %v5219
    %v5976 = vpack.c.b16 %v5232, %v5220
    %v5977 = vpack.c.b16 %v5233, %v5221
    %v5978 = vpack.c.b16 %v5234, %v5222
    %v5979 = vpack.c.b16 %v5235, %v5223
    %v5980 = vpack.c.b16 %v5236, %v5224
    %v5981 = vpack.c.b16 %v5237, %v5225
    %v5982 = vpack.c.b16 %v5238, %v5226
    %v5983 = vpack.c.b16 %v5239, %v5227
    %v5984 = vpack.c.b16 %v5252, %v5240
    %v5985 = vpack.c.b16 %v5253, %v5241
    %v5986 = vpack.c.b16 %v5254, %v5242
    %v5987 = vpack.c.b16 %v5255, %v5243
    %v5988 = vpack.c.b16 %v5256, %v5244
    %v5989 = vpack.c.b16 %v5257, %v5245
    %v5990 = vpack.c.b16 %v5258, %v5246
    %v5991 = vpack.c.b16 %v5259, %v5247
    %v5992 = vpack.c.b16 %v5260, %v5248
    %v5993 = vpack.c.b16 %v5261, %v5249
    %v5994 = vpack.c.b16 %v5262, %v5250
    %v5995 = vpack.c.b16 %v5263, %v5251
    %v5996 = vpack.c.b16 %v5276, %v5264
    %v5997 = vpack.c.b16 %v5277, %v5265
    %v5998 = vpack.c.b16 %v5278, %v5266
    %v5999 = vpack.c.b16 %v5279, %v5267
    %v6000 = vpack.c.b16 %v5280, %v5268
    %v6001 = vpack.c.b16 %v5281, %v5269
    %v6002 = vpack.c.b16 %v5282, %v5270
    %v6003 = vpack.c.b16 %v5283, %v5271
    %v6004 = vpack.c.b16 %v5284, %v5272
    %v6005 = vpack.c.b16 %v5285, %v5273
    %v6006 = vpack.c.b16 %v5286, %v5274
    %v6007 = vpack.c.b16 %v5287, %v5275
    %v6008 = vpack.c.b16 %v5300, %v5288
    %v6009 = vpack.c.b16 %v5301, %v5289
    %v6010 = vpack.c.b16 %v5302, %v5290
    %v6011 = vpack.c.b16 %v5303, %v5291
    %v6012 = vpack.c.b16 %v5304, %v5292
    %v6013 = vpack.c.b16 %v5305, %v5293
    %v6014 = vpack.c.b16 %v5306, %v5294
    %v6015 = vpack.c.b16 %v5307, %v5295
    %v6016 = vpack.c.b16 %v5308, %v5296
    %v6017 = vpack.c.b16 %v5309, %v5297
    %v6018 = vpack.c.b16 %v5310, %v5298
    %v6019 = vpack.c.b16 %v5311, %v5299
    %v6020 = vpack.c.b16 %v5324, %v5312
    %v6021 = vpack.c.b16 %v5325, %v5313
    %v6022 = vpack.c.b16 %v5326, %v5314
    %v6023 = vpack.c.b16 %v5327, %v5315
    %v6024 = vpack.c.b16 %v5328, %v5316
    %v6025 = vpack.c.b16 %v5329, %v5317
    %v6026 = vpack.c.b16 %v5330, %v5318
    %v6027 = vpack.c.b16 %v5331, %v5319
    %v6028 = vpack.c.b16 %v5332, %v5320
    %v6029 = vpack.c.b16 %v5333, %v5321
    %v6030 = vpack.c.b16 %v5334, %v5322
    %v6031 = vpack.c.b16 %v5335, %v5323
    %v6032 = vpack.c.b16 %v5348, %v5336
    %v6033 = vpack.c.b16 %v5349, %v5337
    %v6034 = vpack.c.b16 %v5350, %v5338
    %v6035 = vpack.c.b16 %v5351, %v5339
    %v6036 = vpack.c.b16 %v5352, %v5340
    %v6037 = vpack.c.b16 %v5353, %v5341
    %v6038 = vpack.c.b16 %v5354, %v5342
    %v6039 = vpack.c.b16 %v5355, %v5343
    %v6040 = vpack.c.b16 %v5356, %v5344
    %v6041 = vpack.c.b16 %v5357, %v5345
    %v6042 = vpack.c.b16 %v5358, %v5346
    %v6043 = vpack.c.b16 %v5359, %v5347
    %v6044 = vpack.c.b16 %v5372, %v5360
    %v6045 = vpack.c.b16 %v5373, %v5361
    %v6046 = vpack.c.b16 %v5374, %v5362
    %v6047 = vpack.c.b16 %v5375, %v5363
    %v6048 = vpack.c.b16 %v5376, %v5364
    %v6049 = vpack.c.b16 %v5377, %v5365
    %v6050 = vpack.c.b16 %v5378, %v5366
    %v6051 = vpack.c.b16 %v5379, %v5367
    %v6052 = vpack.c.b16 %v5380, %v5368
    %v6053 = vpack.c.b16 %v5381, %v5369
    %v6054 = vpack.c.b16 %v5382, %v5370
    %v6055 = vpack.c.b16 %v5383, %v5371
    %v6056 = vpack.c.b16 %v5396, %v5384
    %v6057 = vpack.c.b16 %v5397, %v5385
    %v6058 = vpack.c.b16 %v5398, %v5386
    %v6059 = vpack.c.b16 %v5399, %v5387
    %v6060 = vpack.c.b16 %v5400, %v5388
    %v6061 = vpack.c.b16 %v5401, %v5389
    %v6062 = vpack.c.b16 %v5402, %v5390
    %v6063 = vpack.c.b16 %v5403, %v5391
    %v6064 = vpack.c.b16 %v5404, %v5392
    %v6065 = vpack.c.b16 %v5405, %v5393
    %v6066 = vpack.c.b16 %v5406, %v5394
    %v6067 = vpack.c.b16 %v5407, %v5395
    %v6068 = vpack.c.b16 %v5420, %v5408
    %v6069 = vpack.c.b16 %v5421, %v5409
    %v6070 = vpack.c.b16 %v5422, %v5410
    %v6071 = vpack.c.b16 %v5423, %v5411
    %v6072 = vpack.c.b16 %v5424, %v5412
    %v6073 = vpack.c.b16 %v5425, %v5413
    %v6074 = vpack.c.b16 %v5426, %v5414
    %v6075 = vpack.c.b16 %v5427, %v5415
    %v6076 = vpack.c.b16 %v5428, %v5416
    %v6077 = vpack.c.b16 %v5429, %v5417
    %v6078 = vpack.c.b16 %v5430, %v5418
    %v6079 = vpack.c.b16 %v5431, %v5419
    %v6080 = vpack.c.b16 %v5444, %v5432
    %v6081 = vpack.c.b16 %v5445, %v5433
    %v6082 = vpack.c.b16 %v5446, %v5434
    %v6083 = vpack.c.b16 %v5447, %v5435
    %v6084 = vpack.c.b16 %v5448, %v5436
    %v6085 = vpack.c.b16 %v5449, %v5437
    %v6086 = vpack.c.b16 %v5450, %v5438
    %v6087 = vpack.c.b16 %v5451, %v5439
    %v6088 = vpack.c.b16 %v5452, %v5440
    %v6089 = vpack.c.b16 %v5453, %v5441
    %v6090 = vpack.c.b16 %v5454, %v5442
    %v6091 = vpack.c.b16 %v5455, %v5443
    %v6092 = vpack.c.b16 %v5468, %v5456
    %v6093 = vpack.c.b16 %v5469, %v5457
    %v6094 = vpack.c.b16 %v5470, %v5458
    %v6095 = vpack.c.b16 %v5471, %v5459
    %v6096 = vpack.c.b16 %v5472, %v5460
    %v6097 = vpack.c.b16 %v5473, %v5461
    %v6098 = vpack.c.b16 %v5474, %v5462
    %v6099 = vpack.c.b16 %v5475, %v5463
    %v6100 = vpack.c.b16 %v5476, %v5464
    %v6101 = vpack.c.b16 %v5477, %v5465
    %v6102 = vpack.c.b16 %v5478, %v5466
    %v6103 = vpack.c.b16 %v5479, %v5467
    %v6104 = vpack.c.b16 %v5492, %v5480
    %v6105 = vpack.c.b16 %v5493, %v5481
    %v6106 = vpack.c.b16 %v5494, %v5482
    %v6107 = vpack.c.b16 %v5495, %v5483
    %v6108 = vpack.c.b16 %v5496, %v5484
    %v6109 = vpack.c.b16 %v5497, %v5485
    %v6110 = vpack.c.b16 %v5498, %v5486
    %v6111 = vpack.c.b16 %v5499, %v5487
    %v6112 = vpack.c.b16 %v5500, %v5488
    %v6113 = vpack.c.b16 %v5501, %v5489
    %v6114 = vpack.c.b16 %v5502, %v5490
    %v6115 = vpack.c.b16 %v5503, %v5491
    %v6116 = vpack.c.b16 %v5516, %v5504
    %v6117 = vpack.c.b16 %v5517, %v5505
    %v6118 = vpack.c.b16 %v5518, %v5506
    %v6119 = vpack.c.b16 %v5519, %v5507
    %v6120 = vpack.c.b16 %v5520, %v5508
    %v6121 = vpack.c.b16 %v5521, %v5509
    %v6122 = vpack.c.b16 %v5522, %v5510
    %v6123 = vpack.c.b16 %v5523, %v5511
    %v6124 = vpack.c.b16 %v5524, %v5512
    %v6125 = vpack.c.b16 %v5525, %v5513
    %v6126 = vpack.c.b16 %v5526, %v5514
    %v6127 = vpack.c.b16 %v5527, %v5515
    %v6128 = vpack.c.b16 %v5540, %v5528
    %v6129 = vpack.c.b16 %v5541, %v5529
    %v6130 = vpack.c.b16 %v5542, %v5530
    %v6131 = vpack.c.b16 %v5543, %v5531
    %v6132 = vpack.c.b16 %v5544, %v5532
    %v6133 = vpack.c.b16 %v5545, %v5533
    %v6134 = vpack.c.b16 %v5546, %v5534
    %v6135 = vpack.c.b16 %v5547, %v5535
    %v6136 = vpack.c.b16 %v5548, %v5536
    %v6137 = vpack.c.b16 %v5549, %v5537
    %v6138 = vpack.c.b16 %v5550, %v5538
    %v6139 = vpack.c.b16 %v5551, %v5539
    %v6140 = vpack.c.b16 %v5564, %v5552
    %v6141 = vpack.c.b16 %v5565, %v5553
    %v6142 = vpack.c.b16 %v5566, %v5554
    %v6143 = vpack.c.b16 %v5567, %v5555
    %v6144 = vpack.c.b16 %v5568, %v5556
    %v6145 = vpack.c.b16 %v5569, %v5557
    %v6146 = vpack.c.b16 %v5570, %v5558
    %v6147 = vpack.c.b16 %v5571, %v5559
    %v6148 = vpack.c.b16 %v5572, %v5560
    %v6149 = vpack.c.b16 %v5573, %v5561
    %v6150 = vpack.c.b16 %v5574, %v5562
    %v6151 = vpack.c.b16 %v5575, %v5563
    %v6152 = vpack.c.b16 %v5588, %v5576
    %v6153 = vpack.c.b16 %v5589, %v5577
    %v6154 = vpack.c.b16 %v5590, %v5578
    %v6155 = vpack.c.b16 %v5591, %v5579
    %v6156 = vpack.c.b16 %v5592, %v5580
    %v6157 = vpack.c.b16 %v5593, %v5581
    %v6158 = vpack.c.b16 %v5594, %v5582
    %v6159 = vpack.c.b16 %v5595, %v5583
    %v6160 = vpack.c.b16 %v5596, %v5584
    %v6161 = vpack.c.b16 %v5597, %v5585
    %v6162 = vpack.c.b16 %v5598, %v5586
    %v6163 = vpack.c.b16 %v5599, %v5587
    %v6164 = vpack.c.b16 %v5612, %v5600
    %v6165 = vpack.c.b16 %v5613, %v5601
    %v6166 = vpack.c.b16 %v5614, %v5602
    %v6167 = vpack.c.b16 %v5615, %v5603
    %v6168 = vpack.c.b16 %v5616, %v5604
    %v6169 = vpack.c.b16 %v5617, %v5605
    %v6170 = vpack.c.b16 %v5618, %v5606
    %v6171 = vpack.c.b16 %v5619, %v5607
    %v6172 = vpack.c.b16 %v5620, %v5608
    %v6173 = vpack.c.b16 %v5621, %v5609
    %v6174 = vpack.c.b16 %v5622, %v5610
    %v6175 = vpack.c.b16 %v5623, %v5611
    %v6176 = vpack.c.b16 %v5636, %v5624
    %v6177 = vpack.c.b16 %v5637, %v5625
    %v6178 = vpack.c.b16 %v5638, %v5626
    %v6179 = vpack.c.b16 %v5639, %v5627
    %v6180 = vpack.c.b16 %v5640, %v5628
    %v6181 = vpack.c.b16 %v5641, %v5629
    %v6182 = vpack.c.b16 %v5642, %v5630
    %v6183 = vpack.c.b16 %v5643, %v5631
    %v6184 = vpack.c.b16 %v5644, %v5632
    %v6185 = vpack.c.b16 %v5645, %v5633
    %v6186 = vpack.c.b16 %v5646, %v5634
    %v6187 = vpack.c.b16 %v5647, %v5635
    %v6188 = vpack.c.b16 %v5660, %v5648
    %v6189 = vpack.c.b16 %v5661, %v5649
    %v6190 = vpack.c.b16 %v5662, %v5650
    %v6191 = vpack.c.b16 %v5663, %v5651
    %v6192 = vpack.c.b16 %v5664, %v5652
    %v6193 = vpack.c.b16 %v5665, %v5653
    %v6194 = vpack.c.b16 %v5666, %v5654
    %v6195 = vpack.c.b16 %v5667, %v5655
    %v6196 = vpack.c.b16 %v5668, %v5656
    %v6197 = vpack.c.b16 %v5669, %v5657
    %v6198 = vpack.c.b16 %v5670, %v5658
    %v6199 = vpack.c.b16 %v5671, %v5659
    %v6200 = vpack.c.b16 %v5684, %v5672
    %v6201 = vpack.c.b16 %v5685, %v5673
    %v6202 = vpack.c.b16 %v5686, %v5674
    %v6203 = vpack.c.b16 %v5687, %v5675
    %v6204 = vpack.c.b16 %v5688, %v5676
    %v6205 = vpack.c.b16 %v5689, %v5677
    %v6206 = vpack.c.b16 %v5690, %v5678
    %v6207 = vpack.c.b16 %v5691, %v5679
    %v6208 = vpack.c.b16 %v5692, %v5680
    %v6209 = vpack.c.b16 %v5693, %v5681
    %v6210 = vpack.c.b16 %v5694, %v5682
    %v6211 = vpack.c.b16 %v5695, %v5683
    %v6212 = vpack.c.b16 %v5708, %v5696
    %v6213 = vpack.c.b16 %v5709, %v5697
    %v6214 = vpack.c.b16 %v5710, %v5698
    %v6215 = vpack.c.b16 %v5711, %v5699
    %v6216 = vpack.c.b16 %v5712, %v5700
    %v6217 = vpack.c.b16 %v5713, %v5701
    %v6218 = vpack.c.b16 %v5714, %v5702
    %v6219 = vpack.c.b16 %v5715, %v5703
    %v6220 = vpack.c.b16 %v5716, %v5704
    %v6221 = vpack.c.b16 %v5717, %v5705
    %v6222 = vpack.c.b16 %v5718, %v5706
    %v6223 = vpack.c.b16 %v5719, %v5707
    %v6224 = vpack.c.b16 %v5732, %v5720
    %v6225 = vpack.c.b16 %v5733, %v5721
    %v6226 = vpack.c.b16 %v5734, %v5722
    %v6227 = vpack.c.b16 %v5735, %v5723
    %v6228 = vpack.c.b16 %v5736, %v5724
    %v6229 = vpack.c.b16 %v5737, %v5725
    %v6230 = vpack.c.b16 %v5738, %v5726
    %v6231 = vpack.c.b16 %v5739, %v5727
    %v6232 = vpack.c.b16 %v5740, %v5728
    %v6233 = vpack.c.b16 %v5741, %v5729
    %v6234 = vpack.c.b16 %v5742, %v5730
    %v6235 = vpack.c.b16 %v5743, %v5731
    %v6236 = vpack.c.b16 %v5756, %v5744
    %v6237 = vpack.c.b16 %v5757, %v5745
    %v6238 = vpack.c.b16 %v5758, %v5746
    %v6239 = vpack.c.b16 %v5759, %v5747
    %v6240 = vpack.c.b16 %v5760, %v5748
    %v6241 = vpack.c.b16 %v5761, %v5749
    %v6242 = vpack.c.b16 %v5762, %v5750
    %v6243 = vpack.c.b16 %v5763, %v5751
    %v6244 = vpack.c.b16 %v5764, %v5752
    %v6245 = vpack.c.b16 %v5765, %v5753
    %v6246 = vpack.c.b16 %v5766, %v5754
    %v6247 = vpack.c.b16 %v5767, %v5755
    %v6248 = vpack.c.b16 %v5780, %v5768
    %v6249 = vpack.c.b16 %v5781, %v5769
    %v6250 = vpack.c.b16 %v5782, %v5770
    %v6251 = vpack.c.b16 %v5783, %v5771
    %v6252 = vpack.c.b16 %v5784, %v5772
    %v6253 = vpack.c.b16 %v5785, %v5773
    %v6254 = vpack.c.b16 %v5786, %v5774
    %v6255 = vpack.c.b16 %v5787, %v5775
    %v6256 = vpack.c.b16 %v5788, %v5776
    %v6257 = vpack.c.b16 %v5789, %v5777
    %v6258 = vpack.c.b16 %v5790, %v5778
    %v6259 = vpack.c.b16 %v5791, %v5779
    %v6260 = vpack.c.b16 %v5804, %v5792
    %v6261 = vpack.c.b16 %v5805, %v5793
    %v6262 = vpack.c.b16 %v5806, %v5794
    %v6263 = vpack.c.b16 %v5807, %v5795
    %v6264 = vpack.c.b16 %v5808, %v5796
    %v6265 = vpack.c.b16 %v5809, %v5797
    %v6266 = vpack.c.b16 %v5810, %v5798
    %v6267 = vpack.c.b16 %v5811, %v5799
    %v6268 = vpack.c.b16 %v5812, %v5800
    %v6269 = vpack.c.b16 %v5813, %v5801
    %v6270 = vpack.c.b16 %v5814, %v5802
    %v6271 = vpack.c.b16 %v5815, %v5803
    %v6272 = vpack.c.b16 %v5828, %v5816
    %v6273 = vpack.c.b16 %v5829, %v5817
    %v6274 = vpack.c.b16 %v5830, %v5818
    %v6275 = vpack.c.b16 %v5831, %v5819
    %v6276 = vpack.c.b16 %v5832, %v5820
    %v6277 = vpack.c.b16 %v5833, %v5821
    %v6278 = vpack.c.b16 %v5834, %v5822
    %v6279 = vpack.c.b16 %v5835, %v5823
    %v6280 = vpack.c.b16 %v5836, %v5824
    %v6281 = vpack.c.b16 %v5837, %v5825
    %v6282 = vpack.c.b16 %v5838, %v5826
    %v6283 = vpack.c.b16 %v5839, %v5827
    %v6284 = vpack.c.b16 %v5852, %v5840
    %v6285 = vpack.c.b16 %v5853, %v5841
    %v6286 = vpack.c.b16 %v5854, %v5842
    %v6287 = vpack.c.b16 %v5855, %v5843
    %v6288 = vpack.c.b16 %v5856, %v5844
    %v6289 = vpack.c.b16 %v5857, %v5845
    %v6290 = vpack.c.b16 %v5858, %v5846
    %v6291 = vpack.c.b16 %v5859, %v5847
    %v6292 = vpack.c.b16 %v5860, %v5848
    %v6293 = vpack.c.b16 %v5861, %v5849
    %v6294 = vpack.c.b16 %v5862, %v5850
    %v6295 = vpack.c.b16 %v5863, %v5851
    %v6296 = vpack.c.b16 %v5876, %v5864
    %v6297 = vpack.c.b16 %v5877, %v5865
    %v6298 = vpack.c.b16 %v5878, %v5866
    %v6299 = vpack.c.b16 %v5879, %v5867
    %v6300 = vpack.c.b16 %v5880, %v5868
    %v6301 = vpack.c.b16 %v5881, %v5869
    %v6302 = vpack.c.b16 %v5882, %v5870
    %v6303 = vpack.c.b16 %v5883, %v5871
    %v6304 = vpack.c.b16 %v5884, %v5872
    %v6305 = vpack.c.b16 %v5885, %v5873
    %v6306 = vpack.c.b16 %v5886, %v5874
    %v6307 = vpack.c.b16 %v5887, %v5875
    %v6308 = vpack.c.b16 %v5900, %v5888
    %v6309 = vpack.c.b16 %v5901, %v5889
    %v6310 = vpack.c.b16 %v5902, %v5890
    %v6311 = vpack.c.b16 %v5903, %v5891
    %v6312 = vpack.c.b16 %v5904, %v5892
    %v6313 = vpack.c.b16 %v5905, %v5893
    %v6314 = vpack.c.b16 %v5906, %v5894
    %v6315 = vpack.c.b16 %v5907, %v5895
    %v6316 = vpack.c.b16 %v5908, %v5896
    %v6317 = vpack.c.b16 %v5909, %v5897
    %v6318 = vpack.c.b16 %v5910, %v5898
    %v6319 = vpack.c.b16 %v5911, %v5899
    %v6320 = vpack.c.b16 %v5924, %v5912
    %v6321 = vpack.c.b16 %v5925, %v5913
    %v6322 = vpack.c.b16 %v5926, %v5914
    %v6323 = vpack.c.b16 %v5927, %v5915
    %v6324 = vpack.c.b16 %v5928, %v5916
    %v6325 = vpack.c.b16 %v5929, %v5917
    %v6326 = vpack.c.b16 %v5930, %v5918
    %v6327 = vpack.c.b16 %v5931, %v5919
    %v6328 = vpack.c.b16 %v5932, %v5920
    %v6329 = vpack.c.b16 %v5933, %v5921
    %v6330 = vpack.c.b16 %v5934, %v5922
    %v6331 = vpack.c.b16 %v5935, %v5923
    %v6332 = vpack.c.b16 %v5948, %v5936
    %v6333 = vpack.c.b16 %v5949, %v5937
    %v6334 = vpack.c.b16 %v5950, %v5938
    %v6335 = vpack.c.b16 %v5951, %v5939
    %v6336 = vpack.c.b16 %v5952, %v5940
    %v6337 = vpack.c.b16 %v5953, %v5941
    %v6338 = vpack.c.b16 %v5954, %v5942
    %v6339 = vpack.c.b16 %v5955, %v5943
    %v6340 = vpack.c.b16 %v5956, %v5944
    %v6341 = vpack.c.b16 %v5957, %v5945
    %v6342 = vpack.c.b16 %v5958, %v5946
    %v6343 = vpack.c.b16 %v5959, %v5947
    %6728 = vmatprep.subr.bf16.mxu0 %v5961
    %6729 = vmatpush1.bf16.msra.mxu0 %v5960
    %6730 = vmatprep.subr.bf16.mxu0 %v5973
    %6731 = vmatpush1.bf16.msra.mxu0 %v5972
    %6732 = vmatprep.subr.bf16.mxu0 %v5985
    %6733 = vmatpush1.bf16.msra.mxu0 %v5984
    %6734 = vmatprep.subr.bf16.mxu0 %v5997
    %6735 = vmatpush1.bf16.msra.mxu0 %v5996
    %6736 = vmatprep.subr.bf16.mxu0 %v6009
    %6737 = vmatpush1.bf16.msra.mxu0 %v6008
    %6738 = vmatprep.subr.bf16.mxu0 %v6021
    %6739 = vmatpush1.bf16.msra.mxu0 %v6020
    %6740 = vmatprep.subr.bf16.mxu0 %v6033
    %6741 = vmatpush1.bf16.msra.mxu0 %v6032
    %6742 = vmatprep.subr.bf16.mxu0 %v6045
    %6743 = vmatpush1.bf16.msra.mxu0 %v6044
    %6744 = vmatprep.subr.bf16.mxu0 %v6057
    %6745 = vmatpush1.bf16.msra.mxu0 %v6056
    %6746 = vmatprep.subr.bf16.mxu0 %v6069
    %6747 = vmatpush1.bf16.msra.mxu0 %v6068
    %6748 = vmatprep.subr.bf16.mxu0 %v6081
    %6749 = vmatpush1.bf16.msra.mxu0 %v6080
    %6750 = vmatprep.subr.bf16.mxu0 %v6093
    %6751 = vmatpush1.bf16.msra.mxu0 %v6092
    %6752 = vmatprep.subr.bf16.mxu0 %v6105
    %6753 = vmatpush1.bf16.msra.mxu0 %v6104
    %6754 = vmatprep.subr.bf16.mxu0 %v6117
    %6755 = vmatpush1.bf16.msra.mxu0 %v6116
    %6756 = vmatprep.subr.bf16.mxu0 %v6129
    %6757 = vmatpush1.bf16.msra.mxu0 %v6128
    %6758 = vmatprep.subr.bf16.mxu0 %v6141
    %6759 = vmatpush1.bf16.msra.mxu0 %v6140
    %6760 = vmatprep.mubr.bf16.mxu0 %v4357
    %6761 = vmatmul.mubr.bf16.gmra.mrb[0].mxu0 %v4356
    %v6762 = vpop.f32.mrb[0].mxu0
    %v6763 = vadd.f32 %v4751, %v6762
    %v6764 = vpop.f32.mrb[0].mxu0
    %v6765 = vadd.f32 %v4755, %v6764
    %v6766 = vpop.f32.mrb[0].mxu0
    %v6767 = vpop.f32.mrb[0].mxu0
    %6768 = vdwg.mxu0
    %6769 = vmatprep.subr.bf16.mxu0 %v6153
    %6770 = vmatpush1.bf16.msra.mxu0 %v6152
    %6771 = vmatprep.subr.bf16.mxu0 %v6165
    %6772 = vmatpush1.bf16.msra.mxu0 %v6164
    %6773 = vmatprep.subr.bf16.mxu0 %v6177
    %6774 = vmatpush1.bf16.msra.mxu0 %v6176
    %6775 = vmatprep.subr.bf16.mxu0 %v6189
    %6776 = vmatpush1.bf16.msra.mxu0 %v6188
    %6777 = vmatprep.subr.bf16.mxu0 %v6201
    %6778 = vmatpush1.bf16.msra.mxu0 %v6200
    %6779 = vmatprep.subr.bf16.mxu0 %v6213
    %6780 = vmatpush1.bf16.msra.mxu0 %v6212
    %6781 = vmatprep.subr.bf16.mxu0 %v6225
    %6782 = vmatpush1.bf16.msra.mxu0 %v6224
    %6783 = vmatprep.subr.bf16.mxu0 %v6237
    %6784 = vmatpush1.bf16.msra.mxu0 %v6236
    %6785 = vmatprep.subr.bf16.mxu0 %v6249
    %6786 = vmatpush1.bf16.msra.mxu0 %v6248
    %6787 = vmatprep.subr.bf16.mxu0 %v6261
    %6788 = vmatpush1.bf16.msra.mxu0 %v6260
    %6789 = vmatprep.subr.bf16.mxu0 %v6273
    %6790 = vmatpush1.bf16.msra.mxu0 %v6272
    %6791 = vmatprep.subr.bf16.mxu0 %v6285
    %6792 = vmatpush1.bf16.msra.mxu0 %v6284
    %6793 = vmatprep.subr.bf16.mxu0 %v6297
    %6794 = vmatpush1.bf16.msra.mxu0 %v6296
    %6795 = vmatprep.subr.bf16.mxu0 %v6309
    %6796 = vmatpush1.bf16.msra.mxu0 %v6308
    %6797 = vmatprep.subr.bf16.mxu0 %v6321
    %6798 = vmatpush1.bf16.msra.mxu0 %v6320
    %6799 = vmatprep.subr.bf16.mxu0 %v6333
    %6800 = vmatpush1.bf16.msra.mxu0 %v6332
    %6801 = vmatprep.mubr.bf16.mxu0 %v4359
    %6802 = vmatmul.mubr.bf16.gmra.mrb[0].mxu0 %v4358
    %v6803 = vpop.f32.mrb[0].mxu0
    %v6804 = vadd.f32 %v6763, %v6803
    %v6805 = vpop.f32.mrb[0].mxu0
    %v6806 = vadd.f32 %v6765, %v6805
    %v6807 = vpop.f32.mrb[0].mxu0
    %v6808 = vpop.f32.mrb[0].mxu0
    %6809 = vdwg.mxu0
    %6810 = vmatprep.subr.bf16.mxu0 %v5963
    %6811 = vmatpush1.bf16.msra.mxu0 %v5962
    %6812 = vmatprep.subr.bf16.mxu0 %v5975
    %6813 = vmatpush1.bf16.msra.mxu0 %v5974
    %6814 = vmatprep.subr.bf16.mxu0 %v5987
    %6815 = vmatpush1.bf16.msra.mxu0 %v5986
    %6816 = vmatprep.subr.bf16.mxu0 %v5999
    %6817 = vmatpush1.bf16.msra.mxu0 %v5998
    %6818 = vmatprep.subr.bf16.mxu0 %v6011
    %6819 = vmatpush1.bf16.msra.mxu0 %v6010
    %6820 = vmatprep.subr.bf16.mxu0 %v6023
    %6821 = vmatpush1.bf16.msra.mxu0 %v6022
    %6822 = vmatprep.subr.bf16.mxu0 %v6035
    %6823 = vmatpush1.bf16.msra.mxu0 %v6034
    %6824 = vmatprep.subr.bf16.mxu0 %v6047
    %6825 = vmatpush1.bf16.msra.mxu0 %v6046
    %6826 = vmatprep.subr.bf16.mxu0 %v6059
    %6827 = vmatpush1.bf16.msra.mxu0 %v6058
    %6828 = vmatprep.subr.bf16.mxu0 %v6071
    %6829 = vmatpush1.bf16.msra.mxu0 %v6070
    %6830 = vmatprep.subr.bf16.mxu0 %v6083
    %6831 = vmatpush1.bf16.msra.mxu0 %v6082
    %6832 = vmatprep.subr.bf16.mxu0 %v6095
    %6833 = vmatpush1.bf16.msra.mxu0 %v6094
    %6834 = vmatprep.subr.bf16.mxu0 %v6107
    %6835 = vmatpush1.bf16.msra.mxu0 %v6106
    %6836 = vmatprep.subr.bf16.mxu0 %v6119
    %6837 = vmatpush1.bf16.msra.mxu0 %v6118
    %6838 = vmatprep.subr.bf16.mxu0 %v6131
    %6839 = vmatpush1.bf16.msra.mxu0 %v6130
    %6840 = vmatprep.subr.bf16.mxu0 %v6143
    %6841 = vmatpush1.bf16.msra.mxu0 %v6142
    %6842 = vmatprep.mubr.bf16.mxu0 %v4357
    %6843 = vmatmul.mubr.bf16.gmra.mrb[0].mxu0 %v4356
    %v6844 = vpop.f32.mrb[0].mxu0
    %v6845 = vadd.f32 %v4759, %v6844
    %v6846 = vpop.f32.mrb[0].mxu0
    %v6847 = vadd.f32 %v4763, %v6846
    %v6848 = vpop.f32.mrb[0].mxu0
    %v6849 = vpop.f32.mrb[0].mxu0
    %6850 = vdwg.mxu0
    %6851 = vmatprep.subr.bf16.mxu0 %v6155
    %6852 = vmatpush1.bf16.msra.mxu0 %v6154
    %6853 = vmatprep.subr.bf16.mxu0 %v6167
    %6854 = vmatpush1.bf16.msra.mxu0 %v6166
    %6855 = vmatprep.subr.bf16.mxu0 %v6179
    %6856 = vmatpush1.bf16.msra.mxu0 %v6178
    %6857 = vmatprep.subr.bf16.mxu0 %v6191
    %6858 = vmatpush1.bf16.msra.mxu0 %v6190
    %6859 = vmatprep.subr.bf16.mxu0 %v6203
    %6860 = vmatpush1.bf16.msra.mxu0 %v6202
    %6861 = vmatprep.subr.bf16.mxu0 %v6215
    %6862 = vmatpush1.bf16.msra.mxu0 %v6214
    %6863 = vmatprep.subr.bf16.mxu0 %v6227
    %6864 = vmatpush1.bf16.msra.mxu0 %v6226
    %6865 = vmatprep.subr.bf16.mxu0 %v6239
    %6866 = vmatpush1.bf16.msra.mxu0 %v6238
    %6867 = vmatprep.subr.bf16.mxu0 %v6251
    %6868 = vmatpush1.bf16.msra.mxu0 %v6250
    %6869 = vmatprep.subr.bf16.mxu0 %v6263
    %6870 = vmatpush1.bf16.msra.mxu0 %v6262
    %6871 = vmatprep.subr.bf16.mxu0 %v6275
    %6872 = vmatpush1.bf16.msra.mxu0 %v6274
    %6873 = vmatprep.subr.bf16.mxu0 %v6287
    %6874 = vmatpush1.bf16.msra.mxu0 %v6286
    %6875 = vmatprep.subr.bf16.mxu0 %v6299
    %6876 = vmatpush1.bf16.msra.mxu0 %v6298
    %6877 = vmatprep.subr.bf16.mxu0 %v6311
    %6878 = vmatpush1.bf16.msra.mxu0 %v6310
    %6879 = vmatprep.subr.bf16.mxu0 %v6323
    %6880 = vmatpush1.bf16.msra.mxu0 %v6322
    %6881 = vmatprep.subr.bf16.mxu0 %v6335
    %6882 = vmatpush1.bf16.msra.mxu0 %v6334
    %6883 = vmatprep.mubr.bf16.mxu0 %v4359
    %6884 = vmatmul.mubr.bf16.gmra.mrb[0].mxu0 %v4358
    %v6885 = vpop.f32.mrb[0].mxu0
    %v6886 = vadd.f32 %v6845, %v6885
    %v6887 = vpop.f32.mrb[0].mxu0
    %v6888 = vadd.f32 %v6847, %v6887
    %v6889 = vpop.f32.mrb[0].mxu0
    %v6890 = vpop.f32.mrb[0].mxu0
    %6891 = vdwg.mxu0
    %6892 = vmatprep.subr.bf16.mxu0 %v5965
    %6893 = vmatpush1.bf16.msra.mxu0 %v5964
    %6894 = vmatprep.subr.bf16.mxu0 %v5977
    %6895 = vmatpush1.bf16.msra.mxu0 %v5976
    %6896 = vmatprep.subr.bf16.mxu0 %v5989
    %6897 = vmatpush1.bf16.msra.mxu0 %v5988
    %6898 = vmatprep.subr.bf16.mxu0 %v6001
    %6899 = vmatpush1.bf16.msra.mxu0 %v6000
    %6900 = vmatprep.subr.bf16.mxu0 %v6013
    %6901 = vmatpush1.bf16.msra.mxu0 %v6012
    %6902 = vmatprep.subr.bf16.mxu0 %v6025
    %6903 = vmatpush1.bf16.msra.mxu0 %v6024
    %6904 = vmatprep.subr.bf16.mxu0 %v6037
    %6905 = vmatpush1.bf16.msra.mxu0 %v6036
    %6906 = vmatprep.subr.bf16.mxu0 %v6049
    %6907 = vmatpush1.bf16.msra.mxu0 %v6048
    %6908 = vmatprep.subr.bf16.mxu0 %v6061
    %6909 = vmatpush1.bf16.msra.mxu0 %v6060
    %6910 = vmatprep.subr.bf16.mxu0 %v6073
    %6911 = vmatpush1.bf16.msra.mxu0 %v6072
    %6912 = vmatprep.subr.bf16.mxu0 %v6085
    %6913 = vmatpush1.bf16.msra.mxu0 %v6084
    %6914 = vmatprep.subr.bf16.mxu0 %v6097
    %6915 = vmatpush1.bf16.msra.mxu0 %v6096
    %6916 = vmatprep.subr.bf16.mxu0 %v6109
    %6917 = vmatpush1.bf16.msra.mxu0 %v6108
    %6918 = vmatprep.subr.bf16.mxu0 %v6121
    %6919 = vmatpush1.bf16.msra.mxu0 %v6120
    %6920 = vmatprep.subr.bf16.mxu0 %v6133
    %6921 = vmatpush1.bf16.msra.mxu0 %v6132
    %6922 = vmatprep.subr.bf16.mxu0 %v6145
    %6923 = vmatpush1.bf16.msra.mxu0 %v6144
    %6924 = vmatprep.mubr.bf16.mxu0 %v4357
    %6925 = vmatmul.mubr.bf16.gmra.mrb[0].mxu0 %v4356
    %v6926 = vpop.f32.mrb[0].mxu0
    %v6927 = vadd.f32 %v4767, %v6926
    %v6928 = vpop.f32.mrb[0].mxu0
    %v6929 = vadd.f32 %v4771, %v6928
    %v6930 = vpop.f32.mrb[0].mxu0
    %v6931 = vpop.f32.mrb[0].mxu0
    %6932 = vdwg.mxu0
    %6933 = vmatprep.subr.bf16.mxu0 %v6157
    %6934 = vmatpush1.bf16.msra.mxu0 %v6156
    %6935 = vmatprep.subr.bf16.mxu0 %v6169
    %6936 = vmatpush1.bf16.msra.mxu0 %v6168
    %6937 = vmatprep.subr.bf16.mxu0 %v6181
    %6938 = vmatpush1.bf16.msra.mxu0 %v6180
    %6939 = vmatprep.subr.bf16.mxu0 %v6193
    %6940 = vmatpush1.bf16.msra.mxu0 %v6192
    %6941 = vmatprep.subr.bf16.mxu0 %v6205
    %6942 = vmatpush1.bf16.msra.mxu0 %v6204
    %6943 = vmatprep.subr.bf16.mxu0 %v6217
    %6944 = vmatpush1.bf16.msra.mxu0 %v6216
    %6945 = vmatprep.subr.bf16.mxu0 %v6229
    %6946 = vmatpush1.bf16.msra.mxu0 %v6228
    %6947 = vmatprep.subr.bf16.mxu0 %v6241
    %6948 = vmatpush1.bf16.msra.mxu0 %v6240
    %6949 = vmatprep.subr.bf16.mxu0 %v6253
    %6950 = vmatpush1.bf16.msra.mxu0 %v6252
    %6951 = vmatprep.subr.bf16.mxu0 %v6265
    %6952 = vmatpush1.bf16.msra.mxu0 %v6264
    %6953 = vmatprep.subr.bf16.mxu0 %v6277
    %6954 = vmatpush1.bf16.msra.mxu0 %v6276
    %6955 = vmatprep.subr.bf16.mxu0 %v6289
    %6956 = vmatpush1.bf16.msra.mxu0 %v6288
    %6957 = vmatprep.subr.bf16.mxu0 %v6301
    %6958 = vmatpush1.bf16.msra.mxu0 %v6300
    %6959 = vmatprep.subr.bf16.mxu0 %v6313
    %6960 = vmatpush1.bf16.msra.mxu0 %v6312
    %6961 = vmatprep.subr.bf16.mxu0 %v6325
    %6962 = vmatpush1.bf16.msra.mxu0 %v6324
    %6963 = vmatprep.subr.bf16.mxu0 %v6337
    %6964 = vmatpush1.bf16.msra.mxu0 %v6336
    %6965 = vmatprep.mubr.bf16.mxu0 %v4359
    %6966 = vmatmul.mubr.bf16.gmra.mrb[0].mxu0 %v4358
    %v6967 = vpop.f32.mrb[0].mxu0
    %v6968 = vadd.f32 %v6927, %v6967
    %v6969 = vpop.f32.mrb[0].mxu0
    %v6970 = vadd.f32 %v6929, %v6969
    %v6971 = vpop.f32.mrb[0].mxu0
    %v6972 = vpop.f32.mrb[0].mxu0
    %6973 = vdwg.mxu0
    %6974 = vmatprep.subr.bf16.mxu0 %v5967
    %6975 = vmatpush1.bf16.msra.mxu0 %v5966
    %6976 = vmatprep.subr.bf16.mxu0 %v5979
    %6977 = vmatpush1.bf16.msra.mxu0 %v5978
    %6978 = vmatprep.subr.bf16.mxu0 %v5991
    %6979 = vmatpush1.bf16.msra.mxu0 %v5990
    %6980 = vmatprep.subr.bf16.mxu0 %v6003
    %6981 = vmatpush1.bf16.msra.mxu0 %v6002
    %6982 = vmatprep.subr.bf16.mxu0 %v6015
    %6983 = vmatpush1.bf16.msra.mxu0 %v6014
    %6984 = vmatprep.subr.bf16.mxu0 %v6027
    %6985 = vmatpush1.bf16.msra.mxu0 %v6026
    %6986 = vmatprep.subr.bf16.mxu0 %v6039
    %6987 = vmatpush1.bf16.msra.mxu0 %v6038
    %6988 = vmatprep.subr.bf16.mxu0 %v6051
    %6989 = vmatpush1.bf16.msra.mxu0 %v6050
    %6990 = vmatprep.subr.bf16.mxu0 %v6063
    %6991 = vmatpush1.bf16.msra.mxu0 %v6062
    %6992 = vmatprep.subr.bf16.mxu0 %v6075
    %6993 = vmatpush1.bf16.msra.mxu0 %v6074
    %6994 = vmatprep.subr.bf16.mxu0 %v6087
    %6995 = vmatpush1.bf16.msra.mxu0 %v6086
    %6996 = vmatprep.subr.bf16.mxu0 %v6099
    %6997 = vmatpush1.bf16.msra.mxu0 %v6098
    %6998 = vmatprep.subr.bf16.mxu0 %v6111
    %6999 = vmatpush1.bf16.msra.mxu0 %v6110
    %7000 = vmatprep.subr.bf16.mxu0 %v6123
    %7001 = vmatpush1.bf16.msra.mxu0 %v6122
    %7002 = vmatprep.subr.bf16.mxu0 %v6135
    %7003 = vmatpush1.bf16.msra.mxu0 %v6134
    %7004 = vmatprep.subr.bf16.mxu0 %v6147
    %7005 = vmatpush1.bf16.msra.mxu0 %v6146
    %7006 = vmatprep.mubr.bf16.mxu0 %v4357
    %7007 = vmatmul.mubr.bf16.gmra.mrb[0].mxu0 %v4356
    %v7008 = vpop.f32.mrb[0].mxu0
    %v7009 = vadd.f32 %v4775, %v7008
    %v7010 = vpop.f32.mrb[0].mxu0
    %v7011 = vadd.f32 %v4779, %v7010
    %v7012 = vpop.f32.mrb[0].mxu0
    %v7013 = vpop.f32.mrb[0].mxu0
    %7014 = vdwg.mxu0
    %7015 = vmatprep.subr.bf16.mxu0 %v6159
    %7016 = vmatpush1.bf16.msra.mxu0 %v6158
    %7017 = vmatprep.subr.bf16.mxu0 %v6171
    %7018 = vmatpush1.bf16.msra.mxu0 %v6170
    %7019 = vmatprep.subr.bf16.mxu0 %v6183
    %7020 = vmatpush1.bf16.msra.mxu0 %v6182
    %7021 = vmatprep.subr.bf16.mxu0 %v6195
    %7022 = vmatpush1.bf16.msra.mxu0 %v6194
    %7023 = vmatprep.subr.bf16.mxu0 %v6207
    %7024 = vmatpush1.bf16.msra.mxu0 %v6206
    %7025 = vmatprep.subr.bf16.mxu0 %v6219
    %7026 = vmatpush1.bf16.msra.mxu0 %v6218
    %7027 = vmatprep.subr.bf16.mxu0 %v6231
    %7028 = vmatpush1.bf16.msra.mxu0 %v6230
    %7029 = vmatprep.subr.bf16.mxu0 %v6243
    %7030 = vmatpush1.bf16.msra.mxu0 %v6242
    %7031 = vmatprep.subr.bf16.mxu0 %v6255
    %7032 = vmatpush1.bf16.msra.mxu0 %v6254
    %7033 = vmatprep.subr.bf16.mxu0 %v6267
    %7034 = vmatpush1.bf16.msra.mxu0 %v6266
    %7035 = vmatprep.subr.bf16.mxu0 %v6279
    %7036 = vmatpush1.bf16.msra.mxu0 %v6278
    %7037 = vmatprep.subr.bf16.mxu0 %v6291
    %7038 = vmatpush1.bf16.msra.mxu0 %v6290
    %7039 = vmatprep.subr.bf16.mxu0 %v6303
    %7040 = vmatpush1.bf16.msra.mxu0 %v6302
    %7041 = vmatprep.subr.bf16.mxu0 %v6315
    %7042 = vmatpush1.bf16.msra.mxu0 %v6314
    %7043 = vmatprep.subr.bf16.mxu0 %v6327
    %7044 = vmatpush1.bf16.msra.mxu0 %v6326
    %7045 = vmatprep.subr.bf16.mxu0 %v6339
    %7046 = vmatpush1.bf16.msra.mxu0 %v6338
    %7047 = vmatprep.mubr.bf16.mxu0 %v4359
    %7048 = vmatmul.mubr.bf16.gmra.mrb[0].mxu0 %v4358
    %v7049 = vpop.f32.mrb[0].mxu0
    %v7050 = vadd.f32 %v7009, %v7049
    %v7051 = vpop.f32.mrb[0].mxu0
    %v7052 = vadd.f32 %v7011, %v7051
    %v7053 = vpop.f32.mrb[0].mxu0
    %v7054 = vpop.f32.mrb[0].mxu0
    %7055 = vdwg.mxu0
    %7056 = vmatprep.subr.bf16.mxu0 %v5969
    %7057 = vmatpush1.bf16.msra.mxu0 %v5968
    %7058 = vmatprep.subr.bf16.mxu0 %v5981
    %7059 = vmatpush1.bf16.msra.mxu0 %v5980
    %7060 = vmatprep.subr.bf16.mxu0 %v5993
    %7061 = vmatpush1.bf16.msra.mxu0 %v5992
    %7062 = vmatprep.subr.bf16.mxu0 %v6005
    %7063 = vmatpush1.bf16.msra.mxu0 %v6004
    %7064 = vmatprep.subr.bf16.mxu0 %v6017
    %7065 = vmatpush1.bf16.msra.mxu0 %v6016
    %7066 = vmatprep.subr.bf16.mxu0 %v6029
    %7067 = vmatpush1.bf16.msra.mxu0 %v6028
    %7068 = vmatprep.subr.bf16.mxu0 %v6041
    %7069 = vmatpush1.bf16.msra.mxu0 %v6040
    %7070 = vmatprep.subr.bf16.mxu0 %v6053
    %7071 = vmatpush1.bf16.msra.mxu0 %v6052
    %7072 = vmatprep.subr.bf16.mxu0 %v6065
    %7073 = vmatpush1.bf16.msra.mxu0 %v6064
    %7074 = vmatprep.subr.bf16.mxu0 %v6077
    %7075 = vmatpush1.bf16.msra.mxu0 %v6076
    %7076 = vmatprep.subr.bf16.mxu0 %v6089
    %7077 = vmatpush1.bf16.msra.mxu0 %v6088
    %7078 = vmatprep.subr.bf16.mxu0 %v6101
    %7079 = vmatpush1.bf16.msra.mxu0 %v6100
    %7080 = vmatprep.subr.bf16.mxu0 %v6113
    %7081 = vmatpush1.bf16.msra.mxu0 %v6112
    %7082 = vmatprep.subr.bf16.mxu0 %v6125
    %7083 = vmatpush1.bf16.msra.mxu0 %v6124
    %7084 = vmatprep.subr.bf16.mxu0 %v6137
    %7085 = vmatpush1.bf16.msra.mxu0 %v6136
    %7086 = vmatprep.subr.bf16.mxu0 %v6149
    %7087 = vmatpush1.bf16.msra.mxu0 %v6148
    %7088 = vmatprep.mubr.bf16.mxu0 %v4357
    %7089 = vmatmul.mubr.bf16.gmra.mrb[0].mxu0 %v4356
    %v7090 = vpop.f32.mrb[0].mxu0
    %v7091 = vadd.f32 %v4783, %v7090
    %v7092 = vpop.f32.mrb[0].mxu0
    %v7093 = vadd.f32 %v4787, %v7092
    %v7094 = vpop.f32.mrb[0].mxu0
    %v7095 = vpop.f32.mrb[0].mxu0
    %7096 = vdwg.mxu0
    %7097 = vmatprep.subr.bf16.mxu0 %v6161
    %7098 = vmatpush1.bf16.msra.mxu0 %v6160
    %7099 = vmatprep.subr.bf16.mxu0 %v6173
    %7100 = vmatpush1.bf16.msra.mxu0 %v6172
    %7101 = vmatprep.subr.bf16.mxu0 %v6185
    %7102 = vmatpush1.bf16.msra.mxu0 %v6184
    %7103 = vmatprep.subr.bf16.mxu0 %v6197
    %7104 = vmatpush1.bf16.msra.mxu0 %v6196
    %7105 = vmatprep.subr.bf16.mxu0 %v6209
    %7106 = vmatpush1.bf16.msra.mxu0 %v6208
    %7107 = vmatprep.subr.bf16.mxu0 %v6221
    %7108 = vmatpush1.bf16.msra.mxu0 %v6220
    %7109 = vmatprep.subr.bf16.mxu0 %v6233
    %7110 = vmatpush1.bf16.msra.mxu0 %v6232
    %7111 = vmatprep.subr.bf16.mxu0 %v6245
    %7112 = vmatpush1.bf16.msra.mxu0 %v6244
    %7113 = vmatprep.subr.bf16.mxu0 %v6257
    %7114 = vmatpush1.bf16.msra.mxu0 %v6256
    %7115 = vmatprep.subr.bf16.mxu0 %v6269
    %7116 = vmatpush1.bf16.msra.mxu0 %v6268
    %7117 = vmatprep.subr.bf16.mxu0 %v6281
    %7118 = vmatpush1.bf16.msra.mxu0 %v6280
    %7119 = vmatprep.subr.bf16.mxu0 %v6293
    %7120 = vmatpush1.bf16.msra.mxu0 %v6292
    %7121 = vmatprep.subr.bf16.mxu0 %v6305
    %7122 = vmatpush1.bf16.msra.mxu0 %v6304
    %7123 = vmatprep.subr.bf16.mxu0 %v6317
    %7124 = vmatpush1.bf16.msra.mxu0 %v6316
    %7125 = vmatprep.subr.bf16.mxu0 %v6329
    %7126 = vmatpush1.bf16.msra.mxu0 %v6328
    %7127 = vmatprep.subr.bf16.mxu0 %v6341
    %7128 = vmatpush1.bf16.msra.mxu0 %v6340
    %7129 = vmatprep.mubr.bf16.mxu0 %v4359
    %7130 = vmatmul.mubr.bf16.gmra.mrb[0].mxu0 %v4358
    %v7131 = vpop.f32.mrb[0].mxu0
    %v7132 = vadd.f32 %v7091, %v7131
    %v7133 = vpop.f32.mrb[0].mxu0
    %v7134 = vadd.f32 %v7093, %v7133
    %v7135 = vpop.f32.mrb[0].mxu0
    %v7136 = vpop.f32.mrb[0].mxu0
    %7137 = vdwg.mxu0
    %7138 = vmatprep.subr.bf16.mxu0 %v5971
    %7139 = vmatpush1.bf16.msra.mxu0 %v5970
    %7140 = vmatprep.subr.bf16.mxu0 %v5983
    %7141 = vmatpush1.bf16.msra.mxu0 %v5982
    %7142 = vmatprep.subr.bf16.mxu0 %v5995
    %7143 = vmatpush1.bf16.msra.mxu0 %v5994
    %7144 = vmatprep.subr.bf16.mxu0 %v6007
    %7145 = vmatpush1.bf16.msra.mxu0 %v6006
    %7146 = vmatprep.subr.bf16.mxu0 %v6019
    %7147 = vmatpush1.bf16.msra.mxu0 %v6018
    %7148 = vmatprep.subr.bf16.mxu0 %v6031
    %7149 = vmatpush1.bf16.msra.mxu0 %v6030
    %7150 = vmatprep.subr.bf16.mxu0 %v6043
    %7151 = vmatpush1.bf16.msra.mxu0 %v6042
    %7152 = vmatprep.subr.bf16.mxu0 %v6055
    %7153 = vmatpush1.bf16.msra.mxu0 %v6054
    %7154 = vmatprep.subr.bf16.mxu0 %v6067
    %7155 = vmatpush1.bf16.msra.mxu0 %v6066
    %7156 = vmatprep.subr.bf16.mxu0 %v6079
    %7157 = vmatpush1.bf16.msra.mxu0 %v6078
    %7158 = vmatprep.subr.bf16.mxu0 %v6091
    %7159 = vmatpush1.bf16.msra.mxu0 %v6090
    %7160 = vmatprep.subr.bf16.mxu0 %v6103
    %7161 = vmatpush1.bf16.msra.mxu0 %v6102
    %7162 = vmatprep.subr.bf16.mxu0 %v6115
    %7163 = vmatpush1.bf16.msra.mxu0 %v6114
    %7164 = vmatprep.subr.bf16.mxu0 %v6127
    %7165 = vmatpush1.bf16.msra.mxu0 %v6126
    %7166 = vmatprep.subr.bf16.mxu0 %v6139
    %7167 = vmatpush1.bf16.msra.mxu0 %v6138
    %7168 = vmatprep.subr.bf16.mxu0 %v6151
    %7169 = vmatpush1.bf16.msra.mxu0 %v6150
    %7170 = vmatprep.mubr.bf16.mxu0 %v4357
    %7171 = vmatmul.mubr.bf16.gmra.mrb[0].mxu0 %v4356
    %v7172 = vpop.f32.mrb[0].mxu0
    %v7173 = vadd.f32 %v4791, %v7172
    %v7174 = vpop.f32.mrb[0].mxu0
    %v7175 = vadd.f32 %v4795, %v7174
    %v7176 = vpop.f32.mrb[0].mxu0
    %v7177 = vpop.f32.mrb[0].mxu0
    %7178 = vdwg.mxu0
    %7179 = vmatprep.subr.bf16.mxu0 %v6163
    %7180 = vmatpush1.bf16.msra.mxu0 %v6162
    %7181 = vmatprep.subr.bf16.mxu0 %v6175
    %7182 = vmatpush1.bf16.msra.mxu0 %v6174
    %7183 = vmatprep.subr.bf16.mxu0 %v6187
    %7184 = vmatpush1.bf16.msra.mxu0 %v6186
    %7185 = vmatprep.subr.bf16.mxu0 %v6199
    %7186 = vmatpush1.bf16.msra.mxu0 %v6198
    %7187 = vmatprep.subr.bf16.mxu0 %v6211
    %7188 = vmatpush1.bf16.msra.mxu0 %v6210
    %7189 = vmatprep.subr.bf16.mxu0 %v6223
    %7190 = vmatpush1.bf16.msra.mxu0 %v6222
    %7191 = vmatprep.subr.bf16.mxu0 %v6235
    %7192 = vmatpush1.bf16.msra.mxu0 %v6234
    %7193 = vmatprep.subr.bf16.mxu0 %v6247
    %7194 = vmatpush1.bf16.msra.mxu0 %v6246
    %7195 = vmatprep.subr.bf16.mxu0 %v6259
    %7196 = vmatpush1.bf16.msra.mxu0 %v6258
    %7197 = vmatprep.subr.bf16.mxu0 %v6271
    %7198 = vmatpush1.bf16.msra.mxu0 %v6270
    %7199 = vmatprep.subr.bf16.mxu0 %v6283
    %7200 = vmatpush1.bf16.msra.mxu0 %v6282
    %7201 = vmatprep.subr.bf16.mxu0 %v6295
    %7202 = vmatpush1.bf16.msra.mxu0 %v6294
    %7203 = vmatprep.subr.bf16.mxu0 %v6307
    %7204 = vmatpush1.bf16.msra.mxu0 %v6306
    %7205 = vmatprep.subr.bf16.mxu0 %v6319
    %7206 = vmatpush1.bf16.msra.mxu0 %v6318
    %7207 = vmatprep.subr.bf16.mxu0 %v6331
    %7208 = vmatpush1.bf16.msra.mxu0 %v6330
    %7209 = vmatprep.subr.bf16.mxu0 %v6343
    %7210 = vmatpush1.bf16.msra.mxu0 %v6342
    %7211 = vmatprep.mubr.bf16.mxu0 %v4359
    %7212 = vmatmul.mubr.bf16.gmra.mrb[0].mxu0 %v4358
    %v7213 = vpop.f32.mrb[0].mxu0
    %v7214 = vadd.f32 %v7173, %v7213
    %v7215 = vpop.f32.mrb[0].mxu0
    %v7216 = vadd.f32 %v7175, %v7215
    %v7217 = vpop.f32.mrb[0].mxu0
    %v7218 = vpop.f32.mrb[0].mxu0
    %7219 = vdwg.mxu0
    %v7220 = vxor.u32 %v6804, 2147483648
    %v7221 = vxor.u32 %v6806, 2147483648
    %v7222 = vxor.u32 %v6886, 2147483648
    %v7223 = vxor.u32 %v6888, 2147483648
    %v7224 = vxor.u32 %v6968, 2147483648
    %v7225 = vxor.u32 %v6970, 2147483648
    %v7226 = vxor.u32 %v7050, 2147483648
    %v7227 = vxor.u32 %v7052, 2147483648
    %v7228 = vxor.u32 %v7132, 2147483648
    %v7229 = vxor.u32 %v7134, 2147483648
    %v7230 = vxor.u32 %v7214, 2147483648
    %v7231 = vxor.u32 %v7216, 2147483648
    %v7232 = vmul.f32 %v7220, 1.442695
    %v7233 = vpow.pop %v7232
    %v7234 = vmul.f32 %v7221, 1.442695
    %v7235 = vpow.pop %v7234
    %v7236 = vmul.f32 %v7222, 1.442695
    %v7237 = vpow.pop %v7236
    %v7238 = vmul.f32 %v7223, 1.442695
    %v7239 = vpow.pop %v7238
    %v7240 = vmul.f32 %v7224, 1.442695
    %v7241 = vpow.pop %v7240
    %v7242 = vmul.f32 %v7225, 1.442695
    %v7243 = vpow.pop %v7242
    %v7244 = vmul.f32 %v7226, 1.442695
    %v7245 = vpow.pop %v7244
    %v7246 = vmul.f32 %v7227, 1.442695
    %v7247 = vpow.pop %v7246
    %v7248 = vmul.f32 %v7228, 1.442695
    %v7249 = vpow.pop %v7248
    %v7250 = vmul.f32 %v7229, 1.442695
    %v7251 = vpow.pop %v7250
    %v7252 = vmul.f32 %v7230, 1.442695
    %v7253 = vpow.pop %v7252
    %v7254 = vmul.f32 %v7231, 1.442695
    %v7255 = vpow.pop %v7254
    %v7256 = vadd.f32 %v7233, 1.0
    %v7257 = vadd.f32 %v7235, 1.0
    %v7258 = vadd.f32 %v7237, 1.0
    %v7259 = vadd.f32 %v7239, 1.0
    %v7260 = vadd.f32 %v7241, 1.0
    %v7261 = vadd.f32 %v7243, 1.0
    %v7262 = vadd.f32 %v7245, 1.0
    %v7263 = vadd.f32 %v7247, 1.0
    %v7264 = vadd.f32 %v7249, 1.0
    %v7265 = vadd.f32 %v7251, 1.0
    %v7266 = vadd.f32 %v7253, 1.0
    %v7267 = vadd.f32 %v7255, 1.0
    %v7268 = vrcp.pop %v7256
    %v7269 = vmul.f32 1.0, %v7268
    %v7270 = vrcp.pop %v7257
    %v7271 = vmul.f32 1.0, %v7270
    %v7272 = vrcp.pop %v7258
    %v7273 = vmul.f32 1.0, %v7272
    %v7274 = vrcp.pop %v7259
    %v7275 = vmul.f32 1.0, %v7274
    %v7276 = vrcp.pop %v7260
    %v7277 = vmul.f32 1.0, %v7276
    %v7278 = vrcp.pop %v7261
    %v7279 = vmul.f32 1.0, %v7278
    %v7280 = vrcp.pop %v7262
    %v7281 = vmul.f32 1.0, %v7280
    %v7282 = vrcp.pop %v7263
    %v7283 = vmul.f32 1.0, %v7282
    %v7284 = vrcp.pop %v7264
    %v7285 = vmul.f32 1.0, %v7284
    %v7286 = vrcp.pop %v7265
    %v7287 = vmul.f32 1.0, %v7286
    %v7288 = vrcp.pop %v7266
    %v7289 = vmul.f32 1.0, %v7288
    %v7290 = vrcp.pop %v7267
    %v7291 = vmul.f32 1.0, %v7290
    %v7292 = vpack.c.bf16 %v7269, %v7269
    %v7293 = vpack.c.bf16 %v7271, %v7271
    %v7294 = vpack.c.bf16 %v7273, %v7273
    %v7295 = vpack.c.bf16 %v7275, %v7275
    %v7296 = vpack.c.bf16 %v7277, %v7277
    %v7297 = vpack.c.bf16 %v7279, %v7279
    %v7298 = vpack.c.bf16 %v7281, %v7281
    %v7299 = vpack.c.bf16 %v7283, %v7283
    %v7300 = vpack.c.bf16 %v7285, %v7285
    %v7301 = vpack.c.bf16 %v7287, %v7287
    %v7302 = vpack.c.bf16 %v7289, %v7289
    %v7303 = vpack.c.bf16 %v7291, %v7291
    %v7304 = vld [vmem:[%s12] sm:$0xf]
    %v7305 = vld [vmem:[%s12 + $0x4] sm:$0xf]
    %v7306 = vld [vmem:[%s12 + $0x8] sm:$0xf]
    %v7307 = vld [vmem:[%s12 + $0xc] sm:$0xf]
    %v7308 = vld [vmem:[%s12 + $0x10] sm:$0xf]
    %v7309 = vld [vmem:[%s12 + $0x14] sm:$0xf]
    %v7310 = vld [vmem:[%s12 + $0x18] sm:$0xf]
    %v7311 = vld [vmem:[%s12 + $0x1c] sm:$0xf]
    %v7312 = vld [vmem:[%s12 + $0x20] sm:$0xf]
    %v7313 = vld [vmem:[%s12 + $0x24] sm:$0xf]
    %v7314 = vld [vmem:[%s12 + $0x28] sm:$0xf]
    %v7315 = vld [vmem:[%s12 + $0x2c] sm:$0xf]
    %v7316 = vld [vmem:[%s12 + $0x30] sm:$0xf]
    %v7317 = vld [vmem:[%s12 + $0x34] sm:$0xf]
    %v7318 = vld [vmem:[%s12 + $0x38] sm:$0xf]
    %v7319 = vld [vmem:[%s12 + $0x3c] sm:$0xf]
    %v7320 = vld [vmem:[%s12 + $0x40] sm:$0xf]
    %v7321 = vld [vmem:[%s12 + $0x44] sm:$0xf]
    %v7322 = vld [vmem:[%s12 + $0x48] sm:$0xf]
    %v7323 = vld [vmem:[%s12 + $0x4c] sm:$0xf]
    %v7324 = vld [vmem:[%s12 + $0x50] sm:$0xf]
    %v7325 = vld [vmem:[%s12 + $0x54] sm:$0xf]
    %v7326 = vld [vmem:[%s12 + $0x58] sm:$0xf]
    %v7327 = vld [vmem:[%s12 + $0x5c] sm:$0xf]
    %v7328 = vld [vmem:[%s12 + $0x60] sm:$0xf]
    %v7329 = vld [vmem:[%s12 + $0x64] sm:$0xf]
    %v7330 = vld [vmem:[%s12 + $0x68] sm:$0xf]
    %v7331 = vld [vmem:[%s12 + $0x6c] sm:$0xf]
    %v7332 = vld [vmem:[%s12 + $0x70] sm:$0xf]
    %v7333 = vld [vmem:[%s12 + $0x74] sm:$0xf]
    %v7334 = vld [vmem:[%s12 + $0x78] sm:$0xf]
    %v7335 = vld [vmem:[%s12 + $0x7c] sm:$0xf]
    %v7336 = vld [vmem:[%s12 + $0x80] sm:$0xf]
    %v7337 = vld [vmem:[%s12 + $0x84] sm:$0xf]
    %v7338 = vld [vmem:[%s12 + $0x88] sm:$0xf]
    %v7339 = vld [vmem:[%s12 + $0x8c] sm:$0xf]
    %v7340 = vld [vmem:[%s12 + $0x90] sm:$0xf]
    %v7341 = vld [vmem:[%s12 + $0x94] sm:$0xf]
    %v7342 = vld [vmem:[%s12 + $0x98] sm:$0xf]
    %v7343 = vld [vmem:[%s12 + $0x9c] sm:$0xf]
    %v7344 = vld [vmem:[%s12 + $0xa0] sm:$0xf]
    %v7345 = vld [vmem:[%s12 + $0xa4] sm:$0xf]
    %v7346 = vld [vmem:[%s12 + $0xa8] sm:$0xf]
    %v7347 = vld [vmem:[%s12 + $0xac] sm:$0xf]
    %v7348 = vld [vmem:[%s12 + $0xb0] sm:$0xf]
    %v7349 = vld [vmem:[%s12 + $0xb4] sm:$0xf]
    %v7350 = vld [vmem:[%s12 + $0xb8] sm:$0xf]
    %v7351 = vld [vmem:[%s12 + $0xbc] sm:$0xf]
    %v7352 = vld [vmem:[%s12 + $0xc0] sm:$0xf]
    %v7353 = vld [vmem:[%s12 + $0xc4] sm:$0xf]
    %v7354 = vld [vmem:[%s12 + $0xc8] sm:$0xf]
    %v7355 = vld [vmem:[%s12 + $0xcc] sm:$0xf]
    %v7356 = vld [vmem:[%s12 + $0xd0] sm:$0xf]
    %v7357 = vld [vmem:[%s12 + $0xd4] sm:$0xf]
    %v7358 = vld [vmem:[%s12 + $0xd8] sm:$0xf]
    %v7359 = vld [vmem:[%s12 + $0xdc] sm:$0xf]
    %v7360 = vld [vmem:[%s12 + $0xe0] sm:$0xf]
    %v7361 = vld [vmem:[%s12 + $0xe4] sm:$0xf]
    %v7362 = vld [vmem:[%s12 + $0xe8] sm:$0xf]
    %v7363 = vld [vmem:[%s12 + $0xec] sm:$0xf]
    %v7364 = vld [vmem:[%s12 + $0xf0] sm:$0xf]
    %v7365 = vld [vmem:[%s12 + $0xf4] sm:$0xf]
    %v7366 = vld [vmem:[%s12 + $0xf8] sm:$0xf]
    %v7367 = vld [vmem:[%s12 + $0xfc] sm:$0xf]
    %v7368 = vld [vmem:[%s12 + $0x100] sm:$0xf]
    %v7369 = vld [vmem:[%s12 + $0x104] sm:$0xf]
    %v7370 = vld [vmem:[%s12 + $0x108] sm:$0xf]
    %v7371 = vld [vmem:[%s12 + $0x10c] sm:$0xf]
    %v7372 = vld [vmem:[%s12 + $0x110] sm:$0xf]
    %v7373 = vld [vmem:[%s12 + $0x114] sm:$0xf]
    %v7374 = vld [vmem:[%s12 + $0x118] sm:$0xf]
    %v7375 = vld [vmem:[%s12 + $0x11c] sm:$0xf]
    %v7376 = vld [vmem:[%s12 + $0x120] sm:$0xf]
    %v7377 = vld [vmem:[%s12 + $0x124] sm:$0xf]
    %v7378 = vld [vmem:[%s12 + $0x128] sm:$0xf]
    %v7379 = vld [vmem:[%s12 + $0x12c] sm:$0xf]
    %v7380 = vld [vmem:[%s12 + $0x130] sm:$0xf]
    %v7381 = vld [vmem:[%s12 + $0x134] sm:$0xf]
    %v7382 = vld [vmem:[%s12 + $0x138] sm:$0xf]
    %v7383 = vld [vmem:[%s12 + $0x13c] sm:$0xf]
    %v7384 = vld [vmem:[%s12 + $0x140] sm:$0xf]
    %v7385 = vld [vmem:[%s12 + $0x144] sm:$0xf]
    %v7386 = vld [vmem:[%s12 + $0x148] sm:$0xf]
    %v7387 = vld [vmem:[%s12 + $0x14c] sm:$0xf]
    %v7388 = vld [vmem:[%s12 + $0x150] sm:$0xf]
    %v7389 = vld [vmem:[%s12 + $0x154] sm:$0xf]
    %v7390 = vld [vmem:[%s12 + $0x158] sm:$0xf]
    %v7391 = vld [vmem:[%s12 + $0x15c] sm:$0xf]
    %v7392 = vld [vmem:[%s12 + $0x160] sm:$0xf]
    %v7393 = vld [vmem:[%s12 + $0x164] sm:$0xf]
    %v7394 = vld [vmem:[%s12 + $0x168] sm:$0xf]
    %v7395 = vld [vmem:[%s12 + $0x16c] sm:$0xf]
    %v7396 = vld [vmem:[%s12 + $0x170] sm:$0xf]
    %v7397 = vld [vmem:[%s12 + $0x174] sm:$0xf]
    %v7398 = vld [vmem:[%s12 + $0x178] sm:$0xf]
    %v7399 = vld [vmem:[%s12 + $0x17c] sm:$0xf]
    %v7400 = vld [vmem:[%s12 + $0x180] sm:$0xf]
    %v7401 = vld [vmem:[%s12 + $0x184] sm:$0xf]
    %v7402 = vld [vmem:[%s12 + $0x188] sm:$0xf]
    %v7403 = vld [vmem:[%s12 + $0x18c] sm:$0xf]
    %v7404 = vld [vmem:[%s12 + $0x190] sm:$0xf]
    %v7405 = vld [vmem:[%s12 + $0x194] sm:$0xf]
    %v7406 = vld [vmem:[%s12 + $0x198] sm:$0xf]
    %v7407 = vld [vmem:[%s12 + $0x19c] sm:$0xf]
    %v7408 = vld [vmem:[%s12 + $0x1a0] sm:$0xf]
    %v7409 = vld [vmem:[%s12 + $0x1a4] sm:$0xf]
    %v7410 = vld [vmem:[%s12 + $0x1a8] sm:$0xf]
    %v7411 = vld [vmem:[%s12 + $0x1ac] sm:$0xf]
    %v7412 = vld [vmem:[%s12 + $0x1b0] sm:$0xf]
    %v7413 = vld [vmem:[%s12 + $0x1b4] sm:$0xf]
    %v7414 = vld [vmem:[%s12 + $0x1b8] sm:$0xf]
    %v7415 = vld [vmem:[%s12 + $0x1bc] sm:$0xf]
    %v7416 = vld [vmem:[%s12 + $0x1c0] sm:$0xf]
    %v7417 = vld [vmem:[%s12 + $0x1c4] sm:$0xf]
    %v7418 = vld [vmem:[%s12 + $0x1c8] sm:$0xf]
    %v7419 = vld [vmem:[%s12 + $0x1cc] sm:$0xf]
    %v7420 = vld [vmem:[%s12 + $0x1d0] sm:$0xf]
    %v7421 = vld [vmem:[%s12 + $0x1d4] sm:$0xf]
    %v7422 = vld [vmem:[%s12 + $0x1d8] sm:$0xf]
    %v7423 = vld [vmem:[%s12 + $0x1dc] sm:$0xf]
    %v7424 = vld [vmem:[%s12 + $0x1e0] sm:$0xf]
    %v7425 = vld [vmem:[%s12 + $0x1e4] sm:$0xf]
    %v7426 = vld [vmem:[%s12 + $0x1e8] sm:$0xf]
    %v7427 = vld [vmem:[%s12 + $0x1ec] sm:$0xf]
    %v7428 = vld [vmem:[%s12 + $0x1f0] sm:$0xf]
    %v7429 = vld [vmem:[%s12 + $0x1f4] sm:$0xf]
    %v7430 = vld [vmem:[%s12 + $0x1f8] sm:$0xf]
    %v7431 = vld [vmem:[%s12 + $0x1fc] sm:$0xf]
    %v7432 = vld [vmem:[%s12 + $0x200] sm:$0xf]
    %v7433 = vld [vmem:[%s12 + $0x204] sm:$0xf]
    %v7434 = vld [vmem:[%s12 + $0x208] sm:$0xf]
    %v7435 = vld [vmem:[%s12 + $0x20c] sm:$0xf]
    %v7436 = vld [vmem:[%s12 + $0x210] sm:$0xf]
    %v7437 = vld [vmem:[%s12 + $0x214] sm:$0xf]
    %v7438 = vld [vmem:[%s12 + $0x218] sm:$0xf]
    %v7439 = vld [vmem:[%s12 + $0x21c] sm:$0xf]
    %v7440 = vld [vmem:[%s12 + $0x220] sm:$0xf]
    %v7441 = vld [vmem:[%s12 + $0x224] sm:$0xf]
    %v7442 = vld [vmem:[%s12 + $0x228] sm:$0xf]
    %v7443 = vld [vmem:[%s12 + $0x22c] sm:$0xf]
    %v7444 = vld [vmem:[%s12 + $0x230] sm:$0xf]
    %v7445 = vld [vmem:[%s12 + $0x234] sm:$0xf]
    %v7446 = vld [vmem:[%s12 + $0x238] sm:$0xf]
    %v7447 = vld [vmem:[%s12 + $0x23c] sm:$0xf]
    %v7448 = vld [vmem:[%s12 + $0x240] sm:$0xf]
    %v7449 = vld [vmem:[%s12 + $0x244] sm:$0xf]
    %v7450 = vld [vmem:[%s12 + $0x248] sm:$0xf]
    %v7451 = vld [vmem:[%s12 + $0x24c] sm:$0xf]
    %v7452 = vld [vmem:[%s12 + $0x250] sm:$0xf]
    %v7453 = vld [vmem:[%s12 + $0x254] sm:$0xf]
    %v7454 = vld [vmem:[%s12 + $0x258] sm:$0xf]
    %v7455 = vld [vmem:[%s12 + $0x25c] sm:$0xf]
    %v7456 = vld [vmem:[%s12 + $0x260] sm:$0xf]
    %v7457 = vld [vmem:[%s12 + $0x264] sm:$0xf]
    %v7458 = vld [vmem:[%s12 + $0x268] sm:$0xf]
    %v7459 = vld [vmem:[%s12 + $0x26c] sm:$0xf]
    %v7460 = vld [vmem:[%s12 + $0x270] sm:$0xf]
    %v7461 = vld [vmem:[%s12 + $0x274] sm:$0xf]
    %v7462 = vld [vmem:[%s12 + $0x278] sm:$0xf]
    %v7463 = vld [vmem:[%s12 + $0x27c] sm:$0xf]
    %v7464 = vld [vmem:[%s12 + $0x280] sm:$0xf]
    %v7465 = vld [vmem:[%s12 + $0x284] sm:$0xf]
    %v7466 = vld [vmem:[%s12 + $0x288] sm:$0xf]
    %v7467 = vld [vmem:[%s12 + $0x28c] sm:$0xf]
    %v7468 = vld [vmem:[%s12 + $0x290] sm:$0xf]
    %v7469 = vld [vmem:[%s12 + $0x294] sm:$0xf]
    %v7470 = vld [vmem:[%s12 + $0x298] sm:$0xf]
    %v7471 = vld [vmem:[%s12 + $0x29c] sm:$0xf]
    %v7472 = vld [vmem:[%s12 + $0x2a0] sm:$0xf]
    %v7473 = vld [vmem:[%s12 + $0x2a4] sm:$0xf]
    %v7474 = vld [vmem:[%s12 + $0x2a8] sm:$0xf]
    %v7475 = vld [vmem:[%s12 + $0x2ac] sm:$0xf]
    %v7476 = vld [vmem:[%s12 + $0x2b0] sm:$0xf]
    %v7477 = vld [vmem:[%s12 + $0x2b4] sm:$0xf]
    %v7478 = vld [vmem:[%s12 + $0x2b8] sm:$0xf]
    %v7479 = vld [vmem:[%s12 + $0x2bc] sm:$0xf]
    %v7480 = vld [vmem:[%s12 + $0x2c0] sm:$0xf]
    %v7481 = vld [vmem:[%s12 + $0x2c4] sm:$0xf]
    %v7482 = vld [vmem:[%s12 + $0x2c8] sm:$0xf]
    %v7483 = vld [vmem:[%s12 + $0x2cc] sm:$0xf]
    %v7484 = vld [vmem:[%s12 + $0x2d0] sm:$0xf]
    %v7485 = vld [vmem:[%s12 + $0x2d4] sm:$0xf]
    %v7486 = vld [vmem:[%s12 + $0x2d8] sm:$0xf]
    %v7487 = vld [vmem:[%s12 + $0x2dc] sm:$0xf]
    %v7488 = vld [vmem:[%s12 + $0x2e0] sm:$0xf]
    %v7489 = vld [vmem:[%s12 + $0x2e4] sm:$0xf]
    %v7490 = vld [vmem:[%s12 + $0x2e8] sm:$0xf]
    %v7491 = vld [vmem:[%s12 + $0x2ec] sm:$0xf]
    %v7492 = vld [vmem:[%s12 + $0x2f0] sm:$0xf]
    %v7493 = vld [vmem:[%s12 + $0x2f4] sm:$0xf]
    %v7494 = vld [vmem:[%s12 + $0x2f8] sm:$0xf]
    %v7495 = vld [vmem:[%s12 + $0x2fc] sm:$0xf]
    %v7496 = vld [vmem:[#allocation22] sm:$0x1]
    %v7498 = vlaneseq
    %v7499 = vshrl.u32 %v7498, 7
    %v7500 = vsub.s32 0, %v7499
    %v7501 = vrot.slane %v7496, %v7500
    %v7695 = vunpack.c.l.b16 %v7304
    %v7696 = vunpack.c.l.b16 %v7305
    %v7697 = vunpack.c.l.b16 %v7306
    %v7698 = vunpack.c.l.b16 %v7307
    %v7699 = vunpack.c.l.b16 %v7308
    %v7700 = vunpack.c.l.b16 %v7309
    %v7701 = vunpack.c.l.b16 %v7310
    %v7702 = vunpack.c.l.b16 %v7311
    %v7703 = vunpack.c.l.b16 %v7312
    %v7704 = vunpack.c.l.b16 %v7313
    %v7705 = vunpack.c.l.b16 %v7314
    %v7706 = vunpack.c.l.b16 %v7315
    %v7707 = vunpack.c.l.b16 %v7316
    %v7708 = vunpack.c.l.b16 %v7317
    %v7709 = vunpack.c.l.b16 %v7318
    %v7710 = vunpack.c.l.b16 %v7319
    %v7711 = vunpack.c.l.b16 %v7320
    %v7712 = vunpack.c.l.b16 %v7321
    %v7713 = vunpack.c.l.b16 %v7322
    %v7714 = vunpack.c.l.b16 %v7323
    %v7715 = vunpack.c.l.b16 %v7324
    %v7716 = vunpack.c.l.b16 %v7325
    %v7717 = vunpack.c.l.b16 %v7326
    %v7718 = vunpack.c.l.b16 %v7327
    %v7719 = vunpack.c.l.b16 %v7328
    %v7720 = vunpack.c.l.b16 %v7329
    %v7721 = vunpack.c.l.b16 %v7330
    %v7722 = vunpack.c.l.b16 %v7331
    %v7723 = vunpack.c.l.b16 %v7332
    %v7724 = vunpack.c.l.b16 %v7333
    %v7725 = vunpack.c.l.b16 %v7334
    %v7726 = vunpack.c.l.b16 %v7335
    %v7727 = vunpack.c.l.b16 %v7336
    %v7728 = vunpack.c.l.b16 %v7337
    %v7729 = vunpack.c.l.b16 %v7338
    %v7730 = vunpack.c.l.b16 %v7339
    %v7731 = vunpack.c.l.b16 %v7340
    %v7732 = vunpack.c.l.b16 %v7341
    %v7733 = vunpack.c.l.b16 %v7342
    %v7734 = vunpack.c.l.b16 %v7343
    %v7735 = vunpack.c.l.b16 %v7344
    %v7736 = vunpack.c.l.b16 %v7345
    %v7737 = vunpack.c.l.b16 %v7346
    %v7738 = vunpack.c.l.b16 %v7347
    %v7739 = vunpack.c.l.b16 %v7348
    %v7740 = vunpack.c.l.b16 %v7349
    %v7741 = vunpack.c.l.b16 %v7350
    %v7742 = vunpack.c.l.b16 %v7351
    %v7743 = vunpack.c.l.b16 %v7352
    %v7744 = vunpack.c.l.b16 %v7353
    %v7745 = vunpack.c.l.b16 %v7354
    %v7746 = vunpack.c.l.b16 %v7355
    %v7747 = vunpack.c.l.b16 %v7356
    %v7748 = vunpack.c.l.b16 %v7357
    %v7749 = vunpack.c.l.b16 %v7358
    %v7750 = vunpack.c.l.b16 %v7359
    %v7751 = vunpack.c.l.b16 %v7360
    %v7752 = vunpack.c.l.b16 %v7361
    %v7753 = vunpack.c.l.b16 %v7362
    %v7754 = vunpack.c.l.b16 %v7363
    %v7755 = vunpack.c.l.b16 %v7364
    %v7756 = vunpack.c.l.b16 %v7365
    %v7757 = vunpack.c.l.b16 %v7366
    %v7758 = vunpack.c.l.b16 %v7367
    %v7759 = vunpack.c.l.b16 %v7368
    %v7760 = vunpack.c.l.b16 %v7369
    %v7761 = vunpack.c.l.b16 %v7370
    %v7762 = vunpack.c.l.b16 %v7371
    %v7763 = vunpack.c.l.b16 %v7372
    %v7764 = vunpack.c.l.b16 %v7373
    %v7765 = vunpack.c.l.b16 %v7374
    %v7766 = vunpack.c.l.b16 %v7375
    %v7767 = vunpack.c.l.b16 %v7376
    %v7768 = vunpack.c.l.b16 %v7377
    %v7769 = vunpack.c.l.b16 %v7378
    %v7770 = vunpack.c.l.b16 %v7379
    %v7771 = vunpack.c.l.b16 %v7380
    %v7772 = vunpack.c.l.b16 %v7381
    %v7773 = vunpack.c.l.b16 %v7382
    %v7774 = vunpack.c.l.b16 %v7383
    %v7775 = vunpack.c.l.b16 %v7384
    %v7776 = vunpack.c.l.b16 %v7385
    %v7777 = vunpack.c.l.b16 %v7386
    %v7778 = vunpack.c.l.b16 %v7387
    %v7779 = vunpack.c.l.b16 %v7388
    %v7780 = vunpack.c.l.b16 %v7389
    %v7781 = vunpack.c.l.b16 %v7390
    %v7782 = vunpack.c.l.b16 %v7391
    %v7783 = vunpack.c.l.b16 %v7392
    %v7784 = vunpack.c.l.b16 %v7393
    %v7785 = vunpack.c.l.b16 %v7394
    %v7786 = vunpack.c.l.b16 %v7395
    %v7787 = vunpack.c.l.b16 %v7396
    %v7788 = vunpack.c.l.b16 %v7397
    %v7789 = vunpack.c.l.b16 %v7398
    %v7790 = vunpack.c.l.b16 %v7399
    %v7791 = vunpack.c.l.b16 %v7400
    %v7792 = vunpack.c.l.b16 %v7401
    %v7793 = vunpack.c.l.b16 %v7402
    %v7794 = vunpack.c.l.b16 %v7403
    %v7795 = vunpack.c.l.b16 %v7404
    %v7796 = vunpack.c.l.b16 %v7405
    %v7797 = vunpack.c.l.b16 %v7406
    %v7798 = vunpack.c.l.b16 %v7407
    %v7799 = vunpack.c.l.b16 %v7408
    %v7800 = vunpack.c.l.b16 %v7409
    %v7801 = vunpack.c.l.b16 %v7410
    %v7802 = vunpack.c.l.b16 %v7411
    %v7803 = vunpack.c.l.b16 %v7412
    %v7804 = vunpack.c.l.b16 %v7413
    %v7805 = vunpack.c.l.b16 %v7414
    %v7806 = vunpack.c.l.b16 %v7415
    %v7807 = vunpack.c.l.b16 %v7416
    %v7808 = vunpack.c.l.b16 %v7417
    %v7809 = vunpack.c.l.b16 %v7418
    %v7810 = vunpack.c.l.b16 %v7419
    %v7811 = vunpack.c.l.b16 %v7420
    %v7812 = vunpack.c.l.b16 %v7421
    %v7813 = vunpack.c.l.b16 %v7422
    %v7814 = vunpack.c.l.b16 %v7423
    %v7815 = vunpack.c.l.b16 %v7424
    %v7816 = vunpack.c.l.b16 %v7425
    %v7817 = vunpack.c.l.b16 %v7426
    %v7818 = vunpack.c.l.b16 %v7427
    %v7819 = vunpack.c.l.b16 %v7428
    %v7820 = vunpack.c.l.b16 %v7429
    %v7821 = vunpack.c.l.b16 %v7430
    %v7822 = vunpack.c.l.b16 %v7431
    %v7823 = vunpack.c.l.b16 %v7432
    %v7824 = vunpack.c.l.b16 %v7433
    %v7825 = vunpack.c.l.b16 %v7434
    %v7826 = vunpack.c.l.b16 %v7435
    %v7827 = vunpack.c.l.b16 %v7436
    %v7828 = vunpack.c.l.b16 %v7437
    %v7829 = vunpack.c.l.b16 %v7438
    %v7830 = vunpack.c.l.b16 %v7439
    %v7831 = vunpack.c.l.b16 %v7440
    %v7832 = vunpack.c.l.b16 %v7441
    %v7833 = vunpack.c.l.b16 %v7442
    %v7834 = vunpack.c.l.b16 %v7443
    %v7835 = vunpack.c.l.b16 %v7444
    %v7836 = vunpack.c.l.b16 %v7445
    %v7837 = vunpack.c.l.b16 %v7446
    %v7838 = vunpack.c.l.b16 %v7447
    %v7839 = vunpack.c.l.b16 %v7448
    %v7840 = vunpack.c.l.b16 %v7449
    %v7841 = vunpack.c.l.b16 %v7450
    %v7842 = vunpack.c.l.b16 %v7451
    %v7843 = vunpack.c.l.b16 %v7452
    %v7844 = vunpack.c.l.b16 %v7453
    %v7845 = vunpack.c.l.b16 %v7454
    %v7846 = vunpack.c.l.b16 %v7455
    %v7847 = vunpack.c.l.b16 %v7456
    %v7848 = vunpack.c.l.b16 %v7457
    %v7849 = vunpack.c.l.b16 %v7458
    %v7850 = vunpack.c.l.b16 %v7459
    %v7851 = vunpack.c.l.b16 %v7460
    %v7852 = vunpack.c.l.b16 %v7461
    %v7853 = vunpack.c.l.b16 %v7462
    %v7854 = vunpack.c.l.b16 %v7463
    %v7855 = vunpack.c.l.b16 %v7464
    %v7856 = vunpack.c.l.b16 %v7465
    %v7857 = vunpack.c.l.b16 %v7466
    %v7858 = vunpack.c.l.b16 %v7467
    %v7859 = vunpack.c.l.b16 %v7468
    %v7860 = vunpack.c.l.b16 %v7469
    %v7861 = vunpack.c.l.b16 %v7470
    %v7862 = vunpack.c.l.b16 %v7471
    %v7863 = vunpack.c.l.b16 %v7472
    %v7864 = vunpack.c.l.b16 %v7473
    %v7865 = vunpack.c.l.b16 %v7474
    %v7866 = vunpack.c.l.b16 %v7475
    %v7867 = vunpack.c.l.b16 %v7476
    %v7868 = vunpack.c.l.b16 %v7477
    %v7869 = vunpack.c.l.b16 %v7478
    %v7870 = vunpack.c.l.b16 %v7479
    %v7871 = vunpack.c.l.b16 %v7480
    %v7872 = vunpack.c.l.b16 %v7481
    %v7873 = vunpack.c.l.b16 %v7482
    %v7874 = vunpack.c.l.b16 %v7483
    %v7875 = vunpack.c.l.b16 %v7484
    %v7876 = vunpack.c.l.b16 %v7485
    %v7877 = vunpack.c.l.b16 %v7486
    %v7878 = vunpack.c.l.b16 %v7487
    %v7879 = vunpack.c.l.b16 %v7488
    %v7880 = vunpack.c.l.b16 %v7489
    %v7881 = vunpack.c.l.b16 %v7490
    %v7882 = vunpack.c.l.b16 %v7491
    %v7883 = vunpack.c.l.b16 %v7492
    %v7884 = vunpack.c.l.b16 %v7493
    %v7885 = vunpack.c.l.b16 %v7494
    %v7886 = vunpack.c.l.b16 %v7495
    %v7887 = vpack.c.b16 %v7696, %v7695
    %v7888 = vpack.c.b16 %v7698, %v7697
    %v7889 = vpack.c.b16 %v7700, %v7699
    %v7890 = vpack.c.b16 %v7702, %v7701
    %v7891 = vpack.c.b16 %v7704, %v7703
    %v7892 = vpack.c.b16 %v7706, %v7705
    %v7893 = vpack.c.b16 %v7708, %v7707
    %v7894 = vpack.c.b16 %v7710, %v7709
    %v7895 = vpack.c.b16 %v7712, %v7711
    %v7896 = vpack.c.b16 %v7714, %v7713
    %v7897 = vpack.c.b16 %v7716, %v7715
    %v7898 = vpack.c.b16 %v7718, %v7717
    %v7899 = vpack.c.b16 %v7720, %v7719
    %v7900 = vpack.c.b16 %v7722, %v7721
    %v7901 = vpack.c.b16 %v7724, %v7723
    %v7902 = vpack.c.b16 %v7726, %v7725
    %v7903 = vpack.c.b16 %v7728, %v7727
    %v7904 = vpack.c.b16 %v7730, %v7729
    %v7905 = vpack.c.b16 %v7732, %v7731
    %v7906 = vpack.c.b16 %v7734, %v7733
    %v7907 = vpack.c.b16 %v7736, %v7735
    %v7908 = vpack.c.b16 %v7738, %v7737
    %v7909 = vpack.c.b16 %v7740, %v7739
    %v7910 = vpack.c.b16 %v7742, %v7741
    %v7911 = vpack.c.b16 %v7744, %v7743
    %v7912 = vpack.c.b16 %v7746, %v7745
    %v7913 = vpack.c.b16 %v7748, %v7747
    %v7914 = vpack.c.b16 %v7750, %v7749
    %v7915 = vpack.c.b16 %v7752, %v7751
    %v7916 = vpack.c.b16 %v7754, %v7753
    %v7917 = vpack.c.b16 %v7756, %v7755
    %v7918 = vpack.c.b16 %v7758, %v7757
    %v7919 = vpack.c.b16 %v7760, %v7759
    %v7920 = vpack.c.b16 %v7762, %v7761
    %v7921 = vpack.c.b16 %v7764, %v7763
    %v7922 = vpack.c.b16 %v7766, %v7765
    %v7923 = vpack.c.b16 %v7768, %v7767
    %v7924 = vpack.c.b16 %v7770, %v7769
    %v7925 = vpack.c.b16 %v7772, %v7771
    %v7926 = vpack.c.b16 %v7774, %v7773
    %v7927 = vpack.c.b16 %v7776, %v7775
    %v7928 = vpack.c.b16 %v7778, %v7777
    %v7929 = vpack.c.b16 %v7780, %v7779
    %v7930 = vpack.c.b16 %v7782, %v7781
    %v7931 = vpack.c.b16 %v7784, %v7783
    %v7932 = vpack.c.b16 %v7786, %v7785
    %v7933 = vpack.c.b16 %v7788, %v7787
    %v7934 = vpack.c.b16 %v7790, %v7789
    %v7935 = vpack.c.b16 %v7792, %v7791
    %v7936 = vpack.c.b16 %v7794, %v7793
    %v7937 = vpack.c.b16 %v7796, %v7795
    %v7938 = vpack.c.b16 %v7798, %v7797
    %v7939 = vpack.c.b16 %v7800, %v7799
    %v7940 = vpack.c.b16 %v7802, %v7801
    %v7941 = vpack.c.b16 %v7804, %v7803
    %v7942 = vpack.c.b16 %v7806, %v7805
    %v7943 = vpack.c.b16 %v7808, %v7807
    %v7944 = vpack.c.b16 %v7810, %v7809
    %v7945 = vpack.c.b16 %v7812, %v7811
    %v7946 = vpack.c.b16 %v7814, %v7813
    %v7947 = vpack.c.b16 %v7816, %v7815
    %v7948 = vpack.c.b16 %v7818, %v7817
    %v7949 = vpack.c.b16 %v7820, %v7819
    %v7950 = vpack.c.b16 %v7822, %v7821
    %v7951 = vpack.c.b16 %v7824, %v7823
    %v7952 = vpack.c.b16 %v7826, %v7825
    %v7953 = vpack.c.b16 %v7828, %v7827
    %v7954 = vpack.c.b16 %v7830, %v7829
    %v7955 = vpack.c.b16 %v7832, %v7831
    %v7956 = vpack.c.b16 %v7834, %v7833
    %v7957 = vpack.c.b16 %v7836, %v7835
    %v7958 = vpack.c.b16 %v7838, %v7837
    %v7959 = vpack.c.b16 %v7840, %v7839
    %v7960 = vpack.c.b16 %v7842, %v7841
    %v7961 = vpack.c.b16 %v7844, %v7843
    %v7962 = vpack.c.b16 %v7846, %v7845
    %v7963 = vpack.c.b16 %v7848, %v7847
    %v7964 = vpack.c.b16 %v7850, %v7849
    %v7965 = vpack.c.b16 %v7852, %v7851
    %v7966 = vpack.c.b16 %v7854, %v7853
    %v7967 = vpack.c.b16 %v7856, %v7855
    %v7968 = vpack.c.b16 %v7858, %v7857
    %v7969 = vpack.c.b16 %v7860, %v7859
    %v7970 = vpack.c.b16 %v7862, %v7861
    %v7971 = vpack.c.b16 %v7864, %v7863
    %v7972 = vpack.c.b16 %v7866, %v7865
    %v7973 = vpack.c.b16 %v7868, %v7867
    %v7974 = vpack.c.b16 %v7870, %v7869
    %v7975 = vpack.c.b16 %v7872, %v7871
    %v7976 = vpack.c.b16 %v7874, %v7873
    %v7977 = vpack.c.b16 %v7876, %v7875
    %v7978 = vpack.c.b16 %v7878, %v7877
    %v7979 = vpack.c.b16 %v7880, %v7879
    %v7980 = vpack.c.b16 %v7882, %v7881
    %v7981 = vpack.c.b16 %v7884, %v7883
    %v7982 = vpack.c.b16 %v7886, %v7885
    %8079 = vmatprep.subr.bf16.mxu0 0
    %8080 = vmatpush1.bf16.msra.mxu0 %v7887
    %8081 = vmatprep.subr.bf16.mxu0 0
    %8082 = vmatpush1.bf16.msra.mxu0 %v7888
    %8083 = vmatprep.subr.bf16.mxu0 0
    %8084 = vmatpush1.bf16.msra.mxu0 %v7889
    %8085 = vmatprep.subr.bf16.mxu0 0
    %8086 = vmatpush1.bf16.msra.mxu0 %v7890
    %8087 = vmatprep.subr.bf16.mxu0 0
    %8088 = vmatpush1.bf16.msra.mxu0 %v7891
    %8089 = vmatprep.subr.bf16.mxu0 0
    %8090 = vmatpush1.bf16.msra.mxu0 %v7892
    %8091 = vmatprep.subr.bf16.mxu0 0
    %8092 = vmatpush1.bf16.msra.mxu0 %v7893
    %8093 = vmatprep.subr.bf16.mxu0 0
    %8094 = vmatpush1.bf16.msra.mxu0 %v7894
    %8095 = vmatprep.subr.bf16.mxu0 0
    %8096 = vmatpush1.bf16.msra.mxu0 %v7895
    %8097 = vmatprep.subr.bf16.mxu0 0
    %8098 = vmatpush1.bf16.msra.mxu0 %v7896
    %8099 = vmatprep.subr.bf16.mxu0 0
    %8100 = vmatpush1.bf16.msra.mxu0 %v7897
    %8101 = vmatprep.subr.bf16.mxu0 0
    %8102 = vmatpush1.bf16.msra.mxu0 %v7898
    %8103 = vmatprep.subr.bf16.mxu0 0
    %8104 = vmatpush1.bf16.msra.mxu0 %v7899
    %8105 = vmatprep.subr.bf16.mxu0 0
    %8106 = vmatpush1.bf16.msra.mxu0 %v7900
    %8107 = vmatprep.subr.bf16.mxu0 0
    %8108 = vmatpush1.bf16.msra.mxu0 %v7901
    %8109 = vmatprep.subr.bf16.mxu0 0
    %8110 = vmatpush1.bf16.msra.mxu0 %v7902
    %8111 = vmatprep.mubr.bf16.mxu0 %v7293
    %8112 = vmatmul.mubr.bf16.gmra.mrb[0].mxu0 %v7292
    %v8113 = vpop.f32.mrb[0].mxu0
    %v8114 = vadd.f32 %v7501, %v8113
    %v8115 = vpop.f32.mrb[0].mxu0
    %v8116 = vpop.f32.mrb[0].mxu0
    %v8117 = vpop.f32.mrb[0].mxu0
    %8118 = vdwg.mxu0
    %8119 = vmatprep.subr.bf16.mxu0 0
    %8120 = vmatpush1.bf16.msra.mxu0 %v7903
    %8121 = vmatprep.subr.bf16.mxu0 0
    %8122 = vmatpush1.bf16.msra.mxu0 %v7904
    %8123 = vmatprep.subr.bf16.mxu0 0
    %8124 = vmatpush1.bf16.msra.mxu0 %v7905
    %8125 = vmatprep.subr.bf16.mxu0 0
    %8126 = vmatpush1.bf16.msra.mxu0 %v7906
    %8127 = vmatprep.subr.bf16.mxu0 0
    %8128 = vmatpush1.bf16.msra.mxu0 %v7907
    %8129 = vmatprep.subr.bf16.mxu0 0
    %8130 = vmatpush1.bf16.msra.mxu0 %v7908
    %8131 = vmatprep.subr.bf16.mxu0 0
    %8132 = vmatpush1.bf16.msra.mxu0 %v7909
    %8133 = vmatprep.subr.bf16.mxu0 0
    %8134 = vmatpush1.bf16.msra.mxu0 %v7910
    %8135 = vmatprep.subr.bf16.mxu0 0
    %8136 = vmatpush1.bf16.msra.mxu0 %v7911
    %8137 = vmatprep.subr.bf16.mxu0 0
    %8138 = vmatpush1.bf16.msra.mxu0 %v7912
    %8139 = vmatprep.subr.bf16.mxu0 0
    %8140 = vmatpush1.bf16.msra.mxu0 %v7913
    %8141 = vmatprep.subr.bf16.mxu0 0
    %8142 = vmatpush1.bf16.msra.mxu0 %v7914
    %8143 = vmatprep.subr.bf16.mxu0 0
    %8144 = vmatpush1.bf16.msra.mxu0 %v7915
    %8145 = vmatprep.subr.bf16.mxu0 0
    %8146 = vmatpush1.bf16.msra.mxu0 %v7916
    %8147 = vmatprep.subr.bf16.mxu0 0
    %8148 = vmatpush1.bf16.msra.mxu0 %v7917
    %8149 = vmatprep.subr.bf16.mxu0 0
    %8150 = vmatpush1.bf16.msra.mxu0 %v7918
    %8151 = vmatprep.mubr.bf16.mxu0 %v7295
    %8152 = vmatmul.mubr.bf16.gmra.mrb[0].mxu0 %v7294
    %v8153 = vpop.f32.mrb[0].mxu0
    %v8154 = vadd.f32 %v8114, %v8153
    %v8155 = vpop.f32.mrb[0].mxu0
    %v8156 = vpop.f32.mrb[0].mxu0
    %v8157 = vpop.f32.mrb[0].mxu0
    %8158 = vdwg.mxu0
    %8159 = vmatprep.subr.bf16.mxu0 0
    %8160 = vmatpush1.bf16.msra.mxu0 %v7919
    %8161 = vmatprep.subr.bf16.mxu0 0
    %8162 = vmatpush1.bf16.msra.mxu0 %v7920
    %8163 = vmatprep.subr.bf16.mxu0 0
    %8164 = vmatpush1.bf16.msra.mxu0 %v7921
    %8165 = vmatprep.subr.bf16.mxu0 0
    %8166 = vmatpush1.bf16.msra.mxu0 %v7922
    %8167 = vmatprep.subr.bf16.mxu0 0
    %8168 = vmatpush1.bf16.msra.mxu0 %v7923
    %8169 = vmatprep.subr.bf16.mxu0 0
    %8170 = vmatpush1.bf16.msra.mxu0 %v7924
    %8171 = vmatprep.subr.bf16.mxu0 0
    %8172 = vmatpush1.bf16.msra.mxu0 %v7925
    %8173 = vmatprep.subr.bf16.mxu0 0
    %8174 = vmatpush1.bf16.msra.mxu0 %v7926
    %8175 = vmatprep.subr.bf16.mxu0 0
    %8176 = vmatpush1.bf16.msra.mxu0 %v7927
    %8177 = vmatprep.subr.bf16.mxu0 0
    %8178 = vmatpush1.bf16.msra.mxu0 %v7928
    %8179 = vmatprep.subr.bf16.mxu0 0
    %8180 = vmatpush1.bf16.msra.mxu0 %v7929
    %8181 = vmatprep.subr.bf16.mxu0 0
    %8182 = vmatpush1.bf16.msra.mxu0 %v7930
    %8183 = vmatprep.subr.bf16.mxu0 0
    %8184 = vmatpush1.bf16.msra.mxu0 %v7931
    %8185 = vmatprep.subr.bf16.mxu0 0
    %8186 = vmatpush1.bf16.msra.mxu0 %v7932
    %8187 = vmatprep.subr.bf16.mxu0 0
    %8188 = vmatpush1.bf16.msra.mxu0 %v7933
    %8189 = vmatprep.subr.bf16.mxu0 0
    %8190 = vmatpush1.bf16.msra.mxu0 %v7934
    %8191 = vmatprep.mubr.bf16.mxu0 %v7297
    %8192 = vmatmul.mubr.bf16.gmra.mrb[0].mxu0 %v7296
    %v8193 = vpop.f32.mrb[0].mxu0
    %v8194 = vadd.f32 %v8154, %v8193
    %v8195 = vpop.f32.mrb[0].mxu0
    %v8196 = vpop.f32.mrb[0].mxu0
    %v8197 = vpop.f32.mrb[0].mxu0
    %8198 = vdwg.mxu0
    %8199 = vmatprep.subr.bf16.mxu0 0
    %8200 = vmatpush1.bf16.msra.mxu0 %v7935
    %8201 = vmatprep.subr.bf16.mxu0 0
    %8202 = vmatpush1.bf16.msra.mxu0 %v7936
    %8203 = vmatprep.subr.bf16.mxu0 0
    %8204 = vmatpush1.bf16.msra.mxu0 %v7937
    %8205 = vmatprep.subr.bf16.mxu0 0
    %8206 = vmatpush1.bf16.msra.mxu0 %v7938
    %8207 = vmatprep.subr.bf16.mxu0 0
    %8208 = vmatpush1.bf16.msra.mxu0 %v7939
    %8209 = vmatprep.subr.bf16.mxu0 0
    %8210 = vmatpush1.bf16.msra.mxu0 %v7940
    %8211 = vmatprep.subr.bf16.mxu0 0
    %8212 = vmatpush1.bf16.msra.mxu0 %v7941
    %8213 = vmatprep.subr.bf16.mxu0 0
    %8214 = vmatpush1.bf16.msra.mxu0 %v7942
    %8215 = vmatprep.subr.bf16.mxu0 0
    %8216 = vmatpush1.bf16.msra.mxu0 %v7943
    %8217 = vmatprep.subr.bf16.mxu0 0
    %8218 = vmatpush1.bf16.msra.mxu0 %v7944
    %8219 = vmatprep.subr.bf16.mxu0 0
    %8220 = vmatpush1.bf16.msra.mxu0 %v7945
    %8221 = vmatprep.subr.bf16.mxu0 0
    %8222 = vmatpush1.bf16.msra.mxu0 %v7946
    %8223 = vmatprep.subr.bf16.mxu0 0
    %8224 = vmatpush1.bf16.msra.mxu0 %v7947
    %8225 = vmatprep.subr.bf16.mxu0 0
    %8226 = vmatpush1.bf16.msra.mxu0 %v7948
    %8227 = vmatprep.subr.bf16.mxu0 0
    %8228 = vmatpush1.bf16.msra.mxu0 %v7949
    %8229 = vmatprep.subr.bf16.mxu0 0
    %8230 = vmatpush1.bf16.msra.mxu0 %v7950
    %8231 = vmatprep.mubr.bf16.mxu0 %v7299
    %8232 = vmatmul.mubr.bf16.gmra.mrb[0].mxu0 %v7298
    %v8233 = vpop.f32.mrb[0].mxu0
    %v8234 = vadd.f32 %v8194, %v8233
    %v8235 = vpop.f32.mrb[0].mxu0
    %v8236 = vpop.f32.mrb[0].mxu0
    %v8237 = vpop.f32.mrb[0].mxu0
    %8238 = vdwg.mxu0
    %8239 = vmatprep.subr.bf16.mxu0 0
    %8240 = vmatpush1.bf16.msra.mxu0 %v7951
    %8241 = vmatprep.subr.bf16.mxu0 0
    %8242 = vmatpush1.bf16.msra.mxu0 %v7952
    %8243 = vmatprep.subr.bf16.mxu0 0
    %8244 = vmatpush1.bf16.msra.mxu0 %v7953
    %8245 = vmatprep.subr.bf16.mxu0 0
    %8246 = vmatpush1.bf16.msra.mxu0 %v7954
    %8247 = vmatprep.subr.bf16.mxu0 0
    %8248 = vmatpush1.bf16.msra.mxu0 %v7955
    %8249 = vmatprep.subr.bf16.mxu0 0
    %8250 = vmatpush1.bf16.msra.mxu0 %v7956
    %8251 = vmatprep.subr.bf16.mxu0 0
    %8252 = vmatpush1.bf16.msra.mxu0 %v7957
    %8253 = vmatprep.subr.bf16.mxu0 0
    %8254 = vmatpush1.bf16.msra.mxu0 %v7958
    %8255 = vmatprep.subr.bf16.mxu0 0
    %8256 = vmatpush1.bf16.msra.mxu0 %v7959
    %8257 = vmatprep.subr.bf16.mxu0 0
    %8258 = vmatpush1.bf16.msra.mxu0 %v7960
    %8259 = vmatprep.subr.bf16.mxu0 0
    %8260 = vmatpush1.bf16.msra.mxu0 %v7961
    %8261 = vmatprep.subr.bf16.mxu0 0
    %8262 = vmatpush1.bf16.msra.mxu0 %v7962
    %8263 = vmatprep.subr.bf16.mxu0 0
    %8264 = vmatpush1.bf16.msra.mxu0 %v7963
    %8265 = vmatprep.subr.bf16.mxu0 0
    %8266 = vmatpush1.bf16.msra.mxu0 %v7964
    %8267 = vmatprep.subr.bf16.mxu0 0
    %8268 = vmatpush1.bf16.msra.mxu0 %v7965
    %8269 = vmatprep.subr.bf16.mxu0 0
    %8270 = vmatpush1.bf16.msra.mxu0 %v7966
    %8271 = vmatprep.mubr.bf16.mxu0 %v7301
    %8272 = vmatmul.mubr.bf16.gmra.mrb[0].mxu0 %v7300
    %v8273 = vpop.f32.mrb[0].mxu0
    %v8274 = vadd.f32 %v8234, %v8273
    %v8275 = vpop.f32.mrb[0].mxu0
    %v8276 = vpop.f32.mrb[0].mxu0
    %v8277 = vpop.f32.mrb[0].mxu0
    %8278 = vdwg.mxu0
    %8279 = vmatprep.subr.bf16.mxu0 0
    %8280 = vmatpush1.bf16.msra.mxu0 %v7967
    %8281 = vmatprep.subr.bf16.mxu0 0
    %8282 = vmatpush1.bf16.msra.mxu0 %v7968
    %8283 = vmatprep.subr.bf16.mxu0 0
    %8284 = vmatpush1.bf16.msra.mxu0 %v7969
    %8285 = vmatprep.subr.bf16.mxu0 0
    %8286 = vmatpush1.bf16.msra.mxu0 %v7970
    %8287 = vmatprep.subr.bf16.mxu0 0
    %8288 = vmatpush1.bf16.msra.mxu0 %v7971
    %8289 = vmatprep.subr.bf16.mxu0 0
    %8290 = vmatpush1.bf16.msra.mxu0 %v7972
    %8291 = vmatprep.subr.bf16.mxu0 0
    %8292 = vmatpush1.bf16.msra.mxu0 %v7973
    %8293 = vmatprep.subr.bf16.mxu0 0
    %8294 = vmatpush1.bf16.msra.mxu0 %v7974
    %8295 = vmatprep.subr.bf16.mxu0 0
    %8296 = vmatpush1.bf16.msra.mxu0 %v7975
    %8297 = vmatprep.subr.bf16.mxu0 0
    %8298 = vmatpush1.bf16.msra.mxu0 %v7976
    %8299 = vmatprep.subr.bf16.mxu0 0
    %8300 = vmatpush1.bf16.msra.mxu0 %v7977
    %8301 = vmatprep.subr.bf16.mxu0 0
    %8302 = vmatpush1.bf16.msra.mxu0 %v7978
    %8303 = vmatprep.subr.bf16.mxu0 0
    %8304 = vmatpush1.bf16.msra.mxu0 %v7979
    %8305 = vmatprep.subr.bf16.mxu0 0
    %8306 = vmatpush1.bf16.msra.mxu0 %v7980
    %8307 = vmatprep.subr.bf16.mxu0 0
    %8308 = vmatpush1.bf16.msra.mxu0 %v7981
    %8309 = vmatprep.subr.bf16.mxu0 0
    %8310 = vmatpush1.bf16.msra.mxu0 %v7982
    %8311 = vmatprep.mubr.bf16.mxu0 %v7303
    %8312 = vmatmul.mubr.bf16.gmra.mrb[0].mxu0 %v7302
    %v8313 = vpop.f32.mrb[0].mxu0
    %v8314 = vadd.f32 %v8274, %v8313
    %v8315 = vpop.f32.mrb[0].mxu0
    %v8316 = vpop.f32.mrb[0].mxu0
    %v8317 = vpop.f32.mrb[0].mxu0
    %8318 = vdwg.mxu0
    %v8319 = vxor.u32 %v8314, 2147483648
    %v8320 = vmul.f32 %v8319, 1.442695
    %v8321 = vpow.pop %v8320
    %v8322 = vadd.f32 %v8321, 1.0
    %v8323 = vrcp.pop %v8322
    %v8324 = vmul.f32 1.0, %v8323
    %8325 = vst.msk [vmem:[#allocation23] sm:$0xff] %vm565, %v8324
    // Predicated region
    $region110: #{tpu_custom_call.1} parent=1 // pred_check
      _
    $region111: #{tpu_custom_call.1} parent=1 // pred_check_branch
      %8327 = sbr.rel (0) target = $region113
    $region112: #{tpu_custom_call.1} parent=1 // pred_region
      %s8329 = ssub.s32 128, 128
      %8330 = vsyncadd [#allocation4], %s8329
      %s8332 = sshll.u32 [#allocation23], 4
      %s8333 = int_to_ptr.vmem [resolvable:$true] %s8332
      %8335 = dma.vmem_to_hbm [thread:$0]  %s8333, 128, %s14, [#allocation4]
    $region113: #{tpu_custom_call.1} parent=1 // pred_fallthru
      _
    // Predicated region
    $region114: #{tpu_custom_call.1} parent=1 // pred_check
      _
    $region115: #{tpu_custom_call.1} parent=1 // pred_check_branch
      %8337 = sbr.rel (0) target = $region117
    $region116: #{tpu_custom_call.1} parent=1 // pred_region
      %s8339 = ssub.s32 128, 128
      %8340 = vsyncadd [#allocation25], %s8339
      %s8342 = sshll.u32 [#allocation24], 4
      %s8343 = int_to_ptr.vmem [resolvable:$true] %s8342
      %8345 = dma.vmem_to_hbm [thread:$0]  %s8343, 128, %s15, [#allocation25]
    $region117: #{tpu_custom_call.1} parent=1 // pred_fallthru
      _
    // Predicated region
    $region118: #{tpu_custom_call.1} parent=1 // pred_check
      _
    $region119: #{tpu_custom_call.1} parent=1 // pred_check_branch
      %8347 = sbr.rel (0) target = $region121
    $region120: #{tpu_custom_call.1} parent=1 // pred_region
      %s8349 = ssub.s32 128, 128
      %8350 = vsyncadd [#allocation25], %s8349
      %s8352 = sshll.u32 [#allocation26], 4
      %s8353 = int_to_ptr.vmem [resolvable:$true] %s8352
      %8355 = dma.vmem_to_hbm [thread:$0]  %s8353, 128, %s16, [#allocation25]
    $region121: #{tpu_custom_call.1} parent=1 // pred_fallthru
      _
    // Predicated region
    $region122: #{tpu_custom_call.1} parent=1 // pred_check
      _
    $region123: #{tpu_custom_call.1} parent=1 // pred_check_branch
      %8357 = sbr.rel (0) target = $region125
    $region124: #{tpu_custom_call.1} parent=1 // pred_region
      %8358 = dma.done [#allocation4], 128
    $region125: #{tpu_custom_call.1} parent=1 // pred_fallthru
      _
    // Predicated region
    $region126: #{tpu_custom_call.1} parent=1 // pred_check
      _
    $region127: #{tpu_custom_call.1} parent=1 // pred_check_branch
      %8360 = sbr.rel (0) target = $region129
    $region128: #{tpu_custom_call.1} parent=1 // pred_region
      %8361 = dma.done [#allocation25], 128
    $region129: #{tpu_custom_call.1} parent=1 // pred_fallthru
      _
    // Predicated region
    $region130: #{tpu_custom_call.1} parent=1 // pred_check
      _
    $region131: #{tpu_custom_call.1} parent=1 // pred_check_branch
      %8363 = sbr.rel (0) target = $region133
    $region132: #{tpu_custom_call.1} parent=1 // pred_region
      %8364 = dma.done [#allocation25], 128
    $region133: #{tpu_custom_call.1} parent=1 // pred_fallthru
      _
    %8365 = vsyncpa [#allocation3], 1
    %8366 = vsyncpa [#allocation6], 1
    %8367 = vsyncpa [#allocation9], 1
    %8368 = vsyncpa [#allocation12], 1
    %8369 = vsyncpa [#allocation15], 1
    %8370 = vsyncpa [#allocation18], 1
    %8371 = vsyncpa [#allocation21], 1
    %8372 = vsyncpa [#allocation4], 1
    %8373 = vsyncpa [#allocation25], 1

</llo_original>
